<compile_context>
chip_gen: v7x
topology: tpu7x:2x2x1
jax: 0.10.0
libtpu: 0.0.40
codegen_flags: <defaults>
</compile_context>

<pallas_src>
import functools

import jax
import jax.numpy as jnp
import numpy as np
from jax import lax
from jax.experimental import pallas as pl
from jax.experimental.pallas import tpu as pltpu

EPS = 1e-5


# ----------------------------- compiler params ------------------------------


def _compiler_params():
    # Generation-aware scoped-VMEM limit: ~3/4 of physical, capped at 96 MiB
    # (v7x: 64 MiB physical -> 48 MiB; v5e/v6e: 128 MiB -> 96 MiB).
    try:
        cap = int(pltpu.get_tpu_info().vmem_capacity_bytes)
        limit = max(32 * 1024 * 1024, min(3 * cap // 4, 96 * 1024 * 1024))
    except Exception:  # conservative, known-good fallback
        limit = 32 * 1024 * 1024
    return pltpu.CompilerParams(
        dimension_semantics=("parallel", "parallel"),
        vmem_limit_bytes=limit,
    )


# ----------------------------- kernels --------------------------------------


def _conv3x3_acc(acc, x_bf16, w_ref, th, wout):
    """Accumulate a 3x3 'same' conv: 9 shifted (th*wout, Cin) bf16 tiles each
    hit the MXU against w[dy, dx]; the acc chain is a pure f32 accumulate
    (MRB-friendly on v7x).  Cin/Cout are the real (un-padded) channel counts."""
    for dy in range(3):
        for dx in range(3):
            xs = x_bf16[dy:dy + th, dx:dx + wout, :].reshape(th * wout, -1)
            acc = acc + jnp.dot(xs, w_ref[dy, dx],
                                preferred_element_type=jnp.float32)
    return acc


def _store_conv_and_stats(acc, o_ref, stats_ref):
    # Raw conv output (bf16, real channels only) + per-channel [sum, sumsq]
    # partials for the two-pass training-mode BatchNorm (taken from the f32 acc
    # before the bf16 rounding).
    o_ref[...] = acc.reshape(o_ref.shape).astype(o_ref.dtype)
    s = jnp.sum(acc, axis=0, keepdims=True)
    ss = jnp.sum(acc * acc, axis=0, keepdims=True)
    stats_ref[...] = jnp.concatenate([s, ss], axis=0).reshape(stats_ref.shape)


def _conv1_kernel(xu_ref, sk_ref, wx_ref, ws_ref, o_ref, stats_ref,
                  *, th, wout, c_out):
    # conv1 over the (virtual) channel concat [upsampled x, skip]: two weight
    # slabs accumulated into one f32 accumulator, so the concat never exists.
    acc = jnp.zeros((th * wout, c_out), jnp.float32)
    acc = _conv3x3_acc(acc, xu_ref[0], wx_ref, th, wout)
    acc = _conv3x3_acc(acc, sk_ref[0], ws_ref, th, wout)
    _store_conv_and_stats(acc, o_ref, stats_ref)


def _bn_relu_conv_kernel(x_ref, sc_ref, sh_ref, w_ref, o_ref, stats_ref,
                         *, th, wout, c_out):
    # Fused: BN(scale/shift)+ReLU of the previous stage's raw conv output, then
    # this stage's 3x3 conv.  The input was zero-padded in RAW space, so the
    # padding positions are re-zeroed after the affine (halo rows are padding
    # only on the first/last row tile; halo columns always are).
    t = pl.program_id(1)
    last_t = pl.num_programs(1) - 1
    c_in = x_ref.shape[-1]
    sc = sc_ref[...].reshape(1, 1, c_in)
    sh = sh_ref[...].reshape(1, 1, c_in)
    act = jnp.maximum(x_ref[0].astype(jnp.float32) * sc + sh, 0.0)
    row = lax.broadcasted_iota(jnp.int32, act.shape, 0)
    col = lax.broadcasted_iota(jnp.int32, act.shape, 1)
    valid = (col >= 1) & (col <= wout)
    valid &= (row != 0) | (t != 0)              # top halo row is pad only on tile 0
    valid &= (row != th + 1) | (t != last_t)    # bottom halo row is pad only on last tile
    act = jnp.where(valid, act, 0.0)
    acc = jnp.zeros((th * wout, c_out), jnp.float32)
    acc = _conv3x3_acc(acc, act.astype(jnp.bfloat16), w_ref, th, wout)
    _store_conv_and_stats(acc, o_ref, stats_ref)


def _bn_relu_kernel(x_ref, sc_ref, sh_ref, o_ref):
    c = x_ref.shape[-1]
    sc = sc_ref[...].reshape(1, 1, 1, c)
    sh = sh_ref[...].reshape(1, 1, 1, c)
    o_ref[...] = jnp.maximum(x_ref[...].astype(jnp.float32) * sc + sh,
                             0.0).astype(o_ref.dtype)


# ----------------------------- specs / wrappers ------------------------------


def _halo_row_spec(th, hp2, wp2, c):
    """Overlapping (th+2)-row windows of a spatially padded (N, H+2, W+2, C)
    array, fetched straight from HBM (no materialized halo tiles).  If the
    whole padded image is a single row tile this is a plain full block;
    otherwise the row dim is element-indexed so windows may overlap."""
    if th + 2 == hp2:
        return pl.BlockSpec((1, hp2, wp2, c), lambda n, t: (n, 0, 0, 0))
    return pl.BlockSpec((1, pl.Element(th + 2), wp2, c),
                        lambda n, t: (n, t * th, 0, 0))


def _pick_tile_h(H, W):
    """Largest row-tile (divisor of H) keeping the flattened MXU M dim (th*W)
    under ~2048, so per-grid-step overhead is amortized and DMAs stay large."""
    cap_rows = max(8, 2048 // max(W, 1))
    th = 1
    for cand in range(1, H + 1):
        if H % cand == 0 and cand <= cap_rows:
            th = cand
    return th


def _prep_weight(w_oihw):
    """PyTorch (Cout, Cin, 3, 3) -> (3, 3, Cin, Cout) bf16 (no channel padding)."""
    return jnp.transpose(w_oihw, (2, 3, 1, 0)).astype(jnp.bfloat16)


def _conv1_stage(xu_pad, sk_pad, wx, ws, th):
    N, hp2, wp2, _ = xu_pad.shape
    H, W = hp2 - 2, wp2 - 2
    n_t = H // th
    c_out = wx.shape[-1]
    kernel = functools.partial(_conv1_kernel, th=th, wout=W, c_out=c_out)
    out_shape = (jax.ShapeDtypeStruct((N, H, W, c_out), jnp.bfloat16),
                 jax.ShapeDtypeStruct((N, n_t, 2, c_out), jnp.float32))
    out_specs = (pl.BlockSpec((1, th, W, c_out), lambda n, t: (n, t, 0, 0)),
                 pl.BlockSpec((1, 1, 2, c_out), lambda n, t: (n, t, 0, 0)))
    return pl.pallas_call(
        kernel, grid=(N, n_t),
        in_specs=[_halo_row_spec(th, hp2, wp2, xu_pad.shape[-1]),
                  _halo_row_spec(th, hp2, wp2, sk_pad.shape[-1]),
                  pl.BlockSpec(wx.shape, lambda n, t: (0, 0, 0, 0)),
                  pl.BlockSpec(ws.shape, lambda n, t: (0, 0, 0, 0))],
        out_specs=out_specs, out_shape=out_shape,
        compiler_params=_compiler_params(),
    )(xu_pad, sk_pad, wx, ws)


def _conv2_stage(x_pad, scale, shift, w, th):
    N, hp2, wp2, c = x_pad.shape
    H, W = hp2 - 2, wp2 - 2
    n_t = H // th
    c_out = w.shape[-1]
    kernel = functools.partial(_bn_relu_conv_kernel, th=th, wout=W, c_out=c_out)
    out_shape = (jax.ShapeDtypeStruct((N, H, W, c_out), jnp.bfloat16),
                 jax.ShapeDtypeStruct((N, n_t, 2, c_out), jnp.float32))
    out_specs = (pl.BlockSpec((1, th, W, c_out), lambda n, t: (n, t, 0, 0)),
                 pl.BlockSpec((1, 1, 2, c_out), lambda n, t: (n, t, 0, 0)))
    vec_spec = pl.BlockSpec((1, c), lambda n, t: (0, 0))
    return pl.pallas_call(
        kernel, grid=(N, n_t),
        in_specs=[_halo_row_spec(th, hp2, wp2, c),
                  vec_spec, vec_spec,
                  pl.BlockSpec(w.shape, lambda n, t: (0, 0, 0, 0))],
        out_specs=out_specs, out_shape=out_shape,
        compiler_params=_compiler_params(),
    )(x_pad, scale, shift, w)


def _bn_relu_apply(x, scale, shift, th):
    # Final BN+ReLU: purely memory-bound, so it writes only the real c_out
    # channel slab (no 128-lane padding).
    N, H, W, c = x.shape
    n_t = H // th
    return pl.pallas_call(
        _bn_relu_kernel, grid=(N, n_t),
        in_specs=[pl.BlockSpec((1, th, W, c), lambda n, t: (n, t, 0, 0)),
                  pl.BlockSpec((1, c), lambda n, t: (0, 0)),
                  pl.BlockSpec((1, c), lambda n, t: (0, 0))],
        out_specs=pl.BlockSpec((1, th, W, c), lambda n, t: (n, t, 0, 0)),
        out_shape=jax.ShapeDtypeStruct((N, H, W, c), jnp.float32),
        compiler_params=_compiler_params(),
    )(x, scale, shift)


def _fold_bn(stats, gamma, beta, count):
    """Fold per-tile [sum, sumsq] partials into per-channel (scale, shift).
    Train-mode BN: biased variance, eps=1e-5.  Conv bias is omitted because the
    mean subtraction cancels it exactly.
    TODO(synk): switch to a shifted/Welford accumulation for large-magnitude
    activations (E[x^2]-mean^2 can cancel)."""
    s = jnp.sum(stats[:, :, 0, :], axis=(0, 1))
    ss = jnp.sum(stats[:, :, 1, :], axis=(0, 1))
    mean = s / count
    var = jnp.maximum(ss / count - mean * mean, 0.0)
    scale = gamma.astype(jnp.float32) * lax.rsqrt(var + EPS)
    shift = beta.astype(jnp.float32) - mean * scale
    return scale.reshape(1, -1), shift.reshape(1, -1)


def _bilinear_matrix(in_size, out_size):
    """Row interpolation matrix matching F.interpolate(mode='bilinear',
    align_corners=False)."""
    scale = in_size / out_size
    i = jnp.arange(out_size, dtype=jnp.float32)
    src = jnp.maximum((i + 0.5) * scale - 0.5, 0.0)
    i0 = jnp.clip(jnp.floor(src).astype(jnp.int32), 0, in_size - 1)
    i1 = jnp.minimum(i0 + 1, in_size - 1)
    w1 = src - i0.astype(jnp.float32)
    w0 = 1.0 - w1
    mat = jnp.zeros((out_size, in_size), jnp.float32)
    rows = jnp.arange(out_size)
    mat = mat.at[rows, i0].add(w0)
    mat = mat.at[rows, i1].add(w1)
    return mat


def upsample_block_forward(x_nchw, skip_nchw, params):
    """UpSampleBlock.forward: bilinear upsample -> concat -> (conv+BN+ReLU) x2.
    BN uses training-mode batch statistics (a fresh PyTorch module is in train
    mode); conv biases are dropped (cancelled by the BN mean subtraction)."""
    x = jnp.transpose(x_nchw, (0, 2, 3, 1)).astype(jnp.float32)      # NHWC
    skip = jnp.transpose(skip_nchw, (0, 2, 3, 1)).astype(jnp.float32)
    N, Hs, Ws, _ = skip.shape
    c_x = x.shape[-1]
    c_out = params['w1'].shape[0]
    th = _pick_tile_h(Hs, Ws)

    # Bilinear upsample (align_corners=False) as two small interpolation matmuls.
    A = _bilinear_matrix(x.shape[1], Hs)
    B = _bilinear_matrix(x.shape[2], Ws)
    xu = jnp.einsum('hH,nHWc->nhWc', A, x)
    xu = jnp.einsum('wW,nhWc->nhwc', B, xu)

    # Stage-1 inputs stay at their real channel counts: spatial zero-pad + bf16
    # cast only (no 128-lane padding, no materialized channel concat).
    sp = ((0, 0), (1, 1), (1, 1), (0, 0))
    xu_p = jnp.pad(xu.astype(jnp.bfloat16), sp)
    sk_p = jnp.pad(skip.astype(jnp.bfloat16), sp)
    w1x = _prep_weight(params['w1'][:, :c_x])   # x-slab of conv1
    w1s = _prep_weight(params['w1'][:, c_x:])   # skip-slab of conv1
    w2 = _prep_weight(params['w2'])
    # Conv biases b1/b2 intentionally unused: cancelled by train-mode BN.

    count = N * Hs * Ws
    conv1_raw, stats1 = _conv1_stage(xu_p, sk_p, w1x, w1s, th)
    scale1, shift1 = _fold_bn(stats1, params['g1'], params['beta1'], count)

    # Stage 2: BN1-apply + ReLU fused into the conv kernel; the bf16 raw conv1
    # output is only spatially re-padded (padding positions are re-zeroed
    # in-kernel after the affine).
    c1_p = jnp.pad(conv1_raw, sp)
    conv2_raw, stats2 = _conv2_stage(c1_p, scale1, shift1, w2, th)
    scale2, shift2 = _fold_bn(stats2, params['g2'], params['beta2'], count)

    y = _bn_relu_apply(conv2_raw, scale2, shift2, th)   # (N, Hs, Ws, c_out) f32
    return jnp.transpose(y, (0, 3, 1, 2))               # back to NCHW


# ----------------------------- reference ------------------------------------


def _reference(x_nchw, skip_nchw, params):
    """Pure-JAX f32 reference for self-check."""
    x = jnp.transpose(x_nchw, (0, 2, 3, 1)).astype(jnp.float32)
    skip = jnp.transpose(skip_nchw, (0, 2, 3, 1)).astype(jnp.float32)
    A = _bilinear_matrix(x.shape[1], skip.shape[1])
    B = _bilinear_matrix(x.shape[2], skip.shape[2])
    xu = jnp.einsum('hH,nHWc->nhWc', A, x)
    xu = jnp.einsum('wW,nhWc->nhwc', B, xu)
    xc = jnp.concatenate([xu, skip], axis=-1)

    def stage(z, w, b, g, be):
        y = lax.conv_general_dilated(
            z, jnp.transpose(w, (2, 3, 1, 0)), window_strides=(1, 1),
            padding='SAME', dimension_numbers=('NHWC', 'HWIO', 'NHWC')) + b
        m = jnp.mean(y, axis=(0, 1, 2), keepdims=True)
        v = jnp.mean(jnp.square(y - m), axis=(0, 1, 2), keepdims=True)
        return jnp.maximum((y - m) * lax.rsqrt(v + EPS) * g + be, 0.0)

    y = stage(xc, params['w1'], params['b1'], params['g1'], params['beta1'])
    y = stage(y, params['w2'], params['b2'], params['g2'], params['beta2'])
    return jnp.transpose(y, (0, 3, 1, 2))


if __name__ == "__main__":
    key = jax.random.PRNGKey(0)
    ks = jax.random.split(key, 10)

    # x: 4 channels @ 8x8, skip: 4 channels @ 16x16 -> concat = 8 channels,
    # i.e. UpSampleBlock(in_channels=8, out_channels=8).
    N = 2
    in_channels, out_channels = 8, 8
    x = jax.random.normal(ks[0], (N, 4, 8, 8), jnp.float32)       # NCHW
    skip = jax.random.normal(ks[1], (N, 4, 16, 16), jnp.float32)  # NCHW

    params = {
        'w1': 0.2 * jax.random.normal(ks[2], (out_channels, in_channels, 3, 3), jnp.float32),
        'b1': 0.1 * jax.random.normal(ks[3], (out_channels,), jnp.float32),
        'g1': 1.0 + 0.1 * jax.random.normal(ks[4], (out_channels,), jnp.float32),
        'beta1': 0.1 * jax.random.normal(ks[5], (out_channels,), jnp.float32),
        'w2': 0.2 * jax.random.normal(ks[6], (out_channels, out_channels, 3, 3), jnp.float32),
        'b2': 0.1 * jax.random.normal(ks[7], (out_channels,), jnp.float32),
        'g2': 1.0 + 0.1 * jax.random.normal(ks[8], (out_channels,), jnp.float32),
        'beta2': 0.1 * jax.random.normal(ks[9], (out_channels,), jnp.float32),
    }

    fwd = jax.jit(upsample_block_forward)
    out = jax.block_until_ready(fwd(x, skip, params))
    ref = jax.block_until_ready(_reference(x, skip, params))
    assert out.shape == (N, out_channels, 16, 16), out.shape
    # bf16 MXU operands + bf16 intermediates -> slightly looser tolerance than f32.
    np.testing.assert_allclose(np.asarray(out), np.asarray(ref), rtol=3e-2, atol=3e-2)
    print("KERNEL_OK")
</pallas_src>

<mosaic_0001>
module attributes {stable_mosaic.version = 11 : i64} {
  func.func private @main(%arg0: i32) attributes {dimension_semantics = [#tpu.dimension_semantics<core_parallel>], iteration_bounds = array<i64: 2>, tpu.core_type = #tpu.core_type<sc_scalar_subcore>, window_params = []} {
    return
  }
}

module attributes {stable_mosaic.version = 11 : i64} {
  func.func private @main(%arg0: i32) attributes {dimension_semantics = [#tpu.dimension_semantics<core_parallel>], iteration_bounds = array<i64: 2>, tpu.core_type = #tpu.core_type<sc_scalar_subcore>, window_params = []} {
    return
  }
}

module attributes {stable_mosaic.version = 11 : i64} {
  func.func @_bn_relu_conv_kernel(%arg0: i32, %arg1: i32, %arg2: memref<1x18x18x8xbf16, #tpu.memory_space<vmem>>, %arg3: memref<1x8xf32, #tpu.memory_space<vmem>>, %arg4: memref<1x8xf32, #tpu.memory_space<vmem>>, %arg5: memref<3x3x8x8xbf16, #tpu.memory_space<vmem>>, %arg6: memref<1x16x16x8xbf16, #tpu.memory_space<vmem>>, %arg7: memref<1x1x2x8xf32, #tpu.memory_space<vmem>>) attributes {dimension_semantics = [#tpu.dimension_semantics<parallel>, #tpu.dimension_semantics<parallel>], iteration_bounds = array<i64: 2, 1>, scalar_prefetch = 0 : i64, scratch_operands = 0 : i64, tpu.core_type = #tpu.core_type<tc>, window_params = [{transform_indices = @transform_0, window_bounds = array<i64: 1, 18, 18, 8>}, {pipeline_mode = #tpu.pipeline_mode<synchronous>, transform_indices = @transform_1, window_bounds = array<i64: 1, 8>}, {pipeline_mode = #tpu.pipeline_mode<synchronous>, transform_indices = @transform_2, window_bounds = array<i64: 1, 8>}, {pipeline_mode = #tpu.pipeline_mode<synchronous>, transform_indices = @transform_3, window_bounds = array<i64: 3, 3, 8, 8>}, {transform_indices = @transform_4, window_bounds = array<i64: 1, 16, 16, 8>}, {transform_indices = @transform_5, window_bounds = array<i64: 1, 1, 2, 8>}]} {
    %c0 = arith.constant 0 : index
    %c0_0 = arith.constant 0 : index
    %0 = vector.load %arg3[%c0, %c0_0] : memref<1x8xf32, #tpu.memory_space<vmem>>, vector<1x8xf32>
    %1 = vector.shape_cast %0 : vector<1x8xf32> to vector<1x1x8xf32>
    %c0_1 = arith.constant 0 : index
    %c0_2 = arith.constant 0 : index
    %2 = vector.load %arg4[%c0_1, %c0_2] : memref<1x8xf32, #tpu.memory_space<vmem>>, vector<1x8xf32>
    %3 = vector.shape_cast %2 : vector<1x8xf32> to vector<1x1x8xf32>
    %c0_3 = arith.constant 0 : index
    %c0_4 = arith.constant 0 : index
    %c0_5 = arith.constant 0 : index
    %c0_6 = arith.constant 0 : index
    %4 = vector.load %arg2[%c0_3, %c0_4, %c0_5, %c0_6] : memref<1x18x18x8xbf16, #tpu.memory_space<vmem>>, vector<1x18x18x8xbf16>
    %5 = vector.shape_cast %4 : vector<1x18x18x8xbf16> to vector<18x18x8xbf16>
    %6 = arith.extf %5 : vector<18x18x8xbf16> to vector<18x18x8xf32>
    %7 = vector.broadcast %1 : vector<1x1x8xf32> to vector<18x18x8xf32>
    %8 = arith.mulf %6, %7 : vector<18x18x8xf32>
    %9 = vector.broadcast %3 : vector<1x1x8xf32> to vector<18x18x8xf32>
    %10 = arith.addf %8, %9 : vector<18x18x8xf32>
    %cst = arith.constant 0.000000e+00 : f32
    %11 = vector.broadcast %cst : f32 to vector<18x18x8xf32>
    %12 = arith.maximumf %10, %11 : vector<18x18x8xf32>
    %13 = tpu.iota {dimensions = array<i32: 0>} : vector<18x18x8xi32>
    %14 = tpu.iota {dimensions = array<i32: 1>} : vector<18x18x8xi32>
    %c1_i32 = arith.constant 1 : i32
    %15 = vector.broadcast %c1_i32 : i32 to vector<18x18x8xi32>
    %16 = arith.cmpi sge, %14, %15 : vector<18x18x8xi32>
    %c16_i32 = arith.constant 16 : i32
    %17 = vector.broadcast %c16_i32 : i32 to vector<18x18x8xi32>
    %18 = arith.cmpi sle, %14, %17 : vector<18x18x8xi32>
    %19 = arith.andi %16, %18 : vector<18x18x8xi1>
    %c0_i32 = arith.constant 0 : i32
    %20 = vector.broadcast %c0_i32 : i32 to vector<18x18x8xi32>
    %21 = arith.cmpi ne, %13, %20 : vector<18x18x8xi32>
    %c0_i32_7 = arith.constant 0 : i32
    %22 = arith.cmpi ne, %arg1, %c0_i32_7 : i32
    %23 = vector.broadcast %22 : i1 to vector<18x18x8xi1>
    %24 = arith.ori %21, %23 : vector<18x18x8xi1>
    %25 = arith.andi %19, %24 : vector<18x18x8xi1>
    %c17_i32 = arith.constant 17 : i32
    %26 = vector.broadcast %c17_i32 : i32 to vector<18x18x8xi32>
    %27 = arith.cmpi ne, %13, %26 : vector<18x18x8xi32>
    %c0_i32_8 = arith.constant 0 : i32
    %28 = arith.cmpi ne, %arg1, %c0_i32_8 : i32
    %29 = vector.broadcast %28 : i1 to vector<18x18x8xi1>
    %30 = arith.ori %27, %29 : vector<18x18x8xi1>
    %31 = arith.andi %25, %30 : vector<18x18x8xi1>
    %cst_9 = arith.constant 0.000000e+00 : f32
    %32 = vector.broadcast %cst_9 : f32 to vector<18x18x8xf32>
    %33 = arith.select %31, %12, %32 : vector<18x18x8xi1>, vector<18x18x8xf32>
    %cst_10 = arith.constant 0.000000e+00 : f32
    %34 = vector.broadcast %cst_10 : f32 to vector<256x8xf32>
    %35 = arith.truncf %33 : vector<18x18x8xf32> to vector<18x18x8xbf16>
    %36 = vector.extract_strided_slice %35 {offsets = [0, 0, 0], sizes = [16, 16, 8], strides = [1, 1, 1]} : vector<18x18x8xbf16> to vector<16x16x8xbf16>
    %37 = vector.shape_cast %36 : vector<16x16x8xbf16> to vector<256x8xbf16>
    %c0_11 = arith.constant 0 : index
    %c0_12 = arith.constant 0 : index
    %c0_13 = arith.constant 0 : index
    %c0_14 = arith.constant 0 : index
    %38 = vector.load %arg5[%c0_11, %c0_12, %c0_13, %c0_14] : memref<3x3x8x8xbf16, #tpu.memory_space<vmem>>, vector<1x1x8x8xbf16>
    %39 = vector.shape_cast %38 : vector<1x1x8x8xbf16> to vector<8x8xbf16>
    %cst_15 = arith.constant dense<0.000000e+00> : vector<256x8xf32>
    %40 = tpu.matmul %37, %39, %cst_15 {dimension_numbers = #tpu.dot_dimension_numbers<[1], [0], [0], [1], [0, 0, 1, 1], [], []>} : vector<256x8xbf16>, vector<8x8xbf16>, vector<256x8xf32> -> vector<256x8xf32>
    %41 = arith.addf %34, %40 : vector<256x8xf32>
    %42 = vector.extract_strided_slice %35 {offsets = [0, 1, 0], sizes = [16, 16, 8], strides = [1, 1, 1]} : vector<18x18x8xbf16> to vector<16x16x8xbf16>
    %43 = vector.shape_cast %42 : vector<16x16x8xbf16> to vector<256x8xbf16>
    %c0_16 = arith.constant 0 : index
    %c1 = arith.constant 1 : index
    %c0_17 = arith.constant 0 : index
    %c0_18 = arith.constant 0 : index
    %44 = vector.load %arg5[%c0_16, %c1, %c0_17, %c0_18] : memref<3x3x8x8xbf16, #tpu.memory_space<vmem>>, vector<1x1x8x8xbf16>
    %45 = vector.shape_cast %44 : vector<1x1x8x8xbf16> to vector<8x8xbf16>
    %cst_19 = arith.constant dense<0.000000e+00> : vector<256x8xf32>
    %46 = tpu.matmul %43, %45, %cst_19 {dimension_numbers = #tpu.dot_dimension_numbers<[1], [0], [0], [1], [0, 0, 1, 1], [], []>} : vector<256x8xbf16>, vector<8x8xbf16>, vector<256x8xf32> -> vector<256x8xf32>
    %47 = arith.addf %41, %46 : vector<256x8xf32>
    %48 = vector.extract_strided_slice %35 {offsets = [0, 2, 0], sizes = [16, 16, 8], strides = [1, 1, 1]} : vector<18x18x8xbf16> to vector<16x16x8xbf16>
    %49 = vector.shape_cast %48 : vector<16x16x8xbf16> to vector<256x8xbf16>
    %c0_20 = arith.constant 0 : index
    %c2 = arith.constant 2 : index
    %c0_21 = arith.constant 0 : index
    %c0_22 = arith.constant 0 : index
    %50 = vector.load %arg5[%c0_20, %c2, %c0_21, %c0_22] : memref<3x3x8x8xbf16, #tpu.memory_space<vmem>>, vector<1x1x8x8xbf16>
    %51 = vector.shape_cast %50 : vector<1x1x8x8xbf16> to vector<8x8xbf16>
    %cst_23 = arith.constant dense<0.000000e+00> : vector<256x8xf32>
    %52 = tpu.matmul %49, %51, %cst_23 {dimension_numbers = #tpu.dot_dimension_numbers<[1], [0], [0], [1], [0, 0, 1, 1], [], []>} : vector<256x8xbf16>, vector<8x8xbf16>, vector<256x8xf32> -> vector<256x8xf32>
    %53 = arith.addf %47, %52 : vector<256x8xf32>
    %54 = vector.extract_strided_slice %35 {offsets = [1, 0, 0], sizes = [16, 16, 8], strides = [1, 1, 1]} : vector<18x18x8xbf16> to vector<16x16x8xbf16>
    %55 = vector.shape_cast %54 : vector<16x16x8xbf16> to vector<256x8xbf16>
    %c1_24 = arith.constant 1 : index
    %c0_25 = arith.constant 0 : index
    %c0_26 = arith.constant 0 : index
    %c0_27 = arith.constant 0 : index
    %56 = vector.load %arg5[%c1_24, %c0_25, %c0_26, %c0_27] : memref<3x3x8x8xbf16, #tpu.memory_space<vmem>>, vector<1x1x8x8xbf16>
    %57 = vector.shape_cast %56 : vector<1x1x8x8xbf16> to vector<8x8xbf16>
    %cst_28 = arith.constant dense<0.000000e+00> : vector<256x8xf32>
    %58 = tpu.matmul %55, %57, %cst_28 {dimension_numbers = #tpu.dot_dimension_numbers<[1], [0], [0], [1], [0, 0, 1, 1], [], []>} : vector<256x8xbf16>, vector<8x8xbf16>, vector<256x8xf32> -> vector<256x8xf32>
    %59 = arith.addf %53, %58 : vector<256x8xf32>
    %60 = vector.extract_strided_slice %35 {offsets = [1, 1, 0], sizes = [16, 16, 8], strides = [1, 1, 1]} : vector<18x18x8xbf16> to vector<16x16x8xbf16>
    %61 = vector.shape_cast %60 : vector<16x16x8xbf16> to vector<256x8xbf16>
    %c1_29 = arith.constant 1 : index
    %c1_30 = arith.constant 1 : index
    %c0_31 = arith.constant 0 : index
    %c0_32 = arith.constant 0 : index
    %62 = vector.load %arg5[%c1_29, %c1_30, %c0_31, %c0_32] : memref<3x3x8x8xbf16, #tpu.memory_space<vmem>>, vector<1x1x8x8xbf16>
    %63 = vector.shape_cast %62 : vector<1x1x8x8xbf16> to vector<8x8xbf16>
    %cst_33 = arith.constant dense<0.000000e+00> : vector<256x8xf32>
    %64 = tpu.matmul %61, %63, %cst_33 {dimension_numbers = #tpu.dot_dimension_numbers<[1], [0], [0], [1], [0, 0, 1, 1], [], []>} : vector<256x8xbf16>, vector<8x8xbf16>, vector<256x8xf32> -> vector<256x8xf32>
    %65 = arith.addf %59, %64 : vector<256x8xf32>
    %66 = vector.extract_strided_slice %35 {offsets = [1, 2, 0], sizes = [16, 16, 8], strides = [1, 1, 1]} : vector<18x18x8xbf16> to vector<16x16x8xbf16>
    %67 = vector.shape_cast %66 : vector<16x16x8xbf16> to vector<256x8xbf16>
    %c1_34 = arith.constant 1 : index
    %c2_35 = arith.constant 2 : index
    %c0_36 = arith.constant 0 : index
    %c0_37 = arith.constant 0 : index
    %68 = vector.load %arg5[%c1_34, %c2_35, %c0_36, %c0_37] : memref<3x3x8x8xbf16, #tpu.memory_space<vmem>>, vector<1x1x8x8xbf16>
    %69 = vector.shape_cast %68 : vector<1x1x8x8xbf16> to vector<8x8xbf16>
    %cst_38 = arith.constant dense<0.000000e+00> : vector<256x8xf32>
    %70 = tpu.matmul %67, %69, %cst_38 {dimension_numbers = #tpu.dot_dimension_numbers<[1], [0], [0], [1], [0, 0, 1, 1], [], []>} : vector<256x8xbf16>, vector<8x8xbf16>, vector<256x8xf32> -> vector<256x8xf32>
    %71 = arith.addf %65, %70 : vector<256x8xf32>
    %72 = vector.extract_strided_slice %35 {offsets = [2, 0, 0], sizes = [16, 16, 8], strides = [1, 1, 1]} : vector<18x18x8xbf16> to vector<16x16x8xbf16>
    %73 = vector.shape_cast %72 : vector<16x16x8xbf16> to vector<256x8xbf16>
    %c2_39 = arith.constant 2 : index
    %c0_40 = arith.constant 0 : index
    %c0_41 = arith.constant 0 : index
    %c0_42 = arith.constant 0 : index
    %74 = vector.load %arg5[%c2_39, %c0_40, %c0_41, %c0_42] : memref<3x3x8x8xbf16, #tpu.memory_space<vmem>>, vector<1x1x8x8xbf16>
    %75 = vector.shape_cast %74 : vector<1x1x8x8xbf16> to vector<8x8xbf16>
    %cst_43 = arith.constant dense<0.000000e+00> : vector<256x8xf32>
    %76 = tpu.matmul %73, %75, %cst_43 {dimension_numbers = #tpu.dot_dimension_numbers<[1], [0], [0], [1], [0, 0, 1, 1], [], []>} : vector<256x8xbf16>, vector<8x8xbf16>, vector<256x8xf32> -> vector<256x8xf32>
    %77 = arith.addf %71, %76 : vector<256x8xf32>
    %78 = vector.extract_strided_slice %35 {offsets = [2, 1, 0], sizes = [16, 16, 8], strides = [1, 1, 1]} : vector<18x18x8xbf16> to vector<16x16x8xbf16>
    %79 = vector.shape_cast %78 : vector<16x16x8xbf16> to vector<256x8xbf16>
    %c2_44 = arith.constant 2 : index
    %c1_45 = arith.constant 1 : index
    %c0_46 = arith.constant 0 : index
    %c0_47 = arith.constant 0 : index
    %80 = vector.load %arg5[%c2_44, %c1_45, %c0_46, %c0_47] : memref<3x3x8x8xbf16, #tpu.memory_space<vmem>>, vector<1x1x8x8xbf16>
    %81 = vector.shape_cast %80 : vector<1x1x8x8xbf16> to vector<8x8xbf16>
    %cst_48 = arith.constant dense<0.000000e+00> : vector<256x8xf32>
    %82 = tpu.matmul %79, %81, %cst_48 {dimension_numbers = #tpu.dot_dimension_numbers<[1], [0], [0], [1], [0, 0, 1, 1], [], []>} : vector<256x8xbf16>, vector<8x8xbf16>, vector<256x8xf32> -> vector<256x8xf32>
    %83 = arith.addf %77, %82 : vector<256x8xf32>
    %84 = vector.extract_strided_slice %35 {offsets = [2, 2, 0], sizes = [16, 16, 8], strides = [1, 1, 1]} : vector<18x18x8xbf16> to vector<16x16x8xbf16>
    %85 = vector.shape_cast %84 : vector<16x16x8xbf16> to vector<256x8xbf16>
    %c2_49 = arith.constant 2 : index
    %c2_50 = arith.constant 2 : index
    %c0_51 = arith.constant 0 : index
    %c0_52 = arith.constant 0 : index
    %86 = vector.load %arg5[%c2_49, %c2_50, %c0_51, %c0_52] : memref<3x3x8x8xbf16, #tpu.memory_space<vmem>>, vector<1x1x8x8xbf16>
    %87 = vector.shape_cast %86 : vector<1x1x8x8xbf16> to vector<8x8xbf16>
    %cst_53 = arith.constant dense<0.000000e+00> : vector<256x8xf32>
    %88 = tpu.matmul %85, %87, %cst_53 {dimension_numbers = #tpu.dot_dimension_numbers<[1], [0], [0], [1], [0, 0, 1, 1], [], []>} : vector<256x8xbf16>, vector<8x8xbf16>, vector<256x8xf32> -> vector<256x8xf32>
    %89 = arith.addf %83, %88 : vector<256x8xf32>
    %90 = vector.shape_cast %89 : vector<256x8xf32> to vector<1x16x16x8xf32>
    %91 = arith.truncf %90 : vector<1x16x16x8xf32> to vector<1x16x16x8xbf16>
    %c0_54 = arith.constant 0 : index
    %c0_55 = arith.constant 0 : index
    %c0_56 = arith.constant 0 : index
    %c0_57 = arith.constant 0 : index
    %92 = vector.load %arg6[%c0_54, %c0_55, %c0_56, %c0_57] : memref<1x16x16x8xbf16, #tpu.memory_space<vmem>>, vector<1x16x16x8xbf16>
    tpu.vector_store %arg6[%c0_54, %c0_55, %c0_56, %c0_57], %91 {strides = array<i32>} : memref<1x16x16x8xbf16, #tpu.memory_space<vmem>>, vector<1x16x16x8xbf16>,
    %cst_58 = arith.constant dense<0.000000e+00> : vector<8xf32>
    %93 = vector.multi_reduction <add>, %89, %cst_58 [0] : vector<256x8xf32> to vector<8xf32>
    %94 = vector.shape_cast %93 : vector<8xf32> to vector<1x8xf32>
    %95 = arith.mulf %89, %89 : vector<256x8xf32>
    %cst_59 = arith.constant dense<0.000000e+00> : vector<8xf32>
    %96 = vector.multi_reduction <add>, %95, %cst_59 [0] : vector<256x8xf32> to vector<8xf32>
    %97 = vector.shape_cast %96 : vector<8xf32> to vector<1x8xf32>
    %98 = tpu.concatenate %94, %97 in 0 : vector<1x8xf32>, vector<1x8xf32> -> vector<2x8xf32>
    %99 = vector.shape_cast %98 : vector<2x8xf32> to vector<1x1x2x8xf32>
    %c0_60 = arith.constant 0 : index
    %c0_61 = arith.constant 0 : index
    %c0_62 = arith.constant 0 : index
    %c0_63 = arith.constant 0 : index
    %100 = vector.load %arg7[%c0_60, %c0_61, %c0_62, %c0_63] : memref<1x1x2x8xf32, #tpu.memory_space<vmem>>, vector<1x1x2x8xf32>
    tpu.vector_store %arg7[%c0_60, %c0_61, %c0_62, %c0_63], %99 {strides = array<i32>} : memref<1x1x2x8xf32, #tpu.memory_space<vmem>>, vector<1x1x2x8xf32>,
    return
  }
  func.func @transform_0(%arg0: i32, %arg1: i32) -> (i32, i32, i32, i32) {
    %c0_i32 = arith.constant 0 : i32
    %c0_i32_0 = arith.constant 0 : i32
    %c0_i32_1 = arith.constant 0 : i32
    %c0_i32_2 = arith.constant 0 : i32
    return %arg0, %c0_i32, %c0_i32_0, %c0_i32_1 : i32, i32, i32, i32
  }
  func.func @transform_1(%arg0: i32, %arg1: i32) -> (i32, i32) {
    %c0_i32 = arith.constant 0 : i32
    %c0_i32_0 = arith.constant 0 : i32
    %c0_i32_1 = arith.constant 0 : i32
    return %c0_i32, %c0_i32_0 : i32, i32
  }
  func.func @transform_2(%arg0: i32, %arg1: i32) -> (i32, i32) {
    %c0_i32 = arith.constant 0 : i32
    %c0_i32_0 = arith.constant 0 : i32
    %c0_i32_1 = arith.constant 0 : i32
    return %c0_i32, %c0_i32_0 : i32, i32
  }
  func.func @transform_3(%arg0: i32, %arg1: i32) -> (i32, i32, i32, i32) {
    %c0_i32 = arith.constant 0 : i32
    %c0_i32_0 = arith.constant 0 : i32
    %c0_i32_1 = arith.constant 0 : i32
    %c0_i32_2 = arith.constant 0 : i32
    %c0_i32_3 = arith.constant 0 : i32
    return %c0_i32, %c0_i32_0, %c0_i32_1, %c0_i32_2 : i32, i32, i32, i32
  }
  func.func @transform_4(%arg0: i32, %arg1: i32) -> (i32, i32, i32, i32) {
    %c0_i32 = arith.constant 0 : i32
    %c0_i32_0 = arith.constant 0 : i32
    %c0_i32_1 = arith.constant 0 : i32
    return %arg0, %arg1, %c0_i32, %c0_i32_0 : i32, i32, i32, i32
  }
  func.func @transform_5(%arg0: i32, %arg1: i32) -> (i32, i32, i32, i32) {
    %c0_i32 = arith.constant 0 : i32
    %c0_i32_0 = arith.constant 0 : i32
    %c0_i32_1 = arith.constant 0 : i32
    return %arg0, %arg1, %c0_i32, %c0_i32_0 : i32, i32, i32, i32
  }
}

module attributes {stable_mosaic.version = 11 : i64} {
  func.func @_conv1_kernel(%arg0: i32, %arg1: i32, %arg2: memref<1x18x18x4xbf16, #tpu.memory_space<vmem>>, %arg3: memref<1x18x18x4xbf16, #tpu.memory_space<vmem>>, %arg4: memref<3x3x4x8xbf16, #tpu.memory_space<vmem>>, %arg5: memref<3x3x4x8xbf16, #tpu.memory_space<vmem>>, %arg6: memref<1x16x16x8xbf16, #tpu.memory_space<vmem>>, %arg7: memref<1x1x2x8xf32, #tpu.memory_space<vmem>>) attributes {dimension_semantics = [#tpu.dimension_semantics<parallel>, #tpu.dimension_semantics<parallel>], iteration_bounds = array<i64: 2, 1>, scalar_prefetch = 0 : i64, scratch_operands = 0 : i64, tpu.core_type = #tpu.core_type<tc>, window_params = [{transform_indices = @transform_0, window_bounds = array<i64: 1, 18, 18, 4>}, {transform_indices = @transform_1, window_bounds = array<i64: 1, 18, 18, 4>}, {pipeline_mode = #tpu.pipeline_mode<synchronous>, transform_indices = @transform_2, window_bounds = array<i64: 3, 3, 4, 8>}, {pipeline_mode = #tpu.pipeline_mode<synchronous>, transform_indices = @transform_3, window_bounds = array<i64: 3, 3, 4, 8>}, {transform_indices = @transform_4, window_bounds = array<i64: 1, 16, 16, 8>}, {transform_indices = @transform_5, window_bounds = array<i64: 1, 1, 2, 8>}]} {
    %cst = arith.constant 0.000000e+00 : f32
    %0 = vector.broadcast %cst : f32 to vector<256x8xf32>
    %c0 = arith.constant 0 : index
    %c0_0 = arith.constant 0 : index
    %c0_1 = arith.constant 0 : index
    %c0_2 = arith.constant 0 : index
    %1 = vector.load %arg2[%c0, %c0_0, %c0_1, %c0_2] : memref<1x18x18x4xbf16, #tpu.memory_space<vmem>>, vector<1x18x18x4xbf16>
    %2 = vector.shape_cast %1 : vector<1x18x18x4xbf16> to vector<18x18x4xbf16>
    %3 = vector.extract_strided_slice %2 {offsets = [0, 0, 0], sizes = [16, 16, 4], strides = [1, 1, 1]} : vector<18x18x4xbf16> to vector<16x16x4xbf16>
    %4 = vector.shape_cast %3 : vector<16x16x4xbf16> to vector<256x4xbf16>
    %c0_3 = arith.constant 0 : index
    %c0_4 = arith.constant 0 : index
    %c0_5 = arith.constant 0 : index
    %c0_6 = arith.constant 0 : index
    %5 = vector.load %arg4[%c0_3, %c0_4, %c0_5, %c0_6] : memref<3x3x4x8xbf16, #tpu.memory_space<vmem>>, vector<1x1x4x8xbf16>
    %6 = vector.shape_cast %5 : vector<1x1x4x8xbf16> to vector<4x8xbf16>
    %cst_7 = arith.constant dense<0.000000e+00> : vector<256x8xf32>
    %7 = tpu.matmul %4, %6, %cst_7 {dimension_numbers = #tpu.dot_dimension_numbers<[1], [0], [0], [1], [0, 0, 1, 1], [], []>} : vector<256x4xbf16>, vector<4x8xbf16>, vector<256x8xf32> -> vector<256x8xf32>
    %8 = arith.addf %0, %7 : vector<256x8xf32>
    %9 = vector.extract_strided_slice %2 {offsets = [0, 1, 0], sizes = [16, 16, 4], strides = [1, 1, 1]} : vector<18x18x4xbf16> to vector<16x16x4xbf16>
    %10 = vector.shape_cast %9 : vector<16x16x4xbf16> to vector<256x4xbf16>
    %c0_8 = arith.constant 0 : index
    %c1 = arith.constant 1 : index
    %c0_9 = arith.constant 0 : index
    %c0_10 = arith.constant 0 : index
    %11 = vector.load %arg4[%c0_8, %c1, %c0_9, %c0_10] : memref<3x3x4x8xbf16, #tpu.memory_space<vmem>>, vector<1x1x4x8xbf16>
    %12 = vector.shape_cast %11 : vector<1x1x4x8xbf16> to vector<4x8xbf16>
    %cst_11 = arith.constant dense<0.000000e+00> : vector<256x8xf32>
    %13 = tpu.matmul %10, %12, %cst_11 {dimension_numbers = #tpu.dot_dimension_numbers<[1], [0], [0], [1], [0, 0, 1, 1], [], []>} : vector<256x4xbf16>, vector<4x8xbf16>, vector<256x8xf32> -> vector<256x8xf32>
    %14 = arith.addf %8, %13 : vector<256x8xf32>
    %15 = vector.extract_strided_slice %2 {offsets = [0, 2, 0], sizes = [16, 16, 4], strides = [1, 1, 1]} : vector<18x18x4xbf16> to vector<16x16x4xbf16>
    %16 = vector.shape_cast %15 : vector<16x16x4xbf16> to vector<256x4xbf16>
    %c0_12 = arith.constant 0 : index
    %c2 = arith.constant 2 : index
    %c0_13 = arith.constant 0 : index
    %c0_14 = arith.constant 0 : index
    %17 = vector.load %arg4[%c0_12, %c2, %c0_13, %c0_14] : memref<3x3x4x8xbf16, #tpu.memory_space<vmem>>, vector<1x1x4x8xbf16>
    %18 = vector.shape_cast %17 : vector<1x1x4x8xbf16> to vector<4x8xbf16>
    %cst_15 = arith.constant dense<0.000000e+00> : vector<256x8xf32>
    %19 = tpu.matmul %16, %18, %cst_15 {dimension_numbers = #tpu.dot_dimension_numbers<[1], [0], [0], [1], [0, 0, 1, 1], [], []>} : vector<256x4xbf16>, vector<4x8xbf16>, vector<256x8xf32> -> vector<256x8xf32>
    %20 = arith.addf %14, %19 : vector<256x8xf32>
    %21 = vector.extract_strided_slice %2 {offsets = [1, 0, 0], sizes = [16, 16, 4], strides = [1, 1, 1]} : vector<18x18x4xbf16> to vector<16x16x4xbf16>
    %22 = vector.shape_cast %21 : vector<16x16x4xbf16> to vector<256x4xbf16>
    %c1_16 = arith.constant 1 : index
    %c0_17 = arith.constant 0 : index
    %c0_18 = arith.constant 0 : index
    %c0_19 = arith.constant 0 : index
    %23 = vector.load %arg4[%c1_16, %c0_17, %c0_18, %c0_19] : memref<3x3x4x8xbf16, #tpu.memory_space<vmem>>, vector<1x1x4x8xbf16>
    %24 = vector.shape_cast %23 : vector<1x1x4x8xbf16> to vector<4x8xbf16>
    %cst_20 = arith.constant dense<0.000000e+00> : vector<256x8xf32>
    %25 = tpu.matmul %22, %24, %cst_20 {dimension_numbers = #tpu.dot_dimension_numbers<[1], [0], [0], [1], [0, 0, 1, 1], [], []>} : vector<256x4xbf16>, vector<4x8xbf16>, vector<256x8xf32> -> vector<256x8xf32>
    %26 = arith.addf %20, %25 : vector<256x8xf32>
    %27 = vector.extract_strided_slice %2 {offsets = [1, 1, 0], sizes = [16, 16, 4], strides = [1, 1, 1]} : vector<18x18x4xbf16> to vector<16x16x4xbf16>
    %28 = vector.shape_cast %27 : vector<16x16x4xbf16> to vector<256x4xbf16>
    %c1_21 = arith.constant 1 : index
    %c1_22 = arith.constant 1 : index
    %c0_23 = arith.constant 0 : index
    %c0_24 = arith.constant 0 : index
    %29 = vector.load %arg4[%c1_21, %c1_22, %c0_23, %c0_24] : memref<3x3x4x8xbf16, #tpu.memory_space<vmem>>, vector<1x1x4x8xbf16>
    %30 = vector.shape_cast %29 : vector<1x1x4x8xbf16> to vector<4x8xbf16>
    %cst_25 = arith.constant dense<0.000000e+00> : vector<256x8xf32>
    %31 = tpu.matmul %28, %30, %cst_25 {dimension_numbers = #tpu.dot_dimension_numbers<[1], [0], [0], [1], [0, 0, 1, 1], [], []>} : vector<256x4xbf16>, vector<4x8xbf16>, vector<256x8xf32> -> vector<256x8xf32>
    %32 = arith.addf %26, %31 : vector<256x8xf32>
    %33 = vector.extract_strided_slice %2 {offsets = [1, 2, 0], sizes = [16, 16, 4], strides = [1, 1, 1]} : vector<18x18x4xbf16> to vector<16x16x4xbf16>
    %34 = vector.shape_cast %33 : vector<16x16x4xbf16> to vector<256x4xbf16>
    %c1_26 = arith.constant 1 : index
    %c2_27 = arith.constant 2 : index
    %c0_28 = arith.constant 0 : index
    %c0_29 = arith.constant 0 : index
    %35 = vector.load %arg4[%c1_26, %c2_27, %c0_28, %c0_29] : memref<3x3x4x8xbf16, #tpu.memory_space<vmem>>, vector<1x1x4x8xbf16>
    %36 = vector.shape_cast %35 : vector<1x1x4x8xbf16> to vector<4x8xbf16>
    %cst_30 = arith.constant dense<0.000000e+00> : vector<256x8xf32>
    %37 = tpu.matmul %34, %36, %cst_30 {dimension_numbers = #tpu.dot_dimension_numbers<[1], [0], [0], [1], [0, 0, 1, 1], [], []>} : vector<256x4xbf16>, vector<4x8xbf16>, vector<256x8xf32> -> vector<256x8xf32>
    %38 = arith.addf %32, %37 : vector<256x8xf32>
    %39 = vector.extract_strided_slice %2 {offsets = [2, 0, 0], sizes = [16, 16, 4], strides = [1, 1, 1]} : vector<18x18x4xbf16> to vector<16x16x4xbf16>
    %40 = vector.shape_cast %39 : vector<16x16x4xbf16> to vector<256x4xbf16>
    %c2_31 = arith.constant 2 : index
    %c0_32 = arith.constant 0 : index
    %c0_33 = arith.constant 0 : index
    %c0_34 = arith.constant 0 : index
    %41 = vector.load %arg4[%c2_31, %c0_32, %c0_33, %c0_34] : memref<3x3x4x8xbf16, #tpu.memory_space<vmem>>, vector<1x1x4x8xbf16>
    %42 = vector.shape_cast %41 : vector<1x1x4x8xbf16> to vector<4x8xbf16>
    %cst_35 = arith.constant dense<0.000000e+00> : vector<256x8xf32>
    %43 = tpu.matmul %40, %42, %cst_35 {dimension_numbers = #tpu.dot_dimension_numbers<[1], [0], [0], [1], [0, 0, 1, 1], [], []>} : vector<256x4xbf16>, vector<4x8xbf16>, vector<256x8xf32> -> vector<256x8xf32>
    %44 = arith.addf %38, %43 : vector<256x8xf32>
    %45 = vector.extract_strided_slice %2 {offsets = [2, 1, 0], sizes = [16, 16, 4], strides = [1, 1, 1]} : vector<18x18x4xbf16> to vector<16x16x4xbf16>
    %46 = vector.shape_cast %45 : vector<16x16x4xbf16> to vector<256x4xbf16>
    %c2_36 = arith.constant 2 : index
    %c1_37 = arith.constant 1 : index
    %c0_38 = arith.constant 0 : index
    %c0_39 = arith.constant 0 : index
    %47 = vector.load %arg4[%c2_36, %c1_37, %c0_38, %c0_39] : memref<3x3x4x8xbf16, #tpu.memory_space<vmem>>, vector<1x1x4x8xbf16>
    %48 = vector.shape_cast %47 : vector<1x1x4x8xbf16> to vector<4x8xbf16>
    %cst_40 = arith.constant dense<0.000000e+00> : vector<256x8xf32>
    %49 = tpu.matmul %46, %48, %cst_40 {dimension_numbers = #tpu.dot_dimension_numbers<[1], [0], [0], [1], [0, 0, 1, 1], [], []>} : vector<256x4xbf16>, vector<4x8xbf16>, vector<256x8xf32> -> vector<256x8xf32>
    %50 = arith.addf %44, %49 : vector<256x8xf32>
    %51 = vector.extract_strided_slice %2 {offsets = [2, 2, 0], sizes = [16, 16, 4], strides = [1, 1, 1]} : vector<18x18x4xbf16> to vector<16x16x4xbf16>
    %52 = vector.shape_cast %51 : vector<16x16x4xbf16> to vector<256x4xbf16>
    %c2_41 = arith.constant 2 : index
    %c2_42 = arith.constant 2 : index
    %c0_43 = arith.constant 0 : index
    %c0_44 = arith.constant 0 : index
    %53 = vector.load %arg4[%c2_41, %c2_42, %c0_43, %c0_44] : memref<3x3x4x8xbf16, #tpu.memory_space<vmem>>, vector<1x1x4x8xbf16>
    %54 = vector.shape_cast %53 : vector<1x1x4x8xbf16> to vector<4x8xbf16>
    %cst_45 = arith.constant dense<0.000000e+00> : vector<256x8xf32>
    %55 = tpu.matmul %52, %54, %cst_45 {dimension_numbers = #tpu.dot_dimension_numbers<[1], [0], [0], [1], [0, 0, 1, 1], [], []>} : vector<256x4xbf16>, vector<4x8xbf16>, vector<256x8xf32> -> vector<256x8xf32>
    %56 = arith.addf %50, %55 : vector<256x8xf32>
    %c0_46 = arith.constant 0 : index
    %c0_47 = arith.constant 0 : index
    %c0_48 = arith.constant 0 : index
    %c0_49 = arith.constant 0 : index
    %57 = vector.load %arg3[%c0_46, %c0_47, %c0_48, %c0_49] : memref<1x18x18x4xbf16, #tpu.memory_space<vmem>>, vector<1x18x18x4xbf16>
    %58 = vector.shape_cast %57 : vector<1x18x18x4xbf16> to vector<18x18x4xbf16>
    %59 = vector.extract_strided_slice %58 {offsets = [0, 0, 0], sizes = [16, 16, 4], strides = [1, 1, 1]} : vector<18x18x4xbf16> to vector<16x16x4xbf16>
    %60 = vector.shape_cast %59 : vector<16x16x4xbf16> to vector<256x4xbf16>
    %c0_50 = arith.constant 0 : index
    %c0_51 = arith.constant 0 : index
    %c0_52 = arith.constant 0 : index
    %c0_53 = arith.constant 0 : index
    %61 = vector.load %arg5[%c0_50, %c0_51, %c0_52, %c0_53] : memref<3x3x4x8xbf16, #tpu.memory_space<vmem>>, vector<1x1x4x8xbf16>
    %62 = vector.shape_cast %61 : vector<1x1x4x8xbf16> to vector<4x8xbf16>
    %cst_54 = arith.constant dense<0.000000e+00> : vector<256x8xf32>
    %63 = tpu.matmul %60, %62, %cst_54 {dimension_numbers = #tpu.dot_dimension_numbers<[1], [0], [0], [1], [0, 0, 1, 1], [], []>} : vector<256x4xbf16>, vector<4x8xbf16>, vector<256x8xf32> -> vector<256x8xf32>
    %64 = arith.addf %56, %63 : vector<256x8xf32>
    %65 = vector.extract_strided_slice %58 {offsets = [0, 1, 0], sizes = [16, 16, 4], strides = [1, 1, 1]} : vector<18x18x4xbf16> to vector<16x16x4xbf16>
    %66 = vector.shape_cast %65 : vector<16x16x4xbf16> to vector<256x4xbf16>
    %c0_55 = arith.constant 0 : index
    %c1_56 = arith.constant 1 : index
    %c0_57 = arith.constant 0 : index
    %c0_58 = arith.constant 0 : index
    %67 = vector.load %arg5[%c0_55, %c1_56, %c0_57, %c0_58] : memref<3x3x4x8xbf16, #tpu.memory_space<vmem>>, vector<1x1x4x8xbf16>
    %68 = vector.shape_cast %67 : vector<1x1x4x8xbf16> to vector<4x8xbf16>
    %cst_59 = arith.constant dense<0.000000e+00> : vector<256x8xf32>
    %69 = tpu.matmul %66, %68, %cst_59 {dimension_numbers = #tpu.dot_dimension_numbers<[1], [0], [0], [1], [0, 0, 1, 1], [], []>} : vector<256x4xbf16>, vector<4x8xbf16>, vector<256x8xf32> -> vector<256x8xf32>
    %70 = arith.addf %64, %69 : vector<256x8xf32>
    %71 = vector.extract_strided_slice %58 {offsets = [0, 2, 0], sizes = [16, 16, 4], strides = [1, 1, 1]} : vector<18x18x4xbf16> to vector<16x16x4xbf16>
    %72 = vector.shape_cast %71 : vector<16x16x4xbf16> to vector<256x4xbf16>
    %c0_60 = arith.constant 0 : index
    %c2_61 = arith.constant 2 : index
    %c0_62 = arith.constant 0 : index
    %c0_63 = arith.constant 0 : index
    %73 = vector.load %arg5[%c0_60, %c2_61, %c0_62, %c0_63] : memref<3x3x4x8xbf16, #tpu.memory_space<vmem>>, vector<1x1x4x8xbf16>
    %74 = vector.shape_cast %73 : vector<1x1x4x8xbf16> to vector<4x8xbf16>
    %cst_64 = arith.constant dense<0.000000e+00> : vector<256x8xf32>
    %75 = tpu.matmul %72, %74, %cst_64 {dimension_numbers = #tpu.dot_dimension_numbers<[1], [0], [0], [1], [0, 0, 1, 1], [], []>} : vector<256x4xbf16>, vector<4x8xbf16>, vector<256x8xf32> -> vector<256x8xf32>
    %76 = arith.addf %70, %75 : vector<256x8xf32>
    %77 = vector.extract_strided_slice %58 {offsets = [1, 0, 0], sizes = [16, 16, 4], strides = [1, 1, 1]} : vector<18x18x4xbf16> to vector<16x16x4xbf16>
    %78 = vector.shape_cast %77 : vector<16x16x4xbf16> to vector<256x4xbf16>
    %c1_65 = arith.constant 1 : index
    %c0_66 = arith.constant 0 : index
    %c0_67 = arith.constant 0 : index
    %c0_68 = arith.constant 0 : index
    %79 = vector.load %arg5[%c1_65, %c0_66, %c0_67, %c0_68] : memref<3x3x4x8xbf16, #tpu.memory_space<vmem>>, vector<1x1x4x8xbf16>
    %80 = vector.shape_cast %79 : vector<1x1x4x8xbf16> to vector<4x8xbf16>
    %cst_69 = arith.constant dense<0.000000e+00> : vector<256x8xf32>
    %81 = tpu.matmul %78, %80, %cst_69 {dimension_numbers = #tpu.dot_dimension_numbers<[1], [0], [0], [1], [0, 0, 1, 1], [], []>} : vector<256x4xbf16>, vector<4x8xbf16>, vector<256x8xf32> -> vector<256x8xf32>
    %82 = arith.addf %76, %81 : vector<256x8xf32>
    %83 = vector.extract_strided_slice %58 {offsets = [1, 1, 0], sizes = [16, 16, 4], strides = [1, 1, 1]} : vector<18x18x4xbf16> to vector<16x16x4xbf16>
    %84 = vector.shape_cast %83 : vector<16x16x4xbf16> to vector<256x4xbf16>
    %c1_70 = arith.constant 1 : index
    %c1_71 = arith.constant 1 : index
    %c0_72 = arith.constant 0 : index
    %c0_73 = arith.constant 0 : index
    %85 = vector.load %arg5[%c1_70, %c1_71, %c0_72, %c0_73] : memref<3x3x4x8xbf16, #tpu.memory_space<vmem>>, vector<1x1x4x8xbf16>
    %86 = vector.shape_cast %85 : vector<1x1x4x8xbf16> to vector<4x8xbf16>
    %cst_74 = arith.constant dense<0.000000e+00> : vector<256x8xf32>
    %87 = tpu.matmul %84, %86, %cst_74 {dimension_numbers = #tpu.dot_dimension_numbers<[1], [0], [0], [1], [0, 0, 1, 1], [], []>} : vector<256x4xbf16>, vector<4x8xbf16>, vector<256x8xf32> -> vector<256x8xf32>
    %88 = arith.addf %82, %87 : vector<256x8xf32>
    %89 = vector.extract_strided_slice %58 {offsets = [1, 2, 0], sizes = [16, 16, 4], strides = [1, 1, 1]} : vector<18x18x4xbf16> to vector<16x16x4xbf16>
    %90 = vector.shape_cast %89 : vector<16x16x4xbf16> to vector<256x4xbf16>
    %c1_75 = arith.constant 1 : index
    %c2_76 = arith.constant 2 : index
    %c0_77 = arith.constant 0 : index
    %c0_78 = arith.constant 0 : index
    %91 = vector.load %arg5[%c1_75, %c2_76, %c0_77, %c0_78] : memref<3x3x4x8xbf16, #tpu.memory_space<vmem>>, vector<1x1x4x8xbf16>
    %92 = vector.shape_cast %91 : vector<1x1x4x8xbf16> to vector<4x8xbf16>
    %cst_79 = arith.constant dense<0.000000e+00> : vector<256x8xf32>
    %93 = tpu.matmul %90, %92, %cst_79 {dimension_numbers = #tpu.dot_dimension_numbers<[1], [0], [0], [1], [0, 0, 1, 1], [], []>} : vector<256x4xbf16>, vector<4x8xbf16>, vector<256x8xf32> -> vector<256x8xf32>
    %94 = arith.addf %88, %93 : vector<256x8xf32>
    %95 = vector.extract_strided_slice %58 {offsets = [2, 0, 0], sizes = [16, 16, 4], strides = [1, 1, 1]} : vector<18x18x4xbf16> to vector<16x16x4xbf16>
    %96 = vector.shape_cast %95 : vector<16x16x4xbf16> to vector<256x4xbf16>
    %c2_80 = arith.constant 2 : index
    %c0_81 = arith.constant 0 : index
    %c0_82 = arith.constant 0 : index
    %c0_83 = arith.constant 0 : index
    %97 = vector.load %arg5[%c2_80, %c0_81, %c0_82, %c0_83] : memref<3x3x4x8xbf16, #tpu.memory_space<vmem>>, vector<1x1x4x8xbf16>
    %98 = vector.shape_cast %97 : vector<1x1x4x8xbf16> to vector<4x8xbf16>
    %cst_84 = arith.constant dense<0.000000e+00> : vector<256x8xf32>
    %99 = tpu.matmul %96, %98, %cst_84 {dimension_numbers = #tpu.dot_dimension_numbers<[1], [0], [0], [1], [0, 0, 1, 1], [], []>} : vector<256x4xbf16>, vector<4x8xbf16>, vector<256x8xf32> -> vector<256x8xf32>
    %100 = arith.addf %94, %99 : vector<256x8xf32>
    %101 = vector.extract_strided_slice %58 {offsets = [2, 1, 0], sizes = [16, 16, 4], strides = [1, 1, 1]} : vector<18x18x4xbf16> to vector<16x16x4xbf16>
    %102 = vector.shape_cast %101 : vector<16x16x4xbf16> to vector<256x4xbf16>
    %c2_85 = arith.constant 2 : index
    %c1_86 = arith.constant 1 : index
    %c0_87 = arith.constant 0 : index
    %c0_88 = arith.constant 0 : index
    %103 = vector.load %arg5[%c2_85, %c1_86, %c0_87, %c0_88] : memref<3x3x4x8xbf16, #tpu.memory_space<vmem>>, vector<1x1x4x8xbf16>
    %104 = vector.shape_cast %103 : vector<1x1x4x8xbf16> to vector<4x8xbf16>
    %cst_89 = arith.constant dense<0.000000e+00> : vector<256x8xf32>
    %105 = tpu.matmul %102, %104, %cst_89 {dimension_numbers = #tpu.dot_dimension_numbers<[1], [0], [0], [1], [0, 0, 1, 1], [], []>} : vector<256x4xbf16>, vector<4x8xbf16>, vector<256x8xf32> -> vector<256x8xf32>
    %106 = arith.addf %100, %105 : vector<256x8xf32>
    %107 = vector.extract_strided_slice %58 {offsets = [2, 2, 0], sizes = [16, 16, 4], strides = [1, 1, 1]} : vector<18x18x4xbf16> to vector<16x16x4xbf16>
    %108 = vector.shape_cast %107 : vector<16x16x4xbf16> to vector<256x4xbf16>
    %c2_90 = arith.constant 2 : index
    %c2_91 = arith.constant 2 : index
    %c0_92 = arith.constant 0 : index
    %c0_93 = arith.constant 0 : index
    %109 = vector.load %arg5[%c2_90, %c2_91, %c0_92, %c0_93] : memref<3x3x4x8xbf16, #tpu.memory_space<vmem>>, vector<1x1x4x8xbf16>
    %110 = vector.shape_cast %109 : vector<1x1x4x8xbf16> to vector<4x8xbf16>
    %cst_94 = arith.constant dense<0.000000e+00> : vector<256x8xf32>
    %111 = tpu.matmul %108, %110, %cst_94 {dimension_numbers = #tpu.dot_dimension_numbers<[1], [0], [0], [1], [0, 0, 1, 1], [], []>} : vector<256x4xbf16>, vector<4x8xbf16>, vector<256x8xf32> -> vector<256x8xf32>
    %112 = arith.addf %106, %111 : vector<256x8xf32>
    %113 = vector.shape_cast %112 : vector<256x8xf32> to vector<1x16x16x8xf32>
    %114 = arith.truncf %113 : vector<1x16x16x8xf32> to vector<1x16x16x8xbf16>
    %c0_95 = arith.constant 0 : index
    %c0_96 = arith.constant 0 : index
    %c0_97 = arith.constant 0 : index
    %c0_98 = arith.constant 0 : index
    %115 = vector.load %arg6[%c0_95, %c0_96, %c0_97, %c0_98] : memref<1x16x16x8xbf16, #tpu.memory_space<vmem>>, vector<1x16x16x8xbf16>
    tpu.vector_store %arg6[%c0_95, %c0_96, %c0_97, %c0_98], %114 {strides = array<i32>} : memref<1x16x16x8xbf16, #tpu.memory_space<vmem>>, vector<1x16x16x8xbf16>,
    %cst_99 = arith.constant dense<0.000000e+00> : vector<8xf32>
    %116 = vector.multi_reduction <add>, %112, %cst_99 [0] : vector<256x8xf32> to vector<8xf32>
    %117 = vector.shape_cast %116 : vector<8xf32> to vector<1x8xf32>
    %118 = arith.mulf %112, %112 : vector<256x8xf32>
    %cst_100 = arith.constant dense<0.000000e+00> : vector<8xf32>
    %119 = vector.multi_reduction <add>, %118, %cst_100 [0] : vector<256x8xf32> to vector<8xf32>
    %120 = vector.shape_cast %119 : vector<8xf32> to vector<1x8xf32>
    %121 = tpu.concatenate %117, %120 in 0 : vector<1x8xf32>, vector<1x8xf32> -> vector<2x8xf32>
    %122 = vector.shape_cast %121 : vector<2x8xf32> to vector<1x1x2x8xf32>
    %c0_101 = arith.constant 0 : index
    %c0_102 = arith.constant 0 : index
    %c0_103 = arith.constant 0 : index
    %c0_104 = arith.constant 0 : index
    %123 = vector.load %arg7[%c0_101, %c0_102, %c0_103, %c0_104] : memref<1x1x2x8xf32, #tpu.memory_space<vmem>>, vector<1x1x2x8xf32>
    tpu.vector_store %arg7[%c0_101, %c0_102, %c0_103, %c0_104], %122 {strides = array<i32>} : memref<1x1x2x8xf32, #tpu.memory_space<vmem>>, vector<1x1x2x8xf32>,
    return
  }
  func.func @transform_0(%arg0: i32, %arg1: i32) -> (i32, i32, i32, i32) {
    %c0_i32 = arith.constant 0 : i32
    %c0_i32_0 = arith.constant 0 : i32
    %c0_i32_1 = arith.constant 0 : i32
    %c0_i32_2 = arith.constant 0 : i32
    return %arg0, %c0_i32, %c0_i32_0, %c0_i32_1 : i32, i32, i32, i32
  }
  func.func @transform_1(%arg0: i32, %arg1: i32) -> (i32, i32, i32, i32) {
    %c0_i32 = arith.constant 0 : i32
    %c0_i32_0 = arith.constant 0 : i32
    %c0_i32_1 = arith.constant 0 : i32
    %c0_i32_2 = arith.constant 0 : i32
    return %arg0, %c0_i32, %c0_i32_0, %c0_i32_1 : i32, i32, i32, i32
  }
  func.func @transform_2(%arg0: i32, %arg1: i32) -> (i32, i32, i32, i32) {
    %c0_i32 = arith.constant 0 : i32
    %c0_i32_0 = arith.constant 0 : i32
    %c0_i32_1 = arith.constant 0 : i32
    %c0_i32_2 = arith.constant 0 : i32
    %c0_i32_3 = arith.constant 0 : i32
    return %c0_i32, %c0_i32_0, %c0_i32_1, %c0_i32_2 : i32, i32, i32, i32
  }
  func.func @transform_3(%arg0: i32, %arg1: i32) -> (i32, i32, i32, i32) {
    %c0_i32 = arith.constant 0 : i32
    %c0_i32_0 = arith.constant 0 : i32
    %c0_i32_1 = arith.constant 0 : i32
    %c0_i32_2 = arith.constant 0 : i32
    %c0_i32_3 = arith.constant 0 : i32
    return %c0_i32, %c0_i32_0, %c0_i32_1, %c0_i32_2 : i32, i32, i32, i32
  }
  func.func @transform_4(%arg0: i32, %arg1: i32) -> (i32, i32, i32, i32) {
    %c0_i32 = arith.constant 0 : i32
    %c0_i32_0 = arith.constant 0 : i32
    %c0_i32_1 = arith.constant 0 : i32
    return %arg0, %arg1, %c0_i32, %c0_i32_0 : i32, i32, i32, i32
  }
  func.func @transform_5(%arg0: i32, %arg1: i32) -> (i32, i32, i32, i32) {
    %c0_i32 = arith.constant 0 : i32
    %c0_i32_0 = arith.constant 0 : i32
    %c0_i32_1 = arith.constant 0 : i32
    return %arg0, %arg1, %c0_i32, %c0_i32_0 : i32, i32, i32, i32
  }
}

module attributes {stable_mosaic.version = 11 : i64} {
  func.func @_bn_relu_kernel(%arg0: i32, %arg1: i32, %arg2: memref<1x16x16x8xbf16, #tpu.memory_space<vmem>>, %arg3: memref<1x8xf32, #tpu.memory_space<vmem>>, %arg4: memref<1x8xf32, #tpu.memory_space<vmem>>, %arg5: memref<1x16x16x8xf32, #tpu.memory_space<vmem>>) attributes {dimension_semantics = [#tpu.dimension_semantics<parallel>, #tpu.dimension_semantics<parallel>], iteration_bounds = array<i64: 2, 1>, scalar_prefetch = 0 : i64, scratch_operands = 0 : i64, tpu.core_type = #tpu.core_type<tc>, window_params = [{transform_indices = @transform_0, window_bounds = array<i64: 1, 16, 16, 8>}, {pipeline_mode = #tpu.pipeline_mode<synchronous>, transform_indices = @transform_1, window_bounds = array<i64: 1, 8>}, {pipeline_mode = #tpu.pipeline_mode<synchronous>, transform_indices = @transform_2, window_bounds = array<i64: 1, 8>}, {transform_indices = @transform_3, window_bounds = array<i64: 1, 16, 16, 8>}]} {
    %c0 = arith.constant 0 : index
    %c0_0 = arith.constant 0 : index
    %0 = vector.load %arg3[%c0, %c0_0] : memref<1x8xf32, #tpu.memory_space<vmem>>, vector<1x8xf32>
    %1 = vector.shape_cast %0 : vector<1x8xf32> to vector<1x1x1x8xf32>
    %c0_1 = arith.constant 0 : index
    %c0_2 = arith.constant 0 : index
    %2 = vector.load %arg4[%c0_1, %c0_2] : memref<1x8xf32, #tpu.memory_space<vmem>>, vector<1x8xf32>
    %3 = vector.shape_cast %2 : vector<1x8xf32> to vector<1x1x1x8xf32>
    %c0_3 = arith.constant 0 : index
    %c0_4 = arith.constant 0 : index
    %c0_5 = arith.constant 0 : index
    %c0_6 = arith.constant 0 : index
    %4 = vector.load %arg2[%c0_3, %c0_4, %c0_5, %c0_6] : memref<1x16x16x8xbf16, #tpu.memory_space<vmem>>, vector<1x16x16x8xbf16>
    %5 = arith.extf %4 : vector<1x16x16x8xbf16> to vector<1x16x16x8xf32>
    %6 = vector.broadcast %1 : vector<1x1x1x8xf32> to vector<1x16x16x8xf32>
    %7 = arith.mulf %5, %6 : vector<1x16x16x8xf32>
    %8 = vector.broadcast %3 : vector<1x1x1x8xf32> to vector<1x16x16x8xf32>
    %9 = arith.addf %7, %8 : vector<1x16x16x8xf32>
    %cst = arith.constant 0.000000e+00 : f32
    %10 = vector.broadcast %cst : f32 to vector<1x16x16x8xf32>
    %11 = arith.maximumf %9, %10 : vector<1x16x16x8xf32>
    %c0_7 = arith.constant 0 : index
    %c0_8 = arith.constant 0 : index
    %c0_9 = arith.constant 0 : index
    %c0_10 = arith.constant 0 : index
    %12 = vector.load %arg5[%c0_7, %c0_8, %c0_9, %c0_10] : memref<1x16x16x8xf32, #tpu.memory_space<vmem>>, vector<1x16x16x8xf32>
    tpu.vector_store %arg5[%c0_7, %c0_8, %c0_9, %c0_10], %11 {strides = array<i32>} : memref<1x16x16x8xf32, #tpu.memory_space<vmem>>, vector<1x16x16x8xf32>,
    return
  }
  func.func @transform_0(%arg0: i32, %arg1: i32) -> (i32, i32, i32, i32) {
    %c0_i32 = arith.constant 0 : i32
    %c0_i32_0 = arith.constant 0 : i32
    %c0_i32_1 = arith.constant 0 : i32
    return %arg0, %arg1, %c0_i32, %c0_i32_0 : i32, i32, i32, i32
  }
  func.func @transform_1(%arg0: i32, %arg1: i32) -> (i32, i32) {
    %c0_i32 = arith.constant 0 : i32
    %c0_i32_0 = arith.constant 0 : i32
    %c0_i32_1 = arith.constant 0 : i32
    return %c0_i32, %c0_i32_0 : i32, i32
  }
  func.func @transform_2(%arg0: i32, %arg1: i32) -> (i32, i32) {
    %c0_i32 = arith.constant 0 : i32
    %c0_i32_0 = arith.constant 0 : i32
    %c0_i32_1 = arith.constant 0 : i32
    return %c0_i32, %c0_i32_0 : i32, i32
  }
  func.func @transform_3(%arg0: i32, %arg1: i32) -> (i32, i32, i32, i32) {
    %c0_i32 = arith.constant 0 : i32
    %c0_i32_0 = arith.constant 0 : i32
    %c0_i32_1 = arith.constant 0 : i32
    return %arg0, %arg1, %c0_i32, %c0_i32_0 : i32, i32, i32, i32
  }
}

</mosaic_0001>

<llo_original>
// kernel: upsample_block_forward.5
$region0: #{upsample_block_forward.5}
  #allocation0 [shape = 'u32[]', space=smem, size = 0x4, offset = 0x4, fixed_abs, tag = 'smem constant byte address 0x4 - core index']
  #allocation1 [shape = 'u32[144,128]{1,0:T(1,128)}', space=vmem, size = 0x12000, scoped, tag = 'internal scratch']
  %s0 = inlined_call_operand.vmem [shape: bf16[2,16,16,8], index: 0, kind: input, shape index: {}]
  %s1 = inlined_call_operand.vmem [shape: f32[1,8], index: 1, kind: input, shape index: {}]
  %s2 = inlined_call_operand.vmem [shape: f32[1,8], index: 2, kind: input, shape index: {}]
  %s3 = inlined_call_operand.vmem [shape: f32[2,16,16,8], index: 3, kind: output, shape index: {}]
  %s4 = sld [smem:[#allocation0]]
  $region45: #{upsample_block_forward.5} parent=0
    _
  %s6 = ssub.s32 1, %s4
  %s7 = scalar_select 0, %s6, %s4
  loop: start=0, step=1, limit=4
  $region2: #{upsample_block_forward.5} parent=0 // loop_pre_header
    _
  $region3: #{upsample_block_forward.5} parent=0 // loop_header
    %s9 = sphi 0, %s13
    %p10 = scmp.ge.s32.totalorder %s9, 4
    %s16 = sphi 0, %s28
    %s17 = sphi 0, %s24
    %s18 = sphi 0, %s16
    %s19 = sphi 0, %s17
    %s20 = sphi 0, %s18
    %s21 = sphi 0, %s19
    %s33 = sphi 0, %s35
    %s36 = sphi 0, %s33
    %s37 = sphi 0, %s36
    %s53 = sphi 0, %s37
    %s57 = sphi 0, %s57
    %s59 = sphi 0, %s57
    %s60 = sphi 0, %s59
    %s74 = sphi 0, %s60
    %s78 = sphi 0, %s78
    %s80 = sphi 0, %s78
    %s81 = sphi 0, %s80
    %s95 = sphi 0, %s81
    %s103 = sphi 0, %s105
    %s106 = sphi 0, %s103
    %s107 = sphi 0, %s106
    %s123 = sphi 0, %s107
  $region4: #{upsample_block_forward.5} parent=0 // loop_header_branch
    %12 = sbr.rel (%p10) target = $region8
  $region5: #{upsample_block_forward.5} parent=0 // loop_body
    %s14 = ssub.s32 %s9, 1
    %s15 = ssub.s32 %s9, 2
    %s22 = sadd.s32 1, %s17
    %p23 = scmp.ge.s32.totalorder %s22, 1
    %s24 = scalar_select %p23, 0, %s22
    %s25 = sadd.s32 1, %s16
    %s26 = scalar_select %p23, %s25, %s16
    %p27 = scmp.ge.s32.totalorder %s26, 2
    %s28 = scalar_select %p27, 0, %s26
    %s29 = ssub.s32 %s16, %s28
    %s30 = ssub.s32 %s17, %s24
    %s31 = sor.u32 %s29, %s30
    %p32 = scmp.eq.s32.totalorder %s31, 0
    %s34 = sadd.s32 %s33, 1
    %s35 = scalar_select %p32, %s33, %s34
    %p38 = pneg %p32
    %p39 = scmp.eq.s32.totalorder %s9, 1
    %p40 = por %p38, %p39
    %p41 = scmp.ne.s32.totalorder %s33, %s36
    %p42 = scmp.eq.s32.totalorder %s9, 0
    %p43 = por %p41, %p42
    %p44 = scmp.ne.s32.totalorder %s33, %s36
    %p45 = scmp.eq.s32.totalorder %s14, 1
    %p46 = por %p44, %p45
    %p47 = scmp.ne.s32.totalorder %s36, %s37
    %p48 = scmp.eq.s32.totalorder %s14, 0
    %p49 = por %p47, %p48
    %p50 = scmp.ne.s32.totalorder %s36, %s37
    %p51 = scmp.eq.s32.totalorder %s15, 1
    %p52 = por %p50, %p51
    %p54 = scmp.ne.s32.totalorder %s37, %s53
    %p55 = scmp.eq.s32.totalorder %s15, 0
    %p56 = por %p54, %p55
    %s58 = sadd.s32 %s57, 1
    %p61 = scmp.eq.s32.totalorder %s9, 1
    %p62 = scmp.ne.s32.totalorder %s57, %s59
    %p63 = scmp.eq.s32.totalorder %s9, 0
    %p64 = por %p62, %p63
    %p65 = scmp.ne.s32.totalorder %s57, %s59
    %p66 = scmp.eq.s32.totalorder %s14, 1
    %p67 = por %p65, %p66
    %p68 = scmp.ne.s32.totalorder %s59, %s60
    %p69 = scmp.eq.s32.totalorder %s14, 0
    %p70 = por %p68, %p69
    %p71 = scmp.ne.s32.totalorder %s59, %s60
    %p72 = scmp.eq.s32.totalorder %s15, 1
    %p73 = por %p71, %p72
    %p75 = scmp.ne.s32.totalorder %s60, %s74
    %p76 = scmp.eq.s32.totalorder %s15, 0
    %p77 = por %p75, %p76
    %s79 = sadd.s32 %s78, 1
    %p82 = scmp.eq.s32.totalorder %s9, 1
    %p83 = scmp.ne.s32.totalorder %s78, %s80
    %p84 = scmp.eq.s32.totalorder %s9, 0
    %p85 = por %p83, %p84
    %p86 = scmp.ne.s32.totalorder %s78, %s80
    %p87 = scmp.eq.s32.totalorder %s14, 1
    %p88 = por %p86, %p87
    %p89 = scmp.ne.s32.totalorder %s80, %s81
    %p90 = scmp.eq.s32.totalorder %s14, 0
    %p91 = por %p89, %p90
    %p92 = scmp.ne.s32.totalorder %s80, %s81
    %p93 = scmp.eq.s32.totalorder %s15, 1
    %p94 = por %p92, %p93
    %p96 = scmp.ne.s32.totalorder %s81, %s95
    %p97 = scmp.eq.s32.totalorder %s15, 0
    %p98 = por %p96, %p97
    %s99 = ssub.s32 %s16, %s28
    %s100 = ssub.s32 %s17, %s24
    %s101 = sor.u32 %s99, %s100
    %p102 = scmp.eq.s32.totalorder %s101, 0
    %s104 = sadd.s32 %s103, 1
    %s105 = scalar_select %p102, %s103, %s104
    %p108 = pneg %p102
    %p109 = scmp.eq.s32.totalorder %s9, 1
    %p110 = por %p108, %p109
    %p111 = scmp.ne.s32.totalorder %s103, %s106
    %p112 = scmp.eq.s32.totalorder %s9, 0
    %p113 = por %p111, %p112
    %p114 = scmp.ne.s32.totalorder %s103, %s106
    %p115 = scmp.eq.s32.totalorder %s14, 1
    %p116 = por %p114, %p115
    %p117 = scmp.ne.s32.totalorder %s106, %s107
    %p118 = scmp.eq.s32.totalorder %s14, 0
    %p119 = por %p117, %p118
    %p120 = scmp.ne.s32.totalorder %s106, %s107
    %p121 = scmp.eq.s32.totalorder %s15, 1
    %p122 = por %p120, %p121
    %p124 = scmp.ne.s32.totalorder %s107, %s123
    %p125 = scmp.eq.s32.totalorder %s15, 0
    %p126 = por %p124, %p125
    %p127 = scmp.le.s32.totalorder 1, %s9
    %p128 = scmp.lt.s32.totalorder %s9, 3
    %p129 = pnand %p127, %p128
    %p130 = pneg %p129
    // Predicated region
    $region9: #{upsample_block_forward.5} parent=5 // pred_check
      _
    $region10: #{upsample_block_forward.5} parent=5 // pred_check_branch
      %132 = sbr.rel (%p129) target = $region12
    $region11: #{upsample_block_forward.5} parent=5 // pred_region
      %s133 = ssub.s32 %s9, 1
      // Predicated region
      $region13: #{upsample_block_forward.5} parent=11 // pred_check
        %p134 = pneg %p70
      $region14: #{upsample_block_forward.5} parent=11 // pred_check_branch
        %136 = sbr.rel (%p134) target = $region16
      $region15: #{upsample_block_forward.5} parent=11 // pred_region
        _
      $region16: #{upsample_block_forward.5} parent=11 // pred_fallthru
        _
      // Predicated region
      $region17: #{upsample_block_forward.5} parent=11 // pred_check
        %p137 = pneg %p91
      $region18: #{upsample_block_forward.5} parent=11 // pred_check_branch
        %139 = sbr.rel (%p137) target = $region20
      $region19: #{upsample_block_forward.5} parent=11 // pred_region
        _
      $region20: #{upsample_block_forward.5} parent=11 // pred_fallthru
        _
    $region12: #{upsample_block_forward.5} parent=5 // pred_fallthru
      _
    %p140 = scmp.lt.s32.totalorder %s9, 2
    // Predicated region
    $region21: #{upsample_block_forward.5} parent=5 // pred_check
      %p141 = pneg %p140
    $region22: #{upsample_block_forward.5} parent=5 // pred_check_branch
      %143 = sbr.rel (%p141) target = $region24
    $region23: #{upsample_block_forward.5} parent=5 // pred_region
      // Predicated region
      $region25: #{upsample_block_forward.5} parent=23 // pred_check
        %p144 = pneg %p43
      $region26: #{upsample_block_forward.5} parent=23 // pred_check_branch
        %146 = sbr.rel (%p144) target = $region28
      $region27: #{upsample_block_forward.5} parent=23 // pred_region
        %s147 = smul.u32 16, %s17
        %p148 = scmp.lt.s32.totalorder %s16, 1
        %s149 = scalar_select %p148, %s16, 1
        %p150 = scmp.lt.s32.totalorder %s147, 15
        %s151 = scalar_select %p150, %s147, 15
        %s152 = smul.addr %s151, 2
        %s153 = smul.addr %s149, 32
        %s154 = sadd.s32 %s152, %s153
        %s155 = smul.addr %s154, 4
        %s156 = scalar_lea.vmem %s0, %s155
        %s157 = smul.u32 16, %s17
      $region28: #{upsample_block_forward.5} parent=23 // pred_fallthru
        _
    $region24: #{upsample_block_forward.5} parent=5 // pred_fallthru
      _
    %p158 = scmp.le.s32.totalorder 1, %s9
    %p159 = scmp.lt.s32.totalorder %s9, 3
    %p160 = pnand %p158, %p159
    %p161 = pneg %p160
    // Predicated region
    $region29: #{upsample_block_forward.5} parent=5 // pred_check
      _
    $region30: #{upsample_block_forward.5} parent=5 // pred_check_branch
      %163 = sbr.rel (%p160) target = $region32
    $region31: #{upsample_block_forward.5} parent=5 // pred_region
      %s164 = ssub.s32 %s9, 1
      %s165 = smul.u32 16, %s19
      %p166 = scmp.lt.s32.totalorder %s18, 1
      %s167 = scalar_select %p166, %s18, 1
      %p168 = scmp.lt.s32.totalorder %s165, 15
      %s169 = scalar_select %p168, %s165, 15
      %s170 = smul.addr %s169, 2
      %s171 = smul.addr %s167, 32
      %s172 = sadd.s32 %s170, %s171
      %s173 = smul.addr %s172, 4
      %s174 = scalar_lea.vmem %s0, %s173
      %p175 = pneg %p49
      %p176 = pneg %p46
      %p177 = pneg %p70
      %p178 = pneg %p67
      %p179 = pneg %p91
      %p180 = pneg %p88
      %p181 = pneg %p119
      %p182 = pneg %p116
      %s183 = smul.u32 16, %s19
      %p184 = scmp.lt.s32.totalorder %s18, 1
      %s185 = scalar_select %p184, %s18, 1
      %p186 = scmp.lt.s32.totalorder %s183, 15
      %s187 = scalar_select %p186, %s183, 15
      %s188 = smul.addr %s187, 2
      %s189 = smul.addr %s185, 32
      %s190 = sadd.s32 %s188, %s189
      %s191 = smul.addr %s190, 8
      %s192 = scalar_lea.vmem %s3, %s191
      %s193 = smul.u32 16, %s19
      %p194 = scmp.lt.s32.totalorder %s18, 1
      %s195 = scalar_select %p194, %s18, 1
      %p196 = scmp.lt.s32.totalorder %s193, 15
      %s197 = scalar_select %p196, %s193, 15
      %s198 = smul.addr %s197, 2
      %s199 = smul.addr %s195, 32
      %s200 = sadd.s32 %s198, %s199
      %s201 = smul.addr %s200, 4
      %s202 = scalar_lea.vmem %s0, %s201
      %s203 = smul.u32 16, %s19
      %s204 = smul.u32 16, %s19
      %p205 = scmp.lt.s32.totalorder %s18, 1
      %s206 = scalar_select %p205, %s18, 1
      %p207 = scmp.lt.s32.totalorder %s204, 15
      %s208 = scalar_select %p207, %s204, 15
      %s209 = smul.addr %s208, 2
      %s210 = smul.addr %s206, 32
      %s211 = sadd.s32 %s209, %s210
      %s212 = smul.addr %s211, 8
      %s213 = scalar_lea.vmem %s3, %s212
      %s214 = smul.u32 16, %s19
      %v215 = vld [vmem:[%s1] sm:$0x1]
      %v216 = vld [vmem:[%s2] sm:$0x1]
      %v217 = vld [vmem:[%s202] sm:$0xf]
      %v218 = vld [vmem:[%s202 + $0x4] sm:$0xf]
      %v219 = vld [vmem:[%s202 + $0x8] sm:$0xf]
      %v220 = vld [vmem:[%s202 + $0xc] sm:$0xf]
      %v221 = vld [vmem:[%s202 + $0x10] sm:$0xf]
      %v222 = vld [vmem:[%s202 + $0x14] sm:$0xf]
      %v223 = vld [vmem:[%s202 + $0x18] sm:$0xf]
      %v224 = vld [vmem:[%s202 + $0x1c] sm:$0xf]
      %v225 = vld [vmem:[%s202 + $0x20] sm:$0xf]
      %v226 = vld [vmem:[%s202 + $0x24] sm:$0xf]
      %v227 = vld [vmem:[%s202 + $0x28] sm:$0xf]
      %v228 = vld [vmem:[%s202 + $0x2c] sm:$0xf]
      %v229 = vld [vmem:[%s202 + $0x30] sm:$0xf]
      %v230 = vld [vmem:[%s202 + $0x34] sm:$0xf]
      %v231 = vld [vmem:[%s202 + $0x38] sm:$0xf]
      %v232 = vld [vmem:[%s202 + $0x3c] sm:$0xf]
      %v233 = vld [vmem:[%s202 + $0x40] sm:$0xf]
      %v234 = vld [vmem:[%s202 + $0x44] sm:$0xf]
      %v235 = vld [vmem:[%s202 + $0x48] sm:$0xf]
      %v236 = vld [vmem:[%s202 + $0x4c] sm:$0xf]
      %v237 = vld [vmem:[%s202 + $0x50] sm:$0xf]
      %v238 = vld [vmem:[%s202 + $0x54] sm:$0xf]
      %v239 = vld [vmem:[%s202 + $0x58] sm:$0xf]
      %v240 = vld [vmem:[%s202 + $0x5c] sm:$0xf]
      %v241 = vld [vmem:[%s202 + $0x60] sm:$0xf]
      %v242 = vld [vmem:[%s202 + $0x64] sm:$0xf]
      %v243 = vld [vmem:[%s202 + $0x68] sm:$0xf]
      %v244 = vld [vmem:[%s202 + $0x6c] sm:$0xf]
      %v245 = vld [vmem:[%s202 + $0x70] sm:$0xf]
      %v246 = vld [vmem:[%s202 + $0x74] sm:$0xf]
      %v247 = vld [vmem:[%s202 + $0x78] sm:$0xf]
      %v248 = vld [vmem:[%s202 + $0x7c] sm:$0xf]
      %v249 = vunpack.c.l.bf16 %v217
      %v250 = vunpack.c.l.bf16 %v218
      %v251 = vunpack.c.l.bf16 %v219
      %v252 = vunpack.c.l.bf16 %v220
      %v253 = vunpack.c.l.bf16 %v221
      %v254 = vunpack.c.l.bf16 %v222
      %v255 = vunpack.c.l.bf16 %v223
      %v256 = vunpack.c.l.bf16 %v224
      %v257 = vunpack.c.l.bf16 %v225
      %v258 = vunpack.c.l.bf16 %v226
      %v259 = vunpack.c.l.bf16 %v227
      %v260 = vunpack.c.l.bf16 %v228
      %v261 = vunpack.c.l.bf16 %v229
      %v262 = vunpack.c.l.bf16 %v230
      %v263 = vunpack.c.l.bf16 %v231
      %v264 = vunpack.c.l.bf16 %v232
      %v265 = vunpack.c.l.bf16 %v233
      %v266 = vunpack.c.l.bf16 %v234
      %v267 = vunpack.c.l.bf16 %v235
      %v268 = vunpack.c.l.bf16 %v236
      %v269 = vunpack.c.l.bf16 %v237
      %v270 = vunpack.c.l.bf16 %v238
      %v271 = vunpack.c.l.bf16 %v239
      %v272 = vunpack.c.l.bf16 %v240
      %v273 = vunpack.c.l.bf16 %v241
      %v274 = vunpack.c.l.bf16 %v242
      %v275 = vunpack.c.l.bf16 %v243
      %v276 = vunpack.c.l.bf16 %v244
      %v277 = vunpack.c.l.bf16 %v245
      %v278 = vunpack.c.l.bf16 %v246
      %v279 = vunpack.c.l.bf16 %v247
      %v280 = vunpack.c.l.bf16 %v248
      %v282 = vlaneseq
      %v283 = vshrl.u32 %v282, 7
      %v284 = vsub.s32 0, %v283
      %v285 = vrot.slane %v215, %v284
      %v287 = vmul.f32 %v249, %v285
      %v288 = vmul.f32 %v250, %v285
      %v289 = vmul.f32 %v251, %v285
      %v290 = vmul.f32 %v252, %v285
      %v291 = vmul.f32 %v253, %v285
      %v292 = vmul.f32 %v254, %v285
      %v293 = vmul.f32 %v255, %v285
      %v294 = vmul.f32 %v256, %v285
      %v295 = vmul.f32 %v257, %v285
      %v296 = vmul.f32 %v258, %v285
      %v297 = vmul.f32 %v259, %v285
      %v298 = vmul.f32 %v260, %v285
      %v299 = vmul.f32 %v261, %v285
      %v300 = vmul.f32 %v262, %v285
      %v301 = vmul.f32 %v263, %v285
      %v302 = vmul.f32 %v264, %v285
      %v303 = vmul.f32 %v265, %v285
      %v304 = vmul.f32 %v266, %v285
      %v305 = vmul.f32 %v267, %v285
      %v306 = vmul.f32 %v268, %v285
      %v307 = vmul.f32 %v269, %v285
      %v308 = vmul.f32 %v270, %v285
      %v309 = vmul.f32 %v271, %v285
      %v310 = vmul.f32 %v272, %v285
      %v311 = vmul.f32 %v273, %v285
      %v312 = vmul.f32 %v274, %v285
      %v313 = vmul.f32 %v275, %v285
      %v314 = vmul.f32 %v276, %v285
      %v315 = vmul.f32 %v277, %v285
      %v316 = vmul.f32 %v278, %v285
      %v317 = vmul.f32 %v279, %v285
      %v318 = vmul.f32 %v280, %v285
      %v320 = vlaneseq
      %v321 = vshrl.u32 %v320, 7
      %v322 = vsub.s32 0, %v321
      %v323 = vrot.slane %v216, %v322
      %v325 = vadd.f32 %v287, %v323
      %v326 = vadd.f32 %v288, %v323
      %v327 = vadd.f32 %v289, %v323
      %v328 = vadd.f32 %v290, %v323
      %v329 = vadd.f32 %v291, %v323
      %v330 = vadd.f32 %v292, %v323
      %v331 = vadd.f32 %v293, %v323
      %v332 = vadd.f32 %v294, %v323
      %v333 = vadd.f32 %v295, %v323
      %v334 = vadd.f32 %v296, %v323
      %v335 = vadd.f32 %v297, %v323
      %v336 = vadd.f32 %v298, %v323
      %v337 = vadd.f32 %v299, %v323
      %v338 = vadd.f32 %v300, %v323
      %v339 = vadd.f32 %v301, %v323
      %v340 = vadd.f32 %v302, %v323
      %v341 = vadd.f32 %v303, %v323
      %v342 = vadd.f32 %v304, %v323
      %v343 = vadd.f32 %v305, %v323
      %v344 = vadd.f32 %v306, %v323
      %v345 = vadd.f32 %v307, %v323
      %v346 = vadd.f32 %v308, %v323
      %v347 = vadd.f32 %v309, %v323
      %v348 = vadd.f32 %v310, %v323
      %v349 = vadd.f32 %v311, %v323
      %v350 = vadd.f32 %v312, %v323
      %v351 = vadd.f32 %v313, %v323
      %v352 = vadd.f32 %v314, %v323
      %v353 = vadd.f32 %v315, %v323
      %v354 = vadd.f32 %v316, %v323
      %v355 = vadd.f32 %v317, %v323
      %v356 = vadd.f32 %v318, %v323
      %v357 = vmax.f32 %v325, 0.0
      %v358 = vmax.f32 %v326, 0.0
      %v359 = vmax.f32 %v327, 0.0
      %v360 = vmax.f32 %v328, 0.0
      %v361 = vmax.f32 %v329, 0.0
      %v362 = vmax.f32 %v330, 0.0
      %v363 = vmax.f32 %v331, 0.0
      %v364 = vmax.f32 %v332, 0.0
      %v365 = vmax.f32 %v333, 0.0
      %v366 = vmax.f32 %v334, 0.0
      %v367 = vmax.f32 %v335, 0.0
      %v368 = vmax.f32 %v336, 0.0
      %v369 = vmax.f32 %v337, 0.0
      %v370 = vmax.f32 %v338, 0.0
      %v371 = vmax.f32 %v339, 0.0
      %v372 = vmax.f32 %v340, 0.0
      %v373 = vmax.f32 %v341, 0.0
      %v374 = vmax.f32 %v342, 0.0
      %v375 = vmax.f32 %v343, 0.0
      %v376 = vmax.f32 %v344, 0.0
      %v377 = vmax.f32 %v345, 0.0
      %v378 = vmax.f32 %v346, 0.0
      %v379 = vmax.f32 %v347, 0.0
      %v380 = vmax.f32 %v348, 0.0
      %v381 = vmax.f32 %v349, 0.0
      %v382 = vmax.f32 %v350, 0.0
      %v383 = vmax.f32 %v351, 0.0
      %v384 = vmax.f32 %v352, 0.0
      %v385 = vmax.f32 %v353, 0.0
      %v386 = vmax.f32 %v354, 0.0
      %v387 = vmax.f32 %v355, 0.0
      %v388 = vmax.f32 %v356, 0.0
      %vm389 = vcmask 64512
      %390 = vst.msk [vmem:[%s213] sm:$0xff] %vm389, %v357
      %391 = vst.msk [vmem:[%s213 + $0x8] sm:$0xff] %vm389, %v358
      %392 = vst.msk [vmem:[%s213 + $0x10] sm:$0xff] %vm389, %v359
      %393 = vst.msk [vmem:[%s213 + $0x18] sm:$0xff] %vm389, %v360
      %394 = vst.msk [vmem:[%s213 + $0x20] sm:$0xff] %vm389, %v361
      %395 = vst.msk [vmem:[%s213 + $0x28] sm:$0xff] %vm389, %v362
      %396 = vst.msk [vmem:[%s213 + $0x30] sm:$0xff] %vm389, %v363
      %397 = vst.msk [vmem:[%s213 + $0x38] sm:$0xff] %vm389, %v364
      %398 = vst.msk [vmem:[%s213 + $0x40] sm:$0xff] %vm389, %v365
      %399 = vst.msk [vmem:[%s213 + $0x48] sm:$0xff] %vm389, %v366
      %400 = vst.msk [vmem:[%s213 + $0x50] sm:$0xff] %vm389, %v367
      %401 = vst.msk [vmem:[%s213 + $0x58] sm:$0xff] %vm389, %v368
      %402 = vst.msk [vmem:[%s213 + $0x60] sm:$0xff] %vm389, %v369
      %403 = vst.msk [vmem:[%s213 + $0x68] sm:$0xff] %vm389, %v370
      %404 = vst.msk [vmem:[%s213 + $0x70] sm:$0xff] %vm389, %v371
      %405 = vst.msk [vmem:[%s213 + $0x78] sm:$0xff] %vm389, %v372
      %406 = vst.msk [vmem:[%s213 + $0x80] sm:$0xff] %vm389, %v373
      %407 = vst.msk [vmem:[%s213 + $0x88] sm:$0xff] %vm389, %v374
      %408 = vst.msk [vmem:[%s213 + $0x90] sm:$0xff] %vm389, %v375
      %409 = vst.msk [vmem:[%s213 + $0x98] sm:$0xff] %vm389, %v376
      %410 = vst.msk [vmem:[%s213 + $0xa0] sm:$0xff] %vm389, %v377
      %411 = vst.msk [vmem:[%s213 + $0xa8] sm:$0xff] %vm389, %v378
      %412 = vst.msk [vmem:[%s213 + $0xb0] sm:$0xff] %vm389, %v379
      %413 = vst.msk [vmem:[%s213 + $0xb8] sm:$0xff] %vm389, %v380
      %414 = vst.msk [vmem:[%s213 + $0xc0] sm:$0xff] %vm389, %v381
      %415 = vst.msk [vmem:[%s213 + $0xc8] sm:$0xff] %vm389, %v382
      %416 = vst.msk [vmem:[%s213 + $0xd0] sm:$0xff] %vm389, %v383
      %417 = vst.msk [vmem:[%s213 + $0xd8] sm:$0xff] %vm389, %v384
      %418 = vst.msk [vmem:[%s213 + $0xe0] sm:$0xff] %vm389, %v385
      %419 = vst.msk [vmem:[%s213 + $0xe8] sm:$0xff] %vm389, %v386
      %420 = vst.msk [vmem:[%s213 + $0xf0] sm:$0xff] %vm389, %v387
      %421 = vst.msk [vmem:[%s213 + $0xf8] sm:$0xff] %vm389, %v388
      %s422 = smul.u32 16, %s19
      %p423 = scmp.lt.s32.totalorder %s18, 1
      %s424 = scalar_select %p423, %s18, 1
      %p425 = scmp.lt.s32.totalorder %s422, 15
      %s426 = scalar_select %p425, %s422, 15
      %s427 = smul.addr %s426, 2
      %s428 = smul.addr %s424, 32
      %s429 = sadd.s32 %s427, %s428
      %s430 = smul.addr %s429, 8
      %s431 = scalar_lea.vmem %s3, %s430
      // Predicated region
      $region33: #{upsample_block_forward.5} parent=31 // pred_check
        %p432 = pneg %p116
      $region34: #{upsample_block_forward.5} parent=31 // pred_check_branch
        %434 = sbr.rel (%p432) target = $region36
      $region35: #{upsample_block_forward.5} parent=31 // pred_region
        %s435 = smul.u32 16, %s19
      $region36: #{upsample_block_forward.5} parent=31 // pred_fallthru
        _
    $region32: #{upsample_block_forward.5} parent=5 // pred_fallthru
      _
    %p436 = scmp.le.s32.totalorder 2, %s9
    // Predicated region
    $region37: #{upsample_block_forward.5} parent=5 // pred_check
      %p437 = pneg %p436
    $region38: #{upsample_block_forward.5} parent=5 // pred_check_branch
      %439 = sbr.rel (%p437) target = $region40
    $region39: #{upsample_block_forward.5} parent=5 // pred_region
      %s440 = ssub.s32 %s9, 2
      // Predicated region
      $region41: #{upsample_block_forward.5} parent=39 // pred_check
        %p441 = pneg %p122
      $region42: #{upsample_block_forward.5} parent=39 // pred_check_branch
        %443 = sbr.rel (%p441) target = $region44
      $region43: #{upsample_block_forward.5} parent=39 // pred_region
        %s444 = smul.u32 16, %s21
        %p445 = scmp.lt.s32.totalorder %s20, 1
        %s446 = scalar_select %p445, %s20, 1
        %p447 = scmp.lt.s32.totalorder %s444, 15
        %s448 = scalar_select %p447, %s444, 15
        %s449 = smul.addr %s448, 2
        %s450 = smul.addr %s446, 32
        %s451 = sadd.s32 %s449, %s450
        %s452 = smul.addr %s451, 8
        %s453 = scalar_lea.vmem %s3, %s452
      $region44: #{upsample_block_forward.5} parent=39 // pred_fallthru
        _
    $region40: #{upsample_block_forward.5} parent=5 // pred_fallthru
      _
  $region6: #{upsample_block_forward.5} parent=0 // loop_footer
    %s13 = sadd.s32 1, %s9
  $region7: #{upsample_block_forward.5} parent=0 // loop_footer_branch
    %8 = sbr.rel target = $region3
  $region8: #{upsample_block_forward.5} parent=0 // loop_exit
    _

// kernel: upsample_block_forward.4
$region0: #{upsample_block_forward.4}
  #allocation0 [shape = 'u32[]', space=smem, size = 0x4, offset = 0x4, fixed_abs, tag = 'smem constant byte address 0x4 - core index']
  #allocation1 [shape = 'u32[144,128]{1,0:T(1,128)}', space=vmem, size = 0x12000, scoped, tag = 'internal scratch']
  %s0 = inlined_call_operand.vmem [shape: bf16[2,18,18,8], index: 0, kind: input, shape index: {}]
  %s1 = inlined_call_operand.vmem [shape: f32[1,8], index: 1, kind: input, shape index: {}]
  %s2 = inlined_call_operand.vmem [shape: f32[1,8], index: 2, kind: input, shape index: {}]
  %s3 = inlined_call_operand.vmem [shape: bf16[3,3,8,8], index: 3, kind: input, shape index: {}]
  %s4 = inlined_call_operand.vmem [shape: bf16[2,16,16,8], index: 4, kind: output, shape index: {0}]
  %s5 = inlined_call_operand.vmem [shape: f32[2,1,2,8], index: 5, kind: output, shape index: {1}]
  %6 = xla_tuple %s4, %s5
  %s7 = sld [smem:[#allocation0]]
  $region57: #{upsample_block_forward.4} parent=0
    _
  %s9 = ssub.s32 1, %s7
  %s10 = scalar_select 0, %s9, %s7
  loop: start=0, step=1, limit=4
  $region2: #{upsample_block_forward.4} parent=0 // loop_pre_header
    _
  $region3: #{upsample_block_forward.4} parent=0 // loop_header
    %s12 = sphi 0, %s16
    %p13 = scmp.ge.s32.totalorder %s12, 4
    %s19 = sphi 0, %s31
    %s20 = sphi 0, %s27
    %s21 = sphi 0, %s19
    %s22 = sphi 0, %s20
    %s23 = sphi 0, %s21
    %s24 = sphi 0, %s22
    %s34 = sphi 0, %s36
    %s37 = sphi 0, %s34
    %s38 = sphi 0, %s37
    %s54 = sphi 0, %s38
    %s58 = sphi 0, %s58
    %s60 = sphi 0, %s58
    %s61 = sphi 0, %s60
    %s75 = sphi 0, %s61
    %s79 = sphi 0, %s79
    %s81 = sphi 0, %s79
    %s82 = sphi 0, %s81
    %s96 = sphi 0, %s82
    %s100 = sphi 0, %s100
    %s102 = sphi 0, %s100
    %s103 = sphi 0, %s102
    %s117 = sphi 0, %s103
    %s125 = sphi 0, %s127
    %s128 = sphi 0, %s125
    %s129 = sphi 0, %s128
    %s145 = sphi 0, %s129
    %s153 = sphi 0, %s155
    %s156 = sphi 0, %s153
    %s157 = sphi 0, %s156
    %s173 = sphi 0, %s157
  $region4: #{upsample_block_forward.4} parent=0 // loop_header_branch
    %15 = sbr.rel (%p13) target = $region8
  $region5: #{upsample_block_forward.4} parent=0 // loop_body
    %s17 = ssub.s32 %s12, 1
    %s18 = ssub.s32 %s12, 2
    %s25 = sadd.s32 1, %s20
    %p26 = scmp.ge.s32.totalorder %s25, 1
    %s27 = scalar_select %p26, 0, %s25
    %s28 = sadd.s32 1, %s19
    %s29 = scalar_select %p26, %s28, %s19
    %p30 = scmp.ge.s32.totalorder %s29, 2
    %s31 = scalar_select %p30, 0, %s29
    %s32 = ssub.s32 %s19, %s31
    %p33 = scmp.eq.s32.totalorder %s32, 0
    %s35 = sadd.s32 %s34, 1
    %s36 = scalar_select %p33, %s34, %s35
    %p39 = pneg %p33
    %p40 = scmp.eq.s32.totalorder %s12, 1
    %p41 = por %p39, %p40
    %p42 = scmp.ne.s32.totalorder %s34, %s37
    %p43 = scmp.eq.s32.totalorder %s12, 0
    %p44 = por %p42, %p43
    %p45 = scmp.ne.s32.totalorder %s34, %s37
    %p46 = scmp.eq.s32.totalorder %s17, 1
    %p47 = por %p45, %p46
    %p48 = scmp.ne.s32.totalorder %s37, %s38
    %p49 = scmp.eq.s32.totalorder %s17, 0
    %p50 = por %p48, %p49
    %p51 = scmp.ne.s32.totalorder %s37, %s38
    %p52 = scmp.eq.s32.totalorder %s18, 1
    %p53 = por %p51, %p52
    %p55 = scmp.ne.s32.totalorder %s38, %s54
    %p56 = scmp.eq.s32.totalorder %s18, 0
    %p57 = por %p55, %p56
    %s59 = sadd.s32 %s58, 1
    %p62 = scmp.eq.s32.totalorder %s12, 1
    %p63 = scmp.ne.s32.totalorder %s58, %s60
    %p64 = scmp.eq.s32.totalorder %s12, 0
    %p65 = por %p63, %p64
    %p66 = scmp.ne.s32.totalorder %s58, %s60
    %p67 = scmp.eq.s32.totalorder %s17, 1
    %p68 = por %p66, %p67
    %p69 = scmp.ne.s32.totalorder %s60, %s61
    %p70 = scmp.eq.s32.totalorder %s17, 0
    %p71 = por %p69, %p70
    %p72 = scmp.ne.s32.totalorder %s60, %s61
    %p73 = scmp.eq.s32.totalorder %s18, 1
    %p74 = por %p72, %p73
    %p76 = scmp.ne.s32.totalorder %s61, %s75
    %p77 = scmp.eq.s32.totalorder %s18, 0
    %p78 = por %p76, %p77
    %s80 = sadd.s32 %s79, 1
    %p83 = scmp.eq.s32.totalorder %s12, 1
    %p84 = scmp.ne.s32.totalorder %s79, %s81
    %p85 = scmp.eq.s32.totalorder %s12, 0
    %p86 = por %p84, %p85
    %p87 = scmp.ne.s32.totalorder %s79, %s81
    %p88 = scmp.eq.s32.totalorder %s17, 1
    %p89 = por %p87, %p88
    %p90 = scmp.ne.s32.totalorder %s81, %s82
    %p91 = scmp.eq.s32.totalorder %s17, 0
    %p92 = por %p90, %p91
    %p93 = scmp.ne.s32.totalorder %s81, %s82
    %p94 = scmp.eq.s32.totalorder %s18, 1
    %p95 = por %p93, %p94
    %p97 = scmp.ne.s32.totalorder %s82, %s96
    %p98 = scmp.eq.s32.totalorder %s18, 0
    %p99 = por %p97, %p98
    %s101 = sadd.s32 %s100, 1
    %p104 = scmp.eq.s32.totalorder %s12, 1
    %p105 = scmp.ne.s32.totalorder %s100, %s102
    %p106 = scmp.eq.s32.totalorder %s12, 0
    %p107 = por %p105, %p106
    %p108 = scmp.ne.s32.totalorder %s100, %s102
    %p109 = scmp.eq.s32.totalorder %s17, 1
    %p110 = por %p108, %p109
    %p111 = scmp.ne.s32.totalorder %s102, %s103
    %p112 = scmp.eq.s32.totalorder %s17, 0
    %p113 = por %p111, %p112
    %p114 = scmp.ne.s32.totalorder %s102, %s103
    %p115 = scmp.eq.s32.totalorder %s18, 1
    %p116 = por %p114, %p115
    %p118 = scmp.ne.s32.totalorder %s103, %s117
    %p119 = scmp.eq.s32.totalorder %s18, 0
    %p120 = por %p118, %p119
    %s121 = ssub.s32 %s19, %s31
    %s122 = ssub.s32 %s20, %s27
    %s123 = sor.u32 %s121, %s122
    %p124 = scmp.eq.s32.totalorder %s123, 0
    %s126 = sadd.s32 %s125, 1
    %s127 = scalar_select %p124, %s125, %s126
    %p130 = pneg %p124
    %p131 = scmp.eq.s32.totalorder %s12, 1
    %p132 = por %p130, %p131
    %p133 = scmp.ne.s32.totalorder %s125, %s128
    %p134 = scmp.eq.s32.totalorder %s12, 0
    %p135 = por %p133, %p134
    %p136 = scmp.ne.s32.totalorder %s125, %s128
    %p137 = scmp.eq.s32.totalorder %s17, 1
    %p138 = por %p136, %p137
    %p139 = scmp.ne.s32.totalorder %s128, %s129
    %p140 = scmp.eq.s32.totalorder %s17, 0
    %p141 = por %p139, %p140
    %p142 = scmp.ne.s32.totalorder %s128, %s129
    %p143 = scmp.eq.s32.totalorder %s18, 1
    %p144 = por %p142, %p143
    %p146 = scmp.ne.s32.totalorder %s129, %s145
    %p147 = scmp.eq.s32.totalorder %s18, 0
    %p148 = por %p146, %p147
    %s149 = ssub.s32 %s19, %s31
    %s150 = ssub.s32 %s20, %s27
    %s151 = sor.u32 %s149, %s150
    %p152 = scmp.eq.s32.totalorder %s151, 0
    %s154 = sadd.s32 %s153, 1
    %s155 = scalar_select %p152, %s153, %s154
    %p158 = pneg %p152
    %p159 = scmp.eq.s32.totalorder %s12, 1
    %p160 = por %p158, %p159
    %p161 = scmp.ne.s32.totalorder %s153, %s156
    %p162 = scmp.eq.s32.totalorder %s12, 0
    %p163 = por %p161, %p162
    %p164 = scmp.ne.s32.totalorder %s153, %s156
    %p165 = scmp.eq.s32.totalorder %s17, 1
    %p166 = por %p164, %p165
    %p167 = scmp.ne.s32.totalorder %s156, %s157
    %p168 = scmp.eq.s32.totalorder %s17, 0
    %p169 = por %p167, %p168
    %p170 = scmp.ne.s32.totalorder %s156, %s157
    %p171 = scmp.eq.s32.totalorder %s18, 1
    %p172 = por %p170, %p171
    %p174 = scmp.ne.s32.totalorder %s157, %s173
    %p175 = scmp.eq.s32.totalorder %s18, 0
    %p176 = por %p174, %p175
    %p177 = scmp.le.s32.totalorder 1, %s12
    %p178 = scmp.lt.s32.totalorder %s12, 3
    %p179 = pnand %p177, %p178
    %p180 = pneg %p179
    // Predicated region
    $region9: #{upsample_block_forward.4} parent=5 // pred_check
      _
    $region10: #{upsample_block_forward.4} parent=5 // pred_check_branch
      %182 = sbr.rel (%p179) target = $region12
    $region11: #{upsample_block_forward.4} parent=5 // pred_region
      %s183 = ssub.s32 %s12, 1
      // Predicated region
      $region13: #{upsample_block_forward.4} parent=11 // pred_check
        %p184 = pneg %p71
      $region14: #{upsample_block_forward.4} parent=11 // pred_check_branch
        %186 = sbr.rel (%p184) target = $region16
      $region15: #{upsample_block_forward.4} parent=11 // pred_region
        _
      $region16: #{upsample_block_forward.4} parent=11 // pred_fallthru
        _
      // Predicated region
      $region17: #{upsample_block_forward.4} parent=11 // pred_check
        %p187 = pneg %p92
      $region18: #{upsample_block_forward.4} parent=11 // pred_check_branch
        %189 = sbr.rel (%p187) target = $region20
      $region19: #{upsample_block_forward.4} parent=11 // pred_region
        _
      $region20: #{upsample_block_forward.4} parent=11 // pred_fallthru
        _
      // Predicated region
      $region21: #{upsample_block_forward.4} parent=11 // pred_check
        %p190 = pneg %p113
      $region22: #{upsample_block_forward.4} parent=11 // pred_check_branch
        %192 = sbr.rel (%p190) target = $region24
      $region23: #{upsample_block_forward.4} parent=11 // pred_region
        _
      $region24: #{upsample_block_forward.4} parent=11 // pred_fallthru
        _
    $region12: #{upsample_block_forward.4} parent=5 // pred_fallthru
      _
    %p193 = scmp.lt.s32.totalorder %s12, 2
    // Predicated region
    $region25: #{upsample_block_forward.4} parent=5 // pred_check
      %p194 = pneg %p193
    $region26: #{upsample_block_forward.4} parent=5 // pred_check_branch
      %196 = sbr.rel (%p194) target = $region28
    $region27: #{upsample_block_forward.4} parent=5 // pred_region
      // Predicated region
      $region29: #{upsample_block_forward.4} parent=27 // pred_check
        %p197 = pneg %p44
      $region30: #{upsample_block_forward.4} parent=27 // pred_check_branch
        %199 = sbr.rel (%p197) target = $region32
      $region31: #{upsample_block_forward.4} parent=27 // pred_region
        %p200 = scmp.lt.s32.totalorder %s19, 1
        %s201 = scalar_select %p200, %s19, 1
        %s202 = smul.addr %s201, 54
        %s203 = smul.addr %s202, 4
        %s204 = scalar_lea.vmem %s0, %s203
      $region32: #{upsample_block_forward.4} parent=27 // pred_fallthru
        _
    $region28: #{upsample_block_forward.4} parent=5 // pred_fallthru
      _
    %p205 = scmp.le.s32.totalorder 1, %s12
    %p206 = scmp.lt.s32.totalorder %s12, 3
    %p207 = pnand %p205, %p206
    %p208 = pneg %p207
    // Predicated region
    $region33: #{upsample_block_forward.4} parent=5 // pred_check
      _
    $region34: #{upsample_block_forward.4} parent=5 // pred_check_branch
      %210 = sbr.rel (%p207) target = $region36
    $region35: #{upsample_block_forward.4} parent=5 // pred_region
      %s211 = ssub.s32 %s12, 1
      %p212 = scmp.lt.s32.totalorder %s21, 1
      %s213 = scalar_select %p212, %s21, 1
      %s214 = smul.addr %s213, 54
      %s215 = smul.addr %s214, 4
      %s216 = scalar_lea.vmem %s0, %s215
      %p217 = pneg %p50
      %p218 = pneg %p47
      %p219 = pneg %p71
      %p220 = pneg %p68
      %p221 = pneg %p92
      %p222 = pneg %p89
      %p223 = pneg %p113
      %p224 = pneg %p110
      %p225 = pneg %p141
      %p226 = pneg %p138
      %s227 = smul.u32 16, %s22
      %p228 = scmp.lt.s32.totalorder %s21, 1
      %s229 = scalar_select %p228, %s21, 1
      %p230 = scmp.lt.s32.totalorder %s227, 15
      %s231 = scalar_select %p230, %s227, 15
      %s232 = smul.addr %s231, 2
      %s233 = smul.addr %s229, 32
      %s234 = sadd.s32 %s232, %s233
      %s235 = smul.addr %s234, 4
      %s236 = scalar_lea.vmem %s4, %s235
      %p237 = pneg %p169
      %p238 = pneg %p166
      %p239 = scmp.lt.s32.totalorder %s21, 1
      %s240 = scalar_select %p239, %s21, 1
      %p241 = scmp.lt.s32.totalorder %s22, 0
      %s242 = scalar_select %p241, %s22, 0
      %s243 = sadd.s32 %s242, %s240
      %s244 = smul.addr %s243, 2
      %s245 = scalar_lea.vmem %s5, %s244
      %p246 = scmp.lt.s32.totalorder %s21, 1
      %s247 = scalar_select %p246, %s21, 1
      %s248 = smul.addr %s247, 54
      %s249 = smul.addr %s248, 4
      %s250 = scalar_lea.vmem %s0, %s249
      %s251 = smul.u32 16, %s22
      %p252 = scmp.lt.s32.totalorder %s21, 1
      %s253 = scalar_select %p252, %s21, 1
      %p254 = scmp.lt.s32.totalorder %s251, 15
      %s255 = scalar_select %p254, %s251, 15
      %s256 = smul.addr %s255, 2
      %s257 = smul.addr %s253, 32
      %s258 = sadd.s32 %s256, %s257
      %s259 = smul.addr %s258, 4
      %s260 = scalar_lea.vmem %s4, %s259
      %s261 = smul.u32 16, %s22
      %p262 = scmp.lt.s32.totalorder %s21, 1
      %s263 = scalar_select %p262, %s21, 1
      %p264 = scmp.lt.s32.totalorder %s22, 0
      %s265 = scalar_select %p264, %s22, 0
      %s266 = sadd.s32 %s265, %s263
      %s267 = smul.addr %s266, 2
      %s268 = scalar_lea.vmem %s5, %s267
      %v270 = vld [vmem:[%s1] sm:$0x1]
      %v271 = vld [vmem:[%s2] sm:$0x1]
      %v272 = vld [vmem:[%s250] sm:$0xf]
      %v273 = vld [vmem:[%s250 + $0x4] sm:$0xf]
      %v274 = vld [vmem:[%s250 + $0x8] sm:$0x1]
      %v275 = vld [vmem:[%s250 + $0xc] sm:$0xf]
      %v276 = vld [vmem:[%s250 + $0x10] sm:$0xf]
      %v277 = vld [vmem:[%s250 + $0x14] sm:$0x1]
      %v278 = vld [vmem:[%s250 + $0x18] sm:$0xf]
      %v279 = vld [vmem:[%s250 + $0x1c] sm:$0xf]
      %v280 = vld [vmem:[%s250 + $0x20] sm:$0x1]
      %v281 = vld [vmem:[%s250 + $0x24] sm:$0xf]
      %v282 = vld [vmem:[%s250 + $0x28] sm:$0xf]
      %v283 = vld [vmem:[%s250 + $0x2c] sm:$0x1]
      %v284 = vld [vmem:[%s250 + $0x30] sm:$0xf]
      %v285 = vld [vmem:[%s250 + $0x34] sm:$0xf]
      %v286 = vld [vmem:[%s250 + $0x38] sm:$0x1]
      %v287 = vld [vmem:[%s250 + $0x3c] sm:$0xf]
      %v288 = vld [vmem:[%s250 + $0x40] sm:$0xf]
      %v289 = vld [vmem:[%s250 + $0x44] sm:$0x1]
      %v290 = vld [vmem:[%s250 + $0x48] sm:$0xf]
      %v291 = vld [vmem:[%s250 + $0x4c] sm:$0xf]
      %v292 = vld [vmem:[%s250 + $0x50] sm:$0x1]
      %v293 = vld [vmem:[%s250 + $0x54] sm:$0xf]
      %v294 = vld [vmem:[%s250 + $0x58] sm:$0xf]
      %v295 = vld [vmem:[%s250 + $0x5c] sm:$0x1]
      %v296 = vld [vmem:[%s250 + $0x60] sm:$0xf]
      %v297 = vld [vmem:[%s250 + $0x64] sm:$0xf]
      %v298 = vld [vmem:[%s250 + $0x68] sm:$0x1]
      %v299 = vld [vmem:[%s250 + $0x6c] sm:$0xf]
      %v300 = vld [vmem:[%s250 + $0x70] sm:$0xf]
      %v301 = vld [vmem:[%s250 + $0x74] sm:$0x1]
      %v302 = vld [vmem:[%s250 + $0x78] sm:$0xf]
      %v303 = vld [vmem:[%s250 + $0x7c] sm:$0xf]
      %v304 = vld [vmem:[%s250 + $0x80] sm:$0x1]
      %v305 = vld [vmem:[%s250 + $0x84] sm:$0xf]
      %v306 = vld [vmem:[%s250 + $0x88] sm:$0xf]
      %v307 = vld [vmem:[%s250 + $0x8c] sm:$0x1]
      %v308 = vld [vmem:[%s250 + $0x90] sm:$0xf]
      %v309 = vld [vmem:[%s250 + $0x94] sm:$0xf]
      %v310 = vld [vmem:[%s250 + $0x98] sm:$0x1]
      %v311 = vld [vmem:[%s250 + $0x9c] sm:$0xf]
      %v312 = vld [vmem:[%s250 + $0xa0] sm:$0xf]
      %v313 = vld [vmem:[%s250 + $0xa4] sm:$0x1]
      %v314 = vld [vmem:[%s250 + $0xa8] sm:$0xf]
      %v315 = vld [vmem:[%s250 + $0xac] sm:$0xf]
      %v316 = vld [vmem:[%s250 + $0xb0] sm:$0x1]
      %v317 = vld [vmem:[%s250 + $0xb4] sm:$0xf]
      %v318 = vld [vmem:[%s250 + $0xb8] sm:$0xf]
      %v319 = vld [vmem:[%s250 + $0xbc] sm:$0x1]
      %v320 = vld [vmem:[%s250 + $0xc0] sm:$0xf]
      %v321 = vld [vmem:[%s250 + $0xc4] sm:$0xf]
      %v322 = vld [vmem:[%s250 + $0xc8] sm:$0x1]
      %v323 = vld [vmem:[%s250 + $0xcc] sm:$0xf]
      %v324 = vld [vmem:[%s250 + $0xd0] sm:$0xf]
      %v325 = vld [vmem:[%s250 + $0xd4] sm:$0x1]
      %v326 = vunpack.c.l.bf16 %v272
      %v327 = vunpack.c.l.bf16 %v273
      %v328 = vunpack.c.l.bf16 %v274
      %v329 = vunpack.c.l.bf16 %v275
      %v330 = vunpack.c.l.bf16 %v276
      %v331 = vunpack.c.l.bf16 %v277
      %v332 = vunpack.c.l.bf16 %v278
      %v333 = vunpack.c.l.bf16 %v279
      %v334 = vunpack.c.l.bf16 %v280
      %v335 = vunpack.c.l.bf16 %v281
      %v336 = vunpack.c.l.bf16 %v282
      %v337 = vunpack.c.l.bf16 %v283
      %v338 = vunpack.c.l.bf16 %v284
      %v339 = vunpack.c.l.bf16 %v285
      %v340 = vunpack.c.l.bf16 %v286
      %v341 = vunpack.c.l.bf16 %v287
      %v342 = vunpack.c.l.bf16 %v288
      %v343 = vunpack.c.l.bf16 %v289
      %v344 = vunpack.c.l.bf16 %v290
      %v345 = vunpack.c.l.bf16 %v291
      %v346 = vunpack.c.l.bf16 %v292
      %v347 = vunpack.c.l.bf16 %v293
      %v348 = vunpack.c.l.bf16 %v294
      %v349 = vunpack.c.l.bf16 %v295
      %v350 = vunpack.c.l.bf16 %v296
      %v351 = vunpack.c.l.bf16 %v297
      %v352 = vunpack.c.l.bf16 %v298
      %v353 = vunpack.c.l.bf16 %v299
      %v354 = vunpack.c.l.bf16 %v300
      %v355 = vunpack.c.l.bf16 %v301
      %v356 = vunpack.c.l.bf16 %v302
      %v357 = vunpack.c.l.bf16 %v303
      %v358 = vunpack.c.l.bf16 %v304
      %v359 = vunpack.c.l.bf16 %v305
      %v360 = vunpack.c.l.bf16 %v306
      %v361 = vunpack.c.l.bf16 %v307
      %v362 = vunpack.c.l.bf16 %v308
      %v363 = vunpack.c.l.bf16 %v309
      %v364 = vunpack.c.l.bf16 %v310
      %v365 = vunpack.c.l.bf16 %v311
      %v366 = vunpack.c.l.bf16 %v312
      %v367 = vunpack.c.l.bf16 %v313
      %v368 = vunpack.c.l.bf16 %v314
      %v369 = vunpack.c.l.bf16 %v315
      %v370 = vunpack.c.l.bf16 %v316
      %v371 = vunpack.c.l.bf16 %v317
      %v372 = vunpack.c.l.bf16 %v318
      %v373 = vunpack.c.l.bf16 %v319
      %v374 = vunpack.c.l.bf16 %v320
      %v375 = vunpack.c.l.bf16 %v321
      %v376 = vunpack.c.l.bf16 %v322
      %v377 = vunpack.c.l.bf16 %v323
      %v378 = vunpack.c.l.bf16 %v324
      %v379 = vunpack.c.l.bf16 %v325
      %v381 = vlaneseq
      %v382 = vshrl.u32 %v381, 7
      %v383 = vsub.s32 0, %v382
      %v384 = vrot.slane %v270, %v383
      %v386 = vmul.f32 %v326, %v384
      %v387 = vmul.f32 %v327, %v384
      %v388 = vmul.f32 %v328, %v384
      %v389 = vmul.f32 %v329, %v384
      %v390 = vmul.f32 %v330, %v384
      %v391 = vmul.f32 %v331, %v384
      %v392 = vmul.f32 %v332, %v384
      %v393 = vmul.f32 %v333, %v384
      %v394 = vmul.f32 %v334, %v384
      %v395 = vmul.f32 %v335, %v384
      %v396 = vmul.f32 %v336, %v384
      %v397 = vmul.f32 %v337, %v384
      %v398 = vmul.f32 %v338, %v384
      %v399 = vmul.f32 %v339, %v384
      %v400 = vmul.f32 %v340, %v384
      %v401 = vmul.f32 %v341, %v384
      %v402 = vmul.f32 %v342, %v384
      %v403 = vmul.f32 %v343, %v384
      %v404 = vmul.f32 %v344, %v384
      %v405 = vmul.f32 %v345, %v384
      %v406 = vmul.f32 %v346, %v384
      %v407 = vmul.f32 %v347, %v384
      %v408 = vmul.f32 %v348, %v384
      %v409 = vmul.f32 %v349, %v384
      %v410 = vmul.f32 %v350, %v384
      %v411 = vmul.f32 %v351, %v384
      %v412 = vmul.f32 %v352, %v384
      %v413 = vmul.f32 %v353, %v384
      %v414 = vmul.f32 %v354, %v384
      %v415 = vmul.f32 %v355, %v384
      %v416 = vmul.f32 %v356, %v384
      %v417 = vmul.f32 %v357, %v384
      %v418 = vmul.f32 %v358, %v384
      %v419 = vmul.f32 %v359, %v384
      %v420 = vmul.f32 %v360, %v384
      %v421 = vmul.f32 %v361, %v384
      %v422 = vmul.f32 %v362, %v384
      %v423 = vmul.f32 %v363, %v384
      %v424 = vmul.f32 %v364, %v384
      %v425 = vmul.f32 %v365, %v384
      %v426 = vmul.f32 %v366, %v384
      %v427 = vmul.f32 %v367, %v384
      %v428 = vmul.f32 %v368, %v384
      %v429 = vmul.f32 %v369, %v384
      %v430 = vmul.f32 %v370, %v384
      %v431 = vmul.f32 %v371, %v384
      %v432 = vmul.f32 %v372, %v384
      %v433 = vmul.f32 %v373, %v384
      %v434 = vmul.f32 %v374, %v384
      %v435 = vmul.f32 %v375, %v384
      %v436 = vmul.f32 %v376, %v384
      %v437 = vmul.f32 %v377, %v384
      %v438 = vmul.f32 %v378, %v384
      %v439 = vmul.f32 %v379, %v384
      %v441 = vlaneseq
      %v442 = vshrl.u32 %v441, 7
      %v443 = vsub.s32 0, %v442
      %v444 = vrot.slane %v271, %v443
      %v446 = vadd.f32 %v386, %v444
      %v447 = vadd.f32 %v387, %v444
      %v448 = vadd.f32 %v388, %v444
      %v449 = vadd.f32 %v389, %v444
      %v450 = vadd.f32 %v390, %v444
      %v451 = vadd.f32 %v391, %v444
      %v452 = vadd.f32 %v392, %v444
      %v453 = vadd.f32 %v393, %v444
      %v454 = vadd.f32 %v394, %v444
      %v455 = vadd.f32 %v395, %v444
      %v456 = vadd.f32 %v396, %v444
      %v457 = vadd.f32 %v397, %v444
      %v458 = vadd.f32 %v398, %v444
      %v459 = vadd.f32 %v399, %v444
      %v460 = vadd.f32 %v400, %v444
      %v461 = vadd.f32 %v401, %v444
      %v462 = vadd.f32 %v402, %v444
      %v463 = vadd.f32 %v403, %v444
      %v464 = vadd.f32 %v404, %v444
      %v465 = vadd.f32 %v405, %v444
      %v466 = vadd.f32 %v406, %v444
      %v467 = vadd.f32 %v407, %v444
      %v468 = vadd.f32 %v408, %v444
      %v469 = vadd.f32 %v409, %v444
      %v470 = vadd.f32 %v410, %v444
      %v471 = vadd.f32 %v411, %v444
      %v472 = vadd.f32 %v412, %v444
      %v473 = vadd.f32 %v413, %v444
      %v474 = vadd.f32 %v414, %v444
      %v475 = vadd.f32 %v415, %v444
      %v476 = vadd.f32 %v416, %v444
      %v477 = vadd.f32 %v417, %v444
      %v478 = vadd.f32 %v418, %v444
      %v479 = vadd.f32 %v419, %v444
      %v480 = vadd.f32 %v420, %v444
      %v481 = vadd.f32 %v421, %v444
      %v482 = vadd.f32 %v422, %v444
      %v483 = vadd.f32 %v423, %v444
      %v484 = vadd.f32 %v424, %v444
      %v485 = vadd.f32 %v425, %v444
      %v486 = vadd.f32 %v426, %v444
      %v487 = vadd.f32 %v427, %v444
      %v488 = vadd.f32 %v428, %v444
      %v489 = vadd.f32 %v429, %v444
      %v490 = vadd.f32 %v430, %v444
      %v491 = vadd.f32 %v431, %v444
      %v492 = vadd.f32 %v432, %v444
      %v493 = vadd.f32 %v433, %v444
      %v494 = vadd.f32 %v434, %v444
      %v495 = vadd.f32 %v435, %v444
      %v496 = vadd.f32 %v436, %v444
      %v497 = vadd.f32 %v437, %v444
      %v498 = vadd.f32 %v438, %v444
      %v499 = vadd.f32 %v439, %v444
      %v500 = vmax.f32 %v446, 0.0
      %v501 = vmax.f32 %v447, 0.0
      %v502 = vmax.f32 %v448, 0.0
      %v503 = vmax.f32 %v449, 0.0
      %v504 = vmax.f32 %v450, 0.0
      %v505 = vmax.f32 %v451, 0.0
      %v506 = vmax.f32 %v452, 0.0
      %v507 = vmax.f32 %v453, 0.0
      %v508 = vmax.f32 %v454, 0.0
      %v509 = vmax.f32 %v455, 0.0
      %v510 = vmax.f32 %v456, 0.0
      %v511 = vmax.f32 %v457, 0.0
      %v512 = vmax.f32 %v458, 0.0
      %v513 = vmax.f32 %v459, 0.0
      %v514 = vmax.f32 %v460, 0.0
      %v515 = vmax.f32 %v461, 0.0
      %v516 = vmax.f32 %v462, 0.0
      %v517 = vmax.f32 %v463, 0.0
      %v518 = vmax.f32 %v464, 0.0
      %v519 = vmax.f32 %v465, 0.0
      %v520 = vmax.f32 %v466, 0.0
      %v521 = vmax.f32 %v467, 0.0
      %v522 = vmax.f32 %v468, 0.0
      %v523 = vmax.f32 %v469, 0.0
      %v524 = vmax.f32 %v470, 0.0
      %v525 = vmax.f32 %v471, 0.0
      %v526 = vmax.f32 %v472, 0.0
      %v527 = vmax.f32 %v473, 0.0
      %v528 = vmax.f32 %v474, 0.0
      %v529 = vmax.f32 %v475, 0.0
      %v530 = vmax.f32 %v476, 0.0
      %v531 = vmax.f32 %v477, 0.0
      %v532 = vmax.f32 %v478, 0.0
      %v533 = vmax.f32 %v479, 0.0
      %v534 = vmax.f32 %v480, 0.0
      %v535 = vmax.f32 %v481, 0.0
      %v536 = vmax.f32 %v482, 0.0
      %v537 = vmax.f32 %v483, 0.0
      %v538 = vmax.f32 %v484, 0.0
      %v539 = vmax.f32 %v485, 0.0
      %v540 = vmax.f32 %v486, 0.0
      %v541 = vmax.f32 %v487, 0.0
      %v542 = vmax.f32 %v488, 0.0
      %v543 = vmax.f32 %v489, 0.0
      %v544 = vmax.f32 %v490, 0.0
      %v545 = vmax.f32 %v491, 0.0
      %v546 = vmax.f32 %v492, 0.0
      %v547 = vmax.f32 %v493, 0.0
      %v548 = vmax.f32 %v494, 0.0
      %v549 = vmax.f32 %v495, 0.0
      %v550 = vmax.f32 %v496, 0.0
      %v551 = vmax.f32 %v497, 0.0
      %v552 = vmax.f32 %v498, 0.0
      %v553 = vmax.f32 %v499, 0.0
      %v554 = vlaneseq
      %v555 = vshrl.u32 %v554, 7
      %v556 = vadd.s32 %v555, 8
      %v557 = vadd.s32 %v555, 16
      %vm558 = vcmp.ge.s32.totalorder %v555, 1
      %vm559 = vcmp.ge.s32.totalorder %v556, 1
      %vm560 = vcmp.ge.s32.totalorder %v557, 1
      %vm561 = vcmp.le.s32.totalorder %v555, 16
      %vm562 = vcmp.le.s32.totalorder %v556, 16
      %vm563 = vcmp.le.s32.totalorder %v557, 16
      %vm564 = vmand %vm558, %vm561
      %vm565 = vmand %vm559, %vm562
      %vm566 = vmand %vm560, %vm563
      %p567 = scmp.ne.s32.totalorder %s22, 0
      %s568 = scalar_select %p567, 1, 0
      %v569 = vstv %s568
      %vm570 = vcmp.eq.s32.totalorder %v569, 1
      %vm571 = vmand %vm564, %vm570
      %vm572 = vmand %vm565, %vm570
      %vm573 = vmand %vm566, %vm570
      %vm574 = vmand %vm564, 1
      %vm575 = vmand %vm565, 1
      %vm576 = vmand %vm566, 1
      %vm577 = vmand %vm571, 1
      %vm578 = vmand %vm572, 1
      %vm579 = vmand %vm573, 1
      %vm580 = vmand %vm574, %vm570
      %vm581 = vmand %vm575, %vm570
      %vm582 = vmand %vm576, %vm570
      %v583 = vsel %vm577, %v500, 0.0
      %v584 = vsel %vm578, %v501, 0.0
      %v585 = vsel %vm579, %v502, 0.0
      %v586 = vsel %vm574, %v503, 0.0
      %v587 = vsel %vm575, %v504, 0.0
      %v588 = vsel %vm576, %v505, 0.0
      %v589 = vsel %vm574, %v506, 0.0
      %v590 = vsel %vm575, %v507, 0.0
      %v591 = vsel %vm576, %v508, 0.0
      %v592 = vsel %vm574, %v509, 0.0
      %v593 = vsel %vm575, %v510, 0.0
      %v594 = vsel %vm576, %v511, 0.0
      %v595 = vsel %vm574, %v512, 0.0
      %v596 = vsel %vm575, %v513, 0.0
      %v597 = vsel %vm576, %v514, 0.0
      %v598 = vsel %vm574, %v515, 0.0
      %v599 = vsel %vm575, %v516, 0.0
      %v600 = vsel %vm576, %v517, 0.0
      %v601 = vsel %vm574, %v518, 0.0
      %v602 = vsel %vm575, %v519, 0.0
      %v603 = vsel %vm576, %v520, 0.0
      %v604 = vsel %vm574, %v521, 0.0
      %v605 = vsel %vm575, %v522, 0.0
      %v606 = vsel %vm576, %v523, 0.0
      %v607 = vsel %vm574, %v524, 0.0
      %v608 = vsel %vm575, %v525, 0.0
      %v609 = vsel %vm576, %v526, 0.0
      %v610 = vsel %vm574, %v527, 0.0
      %v611 = vsel %vm575, %v528, 0.0
      %v612 = vsel %vm576, %v529, 0.0
      %v613 = vsel %vm574, %v530, 0.0
      %v614 = vsel %vm575, %v531, 0.0
      %v615 = vsel %vm576, %v532, 0.0
      %v616 = vsel %vm574, %v533, 0.0
      %v617 = vsel %vm575, %v534, 0.0
      %v618 = vsel %vm576, %v535, 0.0
      %v619 = vsel %vm574, %v536, 0.0
      %v620 = vsel %vm575, %v537, 0.0
      %v621 = vsel %vm576, %v538, 0.0
      %v622 = vsel %vm574, %v539, 0.0
      %v623 = vsel %vm575, %v540, 0.0
      %v624 = vsel %vm576, %v541, 0.0
      %v625 = vsel %vm574, %v542, 0.0
      %v626 = vsel %vm575, %v543, 0.0
      %v627 = vsel %vm576, %v544, 0.0
      %v628 = vsel %vm574, %v545, 0.0
      %v629 = vsel %vm575, %v546, 0.0
      %v630 = vsel %vm576, %v547, 0.0
      %v631 = vsel %vm574, %v548, 0.0
      %v632 = vsel %vm575, %v549, 0.0
      %v633 = vsel %vm576, %v550, 0.0
      %v634 = vsel %vm580, %v551, 0.0
      %v635 = vsel %vm581, %v552, 0.0
      %v636 = vsel %vm582, %v553, 0.0
      %v637 = vpack.c.bf16 %v584, %v583
      %v638 = vpack.c.bf16 %v585, %v585
      %v639 = vpack.c.bf16 %v587, %v586
      %v640 = vpack.c.bf16 %v588, %v588
      %v641 = vpack.c.bf16 %v590, %v589
      %v642 = vpack.c.bf16 %v591, %v591
      %v643 = vpack.c.bf16 %v593, %v592
      %v644 = vpack.c.bf16 %v594, %v594
      %v645 = vpack.c.bf16 %v596, %v595
      %v646 = vpack.c.bf16 %v597, %v597
      %v647 = vpack.c.bf16 %v599, %v598
      %v648 = vpack.c.bf16 %v600, %v600
      %v649 = vpack.c.bf16 %v602, %v601
      %v650 = vpack.c.bf16 %v603, %v603
      %v651 = vpack.c.bf16 %v605, %v604
      %v652 = vpack.c.bf16 %v606, %v606
      %v653 = vpack.c.bf16 %v608, %v607
      %v654 = vpack.c.bf16 %v609, %v609
      %v655 = vpack.c.bf16 %v611, %v610
      %v656 = vpack.c.bf16 %v612, %v612
      %v657 = vpack.c.bf16 %v614, %v613
      %v658 = vpack.c.bf16 %v615, %v615
      %v659 = vpack.c.bf16 %v617, %v616
      %v660 = vpack.c.bf16 %v618, %v618
      %v661 = vpack.c.bf16 %v620, %v619
      %v662 = vpack.c.bf16 %v621, %v621
      %v663 = vpack.c.bf16 %v623, %v622
      %v664 = vpack.c.bf16 %v624, %v624
      %v665 = vpack.c.bf16 %v626, %v625
      %v666 = vpack.c.bf16 %v627, %v627
      %v667 = vpack.c.bf16 %v629, %v628
      %v668 = vpack.c.bf16 %v630, %v630
      %v669 = vpack.c.bf16 %v632, %v631
      %v670 = vpack.c.bf16 %v633, %v633
      %v671 = vpack.c.bf16 %v635, %v634
      %v672 = vpack.c.bf16 %v636, %v636
      %v673 = vld [vmem:[%s3] sm:$0xf]
      %vm674 = vsmask.f32 7424
      %v676 = vshrl.u32 %v637, 16
      %v678 = vshll.u32 %v637, 16
      %v680 = vrot.slane %v678, 1
      %v681 = vor.u32 %v676, %v680
      %v683 = vshll.u32 %v638, 16
      %v685 = vrot.slane %v683, 1
      %v686 = vsel %vm674, %v681, %v685
      %v688 = vshrl.u32 %v639, 16
      %v690 = vshll.u32 %v639, 16
      %v692 = vrot.slane %v690, 1
      %v693 = vor.u32 %v688, %v692
      %v695 = vshll.u32 %v640, 16
      %v697 = vrot.slane %v695, 1
      %v698 = vsel %vm674, %v693, %v697
      %v700 = vshrl.u32 %v641, 16
      %v702 = vshll.u32 %v641, 16
      %v704 = vrot.slane %v702, 1
      %v705 = vor.u32 %v700, %v704
      %v707 = vshll.u32 %v642, 16
      %v709 = vrot.slane %v707, 1
      %v710 = vsel %vm674, %v705, %v709
      %v712 = vshrl.u32 %v643, 16
      %v714 = vshll.u32 %v643, 16
      %v716 = vrot.slane %v714, 1
      %v717 = vor.u32 %v712, %v716
      %v719 = vshll.u32 %v644, 16
      %v721 = vrot.slane %v719, 1
      %v722 = vsel %vm674, %v717, %v721
      %v724 = vshrl.u32 %v645, 16
      %v726 = vshll.u32 %v645, 16
      %v728 = vrot.slane %v726, 1
      %v729 = vor.u32 %v724, %v728
      %v731 = vshll.u32 %v646, 16
      %v733 = vrot.slane %v731, 1
      %v734 = vsel %vm674, %v729, %v733
      %v736 = vshrl.u32 %v647, 16
      %v738 = vshll.u32 %v647, 16
      %v740 = vrot.slane %v738, 1
      %v741 = vor.u32 %v736, %v740
      %v743 = vshll.u32 %v648, 16
      %v745 = vrot.slane %v743, 1
      %v746 = vsel %vm674, %v741, %v745
      %v748 = vshrl.u32 %v649, 16
      %v750 = vshll.u32 %v649, 16
      %v752 = vrot.slane %v750, 1
      %v753 = vor.u32 %v748, %v752
      %v755 = vshll.u32 %v650, 16
      %v757 = vrot.slane %v755, 1
      %v758 = vsel %vm674, %v753, %v757
      %v760 = vshrl.u32 %v651, 16
      %v762 = vshll.u32 %v651, 16
      %v764 = vrot.slane %v762, 1
      %v765 = vor.u32 %v760, %v764
      %v767 = vshll.u32 %v652, 16
      %v769 = vrot.slane %v767, 1
      %v770 = vsel %vm674, %v765, %v769
      %v772 = vshrl.u32 %v653, 16
      %v774 = vshll.u32 %v653, 16
      %v776 = vrot.slane %v774, 1
      %v777 = vor.u32 %v772, %v776
      %v779 = vshll.u32 %v654, 16
      %v781 = vrot.slane %v779, 1
      %v782 = vsel %vm674, %v777, %v781
      %v784 = vshrl.u32 %v655, 16
      %v786 = vshll.u32 %v655, 16
      %v788 = vrot.slane %v786, 1
      %v789 = vor.u32 %v784, %v788
      %v791 = vshll.u32 %v656, 16
      %v793 = vrot.slane %v791, 1
      %v794 = vsel %vm674, %v789, %v793
      %v796 = vshrl.u32 %v657, 16
      %v798 = vshll.u32 %v657, 16
      %v800 = vrot.slane %v798, 1
      %v801 = vor.u32 %v796, %v800
      %v803 = vshll.u32 %v658, 16
      %v805 = vrot.slane %v803, 1
      %v806 = vsel %vm674, %v801, %v805
      %v808 = vshrl.u32 %v659, 16
      %v810 = vshll.u32 %v659, 16
      %v812 = vrot.slane %v810, 1
      %v813 = vor.u32 %v808, %v812
      %v815 = vshll.u32 %v660, 16
      %v817 = vrot.slane %v815, 1
      %v818 = vsel %vm674, %v813, %v817
      %v820 = vshrl.u32 %v661, 16
      %v822 = vshll.u32 %v661, 16
      %v824 = vrot.slane %v822, 1
      %v825 = vor.u32 %v820, %v824
      %v827 = vshll.u32 %v662, 16
      %v829 = vrot.slane %v827, 1
      %v830 = vsel %vm674, %v825, %v829
      %v832 = vshrl.u32 %v663, 16
      %v834 = vshll.u32 %v663, 16
      %v836 = vrot.slane %v834, 1
      %v837 = vor.u32 %v832, %v836
      %v839 = vshll.u32 %v664, 16
      %v841 = vrot.slane %v839, 1
      %v842 = vsel %vm674, %v837, %v841
      %v844 = vshrl.u32 %v665, 16
      %v846 = vshll.u32 %v665, 16
      %v848 = vrot.slane %v846, 1
      %v849 = vor.u32 %v844, %v848
      %v851 = vshll.u32 %v666, 16
      %v853 = vrot.slane %v851, 1
      %v854 = vsel %vm674, %v849, %v853
      %v856 = vshrl.u32 %v667, 16
      %v858 = vshll.u32 %v667, 16
      %v860 = vrot.slane %v858, 1
      %v861 = vor.u32 %v856, %v860
      %v863 = vshll.u32 %v668, 16
      %v865 = vrot.slane %v863, 1
      %v866 = vsel %vm674, %v861, %v865
      %s867 = scalar_lea.vmem %s3, 4
      %v868 = vld [vmem:[%s867] sm:$0xf]
      %vm869 = vcmask 64512
      %v871 = vsel %vm869, %v686, 0
      %v874 = vsel %vm869, %v698, 0
      %v877 = vsel %vm869, %v710, 0
      %v880 = vsel %vm869, %v722, 0
      %v883 = vsel %vm869, %v734, 0
      %v886 = vsel %vm869, %v746, 0
      %v889 = vsel %vm869, %v758, 0
      %v892 = vsel %vm869, %v770, 0
      %v895 = vsel %vm869, %v782, 0
      %v898 = vsel %vm869, %v794, 0
      %v901 = vsel %vm869, %v806, 0
      %v904 = vsel %vm869, %v818, 0
      %v907 = vsel %vm869, %v830, 0
      %v910 = vsel %vm869, %v842, 0
      %v913 = vsel %vm869, %v854, 0
      %v916 = vsel %vm869, %v866, 0
      %vm918 = vcmask 1043456
      %v920 = vsel %vm918, %v868, 0
      %922 = vmatprep.subr.bf16.mxu0 0
      %923 = vmatpush1.bf16.msra.mxu0 %v920
      %924 = vmatprep.subr.bf16.mxu0 0
      %925 = vmatpush1.bf16.msra.mxu0 0
      %926 = vmatprep.subr.bf16.mxu0 0
      %927 = vmatpush1.bf16.msra.mxu0 0
      %928 = vmatprep.subr.bf16.mxu0 0
      %929 = vmatpush1.bf16.msra.mxu0 0
      %930 = vmatprep.subr.bf16.mxu0 0
      %931 = vmatpush1.bf16.msra.mxu0 0
      %932 = vmatprep.subr.bf16.mxu0 0
      %933 = vmatpush1.bf16.msra.mxu0 0
      %934 = vmatprep.subr.bf16.mxu0 0
      %935 = vmatpush1.bf16.msra.mxu0 0
      %936 = vmatprep.subr.bf16.mxu0 0
      %937 = vmatpush1.bf16.msra.mxu0 0
      %938 = vmatprep.subr.bf16.mxu0 0
      %939 = vmatpush1.bf16.msra.mxu0 0
      %940 = vmatprep.subr.bf16.mxu0 0
      %941 = vmatpush1.bf16.msra.mxu0 0
      %942 = vmatprep.subr.bf16.mxu0 0
      %943 = vmatpush1.bf16.msra.mxu0 0
      %944 = vmatprep.subr.bf16.mxu0 0
      %945 = vmatpush1.bf16.msra.mxu0 0
      %946 = vmatprep.subr.bf16.mxu0 0
      %947 = vmatpush1.bf16.msra.mxu0 0
      %948 = vmatprep.subr.bf16.mxu0 0
      %949 = vmatpush1.bf16.msra.mxu0 0
      %950 = vmatprep.subr.bf16.mxu0 0
      %951 = vmatpush1.bf16.msra.mxu0 0
      %952 = vmatprep.subr.bf16.mxu0 0
      %953 = vmatpush1.bf16.msra.mxu0 0
      %954 = vmatprep.mubr.bf16.mxu0 0
      %955 = vmatmul.mubr.bf16.gmra.mrb[0].mxu0 %v871
      %v956 = vpop.f32.mrb[0].mxu0
      %v957 = vadd.f32 0.0, %v956
      %v958 = vpop.f32.mrb[0].mxu0
      %v959 = vpop.f32.mrb[0].mxu0
      %v960 = vadd.f32 0.0, %v959
      %v961 = vpop.f32.mrb[0].mxu0
      %962 = vmatprep.mubr.bf16.mxu0 0
      %963 = vmatmul.mubr.bf16.gmra.mrb[0].mxu0 %v874
      %v964 = vpop.f32.mrb[0].mxu0
      %v965 = vadd.f32 0.0, %v964
      %v966 = vpop.f32.mrb[0].mxu0
      %v967 = vpop.f32.mrb[0].mxu0
      %v968 = vadd.f32 0.0, %v967
      %v969 = vpop.f32.mrb[0].mxu0
      %970 = vmatprep.mubr.bf16.mxu0 0
      %971 = vmatmul.mubr.bf16.gmra.mrb[0].mxu0 %v877
      %v972 = vpop.f32.mrb[0].mxu0
      %v973 = vadd.f32 0.0, %v972
      %v974 = vpop.f32.mrb[0].mxu0
      %v975 = vpop.f32.mrb[0].mxu0
      %v976 = vadd.f32 0.0, %v975
      %v977 = vpop.f32.mrb[0].mxu0
      %978 = vmatprep.mubr.bf16.mxu0 0
      %979 = vmatmul.mubr.bf16.gmra.mrb[0].mxu0 %v880
      %v980 = vpop.f32.mrb[0].mxu0
      %v981 = vadd.f32 0.0, %v980
      %v982 = vpop.f32.mrb[0].mxu0
      %v983 = vpop.f32.mrb[0].mxu0
      %v984 = vadd.f32 0.0, %v983
      %v985 = vpop.f32.mrb[0].mxu0
      %986 = vmatprep.mubr.bf16.mxu0 0
      %987 = vmatmul.mubr.bf16.gmra.mrb[0].mxu0 %v883
      %v988 = vpop.f32.mrb[0].mxu0
      %v989 = vadd.f32 0.0, %v988
      %v990 = vpop.f32.mrb[0].mxu0
      %v991 = vpop.f32.mrb[0].mxu0
      %v992 = vadd.f32 0.0, %v991
      %v993 = vpop.f32.mrb[0].mxu0
      %994 = vmatprep.mubr.bf16.mxu0 0
      %995 = vmatmul.mubr.bf16.gmra.mrb[0].mxu0 %v886
      %v996 = vpop.f32.mrb[0].mxu0
      %v997 = vadd.f32 0.0, %v996
      %v998 = vpop.f32.mrb[0].mxu0
      %v999 = vpop.f32.mrb[0].mxu0
      %v1000 = vadd.f32 0.0, %v999
      %v1001 = vpop.f32.mrb[0].mxu0
      %1002 = vmatprep.mubr.bf16.mxu0 0
      %1003 = vmatmul.mubr.bf16.gmra.mrb[0].mxu0 %v889
      %v1004 = vpop.f32.mrb[0].mxu0
      %v1005 = vadd.f32 0.0, %v1004
      %v1006 = vpop.f32.mrb[0].mxu0
      %v1007 = vpop.f32.mrb[0].mxu0
      %v1008 = vadd.f32 0.0, %v1007
      %v1009 = vpop.f32.mrb[0].mxu0
      %1010 = vmatprep.mubr.bf16.mxu0 0
      %1011 = vmatmul.mubr.bf16.gmra.mrb[0].mxu0 %v892
      %v1012 = vpop.f32.mrb[0].mxu0
      %v1013 = vadd.f32 0.0, %v1012
      %v1014 = vpop.f32.mrb[0].mxu0
      %v1015 = vpop.f32.mrb[0].mxu0
      %v1016 = vadd.f32 0.0, %v1015
      %v1017 = vpop.f32.mrb[0].mxu0
      %1018 = vmatprep.mubr.bf16.mxu0 0
      %1019 = vmatmul.mubr.bf16.gmra.mrb[0].mxu0 %v895
      %v1020 = vpop.f32.mrb[0].mxu0
      %v1021 = vadd.f32 0.0, %v1020
      %v1022 = vpop.f32.mrb[0].mxu0
      %v1023 = vpop.f32.mrb[0].mxu0
      %v1024 = vadd.f32 0.0, %v1023
      %v1025 = vpop.f32.mrb[0].mxu0
      %1026 = vmatprep.mubr.bf16.mxu0 0
      %1027 = vmatmul.mubr.bf16.gmra.mrb[0].mxu0 %v898
      %v1028 = vpop.f32.mrb[0].mxu0
      %v1029 = vadd.f32 0.0, %v1028
      %v1030 = vpop.f32.mrb[0].mxu0
      %v1031 = vpop.f32.mrb[0].mxu0
      %v1032 = vadd.f32 0.0, %v1031
      %v1033 = vpop.f32.mrb[0].mxu0
      %1034 = vmatprep.mubr.bf16.mxu0 0
      %1035 = vmatmul.mubr.bf16.gmra.mrb[0].mxu0 %v901
      %v1036 = vpop.f32.mrb[0].mxu0
      %v1037 = vadd.f32 0.0, %v1036
      %v1038 = vpop.f32.mrb[0].mxu0
      %v1039 = vpop.f32.mrb[0].mxu0
      %v1040 = vadd.f32 0.0, %v1039
      %v1041 = vpop.f32.mrb[0].mxu0
      %1042 = vmatprep.mubr.bf16.mxu0 0
      %1043 = vmatmul.mubr.bf16.gmra.mrb[0].mxu0 %v904
      %v1044 = vpop.f32.mrb[0].mxu0
      %v1045 = vadd.f32 0.0, %v1044
      %v1046 = vpop.f32.mrb[0].mxu0
      %v1047 = vpop.f32.mrb[0].mxu0
      %v1048 = vadd.f32 0.0, %v1047
      %v1049 = vpop.f32.mrb[0].mxu0
      %1050 = vmatprep.mubr.bf16.mxu0 0
      %1051 = vmatmul.mubr.bf16.gmra.mrb[0].mxu0 %v907
      %v1052 = vpop.f32.mrb[0].mxu0
      %v1053 = vadd.f32 0.0, %v1052
      %v1054 = vpop.f32.mrb[0].mxu0
      %v1055 = vpop.f32.mrb[0].mxu0
      %v1056 = vadd.f32 0.0, %v1055
      %v1057 = vpop.f32.mrb[0].mxu0
      %1058 = vmatprep.mubr.bf16.mxu0 0
      %1059 = vmatmul.mubr.bf16.gmra.mrb[0].mxu0 %v910
      %v1060 = vpop.f32.mrb[0].mxu0
      %v1061 = vadd.f32 0.0, %v1060
      %v1062 = vpop.f32.mrb[0].mxu0
      %v1063 = vpop.f32.mrb[0].mxu0
      %v1064 = vadd.f32 0.0, %v1063
      %v1065 = vpop.f32.mrb[0].mxu0
      %1066 = vmatprep.mubr.bf16.mxu0 0
      %1067 = vmatmul.mubr.bf16.gmra.mrb[0].mxu0 %v913
      %v1068 = vpop.f32.mrb[0].mxu0
      %v1069 = vadd.f32 0.0, %v1068
      %v1070 = vpop.f32.mrb[0].mxu0
      %v1071 = vpop.f32.mrb[0].mxu0
      %v1072 = vadd.f32 0.0, %v1071
      %v1073 = vpop.f32.mrb[0].mxu0
      %1074 = vmatprep.mubr.bf16.mxu0 0
      %1075 = vmatmul.mubr.bf16.gmra.mrb[0].mxu0 %v916
      %v1076 = vpop.f32.mrb[0].mxu0
      %v1077 = vadd.f32 0.0, %v1076
      %v1078 = vpop.f32.mrb[0].mxu0
      %v1079 = vpop.f32.mrb[0].mxu0
      %v1080 = vadd.f32 0.0, %v1079
      %v1081 = vpop.f32.mrb[0].mxu0
      %1082 = vdwg.mxu0
      %v1083 = vsel %vm869, %v637, 0
      %v1085 = vsel %vm869, %v639, 0
      %v1087 = vsel %vm869, %v641, 0
      %v1089 = vsel %vm869, %v643, 0
      %v1091 = vsel %vm869, %v645, 0
      %v1093 = vsel %vm869, %v647, 0
      %v1095 = vsel %vm869, %v649, 0
      %v1097 = vsel %vm869, %v651, 0
      %v1099 = vsel %vm869, %v653, 0
      %v1101 = vsel %vm869, %v655, 0
      %v1103 = vsel %vm869, %v657, 0
      %v1105 = vsel %vm869, %v659, 0
      %v1107 = vsel %vm869, %v661, 0
      %v1109 = vsel %vm869, %v663, 0
      %v1111 = vsel %vm869, %v665, 0
      %v1113 = vsel %vm869, %v667, 0
      %v1116 = vsel %vm918, %v673, 0
      %1118 = vmatprep.subr.bf16.mxu0 0
      %1119 = vmatpush1.bf16.msra.mxu0 %v1116
      %1120 = vmatprep.subr.bf16.mxu0 0
      %1121 = vmatpush1.bf16.msra.mxu0 0
      %1122 = vmatprep.subr.bf16.mxu0 0
      %1123 = vmatpush1.bf16.msra.mxu0 0
      %1124 = vmatprep.subr.bf16.mxu0 0
      %1125 = vmatpush1.bf16.msra.mxu0 0
      %1126 = vmatprep.subr.bf16.mxu0 0
      %1127 = vmatpush1.bf16.msra.mxu0 0
      %1128 = vmatprep.subr.bf16.mxu0 0
      %1129 = vmatpush1.bf16.msra.mxu0 0
      %1130 = vmatprep.subr.bf16.mxu0 0
      %1131 = vmatpush1.bf16.msra.mxu0 0
      %1132 = vmatprep.subr.bf16.mxu0 0
      %1133 = vmatpush1.bf16.msra.mxu0 0
      %1134 = vmatprep.subr.bf16.mxu0 0
      %1135 = vmatpush1.bf16.msra.mxu0 0
      %1136 = vmatprep.subr.bf16.mxu0 0
      %1137 = vmatpush1.bf16.msra.mxu0 0
      %1138 = vmatprep.subr.bf16.mxu0 0
      %1139 = vmatpush1.bf16.msra.mxu0 0
      %1140 = vmatprep.subr.bf16.mxu0 0
      %1141 = vmatpush1.bf16.msra.mxu0 0
      %1142 = vmatprep.subr.bf16.mxu0 0
      %1143 = vmatpush1.bf16.msra.mxu0 0
      %1144 = vmatprep.subr.bf16.mxu0 0
      %1145 = vmatpush1.bf16.msra.mxu0 0
      %1146 = vmatprep.subr.bf16.mxu0 0
      %1147 = vmatpush1.bf16.msra.mxu0 0
      %1148 = vmatprep.subr.bf16.mxu0 0
      %1149 = vmatpush1.bf16.msra.mxu0 0
      %1150 = vmatprep.mubr.bf16.mxu0 0
      %1151 = vmatmul.mubr.bf16.gmra.mrb[0].mxu0 %v1083
      %v1152 = vpop.f32.mrb[0].mxu0
      %v1153 = vadd.f32 %v957, %v1152
      %v1154 = vpop.f32.mrb[0].mxu0
      %v1155 = vpop.f32.mrb[0].mxu0
      %v1156 = vadd.f32 %v960, %v1155
      %v1157 = vpop.f32.mrb[0].mxu0
      %1158 = vmatprep.mubr.bf16.mxu0 0
      %1159 = vmatmul.mubr.bf16.gmra.mrb[0].mxu0 %v1085
      %v1160 = vpop.f32.mrb[0].mxu0
      %v1161 = vadd.f32 %v965, %v1160
      %v1162 = vpop.f32.mrb[0].mxu0
      %v1163 = vpop.f32.mrb[0].mxu0
      %v1164 = vadd.f32 %v968, %v1163
      %v1165 = vpop.f32.mrb[0].mxu0
      %1166 = vmatprep.mubr.bf16.mxu0 0
      %1167 = vmatmul.mubr.bf16.gmra.mrb[0].mxu0 %v1087
      %v1168 = vpop.f32.mrb[0].mxu0
      %v1169 = vadd.f32 %v973, %v1168
      %v1170 = vpop.f32.mrb[0].mxu0
      %v1171 = vpop.f32.mrb[0].mxu0
      %v1172 = vadd.f32 %v976, %v1171
      %v1173 = vpop.f32.mrb[0].mxu0
      %1174 = vmatprep.mubr.bf16.mxu0 0
      %1175 = vmatmul.mubr.bf16.gmra.mrb[0].mxu0 %v1089
      %v1176 = vpop.f32.mrb[0].mxu0
      %v1177 = vadd.f32 %v981, %v1176
      %v1178 = vpop.f32.mrb[0].mxu0
      %v1179 = vpop.f32.mrb[0].mxu0
      %v1180 = vadd.f32 %v984, %v1179
      %v1181 = vpop.f32.mrb[0].mxu0
      %1182 = vmatprep.mubr.bf16.mxu0 0
      %1183 = vmatmul.mubr.bf16.gmra.mrb[0].mxu0 %v1091
      %v1184 = vpop.f32.mrb[0].mxu0
      %v1185 = vadd.f32 %v989, %v1184
      %v1186 = vpop.f32.mrb[0].mxu0
      %v1187 = vpop.f32.mrb[0].mxu0
      %v1188 = vadd.f32 %v992, %v1187
      %v1189 = vpop.f32.mrb[0].mxu0
      %1190 = vmatprep.mubr.bf16.mxu0 0
      %1191 = vmatmul.mubr.bf16.gmra.mrb[0].mxu0 %v1093
      %v1192 = vpop.f32.mrb[0].mxu0
      %v1193 = vadd.f32 %v997, %v1192
      %v1194 = vpop.f32.mrb[0].mxu0
      %v1195 = vpop.f32.mrb[0].mxu0
      %v1196 = vadd.f32 %v1000, %v1195
      %v1197 = vpop.f32.mrb[0].mxu0
      %1198 = vmatprep.mubr.bf16.mxu0 0
      %1199 = vmatmul.mubr.bf16.gmra.mrb[0].mxu0 %v1095
      %v1200 = vpop.f32.mrb[0].mxu0
      %v1201 = vadd.f32 %v1005, %v1200
      %v1202 = vpop.f32.mrb[0].mxu0
      %v1203 = vpop.f32.mrb[0].mxu0
      %v1204 = vadd.f32 %v1008, %v1203
      %v1205 = vpop.f32.mrb[0].mxu0
      %1206 = vmatprep.mubr.bf16.mxu0 0
      %1207 = vmatmul.mubr.bf16.gmra.mrb[0].mxu0 %v1097
      %v1208 = vpop.f32.mrb[0].mxu0
      %v1209 = vadd.f32 %v1013, %v1208
      %v1210 = vpop.f32.mrb[0].mxu0
      %v1211 = vpop.f32.mrb[0].mxu0
      %v1212 = vadd.f32 %v1016, %v1211
      %v1213 = vpop.f32.mrb[0].mxu0
      %1214 = vmatprep.mubr.bf16.mxu0 0
      %1215 = vmatmul.mubr.bf16.gmra.mrb[0].mxu0 %v1099
      %v1216 = vpop.f32.mrb[0].mxu0
      %v1217 = vadd.f32 %v1021, %v1216
      %v1218 = vpop.f32.mrb[0].mxu0
      %v1219 = vpop.f32.mrb[0].mxu0
      %v1220 = vadd.f32 %v1024, %v1219
      %v1221 = vpop.f32.mrb[0].mxu0
      %1222 = vmatprep.mubr.bf16.mxu0 0
      %1223 = vmatmul.mubr.bf16.gmra.mrb[0].mxu0 %v1101
      %v1224 = vpop.f32.mrb[0].mxu0
      %v1225 = vadd.f32 %v1029, %v1224
      %v1226 = vpop.f32.mrb[0].mxu0
      %v1227 = vpop.f32.mrb[0].mxu0
      %v1228 = vadd.f32 %v1032, %v1227
      %v1229 = vpop.f32.mrb[0].mxu0
      %1230 = vmatprep.mubr.bf16.mxu0 0
      %1231 = vmatmul.mubr.bf16.gmra.mrb[0].mxu0 %v1103
      %v1232 = vpop.f32.mrb[0].mxu0
      %v1233 = vadd.f32 %v1037, %v1232
      %v1234 = vpop.f32.mrb[0].mxu0
      %v1235 = vpop.f32.mrb[0].mxu0
      %v1236 = vadd.f32 %v1040, %v1235
      %v1237 = vpop.f32.mrb[0].mxu0
      %1238 = vmatprep.mubr.bf16.mxu0 0
      %1239 = vmatmul.mubr.bf16.gmra.mrb[0].mxu0 %v1105
      %v1240 = vpop.f32.mrb[0].mxu0
      %v1241 = vadd.f32 %v1045, %v1240
      %v1242 = vpop.f32.mrb[0].mxu0
      %v1243 = vpop.f32.mrb[0].mxu0
      %v1244 = vadd.f32 %v1048, %v1243
      %v1245 = vpop.f32.mrb[0].mxu0
      %1246 = vmatprep.mubr.bf16.mxu0 0
      %1247 = vmatmul.mubr.bf16.gmra.mrb[0].mxu0 %v1107
      %v1248 = vpop.f32.mrb[0].mxu0
      %v1249 = vadd.f32 %v1053, %v1248
      %v1250 = vpop.f32.mrb[0].mxu0
      %v1251 = vpop.f32.mrb[0].mxu0
      %v1252 = vadd.f32 %v1056, %v1251
      %v1253 = vpop.f32.mrb[0].mxu0
      %1254 = vmatprep.mubr.bf16.mxu0 0
      %1255 = vmatmul.mubr.bf16.gmra.mrb[0].mxu0 %v1109
      %v1256 = vpop.f32.mrb[0].mxu0
      %v1257 = vadd.f32 %v1061, %v1256
      %v1258 = vpop.f32.mrb[0].mxu0
      %v1259 = vpop.f32.mrb[0].mxu0
      %v1260 = vadd.f32 %v1064, %v1259
      %v1261 = vpop.f32.mrb[0].mxu0
      %1262 = vmatprep.mubr.bf16.mxu0 0
      %1263 = vmatmul.mubr.bf16.gmra.mrb[0].mxu0 %v1111
      %v1264 = vpop.f32.mrb[0].mxu0
      %v1265 = vadd.f32 %v1069, %v1264
      %v1266 = vpop.f32.mrb[0].mxu0
      %v1267 = vpop.f32.mrb[0].mxu0
      %v1268 = vadd.f32 %v1072, %v1267
      %v1269 = vpop.f32.mrb[0].mxu0
      %1270 = vmatprep.mubr.bf16.mxu0 0
      %1271 = vmatmul.mubr.bf16.gmra.mrb[0].mxu0 %v1113
      %v1272 = vpop.f32.mrb[0].mxu0
      %v1273 = vadd.f32 %v1077, %v1272
      %v1274 = vpop.f32.mrb[0].mxu0
      %v1275 = vpop.f32.mrb[0].mxu0
      %v1276 = vadd.f32 %v1080, %v1275
      %v1277 = vpop.f32.mrb[0].mxu0
      %1278 = vdwg.mxu0
      %vm1311 = vcmask 1046528
      %v1312 = vrot.slane %v637, 1
      %v1313 = vrot.slane %v638, 1
      %v1314 = vsel %vm1311, %v1312, %v1313
      %v1315 = vrot.slane %v639, 1
      %v1316 = vrot.slane %v640, 1
      %v1317 = vsel %vm1311, %v1315, %v1316
      %v1318 = vrot.slane %v641, 1
      %v1319 = vrot.slane %v642, 1
      %v1320 = vsel %vm1311, %v1318, %v1319
      %v1321 = vrot.slane %v643, 1
      %v1322 = vrot.slane %v644, 1
      %v1323 = vsel %vm1311, %v1321, %v1322
      %v1324 = vrot.slane %v645, 1
      %v1325 = vrot.slane %v646, 1
      %v1326 = vsel %vm1311, %v1324, %v1325
      %v1327 = vrot.slane %v647, 1
      %v1328 = vrot.slane %v648, 1
      %v1329 = vsel %vm1311, %v1327, %v1328
      %v1330 = vrot.slane %v649, 1
      %v1331 = vrot.slane %v650, 1
      %v1332 = vsel %vm1311, %v1330, %v1331
      %v1333 = vrot.slane %v651, 1
      %v1334 = vrot.slane %v652, 1
      %v1335 = vsel %vm1311, %v1333, %v1334
      %v1336 = vrot.slane %v653, 1
      %v1337 = vrot.slane %v654, 1
      %v1338 = vsel %vm1311, %v1336, %v1337
      %v1339 = vrot.slane %v655, 1
      %v1340 = vrot.slane %v656, 1
      %v1341 = vsel %vm1311, %v1339, %v1340
      %v1342 = vrot.slane %v657, 1
      %v1343 = vrot.slane %v658, 1
      %v1344 = vsel %vm1311, %v1342, %v1343
      %v1345 = vrot.slane %v659, 1
      %v1346 = vrot.slane %v660, 1
      %v1347 = vsel %vm1311, %v1345, %v1346
      %v1348 = vrot.slane %v661, 1
      %v1349 = vrot.slane %v662, 1
      %v1350 = vsel %vm1311, %v1348, %v1349
      %v1351 = vrot.slane %v663, 1
      %v1352 = vrot.slane %v664, 1
      %v1353 = vsel %vm1311, %v1351, %v1352
      %v1354 = vrot.slane %v665, 1
      %v1355 = vrot.slane %v666, 1
      %v1356 = vsel %vm1311, %v1354, %v1355
      %v1357 = vrot.slane %v667, 1
      %v1358 = vrot.slane %v668, 1
      %v1359 = vsel %vm1311, %v1357, %v1358
      %s1360 = scalar_lea.vmem %s3, 8
      %v1361 = vld [vmem:[%s1360] sm:$0xf]
      %v1363 = vsel %vm869, %v1314, 0
      %v1366 = vsel %vm869, %v1317, 0
      %v1369 = vsel %vm869, %v1320, 0
      %v1372 = vsel %vm869, %v1323, 0
      %v1375 = vsel %vm869, %v1326, 0
      %v1378 = vsel %vm869, %v1329, 0
      %v1381 = vsel %vm869, %v1332, 0
      %v1384 = vsel %vm869, %v1335, 0
      %v1387 = vsel %vm869, %v1338, 0
      %v1390 = vsel %vm869, %v1341, 0
      %v1393 = vsel %vm869, %v1344, 0
      %v1396 = vsel %vm869, %v1347, 0
      %v1399 = vsel %vm869, %v1350, 0
      %v1402 = vsel %vm869, %v1353, 0
      %v1405 = vsel %vm869, %v1356, 0
      %v1408 = vsel %vm869, %v1359, 0
      %v1411 = vsel %vm918, %v1361, 0
      %1413 = vmatprep.subr.bf16.mxu0 0
      %1414 = vmatpush1.bf16.msra.mxu0 %v1411
      %1415 = vmatprep.subr.bf16.mxu0 0
      %1416 = vmatpush1.bf16.msra.mxu0 0
      %1417 = vmatprep.subr.bf16.mxu0 0
      %1418 = vmatpush1.bf16.msra.mxu0 0
      %1419 = vmatprep.subr.bf16.mxu0 0
      %1420 = vmatpush1.bf16.msra.mxu0 0
      %1421 = vmatprep.subr.bf16.mxu0 0
      %1422 = vmatpush1.bf16.msra.mxu0 0
      %1423 = vmatprep.subr.bf16.mxu0 0
      %1424 = vmatpush1.bf16.msra.mxu0 0
      %1425 = vmatprep.subr.bf16.mxu0 0
      %1426 = vmatpush1.bf16.msra.mxu0 0
      %1427 = vmatprep.subr.bf16.mxu0 0
      %1428 = vmatpush1.bf16.msra.mxu0 0
      %1429 = vmatprep.subr.bf16.mxu0 0
      %1430 = vmatpush1.bf16.msra.mxu0 0
      %1431 = vmatprep.subr.bf16.mxu0 0
      %1432 = vmatpush1.bf16.msra.mxu0 0
      %1433 = vmatprep.subr.bf16.mxu0 0
      %1434 = vmatpush1.bf16.msra.mxu0 0
      %1435 = vmatprep.subr.bf16.mxu0 0
      %1436 = vmatpush1.bf16.msra.mxu0 0
      %1437 = vmatprep.subr.bf16.mxu0 0
      %1438 = vmatpush1.bf16.msra.mxu0 0
      %1439 = vmatprep.subr.bf16.mxu0 0
      %1440 = vmatpush1.bf16.msra.mxu0 0
      %1441 = vmatprep.subr.bf16.mxu0 0
      %1442 = vmatpush1.bf16.msra.mxu0 0
      %1443 = vmatprep.subr.bf16.mxu0 0
      %1444 = vmatpush1.bf16.msra.mxu0 0
      %1445 = vmatprep.mubr.bf16.mxu0 0
      %1446 = vmatmul.mubr.bf16.gmra.mrb[0].mxu0 %v1363
      %v1447 = vpop.f32.mrb[0].mxu0
      %v1448 = vadd.f32 0.0, %v1447
      %v1449 = vpop.f32.mrb[0].mxu0
      %v1450 = vpop.f32.mrb[0].mxu0
      %v1451 = vadd.f32 0.0, %v1450
      %v1452 = vpop.f32.mrb[0].mxu0
      %1453 = vmatprep.mubr.bf16.mxu0 0
      %1454 = vmatmul.mubr.bf16.gmra.mrb[0].mxu0 %v1366
      %v1455 = vpop.f32.mrb[0].mxu0
      %v1456 = vadd.f32 0.0, %v1455
      %v1457 = vpop.f32.mrb[0].mxu0
      %v1458 = vpop.f32.mrb[0].mxu0
      %v1459 = vadd.f32 0.0, %v1458
      %v1460 = vpop.f32.mrb[0].mxu0
      %1461 = vmatprep.mubr.bf16.mxu0 0
      %1462 = vmatmul.mubr.bf16.gmra.mrb[0].mxu0 %v1369
      %v1463 = vpop.f32.mrb[0].mxu0
      %v1464 = vadd.f32 0.0, %v1463
      %v1465 = vpop.f32.mrb[0].mxu0
      %v1466 = vpop.f32.mrb[0].mxu0
      %v1467 = vadd.f32 0.0, %v1466
      %v1468 = vpop.f32.mrb[0].mxu0
      %1469 = vmatprep.mubr.bf16.mxu0 0
      %1470 = vmatmul.mubr.bf16.gmra.mrb[0].mxu0 %v1372
      %v1471 = vpop.f32.mrb[0].mxu0
      %v1472 = vadd.f32 0.0, %v1471
      %v1473 = vpop.f32.mrb[0].mxu0
      %v1474 = vpop.f32.mrb[0].mxu0
      %v1475 = vadd.f32 0.0, %v1474
      %v1476 = vpop.f32.mrb[0].mxu0
      %1477 = vmatprep.mubr.bf16.mxu0 0
      %1478 = vmatmul.mubr.bf16.gmra.mrb[0].mxu0 %v1375
      %v1479 = vpop.f32.mrb[0].mxu0
      %v1480 = vadd.f32 0.0, %v1479
      %v1481 = vpop.f32.mrb[0].mxu0
      %v1482 = vpop.f32.mrb[0].mxu0
      %v1483 = vadd.f32 0.0, %v1482
      %v1484 = vpop.f32.mrb[0].mxu0
      %1485 = vmatprep.mubr.bf16.mxu0 0
      %1486 = vmatmul.mubr.bf16.gmra.mrb[0].mxu0 %v1378
      %v1487 = vpop.f32.mrb[0].mxu0
      %v1488 = vadd.f32 0.0, %v1487
      %v1489 = vpop.f32.mrb[0].mxu0
      %v1490 = vpop.f32.mrb[0].mxu0
      %v1491 = vadd.f32 0.0, %v1490
      %v1492 = vpop.f32.mrb[0].mxu0
      %1493 = vmatprep.mubr.bf16.mxu0 0
      %1494 = vmatmul.mubr.bf16.gmra.mrb[0].mxu0 %v1381
      %v1495 = vpop.f32.mrb[0].mxu0
      %v1496 = vadd.f32 0.0, %v1495
      %v1497 = vpop.f32.mrb[0].mxu0
      %v1498 = vpop.f32.mrb[0].mxu0
      %v1499 = vadd.f32 0.0, %v1498
      %v1500 = vpop.f32.mrb[0].mxu0
      %1501 = vmatprep.mubr.bf16.mxu0 0
      %1502 = vmatmul.mubr.bf16.gmra.mrb[0].mxu0 %v1384
      %v1503 = vpop.f32.mrb[0].mxu0
      %v1504 = vadd.f32 0.0, %v1503
      %v1505 = vpop.f32.mrb[0].mxu0
      %v1506 = vpop.f32.mrb[0].mxu0
      %v1507 = vadd.f32 0.0, %v1506
      %v1508 = vpop.f32.mrb[0].mxu0
      %1509 = vmatprep.mubr.bf16.mxu0 0
      %1510 = vmatmul.mubr.bf16.gmra.mrb[0].mxu0 %v1387
      %v1511 = vpop.f32.mrb[0].mxu0
      %v1512 = vadd.f32 0.0, %v1511
      %v1513 = vpop.f32.mrb[0].mxu0
      %v1514 = vpop.f32.mrb[0].mxu0
      %v1515 = vadd.f32 0.0, %v1514
      %v1516 = vpop.f32.mrb[0].mxu0
      %1517 = vmatprep.mubr.bf16.mxu0 0
      %1518 = vmatmul.mubr.bf16.gmra.mrb[0].mxu0 %v1390
      %v1519 = vpop.f32.mrb[0].mxu0
      %v1520 = vadd.f32 0.0, %v1519
      %v1521 = vpop.f32.mrb[0].mxu0
      %v1522 = vpop.f32.mrb[0].mxu0
      %v1523 = vadd.f32 0.0, %v1522
      %v1524 = vpop.f32.mrb[0].mxu0
      %1525 = vmatprep.mubr.bf16.mxu0 0
      %1526 = vmatmul.mubr.bf16.gmra.mrb[0].mxu0 %v1393
      %v1527 = vpop.f32.mrb[0].mxu0
      %v1528 = vadd.f32 0.0, %v1527
      %v1529 = vpop.f32.mrb[0].mxu0
      %v1530 = vpop.f32.mrb[0].mxu0
      %v1531 = vadd.f32 0.0, %v1530
      %v1532 = vpop.f32.mrb[0].mxu0
      %1533 = vmatprep.mubr.bf16.mxu0 0
      %1534 = vmatmul.mubr.bf16.gmra.mrb[0].mxu0 %v1396
      %v1535 = vpop.f32.mrb[0].mxu0
      %v1536 = vadd.f32 0.0, %v1535
      %v1537 = vpop.f32.mrb[0].mxu0
      %v1538 = vpop.f32.mrb[0].mxu0
      %v1539 = vadd.f32 0.0, %v1538
      %v1540 = vpop.f32.mrb[0].mxu0
      %1541 = vmatprep.mubr.bf16.mxu0 0
      %1542 = vmatmul.mubr.bf16.gmra.mrb[0].mxu0 %v1399
      %v1543 = vpop.f32.mrb[0].mxu0
      %v1544 = vadd.f32 0.0, %v1543
      %v1545 = vpop.f32.mrb[0].mxu0
      %v1546 = vpop.f32.mrb[0].mxu0
      %v1547 = vadd.f32 0.0, %v1546
      %v1548 = vpop.f32.mrb[0].mxu0
      %1549 = vmatprep.mubr.bf16.mxu0 0
      %1550 = vmatmul.mubr.bf16.gmra.mrb[0].mxu0 %v1402
      %v1551 = vpop.f32.mrb[0].mxu0
      %v1552 = vadd.f32 0.0, %v1551
      %v1553 = vpop.f32.mrb[0].mxu0
      %v1554 = vpop.f32.mrb[0].mxu0
      %v1555 = vadd.f32 0.0, %v1554
      %v1556 = vpop.f32.mrb[0].mxu0
      %1557 = vmatprep.mubr.bf16.mxu0 0
      %1558 = vmatmul.mubr.bf16.gmra.mrb[0].mxu0 %v1405
      %v1559 = vpop.f32.mrb[0].mxu0
      %v1560 = vadd.f32 0.0, %v1559
      %v1561 = vpop.f32.mrb[0].mxu0
      %v1562 = vpop.f32.mrb[0].mxu0
      %v1563 = vadd.f32 0.0, %v1562
      %v1564 = vpop.f32.mrb[0].mxu0
      %1565 = vmatprep.mubr.bf16.mxu0 0
      %1566 = vmatmul.mubr.bf16.gmra.mrb[0].mxu0 %v1408
      %v1567 = vpop.f32.mrb[0].mxu0
      %v1568 = vadd.f32 0.0, %v1567
      %v1569 = vpop.f32.mrb[0].mxu0
      %v1570 = vpop.f32.mrb[0].mxu0
      %v1571 = vadd.f32 0.0, %v1570
      %v1572 = vpop.f32.mrb[0].mxu0
      %1573 = vdwg.mxu0
      %v1574 = vadd.f32 %v1153, %v1448
      %v1575 = vadd.f32 %v1156, %v1451
      %v1576 = vadd.f32 %v1161, %v1456
      %v1577 = vadd.f32 %v1164, %v1459
      %v1578 = vadd.f32 %v1169, %v1464
      %v1579 = vadd.f32 %v1172, %v1467
      %v1580 = vadd.f32 %v1177, %v1472
      %v1581 = vadd.f32 %v1180, %v1475
      %v1582 = vadd.f32 %v1185, %v1480
      %v1583 = vadd.f32 %v1188, %v1483
      %v1584 = vadd.f32 %v1193, %v1488
      %v1585 = vadd.f32 %v1196, %v1491
      %v1586 = vadd.f32 %v1201, %v1496
      %v1587 = vadd.f32 %v1204, %v1499
      %v1588 = vadd.f32 %v1209, %v1504
      %v1589 = vadd.f32 %v1212, %v1507
      %v1590 = vadd.f32 %v1217, %v1512
      %v1591 = vadd.f32 %v1220, %v1515
      %v1592 = vadd.f32 %v1225, %v1520
      %v1593 = vadd.f32 %v1228, %v1523
      %v1594 = vadd.f32 %v1233, %v1528
      %v1595 = vadd.f32 %v1236, %v1531
      %v1596 = vadd.f32 %v1241, %v1536
      %v1597 = vadd.f32 %v1244, %v1539
      %v1598 = vadd.f32 %v1249, %v1544
      %v1599 = vadd.f32 %v1252, %v1547
      %v1600 = vadd.f32 %v1257, %v1552
      %v1601 = vadd.f32 %v1260, %v1555
      %v1602 = vadd.f32 %v1265, %v1560
      %v1603 = vadd.f32 %v1268, %v1563
      %v1604 = vadd.f32 %v1273, %v1568
      %v1605 = vadd.f32 %v1276, %v1571
      %s1606 = scalar_lea.vmem %s3, 12
      %v1607 = vld [vmem:[%s1606] sm:$0xf]
      %v1609 = vsel %vm869, %v669, 0
      %v1612 = vsel %vm918, %v1607, 0
      %1614 = vmatprep.subr.bf16.mxu0 0
      %1615 = vmatpush1.bf16.msra.mxu0 %v1612
      %1616 = vmatprep.subr.bf16.mxu0 0
      %1617 = vmatpush1.bf16.msra.mxu0 0
      %1618 = vmatprep.subr.bf16.mxu0 0
      %1619 = vmatpush1.bf16.msra.mxu0 0
      %1620 = vmatprep.subr.bf16.mxu0 0
      %1621 = vmatpush1.bf16.msra.mxu0 0
      %1622 = vmatprep.subr.bf16.mxu0 0
      %1623 = vmatpush1.bf16.msra.mxu0 0
      %1624 = vmatprep.subr.bf16.mxu0 0
      %1625 = vmatpush1.bf16.msra.mxu0 0
      %1626 = vmatprep.subr.bf16.mxu0 0
      %1627 = vmatpush1.bf16.msra.mxu0 0
      %1628 = vmatprep.subr.bf16.mxu0 0
      %1629 = vmatpush1.bf16.msra.mxu0 0
      %1630 = vmatprep.subr.bf16.mxu0 0
      %1631 = vmatpush1.bf16.msra.mxu0 0
      %1632 = vmatprep.subr.bf16.mxu0 0
      %1633 = vmatpush1.bf16.msra.mxu0 0
      %1634 = vmatprep.subr.bf16.mxu0 0
      %1635 = vmatpush1.bf16.msra.mxu0 0
      %1636 = vmatprep.subr.bf16.mxu0 0
      %1637 = vmatpush1.bf16.msra.mxu0 0
      %1638 = vmatprep.subr.bf16.mxu0 0
      %1639 = vmatpush1.bf16.msra.mxu0 0
      %1640 = vmatprep.subr.bf16.mxu0 0
      %1641 = vmatpush1.bf16.msra.mxu0 0
      %1642 = vmatprep.subr.bf16.mxu0 0
      %1643 = vmatpush1.bf16.msra.mxu0 0
      %1644 = vmatprep.subr.bf16.mxu0 0
      %1645 = vmatpush1.bf16.msra.mxu0 0
      %1646 = vmatprep.mubr.bf16.mxu0 0
      %1647 = vmatmul.mubr.bf16.gmra.mrb[0].mxu0 %v1085
      %v1648 = vpop.f32.mrb[0].mxu0
      %v1649 = vadd.f32 0.0, %v1648
      %v1650 = vpop.f32.mrb[0].mxu0
      %v1651 = vpop.f32.mrb[0].mxu0
      %v1652 = vadd.f32 0.0, %v1651
      %v1653 = vpop.f32.mrb[0].mxu0
      %1654 = vmatprep.mubr.bf16.mxu0 0
      %1655 = vmatmul.mubr.bf16.gmra.mrb[0].mxu0 %v1087
      %v1656 = vpop.f32.mrb[0].mxu0
      %v1657 = vadd.f32 0.0, %v1656
      %v1658 = vpop.f32.mrb[0].mxu0
      %v1659 = vpop.f32.mrb[0].mxu0
      %v1660 = vadd.f32 0.0, %v1659
      %v1661 = vpop.f32.mrb[0].mxu0
      %1662 = vmatprep.mubr.bf16.mxu0 0
      %1663 = vmatmul.mubr.bf16.gmra.mrb[0].mxu0 %v1089
      %v1664 = vpop.f32.mrb[0].mxu0
      %v1665 = vadd.f32 0.0, %v1664
      %v1666 = vpop.f32.mrb[0].mxu0
      %v1667 = vpop.f32.mrb[0].mxu0
      %v1668 = vadd.f32 0.0, %v1667
      %v1669 = vpop.f32.mrb[0].mxu0
      %1670 = vmatprep.mubr.bf16.mxu0 0
      %1671 = vmatmul.mubr.bf16.gmra.mrb[0].mxu0 %v1091
      %v1672 = vpop.f32.mrb[0].mxu0
      %v1673 = vadd.f32 0.0, %v1672
      %v1674 = vpop.f32.mrb[0].mxu0
      %v1675 = vpop.f32.mrb[0].mxu0
      %v1676 = vadd.f32 0.0, %v1675
      %v1677 = vpop.f32.mrb[0].mxu0
      %1678 = vmatprep.mubr.bf16.mxu0 0
      %1679 = vmatmul.mubr.bf16.gmra.mrb[0].mxu0 %v1093
      %v1680 = vpop.f32.mrb[0].mxu0
      %v1681 = vadd.f32 0.0, %v1680
      %v1682 = vpop.f32.mrb[0].mxu0
      %v1683 = vpop.f32.mrb[0].mxu0
      %v1684 = vadd.f32 0.0, %v1683
      %v1685 = vpop.f32.mrb[0].mxu0
      %1686 = vmatprep.mubr.bf16.mxu0 0
      %1687 = vmatmul.mubr.bf16.gmra.mrb[0].mxu0 %v1095
      %v1688 = vpop.f32.mrb[0].mxu0
      %v1689 = vadd.f32 0.0, %v1688
      %v1690 = vpop.f32.mrb[0].mxu0
      %v1691 = vpop.f32.mrb[0].mxu0
      %v1692 = vadd.f32 0.0, %v1691
      %v1693 = vpop.f32.mrb[0].mxu0
      %1694 = vmatprep.mubr.bf16.mxu0 0
      %1695 = vmatmul.mubr.bf16.gmra.mrb[0].mxu0 %v1097
      %v1696 = vpop.f32.mrb[0].mxu0
      %v1697 = vadd.f32 0.0, %v1696
      %v1698 = vpop.f32.mrb[0].mxu0
      %v1699 = vpop.f32.mrb[0].mxu0
      %v1700 = vadd.f32 0.0, %v1699
      %v1701 = vpop.f32.mrb[0].mxu0
      %1702 = vmatprep.mubr.bf16.mxu0 0
      %1703 = vmatmul.mubr.bf16.gmra.mrb[0].mxu0 %v1099
      %v1704 = vpop.f32.mrb[0].mxu0
      %v1705 = vadd.f32 0.0, %v1704
      %v1706 = vpop.f32.mrb[0].mxu0
      %v1707 = vpop.f32.mrb[0].mxu0
      %v1708 = vadd.f32 0.0, %v1707
      %v1709 = vpop.f32.mrb[0].mxu0
      %1710 = vmatprep.mubr.bf16.mxu0 0
      %1711 = vmatmul.mubr.bf16.gmra.mrb[0].mxu0 %v1101
      %v1712 = vpop.f32.mrb[0].mxu0
      %v1713 = vadd.f32 0.0, %v1712
      %v1714 = vpop.f32.mrb[0].mxu0
      %v1715 = vpop.f32.mrb[0].mxu0
      %v1716 = vadd.f32 0.0, %v1715
      %v1717 = vpop.f32.mrb[0].mxu0
      %1718 = vmatprep.mubr.bf16.mxu0 0
      %1719 = vmatmul.mubr.bf16.gmra.mrb[0].mxu0 %v1103
      %v1720 = vpop.f32.mrb[0].mxu0
      %v1721 = vadd.f32 0.0, %v1720
      %v1722 = vpop.f32.mrb[0].mxu0
      %v1723 = vpop.f32.mrb[0].mxu0
      %v1724 = vadd.f32 0.0, %v1723
      %v1725 = vpop.f32.mrb[0].mxu0
      %1726 = vmatprep.mubr.bf16.mxu0 0
      %1727 = vmatmul.mubr.bf16.gmra.mrb[0].mxu0 %v1105
      %v1728 = vpop.f32.mrb[0].mxu0
      %v1729 = vadd.f32 0.0, %v1728
      %v1730 = vpop.f32.mrb[0].mxu0
      %v1731 = vpop.f32.mrb[0].mxu0
      %v1732 = vadd.f32 0.0, %v1731
      %v1733 = vpop.f32.mrb[0].mxu0
      %1734 = vmatprep.mubr.bf16.mxu0 0
      %1735 = vmatmul.mubr.bf16.gmra.mrb[0].mxu0 %v1107
      %v1736 = vpop.f32.mrb[0].mxu0
      %v1737 = vadd.f32 0.0, %v1736
      %v1738 = vpop.f32.mrb[0].mxu0
      %v1739 = vpop.f32.mrb[0].mxu0
      %v1740 = vadd.f32 0.0, %v1739
      %v1741 = vpop.f32.mrb[0].mxu0
      %1742 = vmatprep.mubr.bf16.mxu0 0
      %1743 = vmatmul.mubr.bf16.gmra.mrb[0].mxu0 %v1109
      %v1744 = vpop.f32.mrb[0].mxu0
      %v1745 = vadd.f32 0.0, %v1744
      %v1746 = vpop.f32.mrb[0].mxu0
      %v1747 = vpop.f32.mrb[0].mxu0
      %v1748 = vadd.f32 0.0, %v1747
      %v1749 = vpop.f32.mrb[0].mxu0
      %1750 = vmatprep.mubr.bf16.mxu0 0
      %1751 = vmatmul.mubr.bf16.gmra.mrb[0].mxu0 %v1111
      %v1752 = vpop.f32.mrb[0].mxu0
      %v1753 = vadd.f32 0.0, %v1752
      %v1754 = vpop.f32.mrb[0].mxu0
      %v1755 = vpop.f32.mrb[0].mxu0
      %v1756 = vadd.f32 0.0, %v1755
      %v1757 = vpop.f32.mrb[0].mxu0
      %1758 = vmatprep.mubr.bf16.mxu0 0
      %1759 = vmatmul.mubr.bf16.gmra.mrb[0].mxu0 %v1113
      %v1760 = vpop.f32.mrb[0].mxu0
      %v1761 = vadd.f32 0.0, %v1760
      %v1762 = vpop.f32.mrb[0].mxu0
      %v1763 = vpop.f32.mrb[0].mxu0
      %v1764 = vadd.f32 0.0, %v1763
      %v1765 = vpop.f32.mrb[0].mxu0
      %1766 = vmatprep.mubr.bf16.mxu0 0
      %1767 = vmatmul.mubr.bf16.gmra.mrb[0].mxu0 %v1609
      %v1768 = vpop.f32.mrb[0].mxu0
      %v1769 = vadd.f32 0.0, %v1768
      %v1770 = vpop.f32.mrb[0].mxu0
      %v1771 = vpop.f32.mrb[0].mxu0
      %v1772 = vadd.f32 0.0, %v1771
      %v1773 = vpop.f32.mrb[0].mxu0
      %1774 = vdwg.mxu0
      %v1775 = vadd.f32 %v1574, %v1649
      %v1776 = vadd.f32 %v1575, %v1652
      %v1777 = vadd.f32 %v1576, %v1657
      %v1778 = vadd.f32 %v1577, %v1660
      %v1779 = vadd.f32 %v1578, %v1665
      %v1780 = vadd.f32 %v1579, %v1668
      %v1781 = vadd.f32 %v1580, %v1673
      %v1782 = vadd.f32 %v1581, %v1676
      %v1783 = vadd.f32 %v1582, %v1681
      %v1784 = vadd.f32 %v1583, %v1684
      %v1785 = vadd.f32 %v1584, %v1689
      %v1786 = vadd.f32 %v1585, %v1692
      %v1787 = vadd.f32 %v1586, %v1697
      %v1788 = vadd.f32 %v1587, %v1700
      %v1789 = vadd.f32 %v1588, %v1705
      %v1790 = vadd.f32 %v1589, %v1708
      %v1791 = vadd.f32 %v1590, %v1713
      %v1792 = vadd.f32 %v1591, %v1716
      %v1793 = vadd.f32 %v1592, %v1721
      %v1794 = vadd.f32 %v1593, %v1724
      %v1795 = vadd.f32 %v1594, %v1729
      %v1796 = vadd.f32 %v1595, %v1732
      %v1797 = vadd.f32 %v1596, %v1737
      %v1798 = vadd.f32 %v1597, %v1740
      %v1799 = vadd.f32 %v1598, %v1745
      %v1800 = vadd.f32 %v1599, %v1748
      %v1801 = vadd.f32 %v1600, %v1753
      %v1802 = vadd.f32 %v1601, %v1756
      %v1803 = vadd.f32 %v1602, %v1761
      %v1804 = vadd.f32 %v1603, %v1764
      %v1805 = vadd.f32 %v1604, %v1769
      %v1806 = vadd.f32 %v1605, %v1772
      %v1807 = vshrl.u32 %v669, 16
      %v1809 = vshll.u32 %v669, 16
      %v1811 = vrot.slane %v1809, 1
      %v1812 = vor.u32 %v1807, %v1811
      %v1814 = vshll.u32 %v670, 16
      %v1816 = vrot.slane %v1814, 1
      %v1817 = vsel %vm674, %v1812, %v1816
      %s1818 = scalar_lea.vmem %s3, 16
      %v1819 = vld [vmem:[%s1818] sm:$0xf]
      %v1821 = vsel %vm869, %v1817, 0
      %v1824 = vsel %vm918, %v1819, 0
      %1826 = vmatprep.subr.bf16.mxu0 0
      %1827 = vmatpush1.bf16.msra.mxu0 %v1824
      %1828 = vmatprep.subr.bf16.mxu0 0
      %1829 = vmatpush1.bf16.msra.mxu0 0
      %1830 = vmatprep.subr.bf16.mxu0 0
      %1831 = vmatpush1.bf16.msra.mxu0 0
      %1832 = vmatprep.subr.bf16.mxu0 0
      %1833 = vmatpush1.bf16.msra.mxu0 0
      %1834 = vmatprep.subr.bf16.mxu0 0
      %1835 = vmatpush1.bf16.msra.mxu0 0
      %1836 = vmatprep.subr.bf16.mxu0 0
      %1837 = vmatpush1.bf16.msra.mxu0 0
      %1838 = vmatprep.subr.bf16.mxu0 0
      %1839 = vmatpush1.bf16.msra.mxu0 0
      %1840 = vmatprep.subr.bf16.mxu0 0
      %1841 = vmatpush1.bf16.msra.mxu0 0
      %1842 = vmatprep.subr.bf16.mxu0 0
      %1843 = vmatpush1.bf16.msra.mxu0 0
      %1844 = vmatprep.subr.bf16.mxu0 0
      %1845 = vmatpush1.bf16.msra.mxu0 0
      %1846 = vmatprep.subr.bf16.mxu0 0
      %1847 = vmatpush1.bf16.msra.mxu0 0
      %1848 = vmatprep.subr.bf16.mxu0 0
      %1849 = vmatpush1.bf16.msra.mxu0 0
      %1850 = vmatprep.subr.bf16.mxu0 0
      %1851 = vmatpush1.bf16.msra.mxu0 0
      %1852 = vmatprep.subr.bf16.mxu0 0
      %1853 = vmatpush1.bf16.msra.mxu0 0
      %1854 = vmatprep.subr.bf16.mxu0 0
      %1855 = vmatpush1.bf16.msra.mxu0 0
      %1856 = vmatprep.subr.bf16.mxu0 0
      %1857 = vmatpush1.bf16.msra.mxu0 0
      %1858 = vmatprep.mubr.bf16.mxu0 0
      %1859 = vmatmul.mubr.bf16.gmra.mrb[0].mxu0 %v874
      %v1860 = vpop.f32.mrb[0].mxu0
      %v1861 = vadd.f32 0.0, %v1860
      %v1862 = vpop.f32.mrb[0].mxu0
      %v1863 = vpop.f32.mrb[0].mxu0
      %v1864 = vadd.f32 0.0, %v1863
      %v1865 = vpop.f32.mrb[0].mxu0
      %1866 = vmatprep.mubr.bf16.mxu0 0
      %1867 = vmatmul.mubr.bf16.gmra.mrb[0].mxu0 %v877
      %v1868 = vpop.f32.mrb[0].mxu0
      %v1869 = vadd.f32 0.0, %v1868
      %v1870 = vpop.f32.mrb[0].mxu0
      %v1871 = vpop.f32.mrb[0].mxu0
      %v1872 = vadd.f32 0.0, %v1871
      %v1873 = vpop.f32.mrb[0].mxu0
      %1874 = vmatprep.mubr.bf16.mxu0 0
      %1875 = vmatmul.mubr.bf16.gmra.mrb[0].mxu0 %v880
      %v1876 = vpop.f32.mrb[0].mxu0
      %v1877 = vadd.f32 0.0, %v1876
      %v1878 = vpop.f32.mrb[0].mxu0
      %v1879 = vpop.f32.mrb[0].mxu0
      %v1880 = vadd.f32 0.0, %v1879
      %v1881 = vpop.f32.mrb[0].mxu0
      %1882 = vmatprep.mubr.bf16.mxu0 0
      %1883 = vmatmul.mubr.bf16.gmra.mrb[0].mxu0 %v883
      %v1884 = vpop.f32.mrb[0].mxu0
      %v1885 = vadd.f32 0.0, %v1884
      %v1886 = vpop.f32.mrb[0].mxu0
      %v1887 = vpop.f32.mrb[0].mxu0
      %v1888 = vadd.f32 0.0, %v1887
      %v1889 = vpop.f32.mrb[0].mxu0
      %1890 = vmatprep.mubr.bf16.mxu0 0
      %1891 = vmatmul.mubr.bf16.gmra.mrb[0].mxu0 %v886
      %v1892 = vpop.f32.mrb[0].mxu0
      %v1893 = vadd.f32 0.0, %v1892
      %v1894 = vpop.f32.mrb[0].mxu0
      %v1895 = vpop.f32.mrb[0].mxu0
      %v1896 = vadd.f32 0.0, %v1895
      %v1897 = vpop.f32.mrb[0].mxu0
      %1898 = vmatprep.mubr.bf16.mxu0 0
      %1899 = vmatmul.mubr.bf16.gmra.mrb[0].mxu0 %v889
      %v1900 = vpop.f32.mrb[0].mxu0
      %v1901 = vadd.f32 0.0, %v1900
      %v1902 = vpop.f32.mrb[0].mxu0
      %v1903 = vpop.f32.mrb[0].mxu0
      %v1904 = vadd.f32 0.0, %v1903
      %v1905 = vpop.f32.mrb[0].mxu0
      %1906 = vmatprep.mubr.bf16.mxu0 0
      %1907 = vmatmul.mubr.bf16.gmra.mrb[0].mxu0 %v892
      %v1908 = vpop.f32.mrb[0].mxu0
      %v1909 = vadd.f32 0.0, %v1908
      %v1910 = vpop.f32.mrb[0].mxu0
      %v1911 = vpop.f32.mrb[0].mxu0
      %v1912 = vadd.f32 0.0, %v1911
      %v1913 = vpop.f32.mrb[0].mxu0
      %1914 = vmatprep.mubr.bf16.mxu0 0
      %1915 = vmatmul.mubr.bf16.gmra.mrb[0].mxu0 %v895
      %v1916 = vpop.f32.mrb[0].mxu0
      %v1917 = vadd.f32 0.0, %v1916
      %v1918 = vpop.f32.mrb[0].mxu0
      %v1919 = vpop.f32.mrb[0].mxu0
      %v1920 = vadd.f32 0.0, %v1919
      %v1921 = vpop.f32.mrb[0].mxu0
      %1922 = vmatprep.mubr.bf16.mxu0 0
      %1923 = vmatmul.mubr.bf16.gmra.mrb[0].mxu0 %v898
      %v1924 = vpop.f32.mrb[0].mxu0
      %v1925 = vadd.f32 0.0, %v1924
      %v1926 = vpop.f32.mrb[0].mxu0
      %v1927 = vpop.f32.mrb[0].mxu0
      %v1928 = vadd.f32 0.0, %v1927
      %v1929 = vpop.f32.mrb[0].mxu0
      %1930 = vmatprep.mubr.bf16.mxu0 0
      %1931 = vmatmul.mubr.bf16.gmra.mrb[0].mxu0 %v901
      %v1932 = vpop.f32.mrb[0].mxu0
      %v1933 = vadd.f32 0.0, %v1932
      %v1934 = vpop.f32.mrb[0].mxu0
      %v1935 = vpop.f32.mrb[0].mxu0
      %v1936 = vadd.f32 0.0, %v1935
      %v1937 = vpop.f32.mrb[0].mxu0
      %1938 = vmatprep.mubr.bf16.mxu0 0
      %1939 = vmatmul.mubr.bf16.gmra.mrb[0].mxu0 %v904
      %v1940 = vpop.f32.mrb[0].mxu0
      %v1941 = vadd.f32 0.0, %v1940
      %v1942 = vpop.f32.mrb[0].mxu0
      %v1943 = vpop.f32.mrb[0].mxu0
      %v1944 = vadd.f32 0.0, %v1943
      %v1945 = vpop.f32.mrb[0].mxu0
      %1946 = vmatprep.mubr.bf16.mxu0 0
      %1947 = vmatmul.mubr.bf16.gmra.mrb[0].mxu0 %v907
      %v1948 = vpop.f32.mrb[0].mxu0
      %v1949 = vadd.f32 0.0, %v1948
      %v1950 = vpop.f32.mrb[0].mxu0
      %v1951 = vpop.f32.mrb[0].mxu0
      %v1952 = vadd.f32 0.0, %v1951
      %v1953 = vpop.f32.mrb[0].mxu0
      %1954 = vmatprep.mubr.bf16.mxu0 0
      %1955 = vmatmul.mubr.bf16.gmra.mrb[0].mxu0 %v910
      %v1956 = vpop.f32.mrb[0].mxu0
      %v1957 = vadd.f32 0.0, %v1956
      %v1958 = vpop.f32.mrb[0].mxu0
      %v1959 = vpop.f32.mrb[0].mxu0
      %v1960 = vadd.f32 0.0, %v1959
      %v1961 = vpop.f32.mrb[0].mxu0
      %1962 = vmatprep.mubr.bf16.mxu0 0
      %1963 = vmatmul.mubr.bf16.gmra.mrb[0].mxu0 %v913
      %v1964 = vpop.f32.mrb[0].mxu0
      %v1965 = vadd.f32 0.0, %v1964
      %v1966 = vpop.f32.mrb[0].mxu0
      %v1967 = vpop.f32.mrb[0].mxu0
      %v1968 = vadd.f32 0.0, %v1967
      %v1969 = vpop.f32.mrb[0].mxu0
      %1970 = vmatprep.mubr.bf16.mxu0 0
      %1971 = vmatmul.mubr.bf16.gmra.mrb[0].mxu0 %v916
      %v1972 = vpop.f32.mrb[0].mxu0
      %v1973 = vadd.f32 0.0, %v1972
      %v1974 = vpop.f32.mrb[0].mxu0
      %v1975 = vpop.f32.mrb[0].mxu0
      %v1976 = vadd.f32 0.0, %v1975
      %v1977 = vpop.f32.mrb[0].mxu0
      %1978 = vmatprep.mubr.bf16.mxu0 0
      %1979 = vmatmul.mubr.bf16.gmra.mrb[0].mxu0 %v1821
      %v1980 = vpop.f32.mrb[0].mxu0
      %v1981 = vadd.f32 0.0, %v1980
      %v1982 = vpop.f32.mrb[0].mxu0
      %v1983 = vpop.f32.mrb[0].mxu0
      %v1984 = vadd.f32 0.0, %v1983
      %v1985 = vpop.f32.mrb[0].mxu0
      %1986 = vdwg.mxu0
      %v1987 = vadd.f32 %v1775, %v1861
      %v1988 = vadd.f32 %v1776, %v1864
      %v1989 = vadd.f32 %v1777, %v1869
      %v1990 = vadd.f32 %v1778, %v1872
      %v1991 = vadd.f32 %v1779, %v1877
      %v1992 = vadd.f32 %v1780, %v1880
      %v1993 = vadd.f32 %v1781, %v1885
      %v1994 = vadd.f32 %v1782, %v1888
      %v1995 = vadd.f32 %v1783, %v1893
      %v1996 = vadd.f32 %v1784, %v1896
      %v1997 = vadd.f32 %v1785, %v1901
      %v1998 = vadd.f32 %v1786, %v1904
      %v1999 = vadd.f32 %v1787, %v1909
      %v2000 = vadd.f32 %v1788, %v1912
      %v2001 = vadd.f32 %v1789, %v1917
      %v2002 = vadd.f32 %v1790, %v1920
      %v2003 = vadd.f32 %v1791, %v1925
      %v2004 = vadd.f32 %v1792, %v1928
      %v2005 = vadd.f32 %v1793, %v1933
      %v2006 = vadd.f32 %v1794, %v1936
      %v2007 = vadd.f32 %v1795, %v1941
      %v2008 = vadd.f32 %v1796, %v1944
      %v2009 = vadd.f32 %v1797, %v1949
      %v2010 = vadd.f32 %v1798, %v1952
      %v2011 = vadd.f32 %v1799, %v1957
      %v2012 = vadd.f32 %v1800, %v1960
      %v2013 = vadd.f32 %v1801, %v1965
      %v2014 = vadd.f32 %v1802, %v1968
      %v2015 = vadd.f32 %v1803, %v1973
      %v2016 = vadd.f32 %v1804, %v1976
      %v2017 = vadd.f32 %v1805, %v1981
      %v2018 = vadd.f32 %v1806, %v1984
      %v2021 = vrot.slane %v669, 1
      %v2022 = vrot.slane %v670, 1
      %v2023 = vsel %vm1311, %v2021, %v2022
      %s2024 = scalar_lea.vmem %s3, 20
      %v2025 = vld [vmem:[%s2024] sm:$0xf]
      %v2027 = vsel %vm869, %v2023, 0
      %v2030 = vsel %vm918, %v2025, 0
      %2032 = vmatprep.subr.bf16.mxu0 0
      %2033 = vmatpush1.bf16.msra.mxu0 %v2030
      %2034 = vmatprep.subr.bf16.mxu0 0
      %2035 = vmatpush1.bf16.msra.mxu0 0
      %2036 = vmatprep.subr.bf16.mxu0 0
      %2037 = vmatpush1.bf16.msra.mxu0 0
      %2038 = vmatprep.subr.bf16.mxu0 0
      %2039 = vmatpush1.bf16.msra.mxu0 0
      %2040 = vmatprep.subr.bf16.mxu0 0
      %2041 = vmatpush1.bf16.msra.mxu0 0
      %2042 = vmatprep.subr.bf16.mxu0 0
      %2043 = vmatpush1.bf16.msra.mxu0 0
      %2044 = vmatprep.subr.bf16.mxu0 0
      %2045 = vmatpush1.bf16.msra.mxu0 0
      %2046 = vmatprep.subr.bf16.mxu0 0
      %2047 = vmatpush1.bf16.msra.mxu0 0
      %2048 = vmatprep.subr.bf16.mxu0 0
      %2049 = vmatpush1.bf16.msra.mxu0 0
      %2050 = vmatprep.subr.bf16.mxu0 0
      %2051 = vmatpush1.bf16.msra.mxu0 0
      %2052 = vmatprep.subr.bf16.mxu0 0
      %2053 = vmatpush1.bf16.msra.mxu0 0
      %2054 = vmatprep.subr.bf16.mxu0 0
      %2055 = vmatpush1.bf16.msra.mxu0 0
      %2056 = vmatprep.subr.bf16.mxu0 0
      %2057 = vmatpush1.bf16.msra.mxu0 0
      %2058 = vmatprep.subr.bf16.mxu0 0
      %2059 = vmatpush1.bf16.msra.mxu0 0
      %2060 = vmatprep.subr.bf16.mxu0 0
      %2061 = vmatpush1.bf16.msra.mxu0 0
      %2062 = vmatprep.subr.bf16.mxu0 0
      %2063 = vmatpush1.bf16.msra.mxu0 0
      %2064 = vmatprep.mubr.bf16.mxu0 0
      %2065 = vmatmul.mubr.bf16.gmra.mrb[0].mxu0 %v1366
      %v2066 = vpop.f32.mrb[0].mxu0
      %v2067 = vadd.f32 0.0, %v2066
      %v2068 = vpop.f32.mrb[0].mxu0
      %v2069 = vpop.f32.mrb[0].mxu0
      %v2070 = vadd.f32 0.0, %v2069
      %v2071 = vpop.f32.mrb[0].mxu0
      %2072 = vmatprep.mubr.bf16.mxu0 0
      %2073 = vmatmul.mubr.bf16.gmra.mrb[0].mxu0 %v1369
      %v2074 = vpop.f32.mrb[0].mxu0
      %v2075 = vadd.f32 0.0, %v2074
      %v2076 = vpop.f32.mrb[0].mxu0
      %v2077 = vpop.f32.mrb[0].mxu0
      %v2078 = vadd.f32 0.0, %v2077
      %v2079 = vpop.f32.mrb[0].mxu0
      %2080 = vmatprep.mubr.bf16.mxu0 0
      %2081 = vmatmul.mubr.bf16.gmra.mrb[0].mxu0 %v1372
      %v2082 = vpop.f32.mrb[0].mxu0
      %v2083 = vadd.f32 0.0, %v2082
      %v2084 = vpop.f32.mrb[0].mxu0
      %v2085 = vpop.f32.mrb[0].mxu0
      %v2086 = vadd.f32 0.0, %v2085
      %v2087 = vpop.f32.mrb[0].mxu0
      %2088 = vmatprep.mubr.bf16.mxu0 0
      %2089 = vmatmul.mubr.bf16.gmra.mrb[0].mxu0 %v1375
      %v2090 = vpop.f32.mrb[0].mxu0
      %v2091 = vadd.f32 0.0, %v2090
      %v2092 = vpop.f32.mrb[0].mxu0
      %v2093 = vpop.f32.mrb[0].mxu0
      %v2094 = vadd.f32 0.0, %v2093
      %v2095 = vpop.f32.mrb[0].mxu0
      %2096 = vmatprep.mubr.bf16.mxu0 0
      %2097 = vmatmul.mubr.bf16.gmra.mrb[0].mxu0 %v1378
      %v2098 = vpop.f32.mrb[0].mxu0
      %v2099 = vadd.f32 0.0, %v2098
      %v2100 = vpop.f32.mrb[0].mxu0
      %v2101 = vpop.f32.mrb[0].mxu0
      %v2102 = vadd.f32 0.0, %v2101
      %v2103 = vpop.f32.mrb[0].mxu0
      %2104 = vmatprep.mubr.bf16.mxu0 0
      %2105 = vmatmul.mubr.bf16.gmra.mrb[0].mxu0 %v1381
      %v2106 = vpop.f32.mrb[0].mxu0
      %v2107 = vadd.f32 0.0, %v2106
      %v2108 = vpop.f32.mrb[0].mxu0
      %v2109 = vpop.f32.mrb[0].mxu0
      %v2110 = vadd.f32 0.0, %v2109
      %v2111 = vpop.f32.mrb[0].mxu0
      %2112 = vmatprep.mubr.bf16.mxu0 0
      %2113 = vmatmul.mubr.bf16.gmra.mrb[0].mxu0 %v1384
      %v2114 = vpop.f32.mrb[0].mxu0
      %v2115 = vadd.f32 0.0, %v2114
      %v2116 = vpop.f32.mrb[0].mxu0
      %v2117 = vpop.f32.mrb[0].mxu0
      %v2118 = vadd.f32 0.0, %v2117
      %v2119 = vpop.f32.mrb[0].mxu0
      %2120 = vmatprep.mubr.bf16.mxu0 0
      %2121 = vmatmul.mubr.bf16.gmra.mrb[0].mxu0 %v1387
      %v2122 = vpop.f32.mrb[0].mxu0
      %v2123 = vadd.f32 0.0, %v2122
      %v2124 = vpop.f32.mrb[0].mxu0
      %v2125 = vpop.f32.mrb[0].mxu0
      %v2126 = vadd.f32 0.0, %v2125
      %v2127 = vpop.f32.mrb[0].mxu0
      %2128 = vmatprep.mubr.bf16.mxu0 0
      %2129 = vmatmul.mubr.bf16.gmra.mrb[0].mxu0 %v1390
      %v2130 = vpop.f32.mrb[0].mxu0
      %v2131 = vadd.f32 0.0, %v2130
      %v2132 = vpop.f32.mrb[0].mxu0
      %v2133 = vpop.f32.mrb[0].mxu0
      %v2134 = vadd.f32 0.0, %v2133
      %v2135 = vpop.f32.mrb[0].mxu0
      %2136 = vmatprep.mubr.bf16.mxu0 0
      %2137 = vmatmul.mubr.bf16.gmra.mrb[0].mxu0 %v1393
      %v2138 = vpop.f32.mrb[0].mxu0
      %v2139 = vadd.f32 0.0, %v2138
      %v2140 = vpop.f32.mrb[0].mxu0
      %v2141 = vpop.f32.mrb[0].mxu0
      %v2142 = vadd.f32 0.0, %v2141
      %v2143 = vpop.f32.mrb[0].mxu0
      %2144 = vmatprep.mubr.bf16.mxu0 0
      %2145 = vmatmul.mubr.bf16.gmra.mrb[0].mxu0 %v1396
      %v2146 = vpop.f32.mrb[0].mxu0
      %v2147 = vadd.f32 0.0, %v2146
      %v2148 = vpop.f32.mrb[0].mxu0
      %v2149 = vpop.f32.mrb[0].mxu0
      %v2150 = vadd.f32 0.0, %v2149
      %v2151 = vpop.f32.mrb[0].mxu0
      %2152 = vmatprep.mubr.bf16.mxu0 0
      %2153 = vmatmul.mubr.bf16.gmra.mrb[0].mxu0 %v1399
      %v2154 = vpop.f32.mrb[0].mxu0
      %v2155 = vadd.f32 0.0, %v2154
      %v2156 = vpop.f32.mrb[0].mxu0
      %v2157 = vpop.f32.mrb[0].mxu0
      %v2158 = vadd.f32 0.0, %v2157
      %v2159 = vpop.f32.mrb[0].mxu0
      %2160 = vmatprep.mubr.bf16.mxu0 0
      %2161 = vmatmul.mubr.bf16.gmra.mrb[0].mxu0 %v1402
      %v2162 = vpop.f32.mrb[0].mxu0
      %v2163 = vadd.f32 0.0, %v2162
      %v2164 = vpop.f32.mrb[0].mxu0
      %v2165 = vpop.f32.mrb[0].mxu0
      %v2166 = vadd.f32 0.0, %v2165
      %v2167 = vpop.f32.mrb[0].mxu0
      %2168 = vmatprep.mubr.bf16.mxu0 0
      %2169 = vmatmul.mubr.bf16.gmra.mrb[0].mxu0 %v1405
      %v2170 = vpop.f32.mrb[0].mxu0
      %v2171 = vadd.f32 0.0, %v2170
      %v2172 = vpop.f32.mrb[0].mxu0
      %v2173 = vpop.f32.mrb[0].mxu0
      %v2174 = vadd.f32 0.0, %v2173
      %v2175 = vpop.f32.mrb[0].mxu0
      %2176 = vmatprep.mubr.bf16.mxu0 0
      %2177 = vmatmul.mubr.bf16.gmra.mrb[0].mxu0 %v1408
      %v2178 = vpop.f32.mrb[0].mxu0
      %v2179 = vadd.f32 0.0, %v2178
      %v2180 = vpop.f32.mrb[0].mxu0
      %v2181 = vpop.f32.mrb[0].mxu0
      %v2182 = vadd.f32 0.0, %v2181
      %v2183 = vpop.f32.mrb[0].mxu0
      %2184 = vmatprep.mubr.bf16.mxu0 0
      %2185 = vmatmul.mubr.bf16.gmra.mrb[0].mxu0 %v2027
      %v2186 = vpop.f32.mrb[0].mxu0
      %v2187 = vadd.f32 0.0, %v2186
      %v2188 = vpop.f32.mrb[0].mxu0
      %v2189 = vpop.f32.mrb[0].mxu0
      %v2190 = vadd.f32 0.0, %v2189
      %v2191 = vpop.f32.mrb[0].mxu0
      %2192 = vdwg.mxu0
      %v2193 = vadd.f32 %v1987, %v2067
      %v2194 = vadd.f32 %v1988, %v2070
      %v2195 = vadd.f32 %v1989, %v2075
      %v2196 = vadd.f32 %v1990, %v2078
      %v2197 = vadd.f32 %v1991, %v2083
      %v2198 = vadd.f32 %v1992, %v2086
      %v2199 = vadd.f32 %v1993, %v2091
      %v2200 = vadd.f32 %v1994, %v2094
      %v2201 = vadd.f32 %v1995, %v2099
      %v2202 = vadd.f32 %v1996, %v2102
      %v2203 = vadd.f32 %v1997, %v2107
      %v2204 = vadd.f32 %v1998, %v2110
      %v2205 = vadd.f32 %v1999, %v2115
      %v2206 = vadd.f32 %v2000, %v2118
      %v2207 = vadd.f32 %v2001, %v2123
      %v2208 = vadd.f32 %v2002, %v2126
      %v2209 = vadd.f32 %v2003, %v2131
      %v2210 = vadd.f32 %v2004, %v2134
      %v2211 = vadd.f32 %v2005, %v2139
      %v2212 = vadd.f32 %v2006, %v2142
      %v2213 = vadd.f32 %v2007, %v2147
      %v2214 = vadd.f32 %v2008, %v2150
      %v2215 = vadd.f32 %v2009, %v2155
      %v2216 = vadd.f32 %v2010, %v2158
      %v2217 = vadd.f32 %v2011, %v2163
      %v2218 = vadd.f32 %v2012, %v2166
      %v2219 = vadd.f32 %v2013, %v2171
      %v2220 = vadd.f32 %v2014, %v2174
      %v2221 = vadd.f32 %v2015, %v2179
      %v2222 = vadd.f32 %v2016, %v2182
      %v2223 = vadd.f32 %v2017, %v2187
      %v2224 = vadd.f32 %v2018, %v2190
      %s2225 = scalar_lea.vmem %s3, 24
      %v2226 = vld [vmem:[%s2225] sm:$0xf]
      %v2228 = vsel %vm869, %v671, 0
      %v2231 = vsel %vm918, %v2226, 0
      %2233 = vmatprep.subr.bf16.mxu0 0
      %2234 = vmatpush1.bf16.msra.mxu0 %v2231
      %2235 = vmatprep.subr.bf16.mxu0 0
      %2236 = vmatpush1.bf16.msra.mxu0 0
      %2237 = vmatprep.subr.bf16.mxu0 0
      %2238 = vmatpush1.bf16.msra.mxu0 0
      %2239 = vmatprep.subr.bf16.mxu0 0
      %2240 = vmatpush1.bf16.msra.mxu0 0
      %2241 = vmatprep.subr.bf16.mxu0 0
      %2242 = vmatpush1.bf16.msra.mxu0 0
      %2243 = vmatprep.subr.bf16.mxu0 0
      %2244 = vmatpush1.bf16.msra.mxu0 0
      %2245 = vmatprep.subr.bf16.mxu0 0
      %2246 = vmatpush1.bf16.msra.mxu0 0
      %2247 = vmatprep.subr.bf16.mxu0 0
      %2248 = vmatpush1.bf16.msra.mxu0 0
      %2249 = vmatprep.subr.bf16.mxu0 0
      %2250 = vmatpush1.bf16.msra.mxu0 0
      %2251 = vmatprep.subr.bf16.mxu0 0
      %2252 = vmatpush1.bf16.msra.mxu0 0
      %2253 = vmatprep.subr.bf16.mxu0 0
      %2254 = vmatpush1.bf16.msra.mxu0 0
      %2255 = vmatprep.subr.bf16.mxu0 0
      %2256 = vmatpush1.bf16.msra.mxu0 0
      %2257 = vmatprep.subr.bf16.mxu0 0
      %2258 = vmatpush1.bf16.msra.mxu0 0
      %2259 = vmatprep.subr.bf16.mxu0 0
      %2260 = vmatpush1.bf16.msra.mxu0 0
      %2261 = vmatprep.subr.bf16.mxu0 0
      %2262 = vmatpush1.bf16.msra.mxu0 0
      %2263 = vmatprep.subr.bf16.mxu0 0
      %2264 = vmatpush1.bf16.msra.mxu0 0
      %2265 = vmatprep.mubr.bf16.mxu0 0
      %2266 = vmatmul.mubr.bf16.gmra.mrb[0].mxu0 %v1087
      %v2267 = vpop.f32.mrb[0].mxu0
      %v2268 = vadd.f32 0.0, %v2267
      %v2269 = vpop.f32.mrb[0].mxu0
      %v2270 = vpop.f32.mrb[0].mxu0
      %v2271 = vadd.f32 0.0, %v2270
      %v2272 = vpop.f32.mrb[0].mxu0
      %2273 = vmatprep.mubr.bf16.mxu0 0
      %2274 = vmatmul.mubr.bf16.gmra.mrb[0].mxu0 %v1089
      %v2275 = vpop.f32.mrb[0].mxu0
      %v2276 = vadd.f32 0.0, %v2275
      %v2277 = vpop.f32.mrb[0].mxu0
      %v2278 = vpop.f32.mrb[0].mxu0
      %v2279 = vadd.f32 0.0, %v2278
      %v2280 = vpop.f32.mrb[0].mxu0
      %2281 = vmatprep.mubr.bf16.mxu0 0
      %2282 = vmatmul.mubr.bf16.gmra.mrb[0].mxu0 %v1091
      %v2283 = vpop.f32.mrb[0].mxu0
      %v2284 = vadd.f32 0.0, %v2283
      %v2285 = vpop.f32.mrb[0].mxu0
      %v2286 = vpop.f32.mrb[0].mxu0
      %v2287 = vadd.f32 0.0, %v2286
      %v2288 = vpop.f32.mrb[0].mxu0
      %2289 = vmatprep.mubr.bf16.mxu0 0
      %2290 = vmatmul.mubr.bf16.gmra.mrb[0].mxu0 %v1093
      %v2291 = vpop.f32.mrb[0].mxu0
      %v2292 = vadd.f32 0.0, %v2291
      %v2293 = vpop.f32.mrb[0].mxu0
      %v2294 = vpop.f32.mrb[0].mxu0
      %v2295 = vadd.f32 0.0, %v2294
      %v2296 = vpop.f32.mrb[0].mxu0
      %2297 = vmatprep.mubr.bf16.mxu0 0
      %2298 = vmatmul.mubr.bf16.gmra.mrb[0].mxu0 %v1095
      %v2299 = vpop.f32.mrb[0].mxu0
      %v2300 = vadd.f32 0.0, %v2299
      %v2301 = vpop.f32.mrb[0].mxu0
      %v2302 = vpop.f32.mrb[0].mxu0
      %v2303 = vadd.f32 0.0, %v2302
      %v2304 = vpop.f32.mrb[0].mxu0
      %2305 = vmatprep.mubr.bf16.mxu0 0
      %2306 = vmatmul.mubr.bf16.gmra.mrb[0].mxu0 %v1097
      %v2307 = vpop.f32.mrb[0].mxu0
      %v2308 = vadd.f32 0.0, %v2307
      %v2309 = vpop.f32.mrb[0].mxu0
      %v2310 = vpop.f32.mrb[0].mxu0
      %v2311 = vadd.f32 0.0, %v2310
      %v2312 = vpop.f32.mrb[0].mxu0
      %2313 = vmatprep.mubr.bf16.mxu0 0
      %2314 = vmatmul.mubr.bf16.gmra.mrb[0].mxu0 %v1099
      %v2315 = vpop.f32.mrb[0].mxu0
      %v2316 = vadd.f32 0.0, %v2315
      %v2317 = vpop.f32.mrb[0].mxu0
      %v2318 = vpop.f32.mrb[0].mxu0
      %v2319 = vadd.f32 0.0, %v2318
      %v2320 = vpop.f32.mrb[0].mxu0
      %2321 = vmatprep.mubr.bf16.mxu0 0
      %2322 = vmatmul.mubr.bf16.gmra.mrb[0].mxu0 %v1101
      %v2323 = vpop.f32.mrb[0].mxu0
      %v2324 = vadd.f32 0.0, %v2323
      %v2325 = vpop.f32.mrb[0].mxu0
      %v2326 = vpop.f32.mrb[0].mxu0
      %v2327 = vadd.f32 0.0, %v2326
      %v2328 = vpop.f32.mrb[0].mxu0
      %2329 = vmatprep.mubr.bf16.mxu0 0
      %2330 = vmatmul.mubr.bf16.gmra.mrb[0].mxu0 %v1103
      %v2331 = vpop.f32.mrb[0].mxu0
      %v2332 = vadd.f32 0.0, %v2331
      %v2333 = vpop.f32.mrb[0].mxu0
      %v2334 = vpop.f32.mrb[0].mxu0
      %v2335 = vadd.f32 0.0, %v2334
      %v2336 = vpop.f32.mrb[0].mxu0
      %2337 = vmatprep.mubr.bf16.mxu0 0
      %2338 = vmatmul.mubr.bf16.gmra.mrb[0].mxu0 %v1105
      %v2339 = vpop.f32.mrb[0].mxu0
      %v2340 = vadd.f32 0.0, %v2339
      %v2341 = vpop.f32.mrb[0].mxu0
      %v2342 = vpop.f32.mrb[0].mxu0
      %v2343 = vadd.f32 0.0, %v2342
      %v2344 = vpop.f32.mrb[0].mxu0
      %2345 = vmatprep.mubr.bf16.mxu0 0
      %2346 = vmatmul.mubr.bf16.gmra.mrb[0].mxu0 %v1107
      %v2347 = vpop.f32.mrb[0].mxu0
      %v2348 = vadd.f32 0.0, %v2347
      %v2349 = vpop.f32.mrb[0].mxu0
      %v2350 = vpop.f32.mrb[0].mxu0
      %v2351 = vadd.f32 0.0, %v2350
      %v2352 = vpop.f32.mrb[0].mxu0
      %2353 = vmatprep.mubr.bf16.mxu0 0
      %2354 = vmatmul.mubr.bf16.gmra.mrb[0].mxu0 %v1109
      %v2355 = vpop.f32.mrb[0].mxu0
      %v2356 = vadd.f32 0.0, %v2355
      %v2357 = vpop.f32.mrb[0].mxu0
      %v2358 = vpop.f32.mrb[0].mxu0
      %v2359 = vadd.f32 0.0, %v2358
      %v2360 = vpop.f32.mrb[0].mxu0
      %2361 = vmatprep.mubr.bf16.mxu0 0
      %2362 = vmatmul.mubr.bf16.gmra.mrb[0].mxu0 %v1111
      %v2363 = vpop.f32.mrb[0].mxu0
      %v2364 = vadd.f32 0.0, %v2363
      %v2365 = vpop.f32.mrb[0].mxu0
      %v2366 = vpop.f32.mrb[0].mxu0
      %v2367 = vadd.f32 0.0, %v2366
      %v2368 = vpop.f32.mrb[0].mxu0
      %2369 = vmatprep.mubr.bf16.mxu0 0
      %2370 = vmatmul.mubr.bf16.gmra.mrb[0].mxu0 %v1113
      %v2371 = vpop.f32.mrb[0].mxu0
      %v2372 = vadd.f32 0.0, %v2371
      %v2373 = vpop.f32.mrb[0].mxu0
      %v2374 = vpop.f32.mrb[0].mxu0
      %v2375 = vadd.f32 0.0, %v2374
      %v2376 = vpop.f32.mrb[0].mxu0
      %2377 = vmatprep.mubr.bf16.mxu0 0
      %2378 = vmatmul.mubr.bf16.gmra.mrb[0].mxu0 %v1609
      %v2379 = vpop.f32.mrb[0].mxu0
      %v2380 = vadd.f32 0.0, %v2379
      %v2381 = vpop.f32.mrb[0].mxu0
      %v2382 = vpop.f32.mrb[0].mxu0
      %v2383 = vadd.f32 0.0, %v2382
      %v2384 = vpop.f32.mrb[0].mxu0
      %2385 = vmatprep.mubr.bf16.mxu0 0
      %2386 = vmatmul.mubr.bf16.gmra.mrb[0].mxu0 %v2228
      %v2387 = vpop.f32.mrb[0].mxu0
      %v2388 = vadd.f32 0.0, %v2387
      %v2389 = vpop.f32.mrb[0].mxu0
      %v2390 = vpop.f32.mrb[0].mxu0
      %v2391 = vadd.f32 0.0, %v2390
      %v2392 = vpop.f32.mrb[0].mxu0
      %2393 = vdwg.mxu0
      %v2394 = vadd.f32 %v2193, %v2268
      %v2395 = vadd.f32 %v2194, %v2271
      %v2396 = vadd.f32 %v2195, %v2276
      %v2397 = vadd.f32 %v2196, %v2279
      %v2398 = vadd.f32 %v2197, %v2284
      %v2399 = vadd.f32 %v2198, %v2287
      %v2400 = vadd.f32 %v2199, %v2292
      %v2401 = vadd.f32 %v2200, %v2295
      %v2402 = vadd.f32 %v2201, %v2300
      %v2403 = vadd.f32 %v2202, %v2303
      %v2404 = vadd.f32 %v2203, %v2308
      %v2405 = vadd.f32 %v2204, %v2311
      %v2406 = vadd.f32 %v2205, %v2316
      %v2407 = vadd.f32 %v2206, %v2319
      %v2408 = vadd.f32 %v2207, %v2324
      %v2409 = vadd.f32 %v2208, %v2327
      %v2410 = vadd.f32 %v2209, %v2332
      %v2411 = vadd.f32 %v2210, %v2335
      %v2412 = vadd.f32 %v2211, %v2340
      %v2413 = vadd.f32 %v2212, %v2343
      %v2414 = vadd.f32 %v2213, %v2348
      %v2415 = vadd.f32 %v2214, %v2351
      %v2416 = vadd.f32 %v2215, %v2356
      %v2417 = vadd.f32 %v2216, %v2359
      %v2418 = vadd.f32 %v2217, %v2364
      %v2419 = vadd.f32 %v2218, %v2367
      %v2420 = vadd.f32 %v2219, %v2372
      %v2421 = vadd.f32 %v2220, %v2375
      %v2422 = vadd.f32 %v2221, %v2380
      %v2423 = vadd.f32 %v2222, %v2383
      %v2424 = vadd.f32 %v2223, %v2388
      %v2425 = vadd.f32 %v2224, %v2391
      %v2426 = vshrl.u32 %v671, 16
      %v2428 = vshll.u32 %v671, 16
      %v2430 = vrot.slane %v2428, 1
      %v2431 = vor.u32 %v2426, %v2430
      %v2433 = vshll.u32 %v672, 16
      %v2435 = vrot.slane %v2433, 1
      %v2436 = vsel %vm674, %v2431, %v2435
      %s2437 = scalar_lea.vmem %s3, 28
      %v2438 = vld [vmem:[%s2437] sm:$0xf]
      %v2440 = vsel %vm869, %v2436, 0
      %v2443 = vsel %vm918, %v2438, 0
      %2445 = vmatprep.subr.bf16.mxu0 0
      %2446 = vmatpush1.bf16.msra.mxu0 %v2443
      %2447 = vmatprep.subr.bf16.mxu0 0
      %2448 = vmatpush1.bf16.msra.mxu0 0
      %2449 = vmatprep.subr.bf16.mxu0 0
      %2450 = vmatpush1.bf16.msra.mxu0 0
      %2451 = vmatprep.subr.bf16.mxu0 0
      %2452 = vmatpush1.bf16.msra.mxu0 0
      %2453 = vmatprep.subr.bf16.mxu0 0
      %2454 = vmatpush1.bf16.msra.mxu0 0
      %2455 = vmatprep.subr.bf16.mxu0 0
      %2456 = vmatpush1.bf16.msra.mxu0 0
      %2457 = vmatprep.subr.bf16.mxu0 0
      %2458 = vmatpush1.bf16.msra.mxu0 0
      %2459 = vmatprep.subr.bf16.mxu0 0
      %2460 = vmatpush1.bf16.msra.mxu0 0
      %2461 = vmatprep.subr.bf16.mxu0 0
      %2462 = vmatpush1.bf16.msra.mxu0 0
      %2463 = vmatprep.subr.bf16.mxu0 0
      %2464 = vmatpush1.bf16.msra.mxu0 0
      %2465 = vmatprep.subr.bf16.mxu0 0
      %2466 = vmatpush1.bf16.msra.mxu0 0
      %2467 = vmatprep.subr.bf16.mxu0 0
      %2468 = vmatpush1.bf16.msra.mxu0 0
      %2469 = vmatprep.subr.bf16.mxu0 0
      %2470 = vmatpush1.bf16.msra.mxu0 0
      %2471 = vmatprep.subr.bf16.mxu0 0
      %2472 = vmatpush1.bf16.msra.mxu0 0
      %2473 = vmatprep.subr.bf16.mxu0 0
      %2474 = vmatpush1.bf16.msra.mxu0 0
      %2475 = vmatprep.subr.bf16.mxu0 0
      %2476 = vmatpush1.bf16.msra.mxu0 0
      %2477 = vmatprep.mubr.bf16.mxu0 0
      %2478 = vmatmul.mubr.bf16.gmra.mrb[0].mxu0 %v877
      %v2479 = vpop.f32.mrb[0].mxu0
      %v2480 = vadd.f32 0.0, %v2479
      %v2481 = vpop.f32.mrb[0].mxu0
      %v2482 = vpop.f32.mrb[0].mxu0
      %v2483 = vadd.f32 0.0, %v2482
      %v2484 = vpop.f32.mrb[0].mxu0
      %2485 = vmatprep.mubr.bf16.mxu0 0
      %2486 = vmatmul.mubr.bf16.gmra.mrb[0].mxu0 %v880
      %v2487 = vpop.f32.mrb[0].mxu0
      %v2488 = vadd.f32 0.0, %v2487
      %v2489 = vpop.f32.mrb[0].mxu0
      %v2490 = vpop.f32.mrb[0].mxu0
      %v2491 = vadd.f32 0.0, %v2490
      %v2492 = vpop.f32.mrb[0].mxu0
      %2493 = vmatprep.mubr.bf16.mxu0 0
      %2494 = vmatmul.mubr.bf16.gmra.mrb[0].mxu0 %v883
      %v2495 = vpop.f32.mrb[0].mxu0
      %v2496 = vadd.f32 0.0, %v2495
      %v2497 = vpop.f32.mrb[0].mxu0
      %v2498 = vpop.f32.mrb[0].mxu0
      %v2499 = vadd.f32 0.0, %v2498
      %v2500 = vpop.f32.mrb[0].mxu0
      %2501 = vmatprep.mubr.bf16.mxu0 0
      %2502 = vmatmul.mubr.bf16.gmra.mrb[0].mxu0 %v886
      %v2503 = vpop.f32.mrb[0].mxu0
      %v2504 = vadd.f32 0.0, %v2503
      %v2505 = vpop.f32.mrb[0].mxu0
      %v2506 = vpop.f32.mrb[0].mxu0
      %v2507 = vadd.f32 0.0, %v2506
      %v2508 = vpop.f32.mrb[0].mxu0
      %2509 = vmatprep.mubr.bf16.mxu0 0
      %2510 = vmatmul.mubr.bf16.gmra.mrb[0].mxu0 %v889
      %v2511 = vpop.f32.mrb[0].mxu0
      %v2512 = vadd.f32 0.0, %v2511
      %v2513 = vpop.f32.mrb[0].mxu0
      %v2514 = vpop.f32.mrb[0].mxu0
      %v2515 = vadd.f32 0.0, %v2514
      %v2516 = vpop.f32.mrb[0].mxu0
      %2517 = vmatprep.mubr.bf16.mxu0 0
      %2518 = vmatmul.mubr.bf16.gmra.mrb[0].mxu0 %v892
      %v2519 = vpop.f32.mrb[0].mxu0
      %v2520 = vadd.f32 0.0, %v2519
      %v2521 = vpop.f32.mrb[0].mxu0
      %v2522 = vpop.f32.mrb[0].mxu0
      %v2523 = vadd.f32 0.0, %v2522
      %v2524 = vpop.f32.mrb[0].mxu0
      %2525 = vmatprep.mubr.bf16.mxu0 0
      %2526 = vmatmul.mubr.bf16.gmra.mrb[0].mxu0 %v895
      %v2527 = vpop.f32.mrb[0].mxu0
      %v2528 = vadd.f32 0.0, %v2527
      %v2529 = vpop.f32.mrb[0].mxu0
      %v2530 = vpop.f32.mrb[0].mxu0
      %v2531 = vadd.f32 0.0, %v2530
      %v2532 = vpop.f32.mrb[0].mxu0
      %2533 = vmatprep.mubr.bf16.mxu0 0
      %2534 = vmatmul.mubr.bf16.gmra.mrb[0].mxu0 %v898
      %v2535 = vpop.f32.mrb[0].mxu0
      %v2536 = vadd.f32 0.0, %v2535
      %v2537 = vpop.f32.mrb[0].mxu0
      %v2538 = vpop.f32.mrb[0].mxu0
      %v2539 = vadd.f32 0.0, %v2538
      %v2540 = vpop.f32.mrb[0].mxu0
      %2541 = vmatprep.mubr.bf16.mxu0 0
      %2542 = vmatmul.mubr.bf16.gmra.mrb[0].mxu0 %v901
      %v2543 = vpop.f32.mrb[0].mxu0
      %v2544 = vadd.f32 0.0, %v2543
      %v2545 = vpop.f32.mrb[0].mxu0
      %v2546 = vpop.f32.mrb[0].mxu0
      %v2547 = vadd.f32 0.0, %v2546
      %v2548 = vpop.f32.mrb[0].mxu0
      %2549 = vmatprep.mubr.bf16.mxu0 0
      %2550 = vmatmul.mubr.bf16.gmra.mrb[0].mxu0 %v904
      %v2551 = vpop.f32.mrb[0].mxu0
      %v2552 = vadd.f32 0.0, %v2551
      %v2553 = vpop.f32.mrb[0].mxu0
      %v2554 = vpop.f32.mrb[0].mxu0
      %v2555 = vadd.f32 0.0, %v2554
      %v2556 = vpop.f32.mrb[0].mxu0
      %2557 = vmatprep.mubr.bf16.mxu0 0
      %2558 = vmatmul.mubr.bf16.gmra.mrb[0].mxu0 %v907
      %v2559 = vpop.f32.mrb[0].mxu0
      %v2560 = vadd.f32 0.0, %v2559
      %v2561 = vpop.f32.mrb[0].mxu0
      %v2562 = vpop.f32.mrb[0].mxu0
      %v2563 = vadd.f32 0.0, %v2562
      %v2564 = vpop.f32.mrb[0].mxu0
      %2565 = vmatprep.mubr.bf16.mxu0 0
      %2566 = vmatmul.mubr.bf16.gmra.mrb[0].mxu0 %v910
      %v2567 = vpop.f32.mrb[0].mxu0
      %v2568 = vadd.f32 0.0, %v2567
      %v2569 = vpop.f32.mrb[0].mxu0
      %v2570 = vpop.f32.mrb[0].mxu0
      %v2571 = vadd.f32 0.0, %v2570
      %v2572 = vpop.f32.mrb[0].mxu0
      %2573 = vmatprep.mubr.bf16.mxu0 0
      %2574 = vmatmul.mubr.bf16.gmra.mrb[0].mxu0 %v913
      %v2575 = vpop.f32.mrb[0].mxu0
      %v2576 = vadd.f32 0.0, %v2575
      %v2577 = vpop.f32.mrb[0].mxu0
      %v2578 = vpop.f32.mrb[0].mxu0
      %v2579 = vadd.f32 0.0, %v2578
      %v2580 = vpop.f32.mrb[0].mxu0
      %2581 = vmatprep.mubr.bf16.mxu0 0
      %2582 = vmatmul.mubr.bf16.gmra.mrb[0].mxu0 %v916
      %v2583 = vpop.f32.mrb[0].mxu0
      %v2584 = vadd.f32 0.0, %v2583
      %v2585 = vpop.f32.mrb[0].mxu0
      %v2586 = vpop.f32.mrb[0].mxu0
      %v2587 = vadd.f32 0.0, %v2586
      %v2588 = vpop.f32.mrb[0].mxu0
      %2589 = vmatprep.mubr.bf16.mxu0 0
      %2590 = vmatmul.mubr.bf16.gmra.mrb[0].mxu0 %v1821
      %v2591 = vpop.f32.mrb[0].mxu0
      %v2592 = vadd.f32 0.0, %v2591
      %v2593 = vpop.f32.mrb[0].mxu0
      %v2594 = vpop.f32.mrb[0].mxu0
      %v2595 = vadd.f32 0.0, %v2594
      %v2596 = vpop.f32.mrb[0].mxu0
      %2597 = vmatprep.mubr.bf16.mxu0 0
      %2598 = vmatmul.mubr.bf16.gmra.mrb[0].mxu0 %v2440
      %v2599 = vpop.f32.mrb[0].mxu0
      %v2600 = vadd.f32 0.0, %v2599
      %v2601 = vpop.f32.mrb[0].mxu0
      %v2602 = vpop.f32.mrb[0].mxu0
      %v2603 = vadd.f32 0.0, %v2602
      %v2604 = vpop.f32.mrb[0].mxu0
      %2605 = vdwg.mxu0
      %v2606 = vadd.f32 %v2394, %v2480
      %v2607 = vadd.f32 %v2395, %v2483
      %v2608 = vadd.f32 %v2396, %v2488
      %v2609 = vadd.f32 %v2397, %v2491
      %v2610 = vadd.f32 %v2398, %v2496
      %v2611 = vadd.f32 %v2399, %v2499
      %v2612 = vadd.f32 %v2400, %v2504
      %v2613 = vadd.f32 %v2401, %v2507
      %v2614 = vadd.f32 %v2402, %v2512
      %v2615 = vadd.f32 %v2403, %v2515
      %v2616 = vadd.f32 %v2404, %v2520
      %v2617 = vadd.f32 %v2405, %v2523
      %v2618 = vadd.f32 %v2406, %v2528
      %v2619 = vadd.f32 %v2407, %v2531
      %v2620 = vadd.f32 %v2408, %v2536
      %v2621 = vadd.f32 %v2409, %v2539
      %v2622 = vadd.f32 %v2410, %v2544
      %v2623 = vadd.f32 %v2411, %v2547
      %v2624 = vadd.f32 %v2412, %v2552
      %v2625 = vadd.f32 %v2413, %v2555
      %v2626 = vadd.f32 %v2414, %v2560
      %v2627 = vadd.f32 %v2415, %v2563
      %v2628 = vadd.f32 %v2416, %v2568
      %v2629 = vadd.f32 %v2417, %v2571
      %v2630 = vadd.f32 %v2418, %v2576
      %v2631 = vadd.f32 %v2419, %v2579
      %v2632 = vadd.f32 %v2420, %v2584
      %v2633 = vadd.f32 %v2421, %v2587
      %v2634 = vadd.f32 %v2422, %v2592
      %v2635 = vadd.f32 %v2423, %v2595
      %v2636 = vadd.f32 %v2424, %v2600
      %v2637 = vadd.f32 %v2425, %v2603
      %v2640 = vrot.slane %v671, 1
      %v2641 = vrot.slane %v672, 1
      %v2642 = vsel %vm1311, %v2640, %v2641
      %s2643 = scalar_lea.vmem %s3, 32
      %v2644 = vld [vmem:[%s2643] sm:$0xf]
      %v2646 = vsel %vm869, %v2642, 0
      %v2649 = vsel %vm918, %v2644, 0
      %2651 = vmatprep.subr.bf16.mxu0 0
      %2652 = vmatpush1.bf16.msra.mxu0 %v2649
      %2653 = vmatprep.subr.bf16.mxu0 0
      %2654 = vmatpush1.bf16.msra.mxu0 0
      %2655 = vmatprep.subr.bf16.mxu0 0
      %2656 = vmatpush1.bf16.msra.mxu0 0
      %2657 = vmatprep.subr.bf16.mxu0 0
      %2658 = vmatpush1.bf16.msra.mxu0 0
      %2659 = vmatprep.subr.bf16.mxu0 0
      %2660 = vmatpush1.bf16.msra.mxu0 0
      %2661 = vmatprep.subr.bf16.mxu0 0
      %2662 = vmatpush1.bf16.msra.mxu0 0
      %2663 = vmatprep.subr.bf16.mxu0 0
      %2664 = vmatpush1.bf16.msra.mxu0 0
      %2665 = vmatprep.subr.bf16.mxu0 0
      %2666 = vmatpush1.bf16.msra.mxu0 0
      %2667 = vmatprep.subr.bf16.mxu0 0
      %2668 = vmatpush1.bf16.msra.mxu0 0
      %2669 = vmatprep.subr.bf16.mxu0 0
      %2670 = vmatpush1.bf16.msra.mxu0 0
      %2671 = vmatprep.subr.bf16.mxu0 0
      %2672 = vmatpush1.bf16.msra.mxu0 0
      %2673 = vmatprep.subr.bf16.mxu0 0
      %2674 = vmatpush1.bf16.msra.mxu0 0
      %2675 = vmatprep.subr.bf16.mxu0 0
      %2676 = vmatpush1.bf16.msra.mxu0 0
      %2677 = vmatprep.subr.bf16.mxu0 0
      %2678 = vmatpush1.bf16.msra.mxu0 0
      %2679 = vmatprep.subr.bf16.mxu0 0
      %2680 = vmatpush1.bf16.msra.mxu0 0
      %2681 = vmatprep.subr.bf16.mxu0 0
      %2682 = vmatpush1.bf16.msra.mxu0 0
      %2683 = vmatprep.mubr.bf16.mxu0 0
      %2684 = vmatmul.mubr.bf16.gmra.mrb[0].mxu0 %v1369
      %v2685 = vpop.f32.mrb[0].mxu0
      %v2686 = vadd.f32 0.0, %v2685
      %v2687 = vpop.f32.mrb[0].mxu0
      %v2688 = vpop.f32.mrb[0].mxu0
      %v2689 = vadd.f32 0.0, %v2688
      %v2690 = vpop.f32.mrb[0].mxu0
      %2691 = vmatprep.mubr.bf16.mxu0 0
      %2692 = vmatmul.mubr.bf16.gmra.mrb[0].mxu0 %v1372
      %v2693 = vpop.f32.mrb[0].mxu0
      %v2694 = vadd.f32 0.0, %v2693
      %v2695 = vpop.f32.mrb[0].mxu0
      %v2696 = vpop.f32.mrb[0].mxu0
      %v2697 = vadd.f32 0.0, %v2696
      %v2698 = vpop.f32.mrb[0].mxu0
      %2699 = vmatprep.mubr.bf16.mxu0 0
      %2700 = vmatmul.mubr.bf16.gmra.mrb[0].mxu0 %v1375
      %v2701 = vpop.f32.mrb[0].mxu0
      %v2702 = vadd.f32 0.0, %v2701
      %v2703 = vpop.f32.mrb[0].mxu0
      %v2704 = vpop.f32.mrb[0].mxu0
      %v2705 = vadd.f32 0.0, %v2704
      %v2706 = vpop.f32.mrb[0].mxu0
      %2707 = vmatprep.mubr.bf16.mxu0 0
      %2708 = vmatmul.mubr.bf16.gmra.mrb[0].mxu0 %v1378
      %v2709 = vpop.f32.mrb[0].mxu0
      %v2710 = vadd.f32 0.0, %v2709
      %v2711 = vpop.f32.mrb[0].mxu0
      %v2712 = vpop.f32.mrb[0].mxu0
      %v2713 = vadd.f32 0.0, %v2712
      %v2714 = vpop.f32.mrb[0].mxu0
      %2715 = vmatprep.mubr.bf16.mxu0 0
      %2716 = vmatmul.mubr.bf16.gmra.mrb[0].mxu0 %v1381
      %v2717 = vpop.f32.mrb[0].mxu0
      %v2718 = vadd.f32 0.0, %v2717
      %v2719 = vpop.f32.mrb[0].mxu0
      %v2720 = vpop.f32.mrb[0].mxu0
      %v2721 = vadd.f32 0.0, %v2720
      %v2722 = vpop.f32.mrb[0].mxu0
      %2723 = vmatprep.mubr.bf16.mxu0 0
      %2724 = vmatmul.mubr.bf16.gmra.mrb[0].mxu0 %v1384
      %v2725 = vpop.f32.mrb[0].mxu0
      %v2726 = vadd.f32 0.0, %v2725
      %v2727 = vpop.f32.mrb[0].mxu0
      %v2728 = vpop.f32.mrb[0].mxu0
      %v2729 = vadd.f32 0.0, %v2728
      %v2730 = vpop.f32.mrb[0].mxu0
      %2731 = vmatprep.mubr.bf16.mxu0 0
      %2732 = vmatmul.mubr.bf16.gmra.mrb[0].mxu0 %v1387
      %v2733 = vpop.f32.mrb[0].mxu0
      %v2734 = vadd.f32 0.0, %v2733
      %v2735 = vpop.f32.mrb[0].mxu0
      %v2736 = vpop.f32.mrb[0].mxu0
      %v2737 = vadd.f32 0.0, %v2736
      %v2738 = vpop.f32.mrb[0].mxu0
      %2739 = vmatprep.mubr.bf16.mxu0 0
      %2740 = vmatmul.mubr.bf16.gmra.mrb[0].mxu0 %v1390
      %v2741 = vpop.f32.mrb[0].mxu0
      %v2742 = vadd.f32 0.0, %v2741
      %v2743 = vpop.f32.mrb[0].mxu0
      %v2744 = vpop.f32.mrb[0].mxu0
      %v2745 = vadd.f32 0.0, %v2744
      %v2746 = vpop.f32.mrb[0].mxu0
      %2747 = vmatprep.mubr.bf16.mxu0 0
      %2748 = vmatmul.mubr.bf16.gmra.mrb[0].mxu0 %v1393
      %v2749 = vpop.f32.mrb[0].mxu0
      %v2750 = vadd.f32 0.0, %v2749
      %v2751 = vpop.f32.mrb[0].mxu0
      %v2752 = vpop.f32.mrb[0].mxu0
      %v2753 = vadd.f32 0.0, %v2752
      %v2754 = vpop.f32.mrb[0].mxu0
      %2755 = vmatprep.mubr.bf16.mxu0 0
      %2756 = vmatmul.mubr.bf16.gmra.mrb[0].mxu0 %v1396
      %v2757 = vpop.f32.mrb[0].mxu0
      %v2758 = vadd.f32 0.0, %v2757
      %v2759 = vpop.f32.mrb[0].mxu0
      %v2760 = vpop.f32.mrb[0].mxu0
      %v2761 = vadd.f32 0.0, %v2760
      %v2762 = vpop.f32.mrb[0].mxu0
      %2763 = vmatprep.mubr.bf16.mxu0 0
      %2764 = vmatmul.mubr.bf16.gmra.mrb[0].mxu0 %v1399
      %v2765 = vpop.f32.mrb[0].mxu0
      %v2766 = vadd.f32 0.0, %v2765
      %v2767 = vpop.f32.mrb[0].mxu0
      %v2768 = vpop.f32.mrb[0].mxu0
      %v2769 = vadd.f32 0.0, %v2768
      %v2770 = vpop.f32.mrb[0].mxu0
      %2771 = vmatprep.mubr.bf16.mxu0 0
      %2772 = vmatmul.mubr.bf16.gmra.mrb[0].mxu0 %v1402
      %v2773 = vpop.f32.mrb[0].mxu0
      %v2774 = vadd.f32 0.0, %v2773
      %v2775 = vpop.f32.mrb[0].mxu0
      %v2776 = vpop.f32.mrb[0].mxu0
      %v2777 = vadd.f32 0.0, %v2776
      %v2778 = vpop.f32.mrb[0].mxu0
      %2779 = vmatprep.mubr.bf16.mxu0 0
      %2780 = vmatmul.mubr.bf16.gmra.mrb[0].mxu0 %v1405
      %v2781 = vpop.f32.mrb[0].mxu0
      %v2782 = vadd.f32 0.0, %v2781
      %v2783 = vpop.f32.mrb[0].mxu0
      %v2784 = vpop.f32.mrb[0].mxu0
      %v2785 = vadd.f32 0.0, %v2784
      %v2786 = vpop.f32.mrb[0].mxu0
      %2787 = vmatprep.mubr.bf16.mxu0 0
      %2788 = vmatmul.mubr.bf16.gmra.mrb[0].mxu0 %v1408
      %v2789 = vpop.f32.mrb[0].mxu0
      %v2790 = vadd.f32 0.0, %v2789
      %v2791 = vpop.f32.mrb[0].mxu0
      %v2792 = vpop.f32.mrb[0].mxu0
      %v2793 = vadd.f32 0.0, %v2792
      %v2794 = vpop.f32.mrb[0].mxu0
      %2795 = vmatprep.mubr.bf16.mxu0 0
      %2796 = vmatmul.mubr.bf16.gmra.mrb[0].mxu0 %v2027
      %v2797 = vpop.f32.mrb[0].mxu0
      %v2798 = vadd.f32 0.0, %v2797
      %v2799 = vpop.f32.mrb[0].mxu0
      %v2800 = vpop.f32.mrb[0].mxu0
      %v2801 = vadd.f32 0.0, %v2800
      %v2802 = vpop.f32.mrb[0].mxu0
      %2803 = vmatprep.mubr.bf16.mxu0 0
      %2804 = vmatmul.mubr.bf16.gmra.mrb[0].mxu0 %v2646
      %v2805 = vpop.f32.mrb[0].mxu0
      %v2806 = vadd.f32 0.0, %v2805
      %v2807 = vpop.f32.mrb[0].mxu0
      %v2808 = vpop.f32.mrb[0].mxu0
      %v2809 = vadd.f32 0.0, %v2808
      %v2810 = vpop.f32.mrb[0].mxu0
      %2811 = vdwg.mxu0
      %v2812 = vadd.f32 %v2606, %v2686
      %v2813 = vadd.f32 %v2607, %v2689
      %v2814 = vadd.f32 %v2608, %v2694
      %v2815 = vadd.f32 %v2609, %v2697
      %v2816 = vadd.f32 %v2610, %v2702
      %v2817 = vadd.f32 %v2611, %v2705
      %v2818 = vadd.f32 %v2612, %v2710
      %v2819 = vadd.f32 %v2613, %v2713
      %v2820 = vadd.f32 %v2614, %v2718
      %v2821 = vadd.f32 %v2615, %v2721
      %v2822 = vadd.f32 %v2616, %v2726
      %v2823 = vadd.f32 %v2617, %v2729
      %v2824 = vadd.f32 %v2618, %v2734
      %v2825 = vadd.f32 %v2619, %v2737
      %v2826 = vadd.f32 %v2620, %v2742
      %v2827 = vadd.f32 %v2621, %v2745
      %v2828 = vadd.f32 %v2622, %v2750
      %v2829 = vadd.f32 %v2623, %v2753
      %v2830 = vadd.f32 %v2624, %v2758
      %v2831 = vadd.f32 %v2625, %v2761
      %v2832 = vadd.f32 %v2626, %v2766
      %v2833 = vadd.f32 %v2627, %v2769
      %v2834 = vadd.f32 %v2628, %v2774
      %v2835 = vadd.f32 %v2629, %v2777
      %v2836 = vadd.f32 %v2630, %v2782
      %v2837 = vadd.f32 %v2631, %v2785
      %v2838 = vadd.f32 %v2632, %v2790
      %v2839 = vadd.f32 %v2633, %v2793
      %v2840 = vadd.f32 %v2634, %v2798
      %v2841 = vadd.f32 %v2635, %v2801
      %v2842 = vadd.f32 %v2636, %v2806
      %v2843 = vadd.f32 %v2637, %v2809
      %v2844 = vpack.c.bf16 %v2813, %v2812
      %v2845 = vpack.c.bf16 %v2815, %v2814
      %v2846 = vpack.c.bf16 %v2817, %v2816
      %v2847 = vpack.c.bf16 %v2819, %v2818
      %v2848 = vpack.c.bf16 %v2821, %v2820
      %v2849 = vpack.c.bf16 %v2823, %v2822
      %v2850 = vpack.c.bf16 %v2825, %v2824
      %v2851 = vpack.c.bf16 %v2827, %v2826
      %v2852 = vpack.c.bf16 %v2829, %v2828
      %v2853 = vpack.c.bf16 %v2831, %v2830
      %v2854 = vpack.c.bf16 %v2833, %v2832
      %v2855 = vpack.c.bf16 %v2835, %v2834
      %v2856 = vpack.c.bf16 %v2837, %v2836
      %v2857 = vpack.c.bf16 %v2839, %v2838
      %v2858 = vpack.c.bf16 %v2841, %v2840
      %v2859 = vpack.c.bf16 %v2843, %v2842
      %v2876 = vunpack.c.l.b16 %v2844
      %v2877 = vunpack.c.h.b16 %v2844
      %v2878 = vunpack.c.l.b16 %v2845
      %v2879 = vunpack.c.h.b16 %v2845
      %v2880 = vunpack.c.l.b16 %v2846
      %v2881 = vunpack.c.h.b16 %v2846
      %v2882 = vunpack.c.l.b16 %v2847
      %v2883 = vunpack.c.h.b16 %v2847
      %v2884 = vunpack.c.l.b16 %v2848
      %v2885 = vunpack.c.h.b16 %v2848
      %v2886 = vunpack.c.l.b16 %v2849
      %v2887 = vunpack.c.h.b16 %v2849
      %v2888 = vunpack.c.l.b16 %v2850
      %v2889 = vunpack.c.h.b16 %v2850
      %v2890 = vunpack.c.l.b16 %v2851
      %v2891 = vunpack.c.h.b16 %v2851
      %v2892 = vunpack.c.l.b16 %v2852
      %v2893 = vunpack.c.h.b16 %v2852
      %v2894 = vunpack.c.l.b16 %v2853
      %v2895 = vunpack.c.h.b16 %v2853
      %v2896 = vunpack.c.l.b16 %v2854
      %v2897 = vunpack.c.h.b16 %v2854
      %v2898 = vunpack.c.l.b16 %v2855
      %v2899 = vunpack.c.h.b16 %v2855
      %v2900 = vunpack.c.l.b16 %v2856
      %v2901 = vunpack.c.h.b16 %v2856
      %v2902 = vunpack.c.l.b16 %v2857
      %v2903 = vunpack.c.h.b16 %v2857
      %v2904 = vunpack.c.l.b16 %v2858
      %v2905 = vunpack.c.h.b16 %v2858
      %v2906 = vunpack.c.l.b16 %v2859
      %v2907 = vunpack.c.h.b16 %v2859
      %v2908 = vpack.c.b16 %v2876, %v2876
      %v2909 = vpack.c.b16 %v2877, %v2877
      %v2910 = vpack.c.b16 %v2878, %v2878
      %v2911 = vpack.c.b16 %v2879, %v2879
      %v2912 = vpack.c.b16 %v2880, %v2880
      %v2913 = vpack.c.b16 %v2881, %v2881
      %v2914 = vpack.c.b16 %v2882, %v2882
      %v2915 = vpack.c.b16 %v2883, %v2883
      %v2916 = vpack.c.b16 %v2884, %v2884
      %v2917 = vpack.c.b16 %v2885, %v2885
      %v2918 = vpack.c.b16 %v2886, %v2886
      %v2919 = vpack.c.b16 %v2887, %v2887
      %v2920 = vpack.c.b16 %v2888, %v2888
      %v2921 = vpack.c.b16 %v2889, %v2889
      %v2922 = vpack.c.b16 %v2890, %v2890
      %v2923 = vpack.c.b16 %v2891, %v2891
      %v2924 = vpack.c.b16 %v2892, %v2892
      %v2925 = vpack.c.b16 %v2893, %v2893
      %v2926 = vpack.c.b16 %v2894, %v2894
      %v2927 = vpack.c.b16 %v2895, %v2895
      %v2928 = vpack.c.b16 %v2896, %v2896
      %v2929 = vpack.c.b16 %v2897, %v2897
      %v2930 = vpack.c.b16 %v2898, %v2898
      %v2931 = vpack.c.b16 %v2899, %v2899
      %v2932 = vpack.c.b16 %v2900, %v2900
      %v2933 = vpack.c.b16 %v2901, %v2901
      %v2934 = vpack.c.b16 %v2902, %v2902
      %v2935 = vpack.c.b16 %v2903, %v2903
      %v2936 = vpack.c.b16 %v2904, %v2904
      %v2937 = vpack.c.b16 %v2905, %v2905
      %v2938 = vpack.c.b16 %v2906, %v2906
      %v2939 = vpack.c.b16 %v2907, %v2907
      %vm2972 = vcmask 60416
      %2973 = vst.msk [vmem:[%s260] sm:$0xf] %vm2972, %v2908
      %2974 = vst.msk [vmem:[%s260 + $0x4] sm:$0xf] %vm2972, %v2909
      %2975 = vst.msk [vmem:[%s260 + $0x8] sm:$0xf] %vm2972, %v2910
      %2976 = vst.msk [vmem:[%s260 + $0xc] sm:$0xf] %vm2972, %v2911
      %2977 = vst.msk [vmem:[%s260 + $0x10] sm:$0xf] %vm2972, %v2912
      %2978 = vst.msk [vmem:[%s260 + $0x14] sm:$0xf] %vm2972, %v2913
      %2979 = vst.msk [vmem:[%s260 + $0x18] sm:$0xf] %vm2972, %v2914
      %2980 = vst.msk [vmem:[%s260 + $0x1c] sm:$0xf] %vm2972, %v2915
      %2981 = vst.msk [vmem:[%s260 + $0x20] sm:$0xf] %vm2972, %v2916
      %2982 = vst.msk [vmem:[%s260 + $0x24] sm:$0xf] %vm2972, %v2917
      %2983 = vst.msk [vmem:[%s260 + $0x28] sm:$0xf] %vm2972, %v2918
      %2984 = vst.msk [vmem:[%s260 + $0x2c] sm:$0xf] %vm2972, %v2919
      %2985 = vst.msk [vmem:[%s260 + $0x30] sm:$0xf] %vm2972, %v2920
      %2986 = vst.msk [vmem:[%s260 + $0x34] sm:$0xf] %vm2972, %v2921
      %2987 = vst.msk [vmem:[%s260 + $0x38] sm:$0xf] %vm2972, %v2922
      %2988 = vst.msk [vmem:[%s260 + $0x3c] sm:$0xf] %vm2972, %v2923
      %2989 = vst.msk [vmem:[%s260 + $0x40] sm:$0xf] %vm2972, %v2924
      %2990 = vst.msk [vmem:[%s260 + $0x44] sm:$0xf] %vm2972, %v2925
      %2991 = vst.msk [vmem:[%s260 + $0x48] sm:$0xf] %vm2972, %v2926
      %2992 = vst.msk [vmem:[%s260 + $0x4c] sm:$0xf] %vm2972, %v2927
      %2993 = vst.msk [vmem:[%s260 + $0x50] sm:$0xf] %vm2972, %v2928
      %2994 = vst.msk [vmem:[%s260 + $0x54] sm:$0xf] %vm2972, %v2929
      %2995 = vst.msk [vmem:[%s260 + $0x58] sm:$0xf] %vm2972, %v2930
      %2996 = vst.msk [vmem:[%s260 + $0x5c] sm:$0xf] %vm2972, %v2931
      %2997 = vst.msk [vmem:[%s260 + $0x60] sm:$0xf] %vm2972, %v2932
      %2998 = vst.msk [vmem:[%s260 + $0x64] sm:$0xf] %vm2972, %v2933
      %2999 = vst.msk [vmem:[%s260 + $0x68] sm:$0xf] %vm2972, %v2934
      %3000 = vst.msk [vmem:[%s260 + $0x6c] sm:$0xf] %vm2972, %v2935
      %3001 = vst.msk [vmem:[%s260 + $0x70] sm:$0xf] %vm2972, %v2936
      %3002 = vst.msk [vmem:[%s260 + $0x74] sm:$0xf] %vm2972, %v2937
      %3003 = vst.msk [vmem:[%s260 + $0x78] sm:$0xf] %vm2972, %v2938
      %3004 = vst.msk [vmem:[%s260 + $0x7c] sm:$0xf] %vm2972, %v2939
      %v3005 = vsel %vm869, %v2812, 0.0
      %v3006 = vsel %vm869, %v2813, 0.0
      %v3007 = vadd.f32 %v3005, %v3006
      %v3008 = vsel %vm869, %v2814, 0.0
      %v3009 = vadd.f32 %v3007, %v3008
      %v3010 = vsel %vm869, %v2815, 0.0
      %v3011 = vadd.f32 %v3009, %v3010
      %v3012 = vsel %vm869, %v2816, 0.0
      %v3013 = vadd.f32 %v3011, %v3012
      %v3014 = vsel %vm869, %v2817, 0.0
      %v3015 = vadd.f32 %v3013, %v3014
      %v3016 = vsel %vm869, %v2818, 0.0
      %v3017 = vadd.f32 %v3015, %v3016
      %v3018 = vsel %vm869, %v2819, 0.0
      %v3019 = vadd.f32 %v3017, %v3018
      %v3020 = vsel %vm869, %v2820, 0.0
      %v3021 = vadd.f32 %v3019, %v3020
      %v3022 = vsel %vm869, %v2821, 0.0
      %v3023 = vadd.f32 %v3021, %v3022
      %v3024 = vsel %vm869, %v2822, 0.0
      %v3025 = vadd.f32 %v3023, %v3024
      %v3026 = vsel %vm869, %v2823, 0.0
      %v3027 = vadd.f32 %v3025, %v3026
      %v3028 = vsel %vm869, %v2824, 0.0
      %v3029 = vadd.f32 %v3027, %v3028
      %v3030 = vsel %vm869, %v2825, 0.0
      %v3031 = vadd.f32 %v3029, %v3030
      %v3032 = vsel %vm869, %v2826, 0.0
      %v3033 = vadd.f32 %v3031, %v3032
      %v3034 = vsel %vm869, %v2827, 0.0
      %v3035 = vadd.f32 %v3033, %v3034
      %v3036 = vsel %vm869, %v2828, 0.0
      %v3037 = vadd.f32 %v3035, %v3036
      %v3038 = vsel %vm869, %v2829, 0.0
      %v3039 = vadd.f32 %v3037, %v3038
      %v3040 = vsel %vm869, %v2830, 0.0
      %v3041 = vadd.f32 %v3039, %v3040
      %v3042 = vsel %vm869, %v2831, 0.0
      %v3043 = vadd.f32 %v3041, %v3042
      %v3044 = vsel %vm869, %v2832, 0.0
      %v3045 = vadd.f32 %v3043, %v3044
      %v3046 = vsel %vm869, %v2833, 0.0
      %v3047 = vadd.f32 %v3045, %v3046
      %v3048 = vsel %vm869, %v2834, 0.0
      %v3049 = vadd.f32 %v3047, %v3048
      %v3050 = vsel %vm869, %v2835, 0.0
      %v3051 = vadd.f32 %v3049, %v3050
      %v3052 = vsel %vm869, %v2836, 0.0
      %v3053 = vadd.f32 %v3051, %v3052
      %v3054 = vsel %vm869, %v2837, 0.0
      %v3055 = vadd.f32 %v3053, %v3054
      %v3056 = vsel %vm869, %v2838, 0.0
      %v3057 = vadd.f32 %v3055, %v3056
      %v3058 = vsel %vm869, %v2839, 0.0
      %v3059 = vadd.f32 %v3057, %v3058
      %v3060 = vsel %vm869, %v2840, 0.0
      %v3061 = vadd.f32 %v3059, %v3060
      %v3062 = vsel %vm869, %v2841, 0.0
      %v3063 = vadd.f32 %v3061, %v3062
      %v3064 = vsel %vm869, %v2842, 0.0
      %v3065 = vadd.f32 %v3063, %v3064
      %v3066 = vsel %vm869, %v2843, 0.0
      %v3067 = vadd.f32 %v3065, %v3066
      %v3068 = vrot.slane %v3067, 4
      %v3069 = vadd.f32 %v3067, %v3068
      %v3070 = vrot.slane %v3069, 2
      %v3071 = vadd.f32 %v3069, %v3070
      %v3072 = vrot.slane %v3071, 1
      %v3073 = vadd.f32 %v3071, %v3072
      %v3074 = vmul.f32 %v2812, %v2812
      %v3075 = vmul.f32 %v2813, %v2813
      %v3076 = vmul.f32 %v2814, %v2814
      %v3077 = vmul.f32 %v2815, %v2815
      %v3078 = vmul.f32 %v2816, %v2816
      %v3079 = vmul.f32 %v2817, %v2817
      %v3080 = vmul.f32 %v2818, %v2818
      %v3081 = vmul.f32 %v2819, %v2819
      %v3082 = vmul.f32 %v2820, %v2820
      %v3083 = vmul.f32 %v2821, %v2821
      %v3084 = vmul.f32 %v2822, %v2822
      %v3085 = vmul.f32 %v2823, %v2823
      %v3086 = vmul.f32 %v2824, %v2824
      %v3087 = vmul.f32 %v2825, %v2825
      %v3088 = vmul.f32 %v2826, %v2826
      %v3089 = vmul.f32 %v2827, %v2827
      %v3090 = vmul.f32 %v2828, %v2828
      %v3091 = vmul.f32 %v2829, %v2829
      %v3092 = vmul.f32 %v2830, %v2830
      %v3093 = vmul.f32 %v2831, %v2831
      %v3094 = vmul.f32 %v2832, %v2832
      %v3095 = vmul.f32 %v2833, %v2833
      %v3096 = vmul.f32 %v2834, %v2834
      %v3097 = vmul.f32 %v2835, %v2835
      %v3098 = vmul.f32 %v2836, %v2836
      %v3099 = vmul.f32 %v2837, %v2837
      %v3100 = vmul.f32 %v2838, %v2838
      %v3101 = vmul.f32 %v2839, %v2839
      %v3102 = vmul.f32 %v2840, %v2840
      %v3103 = vmul.f32 %v2841, %v2841
      %v3104 = vmul.f32 %v2842, %v2842
      %v3105 = vmul.f32 %v2843, %v2843
      %v3106 = vsel %vm869, %v3074, 0.0
      %v3107 = vsel %vm869, %v3075, 0.0
      %v3108 = vadd.f32 %v3106, %v3107
      %v3109 = vsel %vm869, %v3076, 0.0
      %v3110 = vadd.f32 %v3108, %v3109
      %v3111 = vsel %vm869, %v3077, 0.0
      %v3112 = vadd.f32 %v3110, %v3111
      %v3113 = vsel %vm869, %v3078, 0.0
      %v3114 = vadd.f32 %v3112, %v3113
      %v3115 = vsel %vm869, %v3079, 0.0
      %v3116 = vadd.f32 %v3114, %v3115
      %v3117 = vsel %vm869, %v3080, 0.0
      %v3118 = vadd.f32 %v3116, %v3117
      %v3119 = vsel %vm869, %v3081, 0.0
      %v3120 = vadd.f32 %v3118, %v3119
      %v3121 = vsel %vm869, %v3082, 0.0
      %v3122 = vadd.f32 %v3120, %v3121
      %v3123 = vsel %vm869, %v3083, 0.0
      %v3124 = vadd.f32 %v3122, %v3123
      %v3125 = vsel %vm869, %v3084, 0.0
      %v3126 = vadd.f32 %v3124, %v3125
      %v3127 = vsel %vm869, %v3085, 0.0
      %v3128 = vadd.f32 %v3126, %v3127
      %v3129 = vsel %vm869, %v3086, 0.0
      %v3130 = vadd.f32 %v3128, %v3129
      %v3131 = vsel %vm869, %v3087, 0.0
      %v3132 = vadd.f32 %v3130, %v3131
      %v3133 = vsel %vm869, %v3088, 0.0
      %v3134 = vadd.f32 %v3132, %v3133
      %v3135 = vsel %vm869, %v3089, 0.0
      %v3136 = vadd.f32 %v3134, %v3135
      %v3137 = vsel %vm869, %v3090, 0.0
      %v3138 = vadd.f32 %v3136, %v3137
      %v3139 = vsel %vm869, %v3091, 0.0
      %v3140 = vadd.f32 %v3138, %v3139
      %v3141 = vsel %vm869, %v3092, 0.0
      %v3142 = vadd.f32 %v3140, %v3141
      %v3143 = vsel %vm869, %v3093, 0.0
      %v3144 = vadd.f32 %v3142, %v3143
      %v3145 = vsel %vm869, %v3094, 0.0
      %v3146 = vadd.f32 %v3144, %v3145
      %v3147 = vsel %vm869, %v3095, 0.0
      %v3148 = vadd.f32 %v3146, %v3147
      %v3149 = vsel %vm869, %v3096, 0.0
      %v3150 = vadd.f32 %v3148, %v3149
      %v3151 = vsel %vm869, %v3097, 0.0
      %v3152 = vadd.f32 %v3150, %v3151
      %v3153 = vsel %vm869, %v3098, 0.0
      %v3154 = vadd.f32 %v3152, %v3153
      %v3155 = vsel %vm869, %v3099, 0.0
      %v3156 = vadd.f32 %v3154, %v3155
      %v3157 = vsel %vm869, %v3100, 0.0
      %v3158 = vadd.f32 %v3156, %v3157
      %v3159 = vsel %vm869, %v3101, 0.0
      %v3160 = vadd.f32 %v3158, %v3159
      %v3161 = vsel %vm869, %v3102, 0.0
      %v3162 = vadd.f32 %v3160, %v3161
      %v3163 = vsel %vm869, %v3103, 0.0
      %v3164 = vadd.f32 %v3162, %v3163
      %v3165 = vsel %vm869, %v3104, 0.0
      %v3166 = vadd.f32 %v3164, %v3165
      %v3167 = vsel %vm869, %v3105, 0.0
      %v3168 = vadd.f32 %v3166, %v3167
      %v3169 = vrot.slane %v3168, 4
      %v3170 = vadd.f32 %v3168, %v3169
      %v3171 = vrot.slane %v3170, 2
      %v3172 = vadd.f32 %v3170, %v3171
      %v3173 = vrot.slane %v3172, 1
      %v3174 = vadd.f32 %v3172, %v3173
      %vm3175 = vcmask 1040384
      %v3176 = vsel %vm3175, %v3073, %v3174
      %vm3177 = vcmask 58368
      %3178 = vst.msk [vmem:[%s268] sm:$0x3] %vm3177, %v3176
      %s3179 = smul.u32 16, %s22
      %p3180 = scmp.lt.s32.totalorder %s21, 1
      %s3181 = scalar_select %p3180, %s21, 1
      %p3182 = scmp.lt.s32.totalorder %s3179, 15
      %s3183 = scalar_select %p3182, %s3179, 15
      %s3184 = smul.addr %s3183, 2
      %s3185 = smul.addr %s3181, 32
      %s3186 = sadd.s32 %s3184, %s3185
      %s3187 = smul.addr %s3186, 4
      %s3188 = scalar_lea.vmem %s4, %s3187
      %p3189 = scmp.lt.s32.totalorder %s21, 1
      %s3190 = scalar_select %p3189, %s21, 1
      %p3191 = scmp.lt.s32.totalorder %s22, 0
      %s3192 = scalar_select %p3191, %s22, 0
      %s3193 = sadd.s32 %s3192, %s3190
      %s3194 = smul.addr %s3193, 2
      %s3195 = scalar_lea.vmem %s5, %s3194
      // Predicated region
      $region37: #{upsample_block_forward.4} parent=35 // pred_check
        %p3196 = pneg %p138
      $region38: #{upsample_block_forward.4} parent=35 // pred_check_branch
        %3198 = sbr.rel (%p3196) target = $region40
      $region39: #{upsample_block_forward.4} parent=35 // pred_region
        %s3199 = smul.u32 16, %s22
      $region40: #{upsample_block_forward.4} parent=35 // pred_fallthru
        _
      // Predicated region
      $region41: #{upsample_block_forward.4} parent=35 // pred_check
        %p3200 = pneg %p166
      $region42: #{upsample_block_forward.4} parent=35 // pred_check_branch
        %3202 = sbr.rel (%p3200) target = $region44
      $region43: #{upsample_block_forward.4} parent=35 // pred_region
        _
      $region44: #{upsample_block_forward.4} parent=35 // pred_fallthru
        _
    $region36: #{upsample_block_forward.4} parent=5 // pred_fallthru
      _
    %p3203 = scmp.le.s32.totalorder 2, %s12
    // Predicated region
    $region45: #{upsample_block_forward.4} parent=5 // pred_check
      %p3204 = pneg %p3203
    $region46: #{upsample_block_forward.4} parent=5 // pred_check_branch
      %3206 = sbr.rel (%p3204) target = $region48
    $region47: #{upsample_block_forward.4} parent=5 // pred_region
      %s3207 = ssub.s32 %s12, 2
      // Predicated region
      $region49: #{upsample_block_forward.4} parent=47 // pred_check
        %p3208 = pneg %p144
      $region50: #{upsample_block_forward.4} parent=47 // pred_check_branch
        %3210 = sbr.rel (%p3208) target = $region52
      $region51: #{upsample_block_forward.4} parent=47 // pred_region
        %s3211 = smul.u32 16, %s24
        %p3212 = scmp.lt.s32.totalorder %s23, 1
        %s3213 = scalar_select %p3212, %s23, 1
        %p3214 = scmp.lt.s32.totalorder %s3211, 15
        %s3215 = scalar_select %p3214, %s3211, 15
        %s3216 = smul.addr %s3215, 2
        %s3217 = smul.addr %s3213, 32
        %s3218 = sadd.s32 %s3216, %s3217
        %s3219 = smul.addr %s3218, 4
        %s3220 = scalar_lea.vmem %s4, %s3219
      $region52: #{upsample_block_forward.4} parent=47 // pred_fallthru
        _
      // Predicated region
      $region53: #{upsample_block_forward.4} parent=47 // pred_check
        %p3221 = pneg %p172
      $region54: #{upsample_block_forward.4} parent=47 // pred_check_branch
        %3223 = sbr.rel (%p3221) target = $region56
      $region55: #{upsample_block_forward.4} parent=47 // pred_region
        %p3224 = scmp.lt.s32.totalorder %s23, 1
        %s3225 = scalar_select %p3224, %s23, 1
        %p3226 = scmp.lt.s32.totalorder %s24, 0
        %s3227 = scalar_select %p3226, %s24, 0
        %s3228 = sadd.s32 %s3227, %s3225
        %s3229 = smul.addr %s3228, 2
        %s3230 = scalar_lea.vmem %s5, %s3229
      $region56: #{upsample_block_forward.4} parent=47 // pred_fallthru
        _
    $region48: #{upsample_block_forward.4} parent=5 // pred_fallthru
      _
  $region6: #{upsample_block_forward.4} parent=0 // loop_footer
    %s16 = sadd.s32 1, %s12
  $region7: #{upsample_block_forward.4} parent=0 // loop_footer_branch
    %11 = sbr.rel target = $region3
  $region8: #{upsample_block_forward.4} parent=0 // loop_exit
    _

// kernel: upsample_block_forward.3
$region0: #{upsample_block_forward.3}
  #allocation0 [shape = 'u32[]', space=smem, size = 0x4, offset = 0x4, fixed_abs, tag = 'smem constant byte address 0x4 - core index']
  #allocation1 [shape = 'u32[144,128]{1,0:T(1,128)}', space=vmem, size = 0x12000, scoped, tag = 'internal scratch']
  %s0 = inlined_call_operand.vmem [shape: bf16[2,18,18,4], index: 0, kind: input, shape index: {}]
  %s1 = inlined_call_operand.vmem [shape: bf16[2,18,18,4], index: 1, kind: input, shape index: {}]
  %s2 = inlined_call_operand.vmem [shape: bf16[3,3,4,8], index: 2, kind: input, shape index: {}]
  %s3 = inlined_call_operand.vmem [shape: bf16[3,3,4,8], index: 3, kind: input, shape index: {}]
  %s4 = inlined_call_operand.vmem [shape: bf16[2,16,16,8], index: 4, kind: output, shape index: {0}]
  %s5 = inlined_call_operand.vmem [shape: f32[2,1,2,8], index: 5, kind: output, shape index: {1}]
  %6 = xla_tuple %s4, %s5
  %s7 = sld [smem:[#allocation0]]
  $region57: #{upsample_block_forward.3} parent=0
    _
  %s9 = ssub.s32 1, %s7
  %s10 = scalar_select 0, %s9, %s7
  loop: start=0, step=1, limit=4
  $region2: #{upsample_block_forward.3} parent=0 // loop_pre_header
    _
  $region3: #{upsample_block_forward.3} parent=0 // loop_header
    %s12 = sphi 0, %s16
    %p13 = scmp.ge.s32.totalorder %s12, 4
    %s19 = sphi 0, %s31
    %s20 = sphi 0, %s27
    %s21 = sphi 0, %s19
    %s22 = sphi 0, %s20
    %s23 = sphi 0, %s21
    %s24 = sphi 0, %s22
    %s34 = sphi 0, %s36
    %s37 = sphi 0, %s34
    %s38 = sphi 0, %s37
    %s54 = sphi 0, %s38
    %s60 = sphi 0, %s62
    %s63 = sphi 0, %s60
    %s64 = sphi 0, %s63
    %s80 = sphi 0, %s64
    %s84 = sphi 0, %s84
    %s86 = sphi 0, %s84
    %s87 = sphi 0, %s86
    %s101 = sphi 0, %s87
    %s105 = sphi 0, %s105
    %s107 = sphi 0, %s105
    %s108 = sphi 0, %s107
    %s122 = sphi 0, %s108
    %s130 = sphi 0, %s132
    %s133 = sphi 0, %s130
    %s134 = sphi 0, %s133
    %s150 = sphi 0, %s134
    %s158 = sphi 0, %s160
    %s161 = sphi 0, %s158
    %s162 = sphi 0, %s161
    %s178 = sphi 0, %s162
  $region4: #{upsample_block_forward.3} parent=0 // loop_header_branch
    %15 = sbr.rel (%p13) target = $region8
  $region5: #{upsample_block_forward.3} parent=0 // loop_body
    %s17 = ssub.s32 %s12, 1
    %s18 = ssub.s32 %s12, 2
    %s25 = sadd.s32 1, %s20
    %p26 = scmp.ge.s32.totalorder %s25, 1
    %s27 = scalar_select %p26, 0, %s25
    %s28 = sadd.s32 1, %s19
    %s29 = scalar_select %p26, %s28, %s19
    %p30 = scmp.ge.s32.totalorder %s29, 2
    %s31 = scalar_select %p30, 0, %s29
    %s32 = ssub.s32 %s19, %s31
    %p33 = scmp.eq.s32.totalorder %s32, 0
    %s35 = sadd.s32 %s34, 1
    %s36 = scalar_select %p33, %s34, %s35
    %p39 = pneg %p33
    %p40 = scmp.eq.s32.totalorder %s12, 1
    %p41 = por %p39, %p40
    %p42 = scmp.ne.s32.totalorder %s34, %s37
    %p43 = scmp.eq.s32.totalorder %s12, 0
    %p44 = por %p42, %p43
    %p45 = scmp.ne.s32.totalorder %s34, %s37
    %p46 = scmp.eq.s32.totalorder %s17, 1
    %p47 = por %p45, %p46
    %p48 = scmp.ne.s32.totalorder %s37, %s38
    %p49 = scmp.eq.s32.totalorder %s17, 0
    %p50 = por %p48, %p49
    %p51 = scmp.ne.s32.totalorder %s37, %s38
    %p52 = scmp.eq.s32.totalorder %s18, 1
    %p53 = por %p51, %p52
    %p55 = scmp.ne.s32.totalorder %s38, %s54
    %p56 = scmp.eq.s32.totalorder %s18, 0
    %p57 = por %p55, %p56
    %s58 = ssub.s32 %s19, %s31
    %p59 = scmp.eq.s32.totalorder %s58, 0
    %s61 = sadd.s32 %s60, 1
    %s62 = scalar_select %p59, %s60, %s61
    %p65 = pneg %p59
    %p66 = scmp.eq.s32.totalorder %s12, 1
    %p67 = por %p65, %p66
    %p68 = scmp.ne.s32.totalorder %s60, %s63
    %p69 = scmp.eq.s32.totalorder %s12, 0
    %p70 = por %p68, %p69
    %p71 = scmp.ne.s32.totalorder %s60, %s63
    %p72 = scmp.eq.s32.totalorder %s17, 1
    %p73 = por %p71, %p72
    %p74 = scmp.ne.s32.totalorder %s63, %s64
    %p75 = scmp.eq.s32.totalorder %s17, 0
    %p76 = por %p74, %p75
    %p77 = scmp.ne.s32.totalorder %s63, %s64
    %p78 = scmp.eq.s32.totalorder %s18, 1
    %p79 = por %p77, %p78
    %p81 = scmp.ne.s32.totalorder %s64, %s80
    %p82 = scmp.eq.s32.totalorder %s18, 0
    %p83 = por %p81, %p82
    %s85 = sadd.s32 %s84, 1
    %p88 = scmp.eq.s32.totalorder %s12, 1
    %p89 = scmp.ne.s32.totalorder %s84, %s86
    %p90 = scmp.eq.s32.totalorder %s12, 0
    %p91 = por %p89, %p90
    %p92 = scmp.ne.s32.totalorder %s84, %s86
    %p93 = scmp.eq.s32.totalorder %s17, 1
    %p94 = por %p92, %p93
    %p95 = scmp.ne.s32.totalorder %s86, %s87
    %p96 = scmp.eq.s32.totalorder %s17, 0
    %p97 = por %p95, %p96
    %p98 = scmp.ne.s32.totalorder %s86, %s87
    %p99 = scmp.eq.s32.totalorder %s18, 1
    %p100 = por %p98, %p99
    %p102 = scmp.ne.s32.totalorder %s87, %s101
    %p103 = scmp.eq.s32.totalorder %s18, 0
    %p104 = por %p102, %p103
    %s106 = sadd.s32 %s105, 1
    %p109 = scmp.eq.s32.totalorder %s12, 1
    %p110 = scmp.ne.s32.totalorder %s105, %s107
    %p111 = scmp.eq.s32.totalorder %s12, 0
    %p112 = por %p110, %p111
    %p113 = scmp.ne.s32.totalorder %s105, %s107
    %p114 = scmp.eq.s32.totalorder %s17, 1
    %p115 = por %p113, %p114
    %p116 = scmp.ne.s32.totalorder %s107, %s108
    %p117 = scmp.eq.s32.totalorder %s17, 0
    %p118 = por %p116, %p117
    %p119 = scmp.ne.s32.totalorder %s107, %s108
    %p120 = scmp.eq.s32.totalorder %s18, 1
    %p121 = por %p119, %p120
    %p123 = scmp.ne.s32.totalorder %s108, %s122
    %p124 = scmp.eq.s32.totalorder %s18, 0
    %p125 = por %p123, %p124
    %s126 = ssub.s32 %s19, %s31
    %s127 = ssub.s32 %s20, %s27
    %s128 = sor.u32 %s126, %s127
    %p129 = scmp.eq.s32.totalorder %s128, 0
    %s131 = sadd.s32 %s130, 1
    %s132 = scalar_select %p129, %s130, %s131
    %p135 = pneg %p129
    %p136 = scmp.eq.s32.totalorder %s12, 1
    %p137 = por %p135, %p136
    %p138 = scmp.ne.s32.totalorder %s130, %s133
    %p139 = scmp.eq.s32.totalorder %s12, 0
    %p140 = por %p138, %p139
    %p141 = scmp.ne.s32.totalorder %s130, %s133
    %p142 = scmp.eq.s32.totalorder %s17, 1
    %p143 = por %p141, %p142
    %p144 = scmp.ne.s32.totalorder %s133, %s134
    %p145 = scmp.eq.s32.totalorder %s17, 0
    %p146 = por %p144, %p145
    %p147 = scmp.ne.s32.totalorder %s133, %s134
    %p148 = scmp.eq.s32.totalorder %s18, 1
    %p149 = por %p147, %p148
    %p151 = scmp.ne.s32.totalorder %s134, %s150
    %p152 = scmp.eq.s32.totalorder %s18, 0
    %p153 = por %p151, %p152
    %s154 = ssub.s32 %s19, %s31
    %s155 = ssub.s32 %s20, %s27
    %s156 = sor.u32 %s154, %s155
    %p157 = scmp.eq.s32.totalorder %s156, 0
    %s159 = sadd.s32 %s158, 1
    %s160 = scalar_select %p157, %s158, %s159
    %p163 = pneg %p157
    %p164 = scmp.eq.s32.totalorder %s12, 1
    %p165 = por %p163, %p164
    %p166 = scmp.ne.s32.totalorder %s158, %s161
    %p167 = scmp.eq.s32.totalorder %s12, 0
    %p168 = por %p166, %p167
    %p169 = scmp.ne.s32.totalorder %s158, %s161
    %p170 = scmp.eq.s32.totalorder %s17, 1
    %p171 = por %p169, %p170
    %p172 = scmp.ne.s32.totalorder %s161, %s162
    %p173 = scmp.eq.s32.totalorder %s17, 0
    %p174 = por %p172, %p173
    %p175 = scmp.ne.s32.totalorder %s161, %s162
    %p176 = scmp.eq.s32.totalorder %s18, 1
    %p177 = por %p175, %p176
    %p179 = scmp.ne.s32.totalorder %s162, %s178
    %p180 = scmp.eq.s32.totalorder %s18, 0
    %p181 = por %p179, %p180
    %p182 = scmp.le.s32.totalorder 1, %s12
    %p183 = scmp.lt.s32.totalorder %s12, 3
    %p184 = pnand %p182, %p183
    %p185 = pneg %p184
    // Predicated region
    $region9: #{upsample_block_forward.3} parent=5 // pred_check
      _
    $region10: #{upsample_block_forward.3} parent=5 // pred_check_branch
      %187 = sbr.rel (%p184) target = $region12
    $region11: #{upsample_block_forward.3} parent=5 // pred_region
      %s188 = ssub.s32 %s12, 1
      // Predicated region
      $region13: #{upsample_block_forward.3} parent=11 // pred_check
        %p189 = pneg %p97
      $region14: #{upsample_block_forward.3} parent=11 // pred_check_branch
        %191 = sbr.rel (%p189) target = $region16
      $region15: #{upsample_block_forward.3} parent=11 // pred_region
        _
      $region16: #{upsample_block_forward.3} parent=11 // pred_fallthru
        _
      // Predicated region
      $region17: #{upsample_block_forward.3} parent=11 // pred_check
        %p192 = pneg %p118
      $region18: #{upsample_block_forward.3} parent=11 // pred_check_branch
        %194 = sbr.rel (%p192) target = $region20
      $region19: #{upsample_block_forward.3} parent=11 // pred_region
        _
      $region20: #{upsample_block_forward.3} parent=11 // pred_fallthru
        _
    $region12: #{upsample_block_forward.3} parent=5 // pred_fallthru
      _
    %p195 = scmp.lt.s32.totalorder %s12, 2
    // Predicated region
    $region21: #{upsample_block_forward.3} parent=5 // pred_check
      %p196 = pneg %p195
    $region22: #{upsample_block_forward.3} parent=5 // pred_check_branch
      %198 = sbr.rel (%p196) target = $region24
    $region23: #{upsample_block_forward.3} parent=5 // pred_region
      // Predicated region
      $region25: #{upsample_block_forward.3} parent=23 // pred_check
        %p199 = pneg %p44
      $region26: #{upsample_block_forward.3} parent=23 // pred_check_branch
        %201 = sbr.rel (%p199) target = $region28
      $region27: #{upsample_block_forward.3} parent=23 // pred_region
        %p202 = scmp.lt.s32.totalorder %s19, 1
        %s203 = scalar_select %p202, %s19, 1
        %s204 = smul.addr %s203, 54
        %s205 = smul.addr %s204, 4
        %s206 = scalar_lea.vmem %s0, %s205
      $region28: #{upsample_block_forward.3} parent=23 // pred_fallthru
        _
      // Predicated region
      $region29: #{upsample_block_forward.3} parent=23 // pred_check
        %p207 = pneg %p70
      $region30: #{upsample_block_forward.3} parent=23 // pred_check_branch
        %209 = sbr.rel (%p207) target = $region32
      $region31: #{upsample_block_forward.3} parent=23 // pred_region
        %p210 = scmp.lt.s32.totalorder %s19, 1
        %s211 = scalar_select %p210, %s19, 1
        %s212 = smul.addr %s211, 54
        %s213 = smul.addr %s212, 4
        %s214 = scalar_lea.vmem %s1, %s213
      $region32: #{upsample_block_forward.3} parent=23 // pred_fallthru
        _
    $region24: #{upsample_block_forward.3} parent=5 // pred_fallthru
      _
    %p215 = scmp.le.s32.totalorder 1, %s12
    %p216 = scmp.lt.s32.totalorder %s12, 3
    %p217 = pnand %p215, %p216
    %p218 = pneg %p217
    // Predicated region
    $region33: #{upsample_block_forward.3} parent=5 // pred_check
      _
    $region34: #{upsample_block_forward.3} parent=5 // pred_check_branch
      %220 = sbr.rel (%p217) target = $region36
    $region35: #{upsample_block_forward.3} parent=5 // pred_region
      %s221 = ssub.s32 %s12, 1
      %p222 = scmp.lt.s32.totalorder %s21, 1
      %s223 = scalar_select %p222, %s21, 1
      %s224 = smul.addr %s223, 54
      %s225 = smul.addr %s224, 4
      %s226 = scalar_lea.vmem %s0, %s225
      %p227 = pneg %p50
      %p228 = pneg %p47
      %p229 = scmp.lt.s32.totalorder %s21, 1
      %s230 = scalar_select %p229, %s21, 1
      %s231 = smul.addr %s230, 54
      %s232 = smul.addr %s231, 4
      %s233 = scalar_lea.vmem %s1, %s232
      %p234 = pneg %p76
      %p235 = pneg %p73
      %p236 = pneg %p97
      %p237 = pneg %p94
      %p238 = pneg %p118
      %p239 = pneg %p115
      %p240 = pneg %p146
      %p241 = pneg %p143
      %s242 = smul.u32 16, %s22
      %p243 = scmp.lt.s32.totalorder %s21, 1
      %s244 = scalar_select %p243, %s21, 1
      %p245 = scmp.lt.s32.totalorder %s242, 15
      %s246 = scalar_select %p245, %s242, 15
      %s247 = smul.addr %s246, 2
      %s248 = smul.addr %s244, 32
      %s249 = sadd.s32 %s247, %s248
      %s250 = smul.addr %s249, 4
      %s251 = scalar_lea.vmem %s4, %s250
      %p252 = pneg %p174
      %p253 = pneg %p171
      %p254 = scmp.lt.s32.totalorder %s21, 1
      %s255 = scalar_select %p254, %s21, 1
      %p256 = scmp.lt.s32.totalorder %s22, 0
      %s257 = scalar_select %p256, %s22, 0
      %s258 = sadd.s32 %s257, %s255
      %s259 = smul.addr %s258, 2
      %s260 = scalar_lea.vmem %s5, %s259
      %p261 = scmp.lt.s32.totalorder %s21, 1
      %s262 = scalar_select %p261, %s21, 1
      %s263 = smul.addr %s262, 54
      %s264 = smul.addr %s263, 4
      %s265 = scalar_lea.vmem %s0, %s264
      %p266 = scmp.lt.s32.totalorder %s21, 1
      %s267 = scalar_select %p266, %s21, 1
      %s268 = smul.addr %s267, 54
      %s269 = smul.addr %s268, 4
      %s270 = scalar_lea.vmem %s1, %s269
      %s271 = smul.u32 16, %s22
      %p272 = scmp.lt.s32.totalorder %s21, 1
      %s273 = scalar_select %p272, %s21, 1
      %p274 = scmp.lt.s32.totalorder %s271, 15
      %s275 = scalar_select %p274, %s271, 15
      %s276 = smul.addr %s275, 2
      %s277 = smul.addr %s273, 32
      %s278 = sadd.s32 %s276, %s277
      %s279 = smul.addr %s278, 4
      %s280 = scalar_lea.vmem %s4, %s279
      %s281 = smul.u32 16, %s22
      %p282 = scmp.lt.s32.totalorder %s21, 1
      %s283 = scalar_select %p282, %s21, 1
      %p284 = scmp.lt.s32.totalorder %s22, 0
      %s285 = scalar_select %p284, %s22, 0
      %s286 = sadd.s32 %s285, %s283
      %s287 = smul.addr %s286, 2
      %s288 = scalar_lea.vmem %s5, %s287
      %v290 = vld [vmem:[%s265] sm:$0xf]
      %v291 = vld [vmem:[%s265 + $0x4] sm:$0xf]
      %v292 = vld [vmem:[%s265 + $0x8] sm:$0x1]
      %v293 = vld [vmem:[%s265 + $0xc] sm:$0xf]
      %v294 = vld [vmem:[%s265 + $0x10] sm:$0xf]
      %v295 = vld [vmem:[%s265 + $0x14] sm:$0x1]
      %v296 = vld [vmem:[%s265 + $0x18] sm:$0xf]
      %v297 = vld [vmem:[%s265 + $0x1c] sm:$0xf]
      %v298 = vld [vmem:[%s265 + $0x20] sm:$0x1]
      %v299 = vld [vmem:[%s265 + $0x24] sm:$0xf]
      %v300 = vld [vmem:[%s265 + $0x28] sm:$0xf]
      %v301 = vld [vmem:[%s265 + $0x2c] sm:$0x1]
      %v302 = vld [vmem:[%s265 + $0x30] sm:$0xf]
      %v303 = vld [vmem:[%s265 + $0x34] sm:$0xf]
      %v304 = vld [vmem:[%s265 + $0x38] sm:$0x1]
      %v305 = vld [vmem:[%s265 + $0x3c] sm:$0xf]
      %v306 = vld [vmem:[%s265 + $0x40] sm:$0xf]
      %v307 = vld [vmem:[%s265 + $0x44] sm:$0x1]
      %v308 = vld [vmem:[%s265 + $0x48] sm:$0xf]
      %v309 = vld [vmem:[%s265 + $0x4c] sm:$0xf]
      %v310 = vld [vmem:[%s265 + $0x50] sm:$0x1]
      %v311 = vld [vmem:[%s265 + $0x54] sm:$0xf]
      %v312 = vld [vmem:[%s265 + $0x58] sm:$0xf]
      %v313 = vld [vmem:[%s265 + $0x5c] sm:$0x1]
      %v314 = vld [vmem:[%s265 + $0x60] sm:$0xf]
      %v315 = vld [vmem:[%s265 + $0x64] sm:$0xf]
      %v316 = vld [vmem:[%s265 + $0x68] sm:$0x1]
      %v317 = vld [vmem:[%s265 + $0x6c] sm:$0xf]
      %v318 = vld [vmem:[%s265 + $0x70] sm:$0xf]
      %v319 = vld [vmem:[%s265 + $0x74] sm:$0x1]
      %v320 = vld [vmem:[%s265 + $0x78] sm:$0xf]
      %v321 = vld [vmem:[%s265 + $0x7c] sm:$0xf]
      %v322 = vld [vmem:[%s265 + $0x80] sm:$0x1]
      %v323 = vld [vmem:[%s265 + $0x84] sm:$0xf]
      %v324 = vld [vmem:[%s265 + $0x88] sm:$0xf]
      %v325 = vld [vmem:[%s265 + $0x8c] sm:$0x1]
      %v326 = vld [vmem:[%s265 + $0x90] sm:$0xf]
      %v327 = vld [vmem:[%s265 + $0x94] sm:$0xf]
      %v328 = vld [vmem:[%s265 + $0x98] sm:$0x1]
      %v329 = vld [vmem:[%s265 + $0x9c] sm:$0xf]
      %v330 = vld [vmem:[%s265 + $0xa0] sm:$0xf]
      %v331 = vld [vmem:[%s265 + $0xa4] sm:$0x1]
      %v332 = vld [vmem:[%s265 + $0xa8] sm:$0xf]
      %v333 = vld [vmem:[%s265 + $0xac] sm:$0xf]
      %v334 = vld [vmem:[%s265 + $0xb0] sm:$0x1]
      %v335 = vld [vmem:[%s265 + $0xb4] sm:$0xf]
      %v336 = vld [vmem:[%s265 + $0xb8] sm:$0xf]
      %v337 = vld [vmem:[%s265 + $0xbc] sm:$0x1]
      %v338 = vld [vmem:[%s265 + $0xc0] sm:$0xf]
      %v339 = vld [vmem:[%s265 + $0xc4] sm:$0xf]
      %v340 = vld [vmem:[%s265 + $0xc8] sm:$0x1]
      %v341 = vld [vmem:[%s265 + $0xcc] sm:$0xf]
      %v342 = vld [vmem:[%s265 + $0xd0] sm:$0xf]
      %v343 = vld [vmem:[%s265 + $0xd4] sm:$0x1]
      %v344 = vld [vmem:[%s2] sm:$0x3]
      %vm345 = vsmask.f32 3328
      %vm346 = vsmask.f32 7440
      %vm347 = vmor %vm345, %vm346
      %v349 = vshrl.u32 %v290, 16
      %v351 = vrot.slane %v349, 4
      %v352 = vshll.u32 %v290, 16
      %v354 = vrot.slane %v352, 5
      %v355 = vor.u32 %v351, %v354
      %v356 = vrot.slane %v355, 4
      %v358 = vshll.u32 %v291, 16
      %v360 = vrot.slane %v358, 5
      %v361 = vsel %vm347, %v356, %v360
      %v362 = vshrl.u32 %v291, 16
      %v364 = vrot.slane %v362, 4
      %v365 = vor.u32 %v364, %v360
      %v366 = vrot.slane %v365, 4
      %v368 = vshll.u32 %v292, 16
      %v370 = vrot.slane %v368, 5
      %v371 = vsel %vm347, %v366, %v370
      %v373 = vshrl.u32 %v293, 16
      %v375 = vrot.slane %v373, 4
      %v376 = vshll.u32 %v293, 16
      %v378 = vrot.slane %v376, 5
      %v379 = vor.u32 %v375, %v378
      %v380 = vrot.slane %v379, 4
      %v382 = vshll.u32 %v294, 16
      %v384 = vrot.slane %v382, 5
      %v385 = vsel %vm347, %v380, %v384
      %v386 = vshrl.u32 %v294, 16
      %v388 = vrot.slane %v386, 4
      %v389 = vor.u32 %v388, %v384
      %v390 = vrot.slane %v389, 4
      %v392 = vshll.u32 %v295, 16
      %v394 = vrot.slane %v392, 5
      %v395 = vsel %vm347, %v390, %v394
      %v397 = vshrl.u32 %v296, 16
      %v399 = vrot.slane %v397, 4
      %v400 = vshll.u32 %v296, 16
      %v402 = vrot.slane %v400, 5
      %v403 = vor.u32 %v399, %v402
      %v404 = vrot.slane %v403, 4
      %v406 = vshll.u32 %v297, 16
      %v408 = vrot.slane %v406, 5
      %v409 = vsel %vm347, %v404, %v408
      %v410 = vshrl.u32 %v297, 16
      %v412 = vrot.slane %v410, 4
      %v413 = vor.u32 %v412, %v408
      %v414 = vrot.slane %v413, 4
      %v416 = vshll.u32 %v298, 16
      %v418 = vrot.slane %v416, 5
      %v419 = vsel %vm347, %v414, %v418
      %v421 = vshrl.u32 %v299, 16
      %v423 = vrot.slane %v421, 4
      %v424 = vshll.u32 %v299, 16
      %v426 = vrot.slane %v424, 5
      %v427 = vor.u32 %v423, %v426
      %v428 = vrot.slane %v427, 4
      %v430 = vshll.u32 %v300, 16
      %v432 = vrot.slane %v430, 5
      %v433 = vsel %vm347, %v428, %v432
      %v434 = vshrl.u32 %v300, 16
      %v436 = vrot.slane %v434, 4
      %v437 = vor.u32 %v436, %v432
      %v438 = vrot.slane %v437, 4
      %v440 = vshll.u32 %v301, 16
      %v442 = vrot.slane %v440, 5
      %v443 = vsel %vm347, %v438, %v442
      %v445 = vshrl.u32 %v302, 16
      %v447 = vrot.slane %v445, 4
      %v448 = vshll.u32 %v302, 16
      %v450 = vrot.slane %v448, 5
      %v451 = vor.u32 %v447, %v450
      %v452 = vrot.slane %v451, 4
      %v454 = vshll.u32 %v303, 16
      %v456 = vrot.slane %v454, 5
      %v457 = vsel %vm347, %v452, %v456
      %v458 = vshrl.u32 %v303, 16
      %v460 = vrot.slane %v458, 4
      %v461 = vor.u32 %v460, %v456
      %v462 = vrot.slane %v461, 4
      %v464 = vshll.u32 %v304, 16
      %v466 = vrot.slane %v464, 5
      %v467 = vsel %vm347, %v462, %v466
      %v469 = vshrl.u32 %v305, 16
      %v471 = vrot.slane %v469, 4
      %v472 = vshll.u32 %v305, 16
      %v474 = vrot.slane %v472, 5
      %v475 = vor.u32 %v471, %v474
      %v476 = vrot.slane %v475, 4
      %v478 = vshll.u32 %v306, 16
      %v480 = vrot.slane %v478, 5
      %v481 = vsel %vm347, %v476, %v480
      %v482 = vshrl.u32 %v306, 16
      %v484 = vrot.slane %v482, 4
      %v485 = vor.u32 %v484, %v480
      %v486 = vrot.slane %v485, 4
      %v488 = vshll.u32 %v307, 16
      %v490 = vrot.slane %v488, 5
      %v491 = vsel %vm347, %v486, %v490
      %v493 = vshrl.u32 %v308, 16
      %v495 = vrot.slane %v493, 4
      %v496 = vshll.u32 %v308, 16
      %v498 = vrot.slane %v496, 5
      %v499 = vor.u32 %v495, %v498
      %v500 = vrot.slane %v499, 4
      %v502 = vshll.u32 %v309, 16
      %v504 = vrot.slane %v502, 5
      %v505 = vsel %vm347, %v500, %v504
      %v506 = vshrl.u32 %v309, 16
      %v508 = vrot.slane %v506, 4
      %v509 = vor.u32 %v508, %v504
      %v510 = vrot.slane %v509, 4
      %v512 = vshll.u32 %v310, 16
      %v514 = vrot.slane %v512, 5
      %v515 = vsel %vm347, %v510, %v514
      %v517 = vshrl.u32 %v311, 16
      %v519 = vrot.slane %v517, 4
      %v520 = vshll.u32 %v311, 16
      %v522 = vrot.slane %v520, 5
      %v523 = vor.u32 %v519, %v522
      %v524 = vrot.slane %v523, 4
      %v526 = vshll.u32 %v312, 16
      %v528 = vrot.slane %v526, 5
      %v529 = vsel %vm347, %v524, %v528
      %v530 = vshrl.u32 %v312, 16
      %v532 = vrot.slane %v530, 4
      %v533 = vor.u32 %v532, %v528
      %v534 = vrot.slane %v533, 4
      %v536 = vshll.u32 %v313, 16
      %v538 = vrot.slane %v536, 5
      %v539 = vsel %vm347, %v534, %v538
      %v541 = vshrl.u32 %v314, 16
      %v543 = vrot.slane %v541, 4
      %v544 = vshll.u32 %v314, 16
      %v546 = vrot.slane %v544, 5
      %v547 = vor.u32 %v543, %v546
      %v548 = vrot.slane %v547, 4
      %v550 = vshll.u32 %v315, 16
      %v552 = vrot.slane %v550, 5
      %v553 = vsel %vm347, %v548, %v552
      %v554 = vshrl.u32 %v315, 16
      %v556 = vrot.slane %v554, 4
      %v557 = vor.u32 %v556, %v552
      %v558 = vrot.slane %v557, 4
      %v560 = vshll.u32 %v316, 16
      %v562 = vrot.slane %v560, 5
      %v563 = vsel %vm347, %v558, %v562
      %v565 = vshrl.u32 %v317, 16
      %v567 = vrot.slane %v565, 4
      %v568 = vshll.u32 %v317, 16
      %v570 = vrot.slane %v568, 5
      %v571 = vor.u32 %v567, %v570
      %v572 = vrot.slane %v571, 4
      %v574 = vshll.u32 %v318, 16
      %v576 = vrot.slane %v574, 5
      %v577 = vsel %vm347, %v572, %v576
      %v578 = vshrl.u32 %v318, 16
      %v580 = vrot.slane %v578, 4
      %v581 = vor.u32 %v580, %v576
      %v582 = vrot.slane %v581, 4
      %v584 = vshll.u32 %v319, 16
      %v586 = vrot.slane %v584, 5
      %v587 = vsel %vm347, %v582, %v586
      %v589 = vshrl.u32 %v320, 16
      %v591 = vrot.slane %v589, 4
      %v592 = vshll.u32 %v320, 16
      %v594 = vrot.slane %v592, 5
      %v595 = vor.u32 %v591, %v594
      %v596 = vrot.slane %v595, 4
      %v598 = vshll.u32 %v321, 16
      %v600 = vrot.slane %v598, 5
      %v601 = vsel %vm347, %v596, %v600
      %v602 = vshrl.u32 %v321, 16
      %v604 = vrot.slane %v602, 4
      %v605 = vor.u32 %v604, %v600
      %v606 = vrot.slane %v605, 4
      %v608 = vshll.u32 %v322, 16
      %v610 = vrot.slane %v608, 5
      %v611 = vsel %vm347, %v606, %v610
      %v613 = vshrl.u32 %v323, 16
      %v615 = vrot.slane %v613, 4
      %v616 = vshll.u32 %v323, 16
      %v618 = vrot.slane %v616, 5
      %v619 = vor.u32 %v615, %v618
      %v620 = vrot.slane %v619, 4
      %v622 = vshll.u32 %v324, 16
      %v624 = vrot.slane %v622, 5
      %v625 = vsel %vm347, %v620, %v624
      %v626 = vshrl.u32 %v324, 16
      %v628 = vrot.slane %v626, 4
      %v629 = vor.u32 %v628, %v624
      %v630 = vrot.slane %v629, 4
      %v632 = vshll.u32 %v325, 16
      %v634 = vrot.slane %v632, 5
      %v635 = vsel %vm347, %v630, %v634
      %v637 = vshrl.u32 %v326, 16
      %v639 = vrot.slane %v637, 4
      %v640 = vshll.u32 %v326, 16
      %v642 = vrot.slane %v640, 5
      %v643 = vor.u32 %v639, %v642
      %v644 = vrot.slane %v643, 4
      %v646 = vshll.u32 %v327, 16
      %v648 = vrot.slane %v646, 5
      %v649 = vsel %vm347, %v644, %v648
      %v650 = vshrl.u32 %v327, 16
      %v652 = vrot.slane %v650, 4
      %v653 = vor.u32 %v652, %v648
      %v654 = vrot.slane %v653, 4
      %v656 = vshll.u32 %v328, 16
      %v658 = vrot.slane %v656, 5
      %v659 = vsel %vm347, %v654, %v658
      %v661 = vshrl.u32 %v329, 16
      %v663 = vrot.slane %v661, 4
      %v664 = vshll.u32 %v329, 16
      %v666 = vrot.slane %v664, 5
      %v667 = vor.u32 %v663, %v666
      %v668 = vrot.slane %v667, 4
      %v670 = vshll.u32 %v330, 16
      %v672 = vrot.slane %v670, 5
      %v673 = vsel %vm347, %v668, %v672
      %v674 = vshrl.u32 %v330, 16
      %v676 = vrot.slane %v674, 4
      %v677 = vor.u32 %v676, %v672
      %v678 = vrot.slane %v677, 4
      %v680 = vshll.u32 %v331, 16
      %v682 = vrot.slane %v680, 5
      %v683 = vsel %vm347, %v678, %v682
      %v685 = vshrl.u32 %v332, 16
      %v687 = vrot.slane %v685, 4
      %v688 = vshll.u32 %v332, 16
      %v690 = vrot.slane %v688, 5
      %v691 = vor.u32 %v687, %v690
      %v692 = vrot.slane %v691, 4
      %v694 = vshll.u32 %v333, 16
      %v696 = vrot.slane %v694, 5
      %v697 = vsel %vm347, %v692, %v696
      %v698 = vshrl.u32 %v333, 16
      %v700 = vrot.slane %v698, 4
      %v701 = vor.u32 %v700, %v696
      %v702 = vrot.slane %v701, 4
      %v704 = vshll.u32 %v334, 16
      %v706 = vrot.slane %v704, 5
      %v707 = vsel %vm347, %v702, %v706
      %v709 = vshrl.u32 %v335, 16
      %v711 = vrot.slane %v709, 4
      %v712 = vshll.u32 %v335, 16
      %v714 = vrot.slane %v712, 5
      %v715 = vor.u32 %v711, %v714
      %v716 = vrot.slane %v715, 4
      %v718 = vshll.u32 %v336, 16
      %v720 = vrot.slane %v718, 5
      %v721 = vsel %vm347, %v716, %v720
      %v722 = vshrl.u32 %v336, 16
      %v724 = vrot.slane %v722, 4
      %v725 = vor.u32 %v724, %v720
      %v726 = vrot.slane %v725, 4
      %v728 = vshll.u32 %v337, 16
      %v730 = vrot.slane %v728, 5
      %v731 = vsel %vm347, %v726, %v730
      %s732 = scalar_lea.vmem %s2, 2
      %v733 = vld [vmem:[%s732] sm:$0x3]
      %v734 = vunpack.c.l.b16 %v361
      %v735 = vunpack.c.l.b16 %v371
      %v736 = vunpack.c.l.b16 %v385
      %v737 = vunpack.c.l.b16 %v395
      %v738 = vunpack.c.l.b16 %v409
      %v739 = vunpack.c.l.b16 %v419
      %v740 = vunpack.c.l.b16 %v433
      %v741 = vunpack.c.l.b16 %v443
      %v742 = vunpack.c.l.b16 %v457
      %v743 = vunpack.c.l.b16 %v467
      %v744 = vunpack.c.l.b16 %v481
      %v745 = vunpack.c.l.b16 %v491
      %v746 = vunpack.c.l.b16 %v505
      %v747 = vunpack.c.l.b16 %v515
      %v748 = vunpack.c.l.b16 %v529
      %v749 = vunpack.c.l.b16 %v539
      %v750 = vunpack.c.l.b16 %v553
      %v751 = vunpack.c.l.b16 %v563
      %v752 = vunpack.c.l.b16 %v577
      %v753 = vunpack.c.l.b16 %v587
      %v754 = vunpack.c.l.b16 %v601
      %v755 = vunpack.c.l.b16 %v611
      %v756 = vunpack.c.l.b16 %v625
      %v757 = vunpack.c.l.b16 %v635
      %v758 = vunpack.c.l.b16 %v649
      %v759 = vunpack.c.l.b16 %v659
      %v760 = vunpack.c.l.b16 %v673
      %v761 = vunpack.c.l.b16 %v683
      %v762 = vunpack.c.l.b16 %v697
      %v763 = vunpack.c.l.b16 %v707
      %v764 = vunpack.c.l.b16 %v721
      %v765 = vunpack.c.l.b16 %v731
      %v766 = vpack.c.b16 %v735, %v734
      %v767 = vpack.c.b16 %v737, %v736
      %v768 = vpack.c.b16 %v739, %v738
      %v769 = vpack.c.b16 %v741, %v740
      %v770 = vpack.c.b16 %v743, %v742
      %v771 = vpack.c.b16 %v745, %v744
      %v772 = vpack.c.b16 %v747, %v746
      %v773 = vpack.c.b16 %v749, %v748
      %v774 = vpack.c.b16 %v751, %v750
      %v775 = vpack.c.b16 %v753, %v752
      %v776 = vpack.c.b16 %v755, %v754
      %v777 = vpack.c.b16 %v757, %v756
      %v778 = vpack.c.b16 %v759, %v758
      %v779 = vpack.c.b16 %v761, %v760
      %v780 = vpack.c.b16 %v763, %v762
      %v781 = vpack.c.b16 %v765, %v764
      %vm782 = vcmask 31744
      %v784 = vsel %vm782, %v766, 0
      %v787 = vsel %vm782, %v767, 0
      %v790 = vsel %vm782, %v768, 0
      %v793 = vsel %vm782, %v769, 0
      %v796 = vsel %vm782, %v770, 0
      %v799 = vsel %vm782, %v771, 0
      %v802 = vsel %vm782, %v772, 0
      %v805 = vsel %vm782, %v773, 0
      %v808 = vsel %vm782, %v774, 0
      %v811 = vsel %vm782, %v775, 0
      %v814 = vsel %vm782, %v776, 0
      %v817 = vsel %vm782, %v777, 0
      %v820 = vsel %vm782, %v778, 0
      %v823 = vsel %vm782, %v779, 0
      %v826 = vsel %vm782, %v780, 0
      %v829 = vsel %vm782, %v781, 0
      %vm831 = vcmask 1041408
      %v833 = vsel %vm831, %v733, 0
      %835 = vmatprep.subr.bf16.mxu0 0
      %836 = vmatpush1.bf16.msra.mxu0 %v833
      %837 = vmatprep.subr.bf16.mxu0 0
      %838 = vmatpush1.bf16.msra.mxu0 0
      %839 = vmatprep.subr.bf16.mxu0 0
      %840 = vmatpush1.bf16.msra.mxu0 0
      %841 = vmatprep.subr.bf16.mxu0 0
      %842 = vmatpush1.bf16.msra.mxu0 0
      %843 = vmatprep.subr.bf16.mxu0 0
      %844 = vmatpush1.bf16.msra.mxu0 0
      %845 = vmatprep.subr.bf16.mxu0 0
      %846 = vmatpush1.bf16.msra.mxu0 0
      %847 = vmatprep.subr.bf16.mxu0 0
      %848 = vmatpush1.bf16.msra.mxu0 0
      %849 = vmatprep.subr.bf16.mxu0 0
      %850 = vmatpush1.bf16.msra.mxu0 0
      %851 = vmatprep.subr.bf16.mxu0 0
      %852 = vmatpush1.bf16.msra.mxu0 0
      %853 = vmatprep.subr.bf16.mxu0 0
      %854 = vmatpush1.bf16.msra.mxu0 0
      %855 = vmatprep.subr.bf16.mxu0 0
      %856 = vmatpush1.bf16.msra.mxu0 0
      %857 = vmatprep.subr.bf16.mxu0 0
      %858 = vmatpush1.bf16.msra.mxu0 0
      %859 = vmatprep.subr.bf16.mxu0 0
      %860 = vmatpush1.bf16.msra.mxu0 0
      %861 = vmatprep.subr.bf16.mxu0 0
      %862 = vmatpush1.bf16.msra.mxu0 0
      %863 = vmatprep.subr.bf16.mxu0 0
      %864 = vmatpush1.bf16.msra.mxu0 0
      %865 = vmatprep.subr.bf16.mxu0 0
      %866 = vmatpush1.bf16.msra.mxu0 0
      %867 = vmatprep.mubr.bf16.mxu0 0
      %868 = vmatmul.mubr.bf16.gmra.mrb[0].mxu0 %v784
      %v869 = vpop.f32.mrb[0].mxu0
      %v870 = vadd.f32 0.0, %v869
      %v871 = vpop.f32.mrb[0].mxu0
      %v872 = vpop.f32.mrb[0].mxu0
      %v873 = vadd.f32 0.0, %v872
      %v874 = vpop.f32.mrb[0].mxu0
      %875 = vmatprep.mubr.bf16.mxu0 0
      %876 = vmatmul.mubr.bf16.gmra.mrb[0].mxu0 %v787
      %v877 = vpop.f32.mrb[0].mxu0
      %v878 = vadd.f32 0.0, %v877
      %v879 = vpop.f32.mrb[0].mxu0
      %v880 = vpop.f32.mrb[0].mxu0
      %v881 = vadd.f32 0.0, %v880
      %v882 = vpop.f32.mrb[0].mxu0
      %883 = vmatprep.mubr.bf16.mxu0 0
      %884 = vmatmul.mubr.bf16.gmra.mrb[0].mxu0 %v790
      %v885 = vpop.f32.mrb[0].mxu0
      %v886 = vadd.f32 0.0, %v885
      %v887 = vpop.f32.mrb[0].mxu0
      %v888 = vpop.f32.mrb[0].mxu0
      %v889 = vadd.f32 0.0, %v888
      %v890 = vpop.f32.mrb[0].mxu0
      %891 = vmatprep.mubr.bf16.mxu0 0
      %892 = vmatmul.mubr.bf16.gmra.mrb[0].mxu0 %v793
      %v893 = vpop.f32.mrb[0].mxu0
      %v894 = vadd.f32 0.0, %v893
      %v895 = vpop.f32.mrb[0].mxu0
      %v896 = vpop.f32.mrb[0].mxu0
      %v897 = vadd.f32 0.0, %v896
      %v898 = vpop.f32.mrb[0].mxu0
      %899 = vmatprep.mubr.bf16.mxu0 0
      %900 = vmatmul.mubr.bf16.gmra.mrb[0].mxu0 %v796
      %v901 = vpop.f32.mrb[0].mxu0
      %v902 = vadd.f32 0.0, %v901
      %v903 = vpop.f32.mrb[0].mxu0
      %v904 = vpop.f32.mrb[0].mxu0
      %v905 = vadd.f32 0.0, %v904
      %v906 = vpop.f32.mrb[0].mxu0
      %907 = vmatprep.mubr.bf16.mxu0 0
      %908 = vmatmul.mubr.bf16.gmra.mrb[0].mxu0 %v799
      %v909 = vpop.f32.mrb[0].mxu0
      %v910 = vadd.f32 0.0, %v909
      %v911 = vpop.f32.mrb[0].mxu0
      %v912 = vpop.f32.mrb[0].mxu0
      %v913 = vadd.f32 0.0, %v912
      %v914 = vpop.f32.mrb[0].mxu0
      %915 = vmatprep.mubr.bf16.mxu0 0
      %916 = vmatmul.mubr.bf16.gmra.mrb[0].mxu0 %v802
      %v917 = vpop.f32.mrb[0].mxu0
      %v918 = vadd.f32 0.0, %v917
      %v919 = vpop.f32.mrb[0].mxu0
      %v920 = vpop.f32.mrb[0].mxu0
      %v921 = vadd.f32 0.0, %v920
      %v922 = vpop.f32.mrb[0].mxu0
      %923 = vmatprep.mubr.bf16.mxu0 0
      %924 = vmatmul.mubr.bf16.gmra.mrb[0].mxu0 %v805
      %v925 = vpop.f32.mrb[0].mxu0
      %v926 = vadd.f32 0.0, %v925
      %v927 = vpop.f32.mrb[0].mxu0
      %v928 = vpop.f32.mrb[0].mxu0
      %v929 = vadd.f32 0.0, %v928
      %v930 = vpop.f32.mrb[0].mxu0
      %931 = vmatprep.mubr.bf16.mxu0 0
      %932 = vmatmul.mubr.bf16.gmra.mrb[0].mxu0 %v808
      %v933 = vpop.f32.mrb[0].mxu0
      %v934 = vadd.f32 0.0, %v933
      %v935 = vpop.f32.mrb[0].mxu0
      %v936 = vpop.f32.mrb[0].mxu0
      %v937 = vadd.f32 0.0, %v936
      %v938 = vpop.f32.mrb[0].mxu0
      %939 = vmatprep.mubr.bf16.mxu0 0
      %940 = vmatmul.mubr.bf16.gmra.mrb[0].mxu0 %v811
      %v941 = vpop.f32.mrb[0].mxu0
      %v942 = vadd.f32 0.0, %v941
      %v943 = vpop.f32.mrb[0].mxu0
      %v944 = vpop.f32.mrb[0].mxu0
      %v945 = vadd.f32 0.0, %v944
      %v946 = vpop.f32.mrb[0].mxu0
      %947 = vmatprep.mubr.bf16.mxu0 0
      %948 = vmatmul.mubr.bf16.gmra.mrb[0].mxu0 %v814
      %v949 = vpop.f32.mrb[0].mxu0
      %v950 = vadd.f32 0.0, %v949
      %v951 = vpop.f32.mrb[0].mxu0
      %v952 = vpop.f32.mrb[0].mxu0
      %v953 = vadd.f32 0.0, %v952
      %v954 = vpop.f32.mrb[0].mxu0
      %955 = vmatprep.mubr.bf16.mxu0 0
      %956 = vmatmul.mubr.bf16.gmra.mrb[0].mxu0 %v817
      %v957 = vpop.f32.mrb[0].mxu0
      %v958 = vadd.f32 0.0, %v957
      %v959 = vpop.f32.mrb[0].mxu0
      %v960 = vpop.f32.mrb[0].mxu0
      %v961 = vadd.f32 0.0, %v960
      %v962 = vpop.f32.mrb[0].mxu0
      %963 = vmatprep.mubr.bf16.mxu0 0
      %964 = vmatmul.mubr.bf16.gmra.mrb[0].mxu0 %v820
      %v965 = vpop.f32.mrb[0].mxu0
      %v966 = vadd.f32 0.0, %v965
      %v967 = vpop.f32.mrb[0].mxu0
      %v968 = vpop.f32.mrb[0].mxu0
      %v969 = vadd.f32 0.0, %v968
      %v970 = vpop.f32.mrb[0].mxu0
      %971 = vmatprep.mubr.bf16.mxu0 0
      %972 = vmatmul.mubr.bf16.gmra.mrb[0].mxu0 %v823
      %v973 = vpop.f32.mrb[0].mxu0
      %v974 = vadd.f32 0.0, %v973
      %v975 = vpop.f32.mrb[0].mxu0
      %v976 = vpop.f32.mrb[0].mxu0
      %v977 = vadd.f32 0.0, %v976
      %v978 = vpop.f32.mrb[0].mxu0
      %979 = vmatprep.mubr.bf16.mxu0 0
      %980 = vmatmul.mubr.bf16.gmra.mrb[0].mxu0 %v826
      %v981 = vpop.f32.mrb[0].mxu0
      %v982 = vadd.f32 0.0, %v981
      %v983 = vpop.f32.mrb[0].mxu0
      %v984 = vpop.f32.mrb[0].mxu0
      %v985 = vadd.f32 0.0, %v984
      %v986 = vpop.f32.mrb[0].mxu0
      %987 = vmatprep.mubr.bf16.mxu0 0
      %988 = vmatmul.mubr.bf16.gmra.mrb[0].mxu0 %v829
      %v989 = vpop.f32.mrb[0].mxu0
      %v990 = vadd.f32 0.0, %v989
      %v991 = vpop.f32.mrb[0].mxu0
      %v992 = vpop.f32.mrb[0].mxu0
      %v993 = vadd.f32 0.0, %v992
      %v994 = vpop.f32.mrb[0].mxu0
      %995 = vdwg.mxu0
      %v1028 = vunpack.c.l.b16 %v290
      %v1029 = vunpack.c.l.b16 %v291
      %v1030 = vunpack.c.l.b16 %v293
      %v1031 = vunpack.c.l.b16 %v294
      %v1032 = vunpack.c.l.b16 %v296
      %v1033 = vunpack.c.l.b16 %v297
      %v1034 = vunpack.c.l.b16 %v299
      %v1035 = vunpack.c.l.b16 %v300
      %v1036 = vunpack.c.l.b16 %v302
      %v1037 = vunpack.c.l.b16 %v303
      %v1038 = vunpack.c.l.b16 %v305
      %v1039 = vunpack.c.l.b16 %v306
      %v1040 = vunpack.c.l.b16 %v308
      %v1041 = vunpack.c.l.b16 %v309
      %v1042 = vunpack.c.l.b16 %v311
      %v1043 = vunpack.c.l.b16 %v312
      %v1044 = vunpack.c.l.b16 %v314
      %v1045 = vunpack.c.l.b16 %v315
      %v1046 = vunpack.c.l.b16 %v317
      %v1047 = vunpack.c.l.b16 %v318
      %v1048 = vunpack.c.l.b16 %v320
      %v1049 = vunpack.c.l.b16 %v321
      %v1050 = vunpack.c.l.b16 %v323
      %v1051 = vunpack.c.l.b16 %v324
      %v1052 = vunpack.c.l.b16 %v326
      %v1053 = vunpack.c.l.b16 %v327
      %v1054 = vunpack.c.l.b16 %v329
      %v1055 = vunpack.c.l.b16 %v330
      %v1056 = vunpack.c.l.b16 %v332
      %v1057 = vunpack.c.l.b16 %v333
      %v1058 = vunpack.c.l.b16 %v335
      %v1059 = vunpack.c.l.b16 %v336
      %v1060 = vpack.c.b16 %v1029, %v1028
      %v1061 = vpack.c.b16 %v1031, %v1030
      %v1062 = vpack.c.b16 %v1033, %v1032
      %v1063 = vpack.c.b16 %v1035, %v1034
      %v1064 = vpack.c.b16 %v1037, %v1036
      %v1065 = vpack.c.b16 %v1039, %v1038
      %v1066 = vpack.c.b16 %v1041, %v1040
      %v1067 = vpack.c.b16 %v1043, %v1042
      %v1068 = vpack.c.b16 %v1045, %v1044
      %v1069 = vpack.c.b16 %v1047, %v1046
      %v1070 = vpack.c.b16 %v1049, %v1048
      %v1071 = vpack.c.b16 %v1051, %v1050
      %v1072 = vpack.c.b16 %v1053, %v1052
      %v1073 = vpack.c.b16 %v1055, %v1054
      %v1074 = vpack.c.b16 %v1057, %v1056
      %v1075 = vpack.c.b16 %v1059, %v1058
      %v1077 = vsel %vm782, %v1060, 0
      %v1080 = vsel %vm782, %v1061, 0
      %v1083 = vsel %vm782, %v1062, 0
      %v1086 = vsel %vm782, %v1063, 0
      %v1089 = vsel %vm782, %v1064, 0
      %v1092 = vsel %vm782, %v1065, 0
      %v1095 = vsel %vm782, %v1066, 0
      %v1098 = vsel %vm782, %v1067, 0
      %v1101 = vsel %vm782, %v1068, 0
      %v1104 = vsel %vm782, %v1069, 0
      %v1107 = vsel %vm782, %v1070, 0
      %v1110 = vsel %vm782, %v1071, 0
      %v1113 = vsel %vm782, %v1072, 0
      %v1116 = vsel %vm782, %v1073, 0
      %v1119 = vsel %vm782, %v1074, 0
      %v1122 = vsel %vm782, %v1075, 0
      %v1125 = vsel %vm831, %v344, 0
      %1127 = vmatprep.subr.bf16.mxu0 0
      %1128 = vmatpush1.bf16.msra.mxu0 %v1125
      %1129 = vmatprep.subr.bf16.mxu0 0
      %1130 = vmatpush1.bf16.msra.mxu0 0
      %1131 = vmatprep.subr.bf16.mxu0 0
      %1132 = vmatpush1.bf16.msra.mxu0 0
      %1133 = vmatprep.subr.bf16.mxu0 0
      %1134 = vmatpush1.bf16.msra.mxu0 0
      %1135 = vmatprep.subr.bf16.mxu0 0
      %1136 = vmatpush1.bf16.msra.mxu0 0
      %1137 = vmatprep.subr.bf16.mxu0 0
      %1138 = vmatpush1.bf16.msra.mxu0 0
      %1139 = vmatprep.subr.bf16.mxu0 0
      %1140 = vmatpush1.bf16.msra.mxu0 0
      %1141 = vmatprep.subr.bf16.mxu0 0
      %1142 = vmatpush1.bf16.msra.mxu0 0
      %1143 = vmatprep.subr.bf16.mxu0 0
      %1144 = vmatpush1.bf16.msra.mxu0 0
      %1145 = vmatprep.subr.bf16.mxu0 0
      %1146 = vmatpush1.bf16.msra.mxu0 0
      %1147 = vmatprep.subr.bf16.mxu0 0
      %1148 = vmatpush1.bf16.msra.mxu0 0
      %1149 = vmatprep.subr.bf16.mxu0 0
      %1150 = vmatpush1.bf16.msra.mxu0 0
      %1151 = vmatprep.subr.bf16.mxu0 0
      %1152 = vmatpush1.bf16.msra.mxu0 0
      %1153 = vmatprep.subr.bf16.mxu0 0
      %1154 = vmatpush1.bf16.msra.mxu0 0
      %1155 = vmatprep.subr.bf16.mxu0 0
      %1156 = vmatpush1.bf16.msra.mxu0 0
      %1157 = vmatprep.subr.bf16.mxu0 0
      %1158 = vmatpush1.bf16.msra.mxu0 0
      %1159 = vmatprep.mubr.bf16.mxu0 0
      %1160 = vmatmul.mubr.bf16.gmra.mrb[0].mxu0 %v1077
      %v1161 = vpop.f32.mrb[0].mxu0
      %v1162 = vadd.f32 %v870, %v1161
      %v1163 = vpop.f32.mrb[0].mxu0
      %v1164 = vpop.f32.mrb[0].mxu0
      %v1165 = vadd.f32 %v873, %v1164
      %v1166 = vpop.f32.mrb[0].mxu0
      %1167 = vmatprep.mubr.bf16.mxu0 0
      %1168 = vmatmul.mubr.bf16.gmra.mrb[0].mxu0 %v1080
      %v1169 = vpop.f32.mrb[0].mxu0
      %v1170 = vadd.f32 %v878, %v1169
      %v1171 = vpop.f32.mrb[0].mxu0
      %v1172 = vpop.f32.mrb[0].mxu0
      %v1173 = vadd.f32 %v881, %v1172
      %v1174 = vpop.f32.mrb[0].mxu0
      %1175 = vmatprep.mubr.bf16.mxu0 0
      %1176 = vmatmul.mubr.bf16.gmra.mrb[0].mxu0 %v1083
      %v1177 = vpop.f32.mrb[0].mxu0
      %v1178 = vadd.f32 %v886, %v1177
      %v1179 = vpop.f32.mrb[0].mxu0
      %v1180 = vpop.f32.mrb[0].mxu0
      %v1181 = vadd.f32 %v889, %v1180
      %v1182 = vpop.f32.mrb[0].mxu0
      %1183 = vmatprep.mubr.bf16.mxu0 0
      %1184 = vmatmul.mubr.bf16.gmra.mrb[0].mxu0 %v1086
      %v1185 = vpop.f32.mrb[0].mxu0
      %v1186 = vadd.f32 %v894, %v1185
      %v1187 = vpop.f32.mrb[0].mxu0
      %v1188 = vpop.f32.mrb[0].mxu0
      %v1189 = vadd.f32 %v897, %v1188
      %v1190 = vpop.f32.mrb[0].mxu0
      %1191 = vmatprep.mubr.bf16.mxu0 0
      %1192 = vmatmul.mubr.bf16.gmra.mrb[0].mxu0 %v1089
      %v1193 = vpop.f32.mrb[0].mxu0
      %v1194 = vadd.f32 %v902, %v1193
      %v1195 = vpop.f32.mrb[0].mxu0
      %v1196 = vpop.f32.mrb[0].mxu0
      %v1197 = vadd.f32 %v905, %v1196
      %v1198 = vpop.f32.mrb[0].mxu0
      %1199 = vmatprep.mubr.bf16.mxu0 0
      %1200 = vmatmul.mubr.bf16.gmra.mrb[0].mxu0 %v1092
      %v1201 = vpop.f32.mrb[0].mxu0
      %v1202 = vadd.f32 %v910, %v1201
      %v1203 = vpop.f32.mrb[0].mxu0
      %v1204 = vpop.f32.mrb[0].mxu0
      %v1205 = vadd.f32 %v913, %v1204
      %v1206 = vpop.f32.mrb[0].mxu0
      %1207 = vmatprep.mubr.bf16.mxu0 0
      %1208 = vmatmul.mubr.bf16.gmra.mrb[0].mxu0 %v1095
      %v1209 = vpop.f32.mrb[0].mxu0
      %v1210 = vadd.f32 %v918, %v1209
      %v1211 = vpop.f32.mrb[0].mxu0
      %v1212 = vpop.f32.mrb[0].mxu0
      %v1213 = vadd.f32 %v921, %v1212
      %v1214 = vpop.f32.mrb[0].mxu0
      %1215 = vmatprep.mubr.bf16.mxu0 0
      %1216 = vmatmul.mubr.bf16.gmra.mrb[0].mxu0 %v1098
      %v1217 = vpop.f32.mrb[0].mxu0
      %v1218 = vadd.f32 %v926, %v1217
      %v1219 = vpop.f32.mrb[0].mxu0
      %v1220 = vpop.f32.mrb[0].mxu0
      %v1221 = vadd.f32 %v929, %v1220
      %v1222 = vpop.f32.mrb[0].mxu0
      %1223 = vmatprep.mubr.bf16.mxu0 0
      %1224 = vmatmul.mubr.bf16.gmra.mrb[0].mxu0 %v1101
      %v1225 = vpop.f32.mrb[0].mxu0
      %v1226 = vadd.f32 %v934, %v1225
      %v1227 = vpop.f32.mrb[0].mxu0
      %v1228 = vpop.f32.mrb[0].mxu0
      %v1229 = vadd.f32 %v937, %v1228
      %v1230 = vpop.f32.mrb[0].mxu0
      %1231 = vmatprep.mubr.bf16.mxu0 0
      %1232 = vmatmul.mubr.bf16.gmra.mrb[0].mxu0 %v1104
      %v1233 = vpop.f32.mrb[0].mxu0
      %v1234 = vadd.f32 %v942, %v1233
      %v1235 = vpop.f32.mrb[0].mxu0
      %v1236 = vpop.f32.mrb[0].mxu0
      %v1237 = vadd.f32 %v945, %v1236
      %v1238 = vpop.f32.mrb[0].mxu0
      %1239 = vmatprep.mubr.bf16.mxu0 0
      %1240 = vmatmul.mubr.bf16.gmra.mrb[0].mxu0 %v1107
      %v1241 = vpop.f32.mrb[0].mxu0
      %v1242 = vadd.f32 %v950, %v1241
      %v1243 = vpop.f32.mrb[0].mxu0
      %v1244 = vpop.f32.mrb[0].mxu0
      %v1245 = vadd.f32 %v953, %v1244
      %v1246 = vpop.f32.mrb[0].mxu0
      %1247 = vmatprep.mubr.bf16.mxu0 0
      %1248 = vmatmul.mubr.bf16.gmra.mrb[0].mxu0 %v1110
      %v1249 = vpop.f32.mrb[0].mxu0
      %v1250 = vadd.f32 %v958, %v1249
      %v1251 = vpop.f32.mrb[0].mxu0
      %v1252 = vpop.f32.mrb[0].mxu0
      %v1253 = vadd.f32 %v961, %v1252
      %v1254 = vpop.f32.mrb[0].mxu0
      %1255 = vmatprep.mubr.bf16.mxu0 0
      %1256 = vmatmul.mubr.bf16.gmra.mrb[0].mxu0 %v1113
      %v1257 = vpop.f32.mrb[0].mxu0
      %v1258 = vadd.f32 %v966, %v1257
      %v1259 = vpop.f32.mrb[0].mxu0
      %v1260 = vpop.f32.mrb[0].mxu0
      %v1261 = vadd.f32 %v969, %v1260
      %v1262 = vpop.f32.mrb[0].mxu0
      %1263 = vmatprep.mubr.bf16.mxu0 0
      %1264 = vmatmul.mubr.bf16.gmra.mrb[0].mxu0 %v1116
      %v1265 = vpop.f32.mrb[0].mxu0
      %v1266 = vadd.f32 %v974, %v1265
      %v1267 = vpop.f32.mrb[0].mxu0
      %v1268 = vpop.f32.mrb[0].mxu0
      %v1269 = vadd.f32 %v977, %v1268
      %v1270 = vpop.f32.mrb[0].mxu0
      %1271 = vmatprep.mubr.bf16.mxu0 0
      %1272 = vmatmul.mubr.bf16.gmra.mrb[0].mxu0 %v1119
      %v1273 = vpop.f32.mrb[0].mxu0
      %v1274 = vadd.f32 %v982, %v1273
      %v1275 = vpop.f32.mrb[0].mxu0
      %v1276 = vpop.f32.mrb[0].mxu0
      %v1277 = vadd.f32 %v985, %v1276
      %v1278 = vpop.f32.mrb[0].mxu0
      %1279 = vmatprep.mubr.bf16.mxu0 0
      %1280 = vmatmul.mubr.bf16.gmra.mrb[0].mxu0 %v1122
      %v1281 = vpop.f32.mrb[0].mxu0
      %v1282 = vadd.f32 %v990, %v1281
      %v1283 = vpop.f32.mrb[0].mxu0
      %v1284 = vpop.f32.mrb[0].mxu0
      %v1285 = vadd.f32 %v993, %v1284
      %v1286 = vpop.f32.mrb[0].mxu0
      %1287 = vdwg.mxu0
      %vm1304 = vcmask 1042432
      %vm1305 = vcmask 1046532
      %vm1306 = vmor %vm1304, %vm1305
      %v1307 = vrot.slane %v290, 5
      %v1308 = vrot.slane %v1307, 4
      %v1309 = vrot.slane %v291, 5
      %v1310 = vsel %vm1306, %v1308, %v1309
      %v1311 = vrot.slane %v1309, 4
      %v1312 = vrot.slane %v292, 5
      %v1313 = vsel %vm1306, %v1311, %v1312
      %v1314 = vrot.slane %v293, 5
      %v1315 = vrot.slane %v1314, 4
      %v1316 = vrot.slane %v294, 5
      %v1317 = vsel %vm1306, %v1315, %v1316
      %v1318 = vrot.slane %v1316, 4
      %v1319 = vrot.slane %v295, 5
      %v1320 = vsel %vm1306, %v1318, %v1319
      %v1321 = vrot.slane %v296, 5
      %v1322 = vrot.slane %v1321, 4
      %v1323 = vrot.slane %v297, 5
      %v1324 = vsel %vm1306, %v1322, %v1323
      %v1325 = vrot.slane %v1323, 4
      %v1326 = vrot.slane %v298, 5
      %v1327 = vsel %vm1306, %v1325, %v1326
      %v1328 = vrot.slane %v299, 5
      %v1329 = vrot.slane %v1328, 4
      %v1330 = vrot.slane %v300, 5
      %v1331 = vsel %vm1306, %v1329, %v1330
      %v1332 = vrot.slane %v1330, 4
      %v1333 = vrot.slane %v301, 5
      %v1334 = vsel %vm1306, %v1332, %v1333
      %v1335 = vrot.slane %v302, 5
      %v1336 = vrot.slane %v1335, 4
      %v1337 = vrot.slane %v303, 5
      %v1338 = vsel %vm1306, %v1336, %v1337
      %v1339 = vrot.slane %v1337, 4
      %v1340 = vrot.slane %v304, 5
      %v1341 = vsel %vm1306, %v1339, %v1340
      %v1342 = vrot.slane %v305, 5
      %v1343 = vrot.slane %v1342, 4
      %v1344 = vrot.slane %v306, 5
      %v1345 = vsel %vm1306, %v1343, %v1344
      %v1346 = vrot.slane %v1344, 4
      %v1347 = vrot.slane %v307, 5
      %v1348 = vsel %vm1306, %v1346, %v1347
      %v1349 = vrot.slane %v308, 5
      %v1350 = vrot.slane %v1349, 4
      %v1351 = vrot.slane %v309, 5
      %v1352 = vsel %vm1306, %v1350, %v1351
      %v1353 = vrot.slane %v1351, 4
      %v1354 = vrot.slane %v310, 5
      %v1355 = vsel %vm1306, %v1353, %v1354
      %v1356 = vrot.slane %v311, 5
      %v1357 = vrot.slane %v1356, 4
      %v1358 = vrot.slane %v312, 5
      %v1359 = vsel %vm1306, %v1357, %v1358
      %v1360 = vrot.slane %v1358, 4
      %v1361 = vrot.slane %v313, 5
      %v1362 = vsel %vm1306, %v1360, %v1361
      %v1363 = vrot.slane %v314, 5
      %v1364 = vrot.slane %v1363, 4
      %v1365 = vrot.slane %v315, 5
      %v1366 = vsel %vm1306, %v1364, %v1365
      %v1367 = vrot.slane %v1365, 4
      %v1368 = vrot.slane %v316, 5
      %v1369 = vsel %vm1306, %v1367, %v1368
      %v1370 = vrot.slane %v317, 5
      %v1371 = vrot.slane %v1370, 4
      %v1372 = vrot.slane %v318, 5
      %v1373 = vsel %vm1306, %v1371, %v1372
      %v1374 = vrot.slane %v1372, 4
      %v1375 = vrot.slane %v319, 5
      %v1376 = vsel %vm1306, %v1374, %v1375
      %v1377 = vrot.slane %v320, 5
      %v1378 = vrot.slane %v1377, 4
      %v1379 = vrot.slane %v321, 5
      %v1380 = vsel %vm1306, %v1378, %v1379
      %v1381 = vrot.slane %v1379, 4
      %v1382 = vrot.slane %v322, 5
      %v1383 = vsel %vm1306, %v1381, %v1382
      %v1384 = vrot.slane %v323, 5
      %v1385 = vrot.slane %v1384, 4
      %v1386 = vrot.slane %v324, 5
      %v1387 = vsel %vm1306, %v1385, %v1386
      %v1388 = vrot.slane %v1386, 4
      %v1389 = vrot.slane %v325, 5
      %v1390 = vsel %vm1306, %v1388, %v1389
      %v1391 = vrot.slane %v326, 5
      %v1392 = vrot.slane %v1391, 4
      %v1393 = vrot.slane %v327, 5
      %v1394 = vsel %vm1306, %v1392, %v1393
      %v1395 = vrot.slane %v1393, 4
      %v1396 = vrot.slane %v328, 5
      %v1397 = vsel %vm1306, %v1395, %v1396
      %v1398 = vrot.slane %v329, 5
      %v1399 = vrot.slane %v1398, 4
      %v1400 = vrot.slane %v330, 5
      %v1401 = vsel %vm1306, %v1399, %v1400
      %v1402 = vrot.slane %v1400, 4
      %v1403 = vrot.slane %v331, 5
      %v1404 = vsel %vm1306, %v1402, %v1403
      %v1405 = vrot.slane %v332, 5
      %v1406 = vrot.slane %v1405, 4
      %v1407 = vrot.slane %v333, 5
      %v1408 = vsel %vm1306, %v1406, %v1407
      %v1409 = vrot.slane %v1407, 4
      %v1410 = vrot.slane %v334, 5
      %v1411 = vsel %vm1306, %v1409, %v1410
      %v1412 = vrot.slane %v335, 5
      %v1413 = vrot.slane %v1412, 4
      %v1414 = vrot.slane %v336, 5
      %v1415 = vsel %vm1306, %v1413, %v1414
      %v1416 = vrot.slane %v1414, 4
      %v1417 = vrot.slane %v337, 5
      %v1418 = vsel %vm1306, %v1416, %v1417
      %s1419 = scalar_lea.vmem %s2, 4
      %v1420 = vld [vmem:[%s1419] sm:$0x3]
      %v1421 = vunpack.c.l.b16 %v1310
      %v1422 = vunpack.c.l.b16 %v1313
      %v1423 = vunpack.c.l.b16 %v1317
      %v1424 = vunpack.c.l.b16 %v1320
      %v1425 = vunpack.c.l.b16 %v1324
      %v1426 = vunpack.c.l.b16 %v1327
      %v1427 = vunpack.c.l.b16 %v1331
      %v1428 = vunpack.c.l.b16 %v1334
      %v1429 = vunpack.c.l.b16 %v1338
      %v1430 = vunpack.c.l.b16 %v1341
      %v1431 = vunpack.c.l.b16 %v1345
      %v1432 = vunpack.c.l.b16 %v1348
      %v1433 = vunpack.c.l.b16 %v1352
      %v1434 = vunpack.c.l.b16 %v1355
      %v1435 = vunpack.c.l.b16 %v1359
      %v1436 = vunpack.c.l.b16 %v1362
      %v1437 = vunpack.c.l.b16 %v1366
      %v1438 = vunpack.c.l.b16 %v1369
      %v1439 = vunpack.c.l.b16 %v1373
      %v1440 = vunpack.c.l.b16 %v1376
      %v1441 = vunpack.c.l.b16 %v1380
      %v1442 = vunpack.c.l.b16 %v1383
      %v1443 = vunpack.c.l.b16 %v1387
      %v1444 = vunpack.c.l.b16 %v1390
      %v1445 = vunpack.c.l.b16 %v1394
      %v1446 = vunpack.c.l.b16 %v1397
      %v1447 = vunpack.c.l.b16 %v1401
      %v1448 = vunpack.c.l.b16 %v1404
      %v1449 = vunpack.c.l.b16 %v1408
      %v1450 = vunpack.c.l.b16 %v1411
      %v1451 = vunpack.c.l.b16 %v1415
      %v1452 = vunpack.c.l.b16 %v1418
      %v1453 = vpack.c.b16 %v1422, %v1421
      %v1454 = vpack.c.b16 %v1424, %v1423
      %v1455 = vpack.c.b16 %v1426, %v1425
      %v1456 = vpack.c.b16 %v1428, %v1427
      %v1457 = vpack.c.b16 %v1430, %v1429
      %v1458 = vpack.c.b16 %v1432, %v1431
      %v1459 = vpack.c.b16 %v1434, %v1433
      %v1460 = vpack.c.b16 %v1436, %v1435
      %v1461 = vpack.c.b16 %v1438, %v1437
      %v1462 = vpack.c.b16 %v1440, %v1439
      %v1463 = vpack.c.b16 %v1442, %v1441
      %v1464 = vpack.c.b16 %v1444, %v1443
      %v1465 = vpack.c.b16 %v1446, %v1445
      %v1466 = vpack.c.b16 %v1448, %v1447
      %v1467 = vpack.c.b16 %v1450, %v1449
      %v1468 = vpack.c.b16 %v1452, %v1451
      %v1470 = vsel %vm782, %v1453, 0
      %v1473 = vsel %vm782, %v1454, 0
      %v1476 = vsel %vm782, %v1455, 0
      %v1479 = vsel %vm782, %v1456, 0
      %v1482 = vsel %vm782, %v1457, 0
      %v1485 = vsel %vm782, %v1458, 0
      %v1488 = vsel %vm782, %v1459, 0
      %v1491 = vsel %vm782, %v1460, 0
      %v1494 = vsel %vm782, %v1461, 0
      %v1497 = vsel %vm782, %v1462, 0
      %v1500 = vsel %vm782, %v1463, 0
      %v1503 = vsel %vm782, %v1464, 0
      %v1506 = vsel %vm782, %v1465, 0
      %v1509 = vsel %vm782, %v1466, 0
      %v1512 = vsel %vm782, %v1467, 0
      %v1515 = vsel %vm782, %v1468, 0
      %v1518 = vsel %vm831, %v1420, 0
      %1520 = vmatprep.subr.bf16.mxu0 0
      %1521 = vmatpush1.bf16.msra.mxu0 %v1518
      %1522 = vmatprep.subr.bf16.mxu0 0
      %1523 = vmatpush1.bf16.msra.mxu0 0
      %1524 = vmatprep.subr.bf16.mxu0 0
      %1525 = vmatpush1.bf16.msra.mxu0 0
      %1526 = vmatprep.subr.bf16.mxu0 0
      %1527 = vmatpush1.bf16.msra.mxu0 0
      %1528 = vmatprep.subr.bf16.mxu0 0
      %1529 = vmatpush1.bf16.msra.mxu0 0
      %1530 = vmatprep.subr.bf16.mxu0 0
      %1531 = vmatpush1.bf16.msra.mxu0 0
      %1532 = vmatprep.subr.bf16.mxu0 0
      %1533 = vmatpush1.bf16.msra.mxu0 0
      %1534 = vmatprep.subr.bf16.mxu0 0
      %1535 = vmatpush1.bf16.msra.mxu0 0
      %1536 = vmatprep.subr.bf16.mxu0 0
      %1537 = vmatpush1.bf16.msra.mxu0 0
      %1538 = vmatprep.subr.bf16.mxu0 0
      %1539 = vmatpush1.bf16.msra.mxu0 0
      %1540 = vmatprep.subr.bf16.mxu0 0
      %1541 = vmatpush1.bf16.msra.mxu0 0
      %1542 = vmatprep.subr.bf16.mxu0 0
      %1543 = vmatpush1.bf16.msra.mxu0 0
      %1544 = vmatprep.subr.bf16.mxu0 0
      %1545 = vmatpush1.bf16.msra.mxu0 0
      %1546 = vmatprep.subr.bf16.mxu0 0
      %1547 = vmatpush1.bf16.msra.mxu0 0
      %1548 = vmatprep.subr.bf16.mxu0 0
      %1549 = vmatpush1.bf16.msra.mxu0 0
      %1550 = vmatprep.subr.bf16.mxu0 0
      %1551 = vmatpush1.bf16.msra.mxu0 0
      %1552 = vmatprep.mubr.bf16.mxu0 0
      %1553 = vmatmul.mubr.bf16.gmra.mrb[0].mxu0 %v1470
      %v1554 = vpop.f32.mrb[0].mxu0
      %v1555 = vadd.f32 0.0, %v1554
      %v1556 = vpop.f32.mrb[0].mxu0
      %v1557 = vpop.f32.mrb[0].mxu0
      %v1558 = vadd.f32 0.0, %v1557
      %v1559 = vpop.f32.mrb[0].mxu0
      %1560 = vmatprep.mubr.bf16.mxu0 0
      %1561 = vmatmul.mubr.bf16.gmra.mrb[0].mxu0 %v1473
      %v1562 = vpop.f32.mrb[0].mxu0
      %v1563 = vadd.f32 0.0, %v1562
      %v1564 = vpop.f32.mrb[0].mxu0
      %v1565 = vpop.f32.mrb[0].mxu0
      %v1566 = vadd.f32 0.0, %v1565
      %v1567 = vpop.f32.mrb[0].mxu0
      %1568 = vmatprep.mubr.bf16.mxu0 0
      %1569 = vmatmul.mubr.bf16.gmra.mrb[0].mxu0 %v1476
      %v1570 = vpop.f32.mrb[0].mxu0
      %v1571 = vadd.f32 0.0, %v1570
      %v1572 = vpop.f32.mrb[0].mxu0
      %v1573 = vpop.f32.mrb[0].mxu0
      %v1574 = vadd.f32 0.0, %v1573
      %v1575 = vpop.f32.mrb[0].mxu0
      %1576 = vmatprep.mubr.bf16.mxu0 0
      %1577 = vmatmul.mubr.bf16.gmra.mrb[0].mxu0 %v1479
      %v1578 = vpop.f32.mrb[0].mxu0
      %v1579 = vadd.f32 0.0, %v1578
      %v1580 = vpop.f32.mrb[0].mxu0
      %v1581 = vpop.f32.mrb[0].mxu0
      %v1582 = vadd.f32 0.0, %v1581
      %v1583 = vpop.f32.mrb[0].mxu0
      %1584 = vmatprep.mubr.bf16.mxu0 0
      %1585 = vmatmul.mubr.bf16.gmra.mrb[0].mxu0 %v1482
      %v1586 = vpop.f32.mrb[0].mxu0
      %v1587 = vadd.f32 0.0, %v1586
      %v1588 = vpop.f32.mrb[0].mxu0
      %v1589 = vpop.f32.mrb[0].mxu0
      %v1590 = vadd.f32 0.0, %v1589
      %v1591 = vpop.f32.mrb[0].mxu0
      %1592 = vmatprep.mubr.bf16.mxu0 0
      %1593 = vmatmul.mubr.bf16.gmra.mrb[0].mxu0 %v1485
      %v1594 = vpop.f32.mrb[0].mxu0
      %v1595 = vadd.f32 0.0, %v1594
      %v1596 = vpop.f32.mrb[0].mxu0
      %v1597 = vpop.f32.mrb[0].mxu0
      %v1598 = vadd.f32 0.0, %v1597
      %v1599 = vpop.f32.mrb[0].mxu0
      %1600 = vmatprep.mubr.bf16.mxu0 0
      %1601 = vmatmul.mubr.bf16.gmra.mrb[0].mxu0 %v1488
      %v1602 = vpop.f32.mrb[0].mxu0
      %v1603 = vadd.f32 0.0, %v1602
      %v1604 = vpop.f32.mrb[0].mxu0
      %v1605 = vpop.f32.mrb[0].mxu0
      %v1606 = vadd.f32 0.0, %v1605
      %v1607 = vpop.f32.mrb[0].mxu0
      %1608 = vmatprep.mubr.bf16.mxu0 0
      %1609 = vmatmul.mubr.bf16.gmra.mrb[0].mxu0 %v1491
      %v1610 = vpop.f32.mrb[0].mxu0
      %v1611 = vadd.f32 0.0, %v1610
      %v1612 = vpop.f32.mrb[0].mxu0
      %v1613 = vpop.f32.mrb[0].mxu0
      %v1614 = vadd.f32 0.0, %v1613
      %v1615 = vpop.f32.mrb[0].mxu0
      %1616 = vmatprep.mubr.bf16.mxu0 0
      %1617 = vmatmul.mubr.bf16.gmra.mrb[0].mxu0 %v1494
      %v1618 = vpop.f32.mrb[0].mxu0
      %v1619 = vadd.f32 0.0, %v1618
      %v1620 = vpop.f32.mrb[0].mxu0
      %v1621 = vpop.f32.mrb[0].mxu0
      %v1622 = vadd.f32 0.0, %v1621
      %v1623 = vpop.f32.mrb[0].mxu0
      %1624 = vmatprep.mubr.bf16.mxu0 0
      %1625 = vmatmul.mubr.bf16.gmra.mrb[0].mxu0 %v1497
      %v1626 = vpop.f32.mrb[0].mxu0
      %v1627 = vadd.f32 0.0, %v1626
      %v1628 = vpop.f32.mrb[0].mxu0
      %v1629 = vpop.f32.mrb[0].mxu0
      %v1630 = vadd.f32 0.0, %v1629
      %v1631 = vpop.f32.mrb[0].mxu0
      %1632 = vmatprep.mubr.bf16.mxu0 0
      %1633 = vmatmul.mubr.bf16.gmra.mrb[0].mxu0 %v1500
      %v1634 = vpop.f32.mrb[0].mxu0
      %v1635 = vadd.f32 0.0, %v1634
      %v1636 = vpop.f32.mrb[0].mxu0
      %v1637 = vpop.f32.mrb[0].mxu0
      %v1638 = vadd.f32 0.0, %v1637
      %v1639 = vpop.f32.mrb[0].mxu0
      %1640 = vmatprep.mubr.bf16.mxu0 0
      %1641 = vmatmul.mubr.bf16.gmra.mrb[0].mxu0 %v1503
      %v1642 = vpop.f32.mrb[0].mxu0
      %v1643 = vadd.f32 0.0, %v1642
      %v1644 = vpop.f32.mrb[0].mxu0
      %v1645 = vpop.f32.mrb[0].mxu0
      %v1646 = vadd.f32 0.0, %v1645
      %v1647 = vpop.f32.mrb[0].mxu0
      %1648 = vmatprep.mubr.bf16.mxu0 0
      %1649 = vmatmul.mubr.bf16.gmra.mrb[0].mxu0 %v1506
      %v1650 = vpop.f32.mrb[0].mxu0
      %v1651 = vadd.f32 0.0, %v1650
      %v1652 = vpop.f32.mrb[0].mxu0
      %v1653 = vpop.f32.mrb[0].mxu0
      %v1654 = vadd.f32 0.0, %v1653
      %v1655 = vpop.f32.mrb[0].mxu0
      %1656 = vmatprep.mubr.bf16.mxu0 0
      %1657 = vmatmul.mubr.bf16.gmra.mrb[0].mxu0 %v1509
      %v1658 = vpop.f32.mrb[0].mxu0
      %v1659 = vadd.f32 0.0, %v1658
      %v1660 = vpop.f32.mrb[0].mxu0
      %v1661 = vpop.f32.mrb[0].mxu0
      %v1662 = vadd.f32 0.0, %v1661
      %v1663 = vpop.f32.mrb[0].mxu0
      %1664 = vmatprep.mubr.bf16.mxu0 0
      %1665 = vmatmul.mubr.bf16.gmra.mrb[0].mxu0 %v1512
      %v1666 = vpop.f32.mrb[0].mxu0
      %v1667 = vadd.f32 0.0, %v1666
      %v1668 = vpop.f32.mrb[0].mxu0
      %v1669 = vpop.f32.mrb[0].mxu0
      %v1670 = vadd.f32 0.0, %v1669
      %v1671 = vpop.f32.mrb[0].mxu0
      %1672 = vmatprep.mubr.bf16.mxu0 0
      %1673 = vmatmul.mubr.bf16.gmra.mrb[0].mxu0 %v1515
      %v1674 = vpop.f32.mrb[0].mxu0
      %v1675 = vadd.f32 0.0, %v1674
      %v1676 = vpop.f32.mrb[0].mxu0
      %v1677 = vpop.f32.mrb[0].mxu0
      %v1678 = vadd.f32 0.0, %v1677
      %v1679 = vpop.f32.mrb[0].mxu0
      %1680 = vdwg.mxu0
      %v1681 = vadd.f32 %v1162, %v1555
      %v1682 = vadd.f32 %v1165, %v1558
      %v1683 = vadd.f32 %v1170, %v1563
      %v1684 = vadd.f32 %v1173, %v1566
      %v1685 = vadd.f32 %v1178, %v1571
      %v1686 = vadd.f32 %v1181, %v1574
      %v1687 = vadd.f32 %v1186, %v1579
      %v1688 = vadd.f32 %v1189, %v1582
      %v1689 = vadd.f32 %v1194, %v1587
      %v1690 = vadd.f32 %v1197, %v1590
      %v1691 = vadd.f32 %v1202, %v1595
      %v1692 = vadd.f32 %v1205, %v1598
      %v1693 = vadd.f32 %v1210, %v1603
      %v1694 = vadd.f32 %v1213, %v1606
      %v1695 = vadd.f32 %v1218, %v1611
      %v1696 = vadd.f32 %v1221, %v1614
      %v1697 = vadd.f32 %v1226, %v1619
      %v1698 = vadd.f32 %v1229, %v1622
      %v1699 = vadd.f32 %v1234, %v1627
      %v1700 = vadd.f32 %v1237, %v1630
      %v1701 = vadd.f32 %v1242, %v1635
      %v1702 = vadd.f32 %v1245, %v1638
      %v1703 = vadd.f32 %v1250, %v1643
      %v1704 = vadd.f32 %v1253, %v1646
      %v1705 = vadd.f32 %v1258, %v1651
      %v1706 = vadd.f32 %v1261, %v1654
      %v1707 = vadd.f32 %v1266, %v1659
      %v1708 = vadd.f32 %v1269, %v1662
      %v1709 = vadd.f32 %v1274, %v1667
      %v1710 = vadd.f32 %v1277, %v1670
      %v1711 = vadd.f32 %v1282, %v1675
      %v1712 = vadd.f32 %v1285, %v1678
      %s1713 = scalar_lea.vmem %s2, 6
      %v1714 = vld [vmem:[%s1713] sm:$0x3]
      %v1717 = vunpack.c.l.b16 %v338
      %v1718 = vunpack.c.l.b16 %v339
      %v1719 = vpack.c.b16 %v1718, %v1717
      %v1721 = vsel %vm782, %v1719, 0
      %v1724 = vsel %vm831, %v1714, 0
      %1726 = vmatprep.subr.bf16.mxu0 0
      %1727 = vmatpush1.bf16.msra.mxu0 %v1724
      %1728 = vmatprep.subr.bf16.mxu0 0
      %1729 = vmatpush1.bf16.msra.mxu0 0
      %1730 = vmatprep.subr.bf16.mxu0 0
      %1731 = vmatpush1.bf16.msra.mxu0 0
      %1732 = vmatprep.subr.bf16.mxu0 0
      %1733 = vmatpush1.bf16.msra.mxu0 0
      %1734 = vmatprep.subr.bf16.mxu0 0
      %1735 = vmatpush1.bf16.msra.mxu0 0
      %1736 = vmatprep.subr.bf16.mxu0 0
      %1737 = vmatpush1.bf16.msra.mxu0 0
      %1738 = vmatprep.subr.bf16.mxu0 0
      %1739 = vmatpush1.bf16.msra.mxu0 0
      %1740 = vmatprep.subr.bf16.mxu0 0
      %1741 = vmatpush1.bf16.msra.mxu0 0
      %1742 = vmatprep.subr.bf16.mxu0 0
      %1743 = vmatpush1.bf16.msra.mxu0 0
      %1744 = vmatprep.subr.bf16.mxu0 0
      %1745 = vmatpush1.bf16.msra.mxu0 0
      %1746 = vmatprep.subr.bf16.mxu0 0
      %1747 = vmatpush1.bf16.msra.mxu0 0
      %1748 = vmatprep.subr.bf16.mxu0 0
      %1749 = vmatpush1.bf16.msra.mxu0 0
      %1750 = vmatprep.subr.bf16.mxu0 0
      %1751 = vmatpush1.bf16.msra.mxu0 0
      %1752 = vmatprep.subr.bf16.mxu0 0
      %1753 = vmatpush1.bf16.msra.mxu0 0
      %1754 = vmatprep.subr.bf16.mxu0 0
      %1755 = vmatpush1.bf16.msra.mxu0 0
      %1756 = vmatprep.subr.bf16.mxu0 0
      %1757 = vmatpush1.bf16.msra.mxu0 0
      %1758 = vmatprep.mubr.bf16.mxu0 0
      %1759 = vmatmul.mubr.bf16.gmra.mrb[0].mxu0 %v1080
      %v1760 = vpop.f32.mrb[0].mxu0
      %v1761 = vadd.f32 0.0, %v1760
      %v1762 = vpop.f32.mrb[0].mxu0
      %v1763 = vpop.f32.mrb[0].mxu0
      %v1764 = vadd.f32 0.0, %v1763
      %v1765 = vpop.f32.mrb[0].mxu0
      %1766 = vmatprep.mubr.bf16.mxu0 0
      %1767 = vmatmul.mubr.bf16.gmra.mrb[0].mxu0 %v1083
      %v1768 = vpop.f32.mrb[0].mxu0
      %v1769 = vadd.f32 0.0, %v1768
      %v1770 = vpop.f32.mrb[0].mxu0
      %v1771 = vpop.f32.mrb[0].mxu0
      %v1772 = vadd.f32 0.0, %v1771
      %v1773 = vpop.f32.mrb[0].mxu0
      %1774 = vmatprep.mubr.bf16.mxu0 0
      %1775 = vmatmul.mubr.bf16.gmra.mrb[0].mxu0 %v1086
      %v1776 = vpop.f32.mrb[0].mxu0
      %v1777 = vadd.f32 0.0, %v1776
      %v1778 = vpop.f32.mrb[0].mxu0
      %v1779 = vpop.f32.mrb[0].mxu0
      %v1780 = vadd.f32 0.0, %v1779
      %v1781 = vpop.f32.mrb[0].mxu0
      %1782 = vmatprep.mubr.bf16.mxu0 0
      %1783 = vmatmul.mubr.bf16.gmra.mrb[0].mxu0 %v1089
      %v1784 = vpop.f32.mrb[0].mxu0
      %v1785 = vadd.f32 0.0, %v1784
      %v1786 = vpop.f32.mrb[0].mxu0
      %v1787 = vpop.f32.mrb[0].mxu0
      %v1788 = vadd.f32 0.0, %v1787
      %v1789 = vpop.f32.mrb[0].mxu0
      %1790 = vmatprep.mubr.bf16.mxu0 0
      %1791 = vmatmul.mubr.bf16.gmra.mrb[0].mxu0 %v1092
      %v1792 = vpop.f32.mrb[0].mxu0
      %v1793 = vadd.f32 0.0, %v1792
      %v1794 = vpop.f32.mrb[0].mxu0
      %v1795 = vpop.f32.mrb[0].mxu0
      %v1796 = vadd.f32 0.0, %v1795
      %v1797 = vpop.f32.mrb[0].mxu0
      %1798 = vmatprep.mubr.bf16.mxu0 0
      %1799 = vmatmul.mubr.bf16.gmra.mrb[0].mxu0 %v1095
      %v1800 = vpop.f32.mrb[0].mxu0
      %v1801 = vadd.f32 0.0, %v1800
      %v1802 = vpop.f32.mrb[0].mxu0
      %v1803 = vpop.f32.mrb[0].mxu0
      %v1804 = vadd.f32 0.0, %v1803
      %v1805 = vpop.f32.mrb[0].mxu0
      %1806 = vmatprep.mubr.bf16.mxu0 0
      %1807 = vmatmul.mubr.bf16.gmra.mrb[0].mxu0 %v1098
      %v1808 = vpop.f32.mrb[0].mxu0
      %v1809 = vadd.f32 0.0, %v1808
      %v1810 = vpop.f32.mrb[0].mxu0
      %v1811 = vpop.f32.mrb[0].mxu0
      %v1812 = vadd.f32 0.0, %v1811
      %v1813 = vpop.f32.mrb[0].mxu0
      %1814 = vmatprep.mubr.bf16.mxu0 0
      %1815 = vmatmul.mubr.bf16.gmra.mrb[0].mxu0 %v1101
      %v1816 = vpop.f32.mrb[0].mxu0
      %v1817 = vadd.f32 0.0, %v1816
      %v1818 = vpop.f32.mrb[0].mxu0
      %v1819 = vpop.f32.mrb[0].mxu0
      %v1820 = vadd.f32 0.0, %v1819
      %v1821 = vpop.f32.mrb[0].mxu0
      %1822 = vmatprep.mubr.bf16.mxu0 0
      %1823 = vmatmul.mubr.bf16.gmra.mrb[0].mxu0 %v1104
      %v1824 = vpop.f32.mrb[0].mxu0
      %v1825 = vadd.f32 0.0, %v1824
      %v1826 = vpop.f32.mrb[0].mxu0
      %v1827 = vpop.f32.mrb[0].mxu0
      %v1828 = vadd.f32 0.0, %v1827
      %v1829 = vpop.f32.mrb[0].mxu0
      %1830 = vmatprep.mubr.bf16.mxu0 0
      %1831 = vmatmul.mubr.bf16.gmra.mrb[0].mxu0 %v1107
      %v1832 = vpop.f32.mrb[0].mxu0
      %v1833 = vadd.f32 0.0, %v1832
      %v1834 = vpop.f32.mrb[0].mxu0
      %v1835 = vpop.f32.mrb[0].mxu0
      %v1836 = vadd.f32 0.0, %v1835
      %v1837 = vpop.f32.mrb[0].mxu0
      %1838 = vmatprep.mubr.bf16.mxu0 0
      %1839 = vmatmul.mubr.bf16.gmra.mrb[0].mxu0 %v1110
      %v1840 = vpop.f32.mrb[0].mxu0
      %v1841 = vadd.f32 0.0, %v1840
      %v1842 = vpop.f32.mrb[0].mxu0
      %v1843 = vpop.f32.mrb[0].mxu0
      %v1844 = vadd.f32 0.0, %v1843
      %v1845 = vpop.f32.mrb[0].mxu0
      %1846 = vmatprep.mubr.bf16.mxu0 0
      %1847 = vmatmul.mubr.bf16.gmra.mrb[0].mxu0 %v1113
      %v1848 = vpop.f32.mrb[0].mxu0
      %v1849 = vadd.f32 0.0, %v1848
      %v1850 = vpop.f32.mrb[0].mxu0
      %v1851 = vpop.f32.mrb[0].mxu0
      %v1852 = vadd.f32 0.0, %v1851
      %v1853 = vpop.f32.mrb[0].mxu0
      %1854 = vmatprep.mubr.bf16.mxu0 0
      %1855 = vmatmul.mubr.bf16.gmra.mrb[0].mxu0 %v1116
      %v1856 = vpop.f32.mrb[0].mxu0
      %v1857 = vadd.f32 0.0, %v1856
      %v1858 = vpop.f32.mrb[0].mxu0
      %v1859 = vpop.f32.mrb[0].mxu0
      %v1860 = vadd.f32 0.0, %v1859
      %v1861 = vpop.f32.mrb[0].mxu0
      %1862 = vmatprep.mubr.bf16.mxu0 0
      %1863 = vmatmul.mubr.bf16.gmra.mrb[0].mxu0 %v1119
      %v1864 = vpop.f32.mrb[0].mxu0
      %v1865 = vadd.f32 0.0, %v1864
      %v1866 = vpop.f32.mrb[0].mxu0
      %v1867 = vpop.f32.mrb[0].mxu0
      %v1868 = vadd.f32 0.0, %v1867
      %v1869 = vpop.f32.mrb[0].mxu0
      %1870 = vmatprep.mubr.bf16.mxu0 0
      %1871 = vmatmul.mubr.bf16.gmra.mrb[0].mxu0 %v1122
      %v1872 = vpop.f32.mrb[0].mxu0
      %v1873 = vadd.f32 0.0, %v1872
      %v1874 = vpop.f32.mrb[0].mxu0
      %v1875 = vpop.f32.mrb[0].mxu0
      %v1876 = vadd.f32 0.0, %v1875
      %v1877 = vpop.f32.mrb[0].mxu0
      %1878 = vmatprep.mubr.bf16.mxu0 0
      %1879 = vmatmul.mubr.bf16.gmra.mrb[0].mxu0 %v1721
      %v1880 = vpop.f32.mrb[0].mxu0
      %v1881 = vadd.f32 0.0, %v1880
      %v1882 = vpop.f32.mrb[0].mxu0
      %v1883 = vpop.f32.mrb[0].mxu0
      %v1884 = vadd.f32 0.0, %v1883
      %v1885 = vpop.f32.mrb[0].mxu0
      %1886 = vdwg.mxu0
      %v1887 = vadd.f32 %v1681, %v1761
      %v1888 = vadd.f32 %v1682, %v1764
      %v1889 = vadd.f32 %v1683, %v1769
      %v1890 = vadd.f32 %v1684, %v1772
      %v1891 = vadd.f32 %v1685, %v1777
      %v1892 = vadd.f32 %v1686, %v1780
      %v1893 = vadd.f32 %v1687, %v1785
      %v1894 = vadd.f32 %v1688, %v1788
      %v1895 = vadd.f32 %v1689, %v1793
      %v1896 = vadd.f32 %v1690, %v1796
      %v1897 = vadd.f32 %v1691, %v1801
      %v1898 = vadd.f32 %v1692, %v1804
      %v1899 = vadd.f32 %v1693, %v1809
      %v1900 = vadd.f32 %v1694, %v1812
      %v1901 = vadd.f32 %v1695, %v1817
      %v1902 = vadd.f32 %v1696, %v1820
      %v1903 = vadd.f32 %v1697, %v1825
      %v1904 = vadd.f32 %v1698, %v1828
      %v1905 = vadd.f32 %v1699, %v1833
      %v1906 = vadd.f32 %v1700, %v1836
      %v1907 = vadd.f32 %v1701, %v1841
      %v1908 = vadd.f32 %v1702, %v1844
      %v1909 = vadd.f32 %v1703, %v1849
      %v1910 = vadd.f32 %v1704, %v1852
      %v1911 = vadd.f32 %v1705, %v1857
      %v1912 = vadd.f32 %v1706, %v1860
      %v1913 = vadd.f32 %v1707, %v1865
      %v1914 = vadd.f32 %v1708, %v1868
      %v1915 = vadd.f32 %v1709, %v1873
      %v1916 = vadd.f32 %v1710, %v1876
      %v1917 = vadd.f32 %v1711, %v1881
      %v1918 = vadd.f32 %v1712, %v1884
      %v1920 = vshrl.u32 %v338, 16
      %v1922 = vrot.slane %v1920, 4
      %v1923 = vshll.u32 %v338, 16
      %v1925 = vrot.slane %v1923, 5
      %v1926 = vor.u32 %v1922, %v1925
      %v1927 = vrot.slane %v1926, 4
      %v1929 = vshll.u32 %v339, 16
      %v1931 = vrot.slane %v1929, 5
      %v1932 = vsel %vm347, %v1927, %v1931
      %v1933 = vshrl.u32 %v339, 16
      %v1935 = vrot.slane %v1933, 4
      %v1936 = vor.u32 %v1935, %v1931
      %v1937 = vrot.slane %v1936, 4
      %v1939 = vshll.u32 %v340, 16
      %v1941 = vrot.slane %v1939, 5
      %v1942 = vsel %vm347, %v1937, %v1941
      %s1943 = scalar_lea.vmem %s2, 8
      %v1944 = vld [vmem:[%s1943] sm:$0x3]
      %v1945 = vunpack.c.l.b16 %v1932
      %v1946 = vunpack.c.l.b16 %v1942
      %v1947 = vpack.c.b16 %v1946, %v1945
      %v1949 = vsel %vm782, %v1947, 0
      %v1952 = vsel %vm831, %v1944, 0
      %1954 = vmatprep.subr.bf16.mxu0 0
      %1955 = vmatpush1.bf16.msra.mxu0 %v1952
      %1956 = vmatprep.subr.bf16.mxu0 0
      %1957 = vmatpush1.bf16.msra.mxu0 0
      %1958 = vmatprep.subr.bf16.mxu0 0
      %1959 = vmatpush1.bf16.msra.mxu0 0
      %1960 = vmatprep.subr.bf16.mxu0 0
      %1961 = vmatpush1.bf16.msra.mxu0 0
      %1962 = vmatprep.subr.bf16.mxu0 0
      %1963 = vmatpush1.bf16.msra.mxu0 0
      %1964 = vmatprep.subr.bf16.mxu0 0
      %1965 = vmatpush1.bf16.msra.mxu0 0
      %1966 = vmatprep.subr.bf16.mxu0 0
      %1967 = vmatpush1.bf16.msra.mxu0 0
      %1968 = vmatprep.subr.bf16.mxu0 0
      %1969 = vmatpush1.bf16.msra.mxu0 0
      %1970 = vmatprep.subr.bf16.mxu0 0
      %1971 = vmatpush1.bf16.msra.mxu0 0
      %1972 = vmatprep.subr.bf16.mxu0 0
      %1973 = vmatpush1.bf16.msra.mxu0 0
      %1974 = vmatprep.subr.bf16.mxu0 0
      %1975 = vmatpush1.bf16.msra.mxu0 0
      %1976 = vmatprep.subr.bf16.mxu0 0
      %1977 = vmatpush1.bf16.msra.mxu0 0
      %1978 = vmatprep.subr.bf16.mxu0 0
      %1979 = vmatpush1.bf16.msra.mxu0 0
      %1980 = vmatprep.subr.bf16.mxu0 0
      %1981 = vmatpush1.bf16.msra.mxu0 0
      %1982 = vmatprep.subr.bf16.mxu0 0
      %1983 = vmatpush1.bf16.msra.mxu0 0
      %1984 = vmatprep.subr.bf16.mxu0 0
      %1985 = vmatpush1.bf16.msra.mxu0 0
      %1986 = vmatprep.mubr.bf16.mxu0 0
      %1987 = vmatmul.mubr.bf16.gmra.mrb[0].mxu0 %v787
      %v1988 = vpop.f32.mrb[0].mxu0
      %v1989 = vadd.f32 0.0, %v1988
      %v1990 = vpop.f32.mrb[0].mxu0
      %v1991 = vpop.f32.mrb[0].mxu0
      %v1992 = vadd.f32 0.0, %v1991
      %v1993 = vpop.f32.mrb[0].mxu0
      %1994 = vmatprep.mubr.bf16.mxu0 0
      %1995 = vmatmul.mubr.bf16.gmra.mrb[0].mxu0 %v790
      %v1996 = vpop.f32.mrb[0].mxu0
      %v1997 = vadd.f32 0.0, %v1996
      %v1998 = vpop.f32.mrb[0].mxu0
      %v1999 = vpop.f32.mrb[0].mxu0
      %v2000 = vadd.f32 0.0, %v1999
      %v2001 = vpop.f32.mrb[0].mxu0
      %2002 = vmatprep.mubr.bf16.mxu0 0
      %2003 = vmatmul.mubr.bf16.gmra.mrb[0].mxu0 %v793
      %v2004 = vpop.f32.mrb[0].mxu0
      %v2005 = vadd.f32 0.0, %v2004
      %v2006 = vpop.f32.mrb[0].mxu0
      %v2007 = vpop.f32.mrb[0].mxu0
      %v2008 = vadd.f32 0.0, %v2007
      %v2009 = vpop.f32.mrb[0].mxu0
      %2010 = vmatprep.mubr.bf16.mxu0 0
      %2011 = vmatmul.mubr.bf16.gmra.mrb[0].mxu0 %v796
      %v2012 = vpop.f32.mrb[0].mxu0
      %v2013 = vadd.f32 0.0, %v2012
      %v2014 = vpop.f32.mrb[0].mxu0
      %v2015 = vpop.f32.mrb[0].mxu0
      %v2016 = vadd.f32 0.0, %v2015
      %v2017 = vpop.f32.mrb[0].mxu0
      %2018 = vmatprep.mubr.bf16.mxu0 0
      %2019 = vmatmul.mubr.bf16.gmra.mrb[0].mxu0 %v799
      %v2020 = vpop.f32.mrb[0].mxu0
      %v2021 = vadd.f32 0.0, %v2020
      %v2022 = vpop.f32.mrb[0].mxu0
      %v2023 = vpop.f32.mrb[0].mxu0
      %v2024 = vadd.f32 0.0, %v2023
      %v2025 = vpop.f32.mrb[0].mxu0
      %2026 = vmatprep.mubr.bf16.mxu0 0
      %2027 = vmatmul.mubr.bf16.gmra.mrb[0].mxu0 %v802
      %v2028 = vpop.f32.mrb[0].mxu0
      %v2029 = vadd.f32 0.0, %v2028
      %v2030 = vpop.f32.mrb[0].mxu0
      %v2031 = vpop.f32.mrb[0].mxu0
      %v2032 = vadd.f32 0.0, %v2031
      %v2033 = vpop.f32.mrb[0].mxu0
      %2034 = vmatprep.mubr.bf16.mxu0 0
      %2035 = vmatmul.mubr.bf16.gmra.mrb[0].mxu0 %v805
      %v2036 = vpop.f32.mrb[0].mxu0
      %v2037 = vadd.f32 0.0, %v2036
      %v2038 = vpop.f32.mrb[0].mxu0
      %v2039 = vpop.f32.mrb[0].mxu0
      %v2040 = vadd.f32 0.0, %v2039
      %v2041 = vpop.f32.mrb[0].mxu0
      %2042 = vmatprep.mubr.bf16.mxu0 0
      %2043 = vmatmul.mubr.bf16.gmra.mrb[0].mxu0 %v808
      %v2044 = vpop.f32.mrb[0].mxu0
      %v2045 = vadd.f32 0.0, %v2044
      %v2046 = vpop.f32.mrb[0].mxu0
      %v2047 = vpop.f32.mrb[0].mxu0
      %v2048 = vadd.f32 0.0, %v2047
      %v2049 = vpop.f32.mrb[0].mxu0
      %2050 = vmatprep.mubr.bf16.mxu0 0
      %2051 = vmatmul.mubr.bf16.gmra.mrb[0].mxu0 %v811
      %v2052 = vpop.f32.mrb[0].mxu0
      %v2053 = vadd.f32 0.0, %v2052
      %v2054 = vpop.f32.mrb[0].mxu0
      %v2055 = vpop.f32.mrb[0].mxu0
      %v2056 = vadd.f32 0.0, %v2055
      %v2057 = vpop.f32.mrb[0].mxu0
      %2058 = vmatprep.mubr.bf16.mxu0 0
      %2059 = vmatmul.mubr.bf16.gmra.mrb[0].mxu0 %v814
      %v2060 = vpop.f32.mrb[0].mxu0
      %v2061 = vadd.f32 0.0, %v2060
      %v2062 = vpop.f32.mrb[0].mxu0
      %v2063 = vpop.f32.mrb[0].mxu0
      %v2064 = vadd.f32 0.0, %v2063
      %v2065 = vpop.f32.mrb[0].mxu0
      %2066 = vmatprep.mubr.bf16.mxu0 0
      %2067 = vmatmul.mubr.bf16.gmra.mrb[0].mxu0 %v817
      %v2068 = vpop.f32.mrb[0].mxu0
      %v2069 = vadd.f32 0.0, %v2068
      %v2070 = vpop.f32.mrb[0].mxu0
      %v2071 = vpop.f32.mrb[0].mxu0
      %v2072 = vadd.f32 0.0, %v2071
      %v2073 = vpop.f32.mrb[0].mxu0
      %2074 = vmatprep.mubr.bf16.mxu0 0
      %2075 = vmatmul.mubr.bf16.gmra.mrb[0].mxu0 %v820
      %v2076 = vpop.f32.mrb[0].mxu0
      %v2077 = vadd.f32 0.0, %v2076
      %v2078 = vpop.f32.mrb[0].mxu0
      %v2079 = vpop.f32.mrb[0].mxu0
      %v2080 = vadd.f32 0.0, %v2079
      %v2081 = vpop.f32.mrb[0].mxu0
      %2082 = vmatprep.mubr.bf16.mxu0 0
      %2083 = vmatmul.mubr.bf16.gmra.mrb[0].mxu0 %v823
      %v2084 = vpop.f32.mrb[0].mxu0
      %v2085 = vadd.f32 0.0, %v2084
      %v2086 = vpop.f32.mrb[0].mxu0
      %v2087 = vpop.f32.mrb[0].mxu0
      %v2088 = vadd.f32 0.0, %v2087
      %v2089 = vpop.f32.mrb[0].mxu0
      %2090 = vmatprep.mubr.bf16.mxu0 0
      %2091 = vmatmul.mubr.bf16.gmra.mrb[0].mxu0 %v826
      %v2092 = vpop.f32.mrb[0].mxu0
      %v2093 = vadd.f32 0.0, %v2092
      %v2094 = vpop.f32.mrb[0].mxu0
      %v2095 = vpop.f32.mrb[0].mxu0
      %v2096 = vadd.f32 0.0, %v2095
      %v2097 = vpop.f32.mrb[0].mxu0
      %2098 = vmatprep.mubr.bf16.mxu0 0
      %2099 = vmatmul.mubr.bf16.gmra.mrb[0].mxu0 %v829
      %v2100 = vpop.f32.mrb[0].mxu0
      %v2101 = vadd.f32 0.0, %v2100
      %v2102 = vpop.f32.mrb[0].mxu0
      %v2103 = vpop.f32.mrb[0].mxu0
      %v2104 = vadd.f32 0.0, %v2103
      %v2105 = vpop.f32.mrb[0].mxu0
      %2106 = vmatprep.mubr.bf16.mxu0 0
      %2107 = vmatmul.mubr.bf16.gmra.mrb[0].mxu0 %v1949
      %v2108 = vpop.f32.mrb[0].mxu0
      %v2109 = vadd.f32 0.0, %v2108
      %v2110 = vpop.f32.mrb[0].mxu0
      %v2111 = vpop.f32.mrb[0].mxu0
      %v2112 = vadd.f32 0.0, %v2111
      %v2113 = vpop.f32.mrb[0].mxu0
      %2114 = vdwg.mxu0
      %v2115 = vadd.f32 %v1887, %v1989
      %v2116 = vadd.f32 %v1888, %v1992
      %v2117 = vadd.f32 %v1889, %v1997
      %v2118 = vadd.f32 %v1890, %v2000
      %v2119 = vadd.f32 %v1891, %v2005
      %v2120 = vadd.f32 %v1892, %v2008
      %v2121 = vadd.f32 %v1893, %v2013
      %v2122 = vadd.f32 %v1894, %v2016
      %v2123 = vadd.f32 %v1895, %v2021
      %v2124 = vadd.f32 %v1896, %v2024
      %v2125 = vadd.f32 %v1897, %v2029
      %v2126 = vadd.f32 %v1898, %v2032
      %v2127 = vadd.f32 %v1899, %v2037
      %v2128 = vadd.f32 %v1900, %v2040
      %v2129 = vadd.f32 %v1901, %v2045
      %v2130 = vadd.f32 %v1902, %v2048
      %v2131 = vadd.f32 %v1903, %v2053
      %v2132 = vadd.f32 %v1904, %v2056
      %v2133 = vadd.f32 %v1905, %v2061
      %v2134 = vadd.f32 %v1906, %v2064
      %v2135 = vadd.f32 %v1907, %v2069
      %v2136 = vadd.f32 %v1908, %v2072
      %v2137 = vadd.f32 %v1909, %v2077
      %v2138 = vadd.f32 %v1910, %v2080
      %v2139 = vadd.f32 %v1911, %v2085
      %v2140 = vadd.f32 %v1912, %v2088
      %v2141 = vadd.f32 %v1913, %v2093
      %v2142 = vadd.f32 %v1914, %v2096
      %v2143 = vadd.f32 %v1915, %v2101
      %v2144 = vadd.f32 %v1916, %v2104
      %v2145 = vadd.f32 %v1917, %v2109
      %v2146 = vadd.f32 %v1918, %v2112
      %v2148 = vrot.slane %v338, 5
      %v2149 = vrot.slane %v2148, 4
      %v2150 = vrot.slane %v339, 5
      %v2151 = vsel %vm1306, %v2149, %v2150
      %v2152 = vrot.slane %v2150, 4
      %v2153 = vrot.slane %v340, 5
      %v2154 = vsel %vm1306, %v2152, %v2153
      %s2155 = scalar_lea.vmem %s2, 10
      %v2156 = vld [vmem:[%s2155] sm:$0x3]
      %v2157 = vunpack.c.l.b16 %v2151
      %v2158 = vunpack.c.l.b16 %v2154
      %v2159 = vpack.c.b16 %v2158, %v2157
      %v2161 = vsel %vm782, %v2159, 0
      %v2164 = vsel %vm831, %v2156, 0
      %2166 = vmatprep.subr.bf16.mxu0 0
      %2167 = vmatpush1.bf16.msra.mxu0 %v2164
      %2168 = vmatprep.subr.bf16.mxu0 0
      %2169 = vmatpush1.bf16.msra.mxu0 0
      %2170 = vmatprep.subr.bf16.mxu0 0
      %2171 = vmatpush1.bf16.msra.mxu0 0
      %2172 = vmatprep.subr.bf16.mxu0 0
      %2173 = vmatpush1.bf16.msra.mxu0 0
      %2174 = vmatprep.subr.bf16.mxu0 0
      %2175 = vmatpush1.bf16.msra.mxu0 0
      %2176 = vmatprep.subr.bf16.mxu0 0
      %2177 = vmatpush1.bf16.msra.mxu0 0
      %2178 = vmatprep.subr.bf16.mxu0 0
      %2179 = vmatpush1.bf16.msra.mxu0 0
      %2180 = vmatprep.subr.bf16.mxu0 0
      %2181 = vmatpush1.bf16.msra.mxu0 0
      %2182 = vmatprep.subr.bf16.mxu0 0
      %2183 = vmatpush1.bf16.msra.mxu0 0
      %2184 = vmatprep.subr.bf16.mxu0 0
      %2185 = vmatpush1.bf16.msra.mxu0 0
      %2186 = vmatprep.subr.bf16.mxu0 0
      %2187 = vmatpush1.bf16.msra.mxu0 0
      %2188 = vmatprep.subr.bf16.mxu0 0
      %2189 = vmatpush1.bf16.msra.mxu0 0
      %2190 = vmatprep.subr.bf16.mxu0 0
      %2191 = vmatpush1.bf16.msra.mxu0 0
      %2192 = vmatprep.subr.bf16.mxu0 0
      %2193 = vmatpush1.bf16.msra.mxu0 0
      %2194 = vmatprep.subr.bf16.mxu0 0
      %2195 = vmatpush1.bf16.msra.mxu0 0
      %2196 = vmatprep.subr.bf16.mxu0 0
      %2197 = vmatpush1.bf16.msra.mxu0 0
      %2198 = vmatprep.mubr.bf16.mxu0 0
      %2199 = vmatmul.mubr.bf16.gmra.mrb[0].mxu0 %v1473
      %v2200 = vpop.f32.mrb[0].mxu0
      %v2201 = vadd.f32 0.0, %v2200
      %v2202 = vpop.f32.mrb[0].mxu0
      %v2203 = vpop.f32.mrb[0].mxu0
      %v2204 = vadd.f32 0.0, %v2203
      %v2205 = vpop.f32.mrb[0].mxu0
      %2206 = vmatprep.mubr.bf16.mxu0 0
      %2207 = vmatmul.mubr.bf16.gmra.mrb[0].mxu0 %v1476
      %v2208 = vpop.f32.mrb[0].mxu0
      %v2209 = vadd.f32 0.0, %v2208
      %v2210 = vpop.f32.mrb[0].mxu0
      %v2211 = vpop.f32.mrb[0].mxu0
      %v2212 = vadd.f32 0.0, %v2211
      %v2213 = vpop.f32.mrb[0].mxu0
      %2214 = vmatprep.mubr.bf16.mxu0 0
      %2215 = vmatmul.mubr.bf16.gmra.mrb[0].mxu0 %v1479
      %v2216 = vpop.f32.mrb[0].mxu0
      %v2217 = vadd.f32 0.0, %v2216
      %v2218 = vpop.f32.mrb[0].mxu0
      %v2219 = vpop.f32.mrb[0].mxu0
      %v2220 = vadd.f32 0.0, %v2219
      %v2221 = vpop.f32.mrb[0].mxu0
      %2222 = vmatprep.mubr.bf16.mxu0 0
      %2223 = vmatmul.mubr.bf16.gmra.mrb[0].mxu0 %v1482
      %v2224 = vpop.f32.mrb[0].mxu0
      %v2225 = vadd.f32 0.0, %v2224
      %v2226 = vpop.f32.mrb[0].mxu0
      %v2227 = vpop.f32.mrb[0].mxu0
      %v2228 = vadd.f32 0.0, %v2227
      %v2229 = vpop.f32.mrb[0].mxu0
      %2230 = vmatprep.mubr.bf16.mxu0 0
      %2231 = vmatmul.mubr.bf16.gmra.mrb[0].mxu0 %v1485
      %v2232 = vpop.f32.mrb[0].mxu0
      %v2233 = vadd.f32 0.0, %v2232
      %v2234 = vpop.f32.mrb[0].mxu0
      %v2235 = vpop.f32.mrb[0].mxu0
      %v2236 = vadd.f32 0.0, %v2235
      %v2237 = vpop.f32.mrb[0].mxu0
      %2238 = vmatprep.mubr.bf16.mxu0 0
      %2239 = vmatmul.mubr.bf16.gmra.mrb[0].mxu0 %v1488
      %v2240 = vpop.f32.mrb[0].mxu0
      %v2241 = vadd.f32 0.0, %v2240
      %v2242 = vpop.f32.mrb[0].mxu0
      %v2243 = vpop.f32.mrb[0].mxu0
      %v2244 = vadd.f32 0.0, %v2243
      %v2245 = vpop.f32.mrb[0].mxu0
      %2246 = vmatprep.mubr.bf16.mxu0 0
      %2247 = vmatmul.mubr.bf16.gmra.mrb[0].mxu0 %v1491
      %v2248 = vpop.f32.mrb[0].mxu0
      %v2249 = vadd.f32 0.0, %v2248
      %v2250 = vpop.f32.mrb[0].mxu0
      %v2251 = vpop.f32.mrb[0].mxu0
      %v2252 = vadd.f32 0.0, %v2251
      %v2253 = vpop.f32.mrb[0].mxu0
      %2254 = vmatprep.mubr.bf16.mxu0 0
      %2255 = vmatmul.mubr.bf16.gmra.mrb[0].mxu0 %v1494
      %v2256 = vpop.f32.mrb[0].mxu0
      %v2257 = vadd.f32 0.0, %v2256
      %v2258 = vpop.f32.mrb[0].mxu0
      %v2259 = vpop.f32.mrb[0].mxu0
      %v2260 = vadd.f32 0.0, %v2259
      %v2261 = vpop.f32.mrb[0].mxu0
      %2262 = vmatprep.mubr.bf16.mxu0 0
      %2263 = vmatmul.mubr.bf16.gmra.mrb[0].mxu0 %v1497
      %v2264 = vpop.f32.mrb[0].mxu0
      %v2265 = vadd.f32 0.0, %v2264
      %v2266 = vpop.f32.mrb[0].mxu0
      %v2267 = vpop.f32.mrb[0].mxu0
      %v2268 = vadd.f32 0.0, %v2267
      %v2269 = vpop.f32.mrb[0].mxu0
      %2270 = vmatprep.mubr.bf16.mxu0 0
      %2271 = vmatmul.mubr.bf16.gmra.mrb[0].mxu0 %v1500
      %v2272 = vpop.f32.mrb[0].mxu0
      %v2273 = vadd.f32 0.0, %v2272
      %v2274 = vpop.f32.mrb[0].mxu0
      %v2275 = vpop.f32.mrb[0].mxu0
      %v2276 = vadd.f32 0.0, %v2275
      %v2277 = vpop.f32.mrb[0].mxu0
      %2278 = vmatprep.mubr.bf16.mxu0 0
      %2279 = vmatmul.mubr.bf16.gmra.mrb[0].mxu0 %v1503
      %v2280 = vpop.f32.mrb[0].mxu0
      %v2281 = vadd.f32 0.0, %v2280
      %v2282 = vpop.f32.mrb[0].mxu0
      %v2283 = vpop.f32.mrb[0].mxu0
      %v2284 = vadd.f32 0.0, %v2283
      %v2285 = vpop.f32.mrb[0].mxu0
      %2286 = vmatprep.mubr.bf16.mxu0 0
      %2287 = vmatmul.mubr.bf16.gmra.mrb[0].mxu0 %v1506
      %v2288 = vpop.f32.mrb[0].mxu0
      %v2289 = vadd.f32 0.0, %v2288
      %v2290 = vpop.f32.mrb[0].mxu0
      %v2291 = vpop.f32.mrb[0].mxu0
      %v2292 = vadd.f32 0.0, %v2291
      %v2293 = vpop.f32.mrb[0].mxu0
      %2294 = vmatprep.mubr.bf16.mxu0 0
      %2295 = vmatmul.mubr.bf16.gmra.mrb[0].mxu0 %v1509
      %v2296 = vpop.f32.mrb[0].mxu0
      %v2297 = vadd.f32 0.0, %v2296
      %v2298 = vpop.f32.mrb[0].mxu0
      %v2299 = vpop.f32.mrb[0].mxu0
      %v2300 = vadd.f32 0.0, %v2299
      %v2301 = vpop.f32.mrb[0].mxu0
      %2302 = vmatprep.mubr.bf16.mxu0 0
      %2303 = vmatmul.mubr.bf16.gmra.mrb[0].mxu0 %v1512
      %v2304 = vpop.f32.mrb[0].mxu0
      %v2305 = vadd.f32 0.0, %v2304
      %v2306 = vpop.f32.mrb[0].mxu0
      %v2307 = vpop.f32.mrb[0].mxu0
      %v2308 = vadd.f32 0.0, %v2307
      %v2309 = vpop.f32.mrb[0].mxu0
      %2310 = vmatprep.mubr.bf16.mxu0 0
      %2311 = vmatmul.mubr.bf16.gmra.mrb[0].mxu0 %v1515
      %v2312 = vpop.f32.mrb[0].mxu0
      %v2313 = vadd.f32 0.0, %v2312
      %v2314 = vpop.f32.mrb[0].mxu0
      %v2315 = vpop.f32.mrb[0].mxu0
      %v2316 = vadd.f32 0.0, %v2315
      %v2317 = vpop.f32.mrb[0].mxu0
      %2318 = vmatprep.mubr.bf16.mxu0 0
      %2319 = vmatmul.mubr.bf16.gmra.mrb[0].mxu0 %v2161
      %v2320 = vpop.f32.mrb[0].mxu0
      %v2321 = vadd.f32 0.0, %v2320
      %v2322 = vpop.f32.mrb[0].mxu0
      %v2323 = vpop.f32.mrb[0].mxu0
      %v2324 = vadd.f32 0.0, %v2323
      %v2325 = vpop.f32.mrb[0].mxu0
      %2326 = vdwg.mxu0
      %v2327 = vadd.f32 %v2115, %v2201
      %v2328 = vadd.f32 %v2116, %v2204
      %v2329 = vadd.f32 %v2117, %v2209
      %v2330 = vadd.f32 %v2118, %v2212
      %v2331 = vadd.f32 %v2119, %v2217
      %v2332 = vadd.f32 %v2120, %v2220
      %v2333 = vadd.f32 %v2121, %v2225
      %v2334 = vadd.f32 %v2122, %v2228
      %v2335 = vadd.f32 %v2123, %v2233
      %v2336 = vadd.f32 %v2124, %v2236
      %v2337 = vadd.f32 %v2125, %v2241
      %v2338 = vadd.f32 %v2126, %v2244
      %v2339 = vadd.f32 %v2127, %v2249
      %v2340 = vadd.f32 %v2128, %v2252
      %v2341 = vadd.f32 %v2129, %v2257
      %v2342 = vadd.f32 %v2130, %v2260
      %v2343 = vadd.f32 %v2131, %v2265
      %v2344 = vadd.f32 %v2132, %v2268
      %v2345 = vadd.f32 %v2133, %v2273
      %v2346 = vadd.f32 %v2134, %v2276
      %v2347 = vadd.f32 %v2135, %v2281
      %v2348 = vadd.f32 %v2136, %v2284
      %v2349 = vadd.f32 %v2137, %v2289
      %v2350 = vadd.f32 %v2138, %v2292
      %v2351 = vadd.f32 %v2139, %v2297
      %v2352 = vadd.f32 %v2140, %v2300
      %v2353 = vadd.f32 %v2141, %v2305
      %v2354 = vadd.f32 %v2142, %v2308
      %v2355 = vadd.f32 %v2143, %v2313
      %v2356 = vadd.f32 %v2144, %v2316
      %v2357 = vadd.f32 %v2145, %v2321
      %v2358 = vadd.f32 %v2146, %v2324
      %s2359 = scalar_lea.vmem %s2, 12
      %v2360 = vld [vmem:[%s2359] sm:$0x3]
      %v2363 = vunpack.c.l.b16 %v341
      %v2364 = vunpack.c.l.b16 %v342
      %v2365 = vpack.c.b16 %v2364, %v2363
      %v2367 = vsel %vm782, %v2365, 0
      %v2370 = vsel %vm831, %v2360, 0
      %2372 = vmatprep.subr.bf16.mxu0 0
      %2373 = vmatpush1.bf16.msra.mxu0 %v2370
      %2374 = vmatprep.subr.bf16.mxu0 0
      %2375 = vmatpush1.bf16.msra.mxu0 0
      %2376 = vmatprep.subr.bf16.mxu0 0
      %2377 = vmatpush1.bf16.msra.mxu0 0
      %2378 = vmatprep.subr.bf16.mxu0 0
      %2379 = vmatpush1.bf16.msra.mxu0 0
      %2380 = vmatprep.subr.bf16.mxu0 0
      %2381 = vmatpush1.bf16.msra.mxu0 0
      %2382 = vmatprep.subr.bf16.mxu0 0
      %2383 = vmatpush1.bf16.msra.mxu0 0
      %2384 = vmatprep.subr.bf16.mxu0 0
      %2385 = vmatpush1.bf16.msra.mxu0 0
      %2386 = vmatprep.subr.bf16.mxu0 0
      %2387 = vmatpush1.bf16.msra.mxu0 0
      %2388 = vmatprep.subr.bf16.mxu0 0
      %2389 = vmatpush1.bf16.msra.mxu0 0
      %2390 = vmatprep.subr.bf16.mxu0 0
      %2391 = vmatpush1.bf16.msra.mxu0 0
      %2392 = vmatprep.subr.bf16.mxu0 0
      %2393 = vmatpush1.bf16.msra.mxu0 0
      %2394 = vmatprep.subr.bf16.mxu0 0
      %2395 = vmatpush1.bf16.msra.mxu0 0
      %2396 = vmatprep.subr.bf16.mxu0 0
      %2397 = vmatpush1.bf16.msra.mxu0 0
      %2398 = vmatprep.subr.bf16.mxu0 0
      %2399 = vmatpush1.bf16.msra.mxu0 0
      %2400 = vmatprep.subr.bf16.mxu0 0
      %2401 = vmatpush1.bf16.msra.mxu0 0
      %2402 = vmatprep.subr.bf16.mxu0 0
      %2403 = vmatpush1.bf16.msra.mxu0 0
      %2404 = vmatprep.mubr.bf16.mxu0 0
      %2405 = vmatmul.mubr.bf16.gmra.mrb[0].mxu0 %v1083
      %v2406 = vpop.f32.mrb[0].mxu0
      %v2407 = vadd.f32 0.0, %v2406
      %v2408 = vpop.f32.mrb[0].mxu0
      %v2409 = vpop.f32.mrb[0].mxu0
      %v2410 = vadd.f32 0.0, %v2409
      %v2411 = vpop.f32.mrb[0].mxu0
      %2412 = vmatprep.mubr.bf16.mxu0 0
      %2413 = vmatmul.mubr.bf16.gmra.mrb[0].mxu0 %v1086
      %v2414 = vpop.f32.mrb[0].mxu0
      %v2415 = vadd.f32 0.0, %v2414
      %v2416 = vpop.f32.mrb[0].mxu0
      %v2417 = vpop.f32.mrb[0].mxu0
      %v2418 = vadd.f32 0.0, %v2417
      %v2419 = vpop.f32.mrb[0].mxu0
      %2420 = vmatprep.mubr.bf16.mxu0 0
      %2421 = vmatmul.mubr.bf16.gmra.mrb[0].mxu0 %v1089
      %v2422 = vpop.f32.mrb[0].mxu0
      %v2423 = vadd.f32 0.0, %v2422
      %v2424 = vpop.f32.mrb[0].mxu0
      %v2425 = vpop.f32.mrb[0].mxu0
      %v2426 = vadd.f32 0.0, %v2425
      %v2427 = vpop.f32.mrb[0].mxu0
      %2428 = vmatprep.mubr.bf16.mxu0 0
      %2429 = vmatmul.mubr.bf16.gmra.mrb[0].mxu0 %v1092
      %v2430 = vpop.f32.mrb[0].mxu0
      %v2431 = vadd.f32 0.0, %v2430
      %v2432 = vpop.f32.mrb[0].mxu0
      %v2433 = vpop.f32.mrb[0].mxu0
      %v2434 = vadd.f32 0.0, %v2433
      %v2435 = vpop.f32.mrb[0].mxu0
      %2436 = vmatprep.mubr.bf16.mxu0 0
      %2437 = vmatmul.mubr.bf16.gmra.mrb[0].mxu0 %v1095
      %v2438 = vpop.f32.mrb[0].mxu0
      %v2439 = vadd.f32 0.0, %v2438
      %v2440 = vpop.f32.mrb[0].mxu0
      %v2441 = vpop.f32.mrb[0].mxu0
      %v2442 = vadd.f32 0.0, %v2441
      %v2443 = vpop.f32.mrb[0].mxu0
      %2444 = vmatprep.mubr.bf16.mxu0 0
      %2445 = vmatmul.mubr.bf16.gmra.mrb[0].mxu0 %v1098
      %v2446 = vpop.f32.mrb[0].mxu0
      %v2447 = vadd.f32 0.0, %v2446
      %v2448 = vpop.f32.mrb[0].mxu0
      %v2449 = vpop.f32.mrb[0].mxu0
      %v2450 = vadd.f32 0.0, %v2449
      %v2451 = vpop.f32.mrb[0].mxu0
      %2452 = vmatprep.mubr.bf16.mxu0 0
      %2453 = vmatmul.mubr.bf16.gmra.mrb[0].mxu0 %v1101
      %v2454 = vpop.f32.mrb[0].mxu0
      %v2455 = vadd.f32 0.0, %v2454
      %v2456 = vpop.f32.mrb[0].mxu0
      %v2457 = vpop.f32.mrb[0].mxu0
      %v2458 = vadd.f32 0.0, %v2457
      %v2459 = vpop.f32.mrb[0].mxu0
      %2460 = vmatprep.mubr.bf16.mxu0 0
      %2461 = vmatmul.mubr.bf16.gmra.mrb[0].mxu0 %v1104
      %v2462 = vpop.f32.mrb[0].mxu0
      %v2463 = vadd.f32 0.0, %v2462
      %v2464 = vpop.f32.mrb[0].mxu0
      %v2465 = vpop.f32.mrb[0].mxu0
      %v2466 = vadd.f32 0.0, %v2465
      %v2467 = vpop.f32.mrb[0].mxu0
      %2468 = vmatprep.mubr.bf16.mxu0 0
      %2469 = vmatmul.mubr.bf16.gmra.mrb[0].mxu0 %v1107
      %v2470 = vpop.f32.mrb[0].mxu0
      %v2471 = vadd.f32 0.0, %v2470
      %v2472 = vpop.f32.mrb[0].mxu0
      %v2473 = vpop.f32.mrb[0].mxu0
      %v2474 = vadd.f32 0.0, %v2473
      %v2475 = vpop.f32.mrb[0].mxu0
      %2476 = vmatprep.mubr.bf16.mxu0 0
      %2477 = vmatmul.mubr.bf16.gmra.mrb[0].mxu0 %v1110
      %v2478 = vpop.f32.mrb[0].mxu0
      %v2479 = vadd.f32 0.0, %v2478
      %v2480 = vpop.f32.mrb[0].mxu0
      %v2481 = vpop.f32.mrb[0].mxu0
      %v2482 = vadd.f32 0.0, %v2481
      %v2483 = vpop.f32.mrb[0].mxu0
      %2484 = vmatprep.mubr.bf16.mxu0 0
      %2485 = vmatmul.mubr.bf16.gmra.mrb[0].mxu0 %v1113
      %v2486 = vpop.f32.mrb[0].mxu0
      %v2487 = vadd.f32 0.0, %v2486
      %v2488 = vpop.f32.mrb[0].mxu0
      %v2489 = vpop.f32.mrb[0].mxu0
      %v2490 = vadd.f32 0.0, %v2489
      %v2491 = vpop.f32.mrb[0].mxu0
      %2492 = vmatprep.mubr.bf16.mxu0 0
      %2493 = vmatmul.mubr.bf16.gmra.mrb[0].mxu0 %v1116
      %v2494 = vpop.f32.mrb[0].mxu0
      %v2495 = vadd.f32 0.0, %v2494
      %v2496 = vpop.f32.mrb[0].mxu0
      %v2497 = vpop.f32.mrb[0].mxu0
      %v2498 = vadd.f32 0.0, %v2497
      %v2499 = vpop.f32.mrb[0].mxu0
      %2500 = vmatprep.mubr.bf16.mxu0 0
      %2501 = vmatmul.mubr.bf16.gmra.mrb[0].mxu0 %v1119
      %v2502 = vpop.f32.mrb[0].mxu0
      %v2503 = vadd.f32 0.0, %v2502
      %v2504 = vpop.f32.mrb[0].mxu0
      %v2505 = vpop.f32.mrb[0].mxu0
      %v2506 = vadd.f32 0.0, %v2505
      %v2507 = vpop.f32.mrb[0].mxu0
      %2508 = vmatprep.mubr.bf16.mxu0 0
      %2509 = vmatmul.mubr.bf16.gmra.mrb[0].mxu0 %v1122
      %v2510 = vpop.f32.mrb[0].mxu0
      %v2511 = vadd.f32 0.0, %v2510
      %v2512 = vpop.f32.mrb[0].mxu0
      %v2513 = vpop.f32.mrb[0].mxu0
      %v2514 = vadd.f32 0.0, %v2513
      %v2515 = vpop.f32.mrb[0].mxu0
      %2516 = vmatprep.mubr.bf16.mxu0 0
      %2517 = vmatmul.mubr.bf16.gmra.mrb[0].mxu0 %v1721
      %v2518 = vpop.f32.mrb[0].mxu0
      %v2519 = vadd.f32 0.0, %v2518
      %v2520 = vpop.f32.mrb[0].mxu0
      %v2521 = vpop.f32.mrb[0].mxu0
      %v2522 = vadd.f32 0.0, %v2521
      %v2523 = vpop.f32.mrb[0].mxu0
      %2524 = vmatprep.mubr.bf16.mxu0 0
      %2525 = vmatmul.mubr.bf16.gmra.mrb[0].mxu0 %v2367
      %v2526 = vpop.f32.mrb[0].mxu0
      %v2527 = vadd.f32 0.0, %v2526
      %v2528 = vpop.f32.mrb[0].mxu0
      %v2529 = vpop.f32.mrb[0].mxu0
      %v2530 = vadd.f32 0.0, %v2529
      %v2531 = vpop.f32.mrb[0].mxu0
      %2532 = vdwg.mxu0
      %v2533 = vadd.f32 %v2327, %v2407
      %v2534 = vadd.f32 %v2328, %v2410
      %v2535 = vadd.f32 %v2329, %v2415
      %v2536 = vadd.f32 %v2330, %v2418
      %v2537 = vadd.f32 %v2331, %v2423
      %v2538 = vadd.f32 %v2332, %v2426
      %v2539 = vadd.f32 %v2333, %v2431
      %v2540 = vadd.f32 %v2334, %v2434
      %v2541 = vadd.f32 %v2335, %v2439
      %v2542 = vadd.f32 %v2336, %v2442
      %v2543 = vadd.f32 %v2337, %v2447
      %v2544 = vadd.f32 %v2338, %v2450
      %v2545 = vadd.f32 %v2339, %v2455
      %v2546 = vadd.f32 %v2340, %v2458
      %v2547 = vadd.f32 %v2341, %v2463
      %v2548 = vadd.f32 %v2342, %v2466
      %v2549 = vadd.f32 %v2343, %v2471
      %v2550 = vadd.f32 %v2344, %v2474
      %v2551 = vadd.f32 %v2345, %v2479
      %v2552 = vadd.f32 %v2346, %v2482
      %v2553 = vadd.f32 %v2347, %v2487
      %v2554 = vadd.f32 %v2348, %v2490
      %v2555 = vadd.f32 %v2349, %v2495
      %v2556 = vadd.f32 %v2350, %v2498
      %v2557 = vadd.f32 %v2351, %v2503
      %v2558 = vadd.f32 %v2352, %v2506
      %v2559 = vadd.f32 %v2353, %v2511
      %v2560 = vadd.f32 %v2354, %v2514
      %v2561 = vadd.f32 %v2355, %v2519
      %v2562 = vadd.f32 %v2356, %v2522
      %v2563 = vadd.f32 %v2357, %v2527
      %v2564 = vadd.f32 %v2358, %v2530
      %v2566 = vshrl.u32 %v341, 16
      %v2568 = vrot.slane %v2566, 4
      %v2569 = vshll.u32 %v341, 16
      %v2571 = vrot.slane %v2569, 5
      %v2572 = vor.u32 %v2568, %v2571
      %v2573 = vrot.slane %v2572, 4
      %v2575 = vshll.u32 %v342, 16
      %v2577 = vrot.slane %v2575, 5
      %v2578 = vsel %vm347, %v2573, %v2577
      %v2579 = vshrl.u32 %v342, 16
      %v2581 = vrot.slane %v2579, 4
      %v2582 = vor.u32 %v2581, %v2577
      %v2583 = vrot.slane %v2582, 4
      %v2585 = vshll.u32 %v343, 16
      %v2587 = vrot.slane %v2585, 5
      %v2588 = vsel %vm347, %v2583, %v2587
      %s2589 = scalar_lea.vmem %s2, 14
      %v2590 = vld [vmem:[%s2589] sm:$0x3]
      %v2591 = vunpack.c.l.b16 %v2578
      %v2592 = vunpack.c.l.b16 %v2588
      %v2593 = vpack.c.b16 %v2592, %v2591
      %v2595 = vsel %vm782, %v2593, 0
      %v2598 = vsel %vm831, %v2590, 0
      %2600 = vmatprep.subr.bf16.mxu0 0
      %2601 = vmatpush1.bf16.msra.mxu0 %v2598
      %2602 = vmatprep.subr.bf16.mxu0 0
      %2603 = vmatpush1.bf16.msra.mxu0 0
      %2604 = vmatprep.subr.bf16.mxu0 0
      %2605 = vmatpush1.bf16.msra.mxu0 0
      %2606 = vmatprep.subr.bf16.mxu0 0
      %2607 = vmatpush1.bf16.msra.mxu0 0
      %2608 = vmatprep.subr.bf16.mxu0 0
      %2609 = vmatpush1.bf16.msra.mxu0 0
      %2610 = vmatprep.subr.bf16.mxu0 0
      %2611 = vmatpush1.bf16.msra.mxu0 0
      %2612 = vmatprep.subr.bf16.mxu0 0
      %2613 = vmatpush1.bf16.msra.mxu0 0
      %2614 = vmatprep.subr.bf16.mxu0 0
      %2615 = vmatpush1.bf16.msra.mxu0 0
      %2616 = vmatprep.subr.bf16.mxu0 0
      %2617 = vmatpush1.bf16.msra.mxu0 0
      %2618 = vmatprep.subr.bf16.mxu0 0
      %2619 = vmatpush1.bf16.msra.mxu0 0
      %2620 = vmatprep.subr.bf16.mxu0 0
      %2621 = vmatpush1.bf16.msra.mxu0 0
      %2622 = vmatprep.subr.bf16.mxu0 0
      %2623 = vmatpush1.bf16.msra.mxu0 0
      %2624 = vmatprep.subr.bf16.mxu0 0
      %2625 = vmatpush1.bf16.msra.mxu0 0
      %2626 = vmatprep.subr.bf16.mxu0 0
      %2627 = vmatpush1.bf16.msra.mxu0 0
      %2628 = vmatprep.subr.bf16.mxu0 0
      %2629 = vmatpush1.bf16.msra.mxu0 0
      %2630 = vmatprep.subr.bf16.mxu0 0
      %2631 = vmatpush1.bf16.msra.mxu0 0
      %2632 = vmatprep.mubr.bf16.mxu0 0
      %2633 = vmatmul.mubr.bf16.gmra.mrb[0].mxu0 %v790
      %v2634 = vpop.f32.mrb[0].mxu0
      %v2635 = vadd.f32 0.0, %v2634
      %v2636 = vpop.f32.mrb[0].mxu0
      %v2637 = vpop.f32.mrb[0].mxu0
      %v2638 = vadd.f32 0.0, %v2637
      %v2639 = vpop.f32.mrb[0].mxu0
      %2640 = vmatprep.mubr.bf16.mxu0 0
      %2641 = vmatmul.mubr.bf16.gmra.mrb[0].mxu0 %v793
      %v2642 = vpop.f32.mrb[0].mxu0
      %v2643 = vadd.f32 0.0, %v2642
      %v2644 = vpop.f32.mrb[0].mxu0
      %v2645 = vpop.f32.mrb[0].mxu0
      %v2646 = vadd.f32 0.0, %v2645
      %v2647 = vpop.f32.mrb[0].mxu0
      %2648 = vmatprep.mubr.bf16.mxu0 0
      %2649 = vmatmul.mubr.bf16.gmra.mrb[0].mxu0 %v796
      %v2650 = vpop.f32.mrb[0].mxu0
      %v2651 = vadd.f32 0.0, %v2650
      %v2652 = vpop.f32.mrb[0].mxu0
      %v2653 = vpop.f32.mrb[0].mxu0
      %v2654 = vadd.f32 0.0, %v2653
      %v2655 = vpop.f32.mrb[0].mxu0
      %2656 = vmatprep.mubr.bf16.mxu0 0
      %2657 = vmatmul.mubr.bf16.gmra.mrb[0].mxu0 %v799
      %v2658 = vpop.f32.mrb[0].mxu0
      %v2659 = vadd.f32 0.0, %v2658
      %v2660 = vpop.f32.mrb[0].mxu0
      %v2661 = vpop.f32.mrb[0].mxu0
      %v2662 = vadd.f32 0.0, %v2661
      %v2663 = vpop.f32.mrb[0].mxu0
      %2664 = vmatprep.mubr.bf16.mxu0 0
      %2665 = vmatmul.mubr.bf16.gmra.mrb[0].mxu0 %v802
      %v2666 = vpop.f32.mrb[0].mxu0
      %v2667 = vadd.f32 0.0, %v2666
      %v2668 = vpop.f32.mrb[0].mxu0
      %v2669 = vpop.f32.mrb[0].mxu0
      %v2670 = vadd.f32 0.0, %v2669
      %v2671 = vpop.f32.mrb[0].mxu0
      %2672 = vmatprep.mubr.bf16.mxu0 0
      %2673 = vmatmul.mubr.bf16.gmra.mrb[0].mxu0 %v805
      %v2674 = vpop.f32.mrb[0].mxu0
      %v2675 = vadd.f32 0.0, %v2674
      %v2676 = vpop.f32.mrb[0].mxu0
      %v2677 = vpop.f32.mrb[0].mxu0
      %v2678 = vadd.f32 0.0, %v2677
      %v2679 = vpop.f32.mrb[0].mxu0
      %2680 = vmatprep.mubr.bf16.mxu0 0
      %2681 = vmatmul.mubr.bf16.gmra.mrb[0].mxu0 %v808
      %v2682 = vpop.f32.mrb[0].mxu0
      %v2683 = vadd.f32 0.0, %v2682
      %v2684 = vpop.f32.mrb[0].mxu0
      %v2685 = vpop.f32.mrb[0].mxu0
      %v2686 = vadd.f32 0.0, %v2685
      %v2687 = vpop.f32.mrb[0].mxu0
      %2688 = vmatprep.mubr.bf16.mxu0 0
      %2689 = vmatmul.mubr.bf16.gmra.mrb[0].mxu0 %v811
      %v2690 = vpop.f32.mrb[0].mxu0
      %v2691 = vadd.f32 0.0, %v2690
      %v2692 = vpop.f32.mrb[0].mxu0
      %v2693 = vpop.f32.mrb[0].mxu0
      %v2694 = vadd.f32 0.0, %v2693
      %v2695 = vpop.f32.mrb[0].mxu0
      %2696 = vmatprep.mubr.bf16.mxu0 0
      %2697 = vmatmul.mubr.bf16.gmra.mrb[0].mxu0 %v814
      %v2698 = vpop.f32.mrb[0].mxu0
      %v2699 = vadd.f32 0.0, %v2698
      %v2700 = vpop.f32.mrb[0].mxu0
      %v2701 = vpop.f32.mrb[0].mxu0
      %v2702 = vadd.f32 0.0, %v2701
      %v2703 = vpop.f32.mrb[0].mxu0
      %2704 = vmatprep.mubr.bf16.mxu0 0
      %2705 = vmatmul.mubr.bf16.gmra.mrb[0].mxu0 %v817
      %v2706 = vpop.f32.mrb[0].mxu0
      %v2707 = vadd.f32 0.0, %v2706
      %v2708 = vpop.f32.mrb[0].mxu0
      %v2709 = vpop.f32.mrb[0].mxu0
      %v2710 = vadd.f32 0.0, %v2709
      %v2711 = vpop.f32.mrb[0].mxu0
      %2712 = vmatprep.mubr.bf16.mxu0 0
      %2713 = vmatmul.mubr.bf16.gmra.mrb[0].mxu0 %v820
      %v2714 = vpop.f32.mrb[0].mxu0
      %v2715 = vadd.f32 0.0, %v2714
      %v2716 = vpop.f32.mrb[0].mxu0
      %v2717 = vpop.f32.mrb[0].mxu0
      %v2718 = vadd.f32 0.0, %v2717
      %v2719 = vpop.f32.mrb[0].mxu0
      %2720 = vmatprep.mubr.bf16.mxu0 0
      %2721 = vmatmul.mubr.bf16.gmra.mrb[0].mxu0 %v823
      %v2722 = vpop.f32.mrb[0].mxu0
      %v2723 = vadd.f32 0.0, %v2722
      %v2724 = vpop.f32.mrb[0].mxu0
      %v2725 = vpop.f32.mrb[0].mxu0
      %v2726 = vadd.f32 0.0, %v2725
      %v2727 = vpop.f32.mrb[0].mxu0
      %2728 = vmatprep.mubr.bf16.mxu0 0
      %2729 = vmatmul.mubr.bf16.gmra.mrb[0].mxu0 %v826
      %v2730 = vpop.f32.mrb[0].mxu0
      %v2731 = vadd.f32 0.0, %v2730
      %v2732 = vpop.f32.mrb[0].mxu0
      %v2733 = vpop.f32.mrb[0].mxu0
      %v2734 = vadd.f32 0.0, %v2733
      %v2735 = vpop.f32.mrb[0].mxu0
      %2736 = vmatprep.mubr.bf16.mxu0 0
      %2737 = vmatmul.mubr.bf16.gmra.mrb[0].mxu0 %v829
      %v2738 = vpop.f32.mrb[0].mxu0
      %v2739 = vadd.f32 0.0, %v2738
      %v2740 = vpop.f32.mrb[0].mxu0
      %v2741 = vpop.f32.mrb[0].mxu0
      %v2742 = vadd.f32 0.0, %v2741
      %v2743 = vpop.f32.mrb[0].mxu0
      %2744 = vmatprep.mubr.bf16.mxu0 0
      %2745 = vmatmul.mubr.bf16.gmra.mrb[0].mxu0 %v1949
      %v2746 = vpop.f32.mrb[0].mxu0
      %v2747 = vadd.f32 0.0, %v2746
      %v2748 = vpop.f32.mrb[0].mxu0
      %v2749 = vpop.f32.mrb[0].mxu0
      %v2750 = vadd.f32 0.0, %v2749
      %v2751 = vpop.f32.mrb[0].mxu0
      %2752 = vmatprep.mubr.bf16.mxu0 0
      %2753 = vmatmul.mubr.bf16.gmra.mrb[0].mxu0 %v2595
      %v2754 = vpop.f32.mrb[0].mxu0
      %v2755 = vadd.f32 0.0, %v2754
      %v2756 = vpop.f32.mrb[0].mxu0
      %v2757 = vpop.f32.mrb[0].mxu0
      %v2758 = vadd.f32 0.0, %v2757
      %v2759 = vpop.f32.mrb[0].mxu0
      %2760 = vdwg.mxu0
      %v2761 = vadd.f32 %v2533, %v2635
      %v2762 = vadd.f32 %v2534, %v2638
      %v2763 = vadd.f32 %v2535, %v2643
      %v2764 = vadd.f32 %v2536, %v2646
      %v2765 = vadd.f32 %v2537, %v2651
      %v2766 = vadd.f32 %v2538, %v2654
      %v2767 = vadd.f32 %v2539, %v2659
      %v2768 = vadd.f32 %v2540, %v2662
      %v2769 = vadd.f32 %v2541, %v2667
      %v2770 = vadd.f32 %v2542, %v2670
      %v2771 = vadd.f32 %v2543, %v2675
      %v2772 = vadd.f32 %v2544, %v2678
      %v2773 = vadd.f32 %v2545, %v2683
      %v2774 = vadd.f32 %v2546, %v2686
      %v2775 = vadd.f32 %v2547, %v2691
      %v2776 = vadd.f32 %v2548, %v2694
      %v2777 = vadd.f32 %v2549, %v2699
      %v2778 = vadd.f32 %v2550, %v2702
      %v2779 = vadd.f32 %v2551, %v2707
      %v2780 = vadd.f32 %v2552, %v2710
      %v2781 = vadd.f32 %v2553, %v2715
      %v2782 = vadd.f32 %v2554, %v2718
      %v2783 = vadd.f32 %v2555, %v2723
      %v2784 = vadd.f32 %v2556, %v2726
      %v2785 = vadd.f32 %v2557, %v2731
      %v2786 = vadd.f32 %v2558, %v2734
      %v2787 = vadd.f32 %v2559, %v2739
      %v2788 = vadd.f32 %v2560, %v2742
      %v2789 = vadd.f32 %v2561, %v2747
      %v2790 = vadd.f32 %v2562, %v2750
      %v2791 = vadd.f32 %v2563, %v2755
      %v2792 = vadd.f32 %v2564, %v2758
      %v2794 = vrot.slane %v341, 5
      %v2795 = vrot.slane %v2794, 4
      %v2796 = vrot.slane %v342, 5
      %v2797 = vsel %vm1306, %v2795, %v2796
      %v2798 = vrot.slane %v2796, 4
      %v2799 = vrot.slane %v343, 5
      %v2800 = vsel %vm1306, %v2798, %v2799
      %s2801 = scalar_lea.vmem %s2, 16
      %v2802 = vld [vmem:[%s2801] sm:$0x3]
      %v2803 = vunpack.c.l.b16 %v2797
      %v2804 = vunpack.c.l.b16 %v2800
      %v2805 = vpack.c.b16 %v2804, %v2803
      %v2807 = vsel %vm782, %v2805, 0
      %v2810 = vsel %vm831, %v2802, 0
      %2812 = vmatprep.subr.bf16.mxu0 0
      %2813 = vmatpush1.bf16.msra.mxu0 %v2810
      %2814 = vmatprep.subr.bf16.mxu0 0
      %2815 = vmatpush1.bf16.msra.mxu0 0
      %2816 = vmatprep.subr.bf16.mxu0 0
      %2817 = vmatpush1.bf16.msra.mxu0 0
      %2818 = vmatprep.subr.bf16.mxu0 0
      %2819 = vmatpush1.bf16.msra.mxu0 0
      %2820 = vmatprep.subr.bf16.mxu0 0
      %2821 = vmatpush1.bf16.msra.mxu0 0
      %2822 = vmatprep.subr.bf16.mxu0 0
      %2823 = vmatpush1.bf16.msra.mxu0 0
      %2824 = vmatprep.subr.bf16.mxu0 0
      %2825 = vmatpush1.bf16.msra.mxu0 0
      %2826 = vmatprep.subr.bf16.mxu0 0
      %2827 = vmatpush1.bf16.msra.mxu0 0
      %2828 = vmatprep.subr.bf16.mxu0 0
      %2829 = vmatpush1.bf16.msra.mxu0 0
      %2830 = vmatprep.subr.bf16.mxu0 0
      %2831 = vmatpush1.bf16.msra.mxu0 0
      %2832 = vmatprep.subr.bf16.mxu0 0
      %2833 = vmatpush1.bf16.msra.mxu0 0
      %2834 = vmatprep.subr.bf16.mxu0 0
      %2835 = vmatpush1.bf16.msra.mxu0 0
      %2836 = vmatprep.subr.bf16.mxu0 0
      %2837 = vmatpush1.bf16.msra.mxu0 0
      %2838 = vmatprep.subr.bf16.mxu0 0
      %2839 = vmatpush1.bf16.msra.mxu0 0
      %2840 = vmatprep.subr.bf16.mxu0 0
      %2841 = vmatpush1.bf16.msra.mxu0 0
      %2842 = vmatprep.subr.bf16.mxu0 0
      %2843 = vmatpush1.bf16.msra.mxu0 0
      %2844 = vmatprep.mubr.bf16.mxu0 0
      %2845 = vmatmul.mubr.bf16.gmra.mrb[0].mxu0 %v1476
      %v2846 = vpop.f32.mrb[0].mxu0
      %v2847 = vadd.f32 0.0, %v2846
      %v2848 = vpop.f32.mrb[0].mxu0
      %v2849 = vpop.f32.mrb[0].mxu0
      %v2850 = vadd.f32 0.0, %v2849
      %v2851 = vpop.f32.mrb[0].mxu0
      %2852 = vmatprep.mubr.bf16.mxu0 0
      %2853 = vmatmul.mubr.bf16.gmra.mrb[0].mxu0 %v1479
      %v2854 = vpop.f32.mrb[0].mxu0
      %v2855 = vadd.f32 0.0, %v2854
      %v2856 = vpop.f32.mrb[0].mxu0
      %v2857 = vpop.f32.mrb[0].mxu0
      %v2858 = vadd.f32 0.0, %v2857
      %v2859 = vpop.f32.mrb[0].mxu0
      %2860 = vmatprep.mubr.bf16.mxu0 0
      %2861 = vmatmul.mubr.bf16.gmra.mrb[0].mxu0 %v1482
      %v2862 = vpop.f32.mrb[0].mxu0
      %v2863 = vadd.f32 0.0, %v2862
      %v2864 = vpop.f32.mrb[0].mxu0
      %v2865 = vpop.f32.mrb[0].mxu0
      %v2866 = vadd.f32 0.0, %v2865
      %v2867 = vpop.f32.mrb[0].mxu0
      %2868 = vmatprep.mubr.bf16.mxu0 0
      %2869 = vmatmul.mubr.bf16.gmra.mrb[0].mxu0 %v1485
      %v2870 = vpop.f32.mrb[0].mxu0
      %v2871 = vadd.f32 0.0, %v2870
      %v2872 = vpop.f32.mrb[0].mxu0
      %v2873 = vpop.f32.mrb[0].mxu0
      %v2874 = vadd.f32 0.0, %v2873
      %v2875 = vpop.f32.mrb[0].mxu0
      %2876 = vmatprep.mubr.bf16.mxu0 0
      %2877 = vmatmul.mubr.bf16.gmra.mrb[0].mxu0 %v1488
      %v2878 = vpop.f32.mrb[0].mxu0
      %v2879 = vadd.f32 0.0, %v2878
      %v2880 = vpop.f32.mrb[0].mxu0
      %v2881 = vpop.f32.mrb[0].mxu0
      %v2882 = vadd.f32 0.0, %v2881
      %v2883 = vpop.f32.mrb[0].mxu0
      %2884 = vmatprep.mubr.bf16.mxu0 0
      %2885 = vmatmul.mubr.bf16.gmra.mrb[0].mxu0 %v1491
      %v2886 = vpop.f32.mrb[0].mxu0
      %v2887 = vadd.f32 0.0, %v2886
      %v2888 = vpop.f32.mrb[0].mxu0
      %v2889 = vpop.f32.mrb[0].mxu0
      %v2890 = vadd.f32 0.0, %v2889
      %v2891 = vpop.f32.mrb[0].mxu0
      %2892 = vmatprep.mubr.bf16.mxu0 0
      %2893 = vmatmul.mubr.bf16.gmra.mrb[0].mxu0 %v1494
      %v2894 = vpop.f32.mrb[0].mxu0
      %v2895 = vadd.f32 0.0, %v2894
      %v2896 = vpop.f32.mrb[0].mxu0
      %v2897 = vpop.f32.mrb[0].mxu0
      %v2898 = vadd.f32 0.0, %v2897
      %v2899 = vpop.f32.mrb[0].mxu0
      %2900 = vmatprep.mubr.bf16.mxu0 0
      %2901 = vmatmul.mubr.bf16.gmra.mrb[0].mxu0 %v1497
      %v2902 = vpop.f32.mrb[0].mxu0
      %v2903 = vadd.f32 0.0, %v2902
      %v2904 = vpop.f32.mrb[0].mxu0
      %v2905 = vpop.f32.mrb[0].mxu0
      %v2906 = vadd.f32 0.0, %v2905
      %v2907 = vpop.f32.mrb[0].mxu0
      %2908 = vmatprep.mubr.bf16.mxu0 0
      %2909 = vmatmul.mubr.bf16.gmra.mrb[0].mxu0 %v1500
      %v2910 = vpop.f32.mrb[0].mxu0
      %v2911 = vadd.f32 0.0, %v2910
      %v2912 = vpop.f32.mrb[0].mxu0
      %v2913 = vpop.f32.mrb[0].mxu0
      %v2914 = vadd.f32 0.0, %v2913
      %v2915 = vpop.f32.mrb[0].mxu0
      %2916 = vmatprep.mubr.bf16.mxu0 0
      %2917 = vmatmul.mubr.bf16.gmra.mrb[0].mxu0 %v1503
      %v2918 = vpop.f32.mrb[0].mxu0
      %v2919 = vadd.f32 0.0, %v2918
      %v2920 = vpop.f32.mrb[0].mxu0
      %v2921 = vpop.f32.mrb[0].mxu0
      %v2922 = vadd.f32 0.0, %v2921
      %v2923 = vpop.f32.mrb[0].mxu0
      %2924 = vmatprep.mubr.bf16.mxu0 0
      %2925 = vmatmul.mubr.bf16.gmra.mrb[0].mxu0 %v1506
      %v2926 = vpop.f32.mrb[0].mxu0
      %v2927 = vadd.f32 0.0, %v2926
      %v2928 = vpop.f32.mrb[0].mxu0
      %v2929 = vpop.f32.mrb[0].mxu0
      %v2930 = vadd.f32 0.0, %v2929
      %v2931 = vpop.f32.mrb[0].mxu0
      %2932 = vmatprep.mubr.bf16.mxu0 0
      %2933 = vmatmul.mubr.bf16.gmra.mrb[0].mxu0 %v1509
      %v2934 = vpop.f32.mrb[0].mxu0
      %v2935 = vadd.f32 0.0, %v2934
      %v2936 = vpop.f32.mrb[0].mxu0
      %v2937 = vpop.f32.mrb[0].mxu0
      %v2938 = vadd.f32 0.0, %v2937
      %v2939 = vpop.f32.mrb[0].mxu0
      %2940 = vmatprep.mubr.bf16.mxu0 0
      %2941 = vmatmul.mubr.bf16.gmra.mrb[0].mxu0 %v1512
      %v2942 = vpop.f32.mrb[0].mxu0
      %v2943 = vadd.f32 0.0, %v2942
      %v2944 = vpop.f32.mrb[0].mxu0
      %v2945 = vpop.f32.mrb[0].mxu0
      %v2946 = vadd.f32 0.0, %v2945
      %v2947 = vpop.f32.mrb[0].mxu0
      %2948 = vmatprep.mubr.bf16.mxu0 0
      %2949 = vmatmul.mubr.bf16.gmra.mrb[0].mxu0 %v1515
      %v2950 = vpop.f32.mrb[0].mxu0
      %v2951 = vadd.f32 0.0, %v2950
      %v2952 = vpop.f32.mrb[0].mxu0
      %v2953 = vpop.f32.mrb[0].mxu0
      %v2954 = vadd.f32 0.0, %v2953
      %v2955 = vpop.f32.mrb[0].mxu0
      %2956 = vmatprep.mubr.bf16.mxu0 0
      %2957 = vmatmul.mubr.bf16.gmra.mrb[0].mxu0 %v2161
      %v2958 = vpop.f32.mrb[0].mxu0
      %v2959 = vadd.f32 0.0, %v2958
      %v2960 = vpop.f32.mrb[0].mxu0
      %v2961 = vpop.f32.mrb[0].mxu0
      %v2962 = vadd.f32 0.0, %v2961
      %v2963 = vpop.f32.mrb[0].mxu0
      %2964 = vmatprep.mubr.bf16.mxu0 0
      %2965 = vmatmul.mubr.bf16.gmra.mrb[0].mxu0 %v2807
      %v2966 = vpop.f32.mrb[0].mxu0
      %v2967 = vadd.f32 0.0, %v2966
      %v2968 = vpop.f32.mrb[0].mxu0
      %v2969 = vpop.f32.mrb[0].mxu0
      %v2970 = vadd.f32 0.0, %v2969
      %v2971 = vpop.f32.mrb[0].mxu0
      %2972 = vdwg.mxu0
      %v2973 = vadd.f32 %v2761, %v2847
      %v2974 = vadd.f32 %v2762, %v2850
      %v2975 = vadd.f32 %v2763, %v2855
      %v2976 = vadd.f32 %v2764, %v2858
      %v2977 = vadd.f32 %v2765, %v2863
      %v2978 = vadd.f32 %v2766, %v2866
      %v2979 = vadd.f32 %v2767, %v2871
      %v2980 = vadd.f32 %v2768, %v2874
      %v2981 = vadd.f32 %v2769, %v2879
      %v2982 = vadd.f32 %v2770, %v2882
      %v2983 = vadd.f32 %v2771, %v2887
      %v2984 = vadd.f32 %v2772, %v2890
      %v2985 = vadd.f32 %v2773, %v2895
      %v2986 = vadd.f32 %v2774, %v2898
      %v2987 = vadd.f32 %v2775, %v2903
      %v2988 = vadd.f32 %v2776, %v2906
      %v2989 = vadd.f32 %v2777, %v2911
      %v2990 = vadd.f32 %v2778, %v2914
      %v2991 = vadd.f32 %v2779, %v2919
      %v2992 = vadd.f32 %v2780, %v2922
      %v2993 = vadd.f32 %v2781, %v2927
      %v2994 = vadd.f32 %v2782, %v2930
      %v2995 = vadd.f32 %v2783, %v2935
      %v2996 = vadd.f32 %v2784, %v2938
      %v2997 = vadd.f32 %v2785, %v2943
      %v2998 = vadd.f32 %v2786, %v2946
      %v2999 = vadd.f32 %v2787, %v2951
      %v3000 = vadd.f32 %v2788, %v2954
      %v3001 = vadd.f32 %v2789, %v2959
      %v3002 = vadd.f32 %v2790, %v2962
      %v3003 = vadd.f32 %v2791, %v2967
      %v3004 = vadd.f32 %v2792, %v2970
      %v3005 = vld [vmem:[%s270] sm:$0xf]
      %v3006 = vld [vmem:[%s270 + $0x4] sm:$0xf]
      %v3007 = vld [vmem:[%s270 + $0x8] sm:$0x1]
      %v3008 = vld [vmem:[%s270 + $0xc] sm:$0xf]
      %v3009 = vld [vmem:[%s270 + $0x10] sm:$0xf]
      %v3010 = vld [vmem:[%s270 + $0x14] sm:$0x1]
      %v3011 = vld [vmem:[%s270 + $0x18] sm:$0xf]
      %v3012 = vld [vmem:[%s270 + $0x1c] sm:$0xf]
      %v3013 = vld [vmem:[%s270 + $0x20] sm:$0x1]
      %v3014 = vld [vmem:[%s270 + $0x24] sm:$0xf]
      %v3015 = vld [vmem:[%s270 + $0x28] sm:$0xf]
      %v3016 = vld [vmem:[%s270 + $0x2c] sm:$0x1]
      %v3017 = vld [vmem:[%s270 + $0x30] sm:$0xf]
      %v3018 = vld [vmem:[%s270 + $0x34] sm:$0xf]
      %v3019 = vld [vmem:[%s270 + $0x38] sm:$0x1]
      %v3020 = vld [vmem:[%s270 + $0x3c] sm:$0xf]
      %v3021 = vld [vmem:[%s270 + $0x40] sm:$0xf]
      %v3022 = vld [vmem:[%s270 + $0x44] sm:$0x1]
      %v3023 = vld [vmem:[%s270 + $0x48] sm:$0xf]
      %v3024 = vld [vmem:[%s270 + $0x4c] sm:$0xf]
      %v3025 = vld [vmem:[%s270 + $0x50] sm:$0x1]
      %v3026 = vld [vmem:[%s270 + $0x54] sm:$0xf]
      %v3027 = vld [vmem:[%s270 + $0x58] sm:$0xf]
      %v3028 = vld [vmem:[%s270 + $0x5c] sm:$0x1]
      %v3029 = vld [vmem:[%s270 + $0x60] sm:$0xf]
      %v3030 = vld [vmem:[%s270 + $0x64] sm:$0xf]
      %v3031 = vld [vmem:[%s270 + $0x68] sm:$0x1]
      %v3032 = vld [vmem:[%s270 + $0x6c] sm:$0xf]
      %v3033 = vld [vmem:[%s270 + $0x70] sm:$0xf]
      %v3034 = vld [vmem:[%s270 + $0x74] sm:$0x1]
      %v3035 = vld [vmem:[%s270 + $0x78] sm:$0xf]
      %v3036 = vld [vmem:[%s270 + $0x7c] sm:$0xf]
      %v3037 = vld [vmem:[%s270 + $0x80] sm:$0x1]
      %v3038 = vld [vmem:[%s270 + $0x84] sm:$0xf]
      %v3039 = vld [vmem:[%s270 + $0x88] sm:$0xf]
      %v3040 = vld [vmem:[%s270 + $0x8c] sm:$0x1]
      %v3041 = vld [vmem:[%s270 + $0x90] sm:$0xf]
      %v3042 = vld [vmem:[%s270 + $0x94] sm:$0xf]
      %v3043 = vld [vmem:[%s270 + $0x98] sm:$0x1]
      %v3044 = vld [vmem:[%s270 + $0x9c] sm:$0xf]
      %v3045 = vld [vmem:[%s270 + $0xa0] sm:$0xf]
      %v3046 = vld [vmem:[%s270 + $0xa4] sm:$0x1]
      %v3047 = vld [vmem:[%s270 + $0xa8] sm:$0xf]
      %v3048 = vld [vmem:[%s270 + $0xac] sm:$0xf]
      %v3049 = vld [vmem:[%s270 + $0xb0] sm:$0x1]
      %v3050 = vld [vmem:[%s270 + $0xb4] sm:$0xf]
      %v3051 = vld [vmem:[%s270 + $0xb8] sm:$0xf]
      %v3052 = vld [vmem:[%s270 + $0xbc] sm:$0x1]
      %v3053 = vld [vmem:[%s270 + $0xc0] sm:$0xf]
      %v3054 = vld [vmem:[%s270 + $0xc4] sm:$0xf]
      %v3055 = vld [vmem:[%s270 + $0xc8] sm:$0x1]
      %v3056 = vld [vmem:[%s270 + $0xcc] sm:$0xf]
      %v3057 = vld [vmem:[%s270 + $0xd0] sm:$0xf]
      %v3058 = vld [vmem:[%s270 + $0xd4] sm:$0x1]
      %v3059 = vld [vmem:[%s3] sm:$0x3]
      %v3092 = vunpack.c.l.b16 %v3005
      %v3093 = vunpack.c.l.b16 %v3006
      %v3094 = vunpack.c.l.b16 %v3008
      %v3095 = vunpack.c.l.b16 %v3009
      %v3096 = vunpack.c.l.b16 %v3011
      %v3097 = vunpack.c.l.b16 %v3012
      %v3098 = vunpack.c.l.b16 %v3014
      %v3099 = vunpack.c.l.b16 %v3015
      %v3100 = vunpack.c.l.b16 %v3017
      %v3101 = vunpack.c.l.b16 %v3018
      %v3102 = vunpack.c.l.b16 %v3020
      %v3103 = vunpack.c.l.b16 %v3021
      %v3104 = vunpack.c.l.b16 %v3023
      %v3105 = vunpack.c.l.b16 %v3024
      %v3106 = vunpack.c.l.b16 %v3026
      %v3107 = vunpack.c.l.b16 %v3027
      %v3108 = vunpack.c.l.b16 %v3029
      %v3109 = vunpack.c.l.b16 %v3030
      %v3110 = vunpack.c.l.b16 %v3032
      %v3111 = vunpack.c.l.b16 %v3033
      %v3112 = vunpack.c.l.b16 %v3035
      %v3113 = vunpack.c.l.b16 %v3036
      %v3114 = vunpack.c.l.b16 %v3038
      %v3115 = vunpack.c.l.b16 %v3039
      %v3116 = vunpack.c.l.b16 %v3041
      %v3117 = vunpack.c.l.b16 %v3042
      %v3118 = vunpack.c.l.b16 %v3044
      %v3119 = vunpack.c.l.b16 %v3045
      %v3120 = vunpack.c.l.b16 %v3047
      %v3121 = vunpack.c.l.b16 %v3048
      %v3122 = vunpack.c.l.b16 %v3050
      %v3123 = vunpack.c.l.b16 %v3051
      %v3124 = vpack.c.b16 %v3093, %v3092
      %v3125 = vpack.c.b16 %v3095, %v3094
      %v3126 = vpack.c.b16 %v3097, %v3096
      %v3127 = vpack.c.b16 %v3099, %v3098
      %v3128 = vpack.c.b16 %v3101, %v3100
      %v3129 = vpack.c.b16 %v3103, %v3102
      %v3130 = vpack.c.b16 %v3105, %v3104
      %v3131 = vpack.c.b16 %v3107, %v3106
      %v3132 = vpack.c.b16 %v3109, %v3108
      %v3133 = vpack.c.b16 %v3111, %v3110
      %v3134 = vpack.c.b16 %v3113, %v3112
      %v3135 = vpack.c.b16 %v3115, %v3114
      %v3136 = vpack.c.b16 %v3117, %v3116
      %v3137 = vpack.c.b16 %v3119, %v3118
      %v3138 = vpack.c.b16 %v3121, %v3120
      %v3139 = vpack.c.b16 %v3123, %v3122
      %v3141 = vsel %vm782, %v3124, 0
      %v3144 = vsel %vm782, %v3125, 0
      %v3147 = vsel %vm782, %v3126, 0
      %v3150 = vsel %vm782, %v3127, 0
      %v3153 = vsel %vm782, %v3128, 0
      %v3156 = vsel %vm782, %v3129, 0
      %v3159 = vsel %vm782, %v3130, 0
      %v3162 = vsel %vm782, %v3131, 0
      %v3165 = vsel %vm782, %v3132, 0
      %v3168 = vsel %vm782, %v3133, 0
      %v3171 = vsel %vm782, %v3134, 0
      %v3174 = vsel %vm782, %v3135, 0
      %v3177 = vsel %vm782, %v3136, 0
      %v3180 = vsel %vm782, %v3137, 0
      %v3183 = vsel %vm782, %v3138, 0
      %v3186 = vsel %vm782, %v3139, 0
      %v3189 = vsel %vm831, %v3059, 0
      %3191 = vmatprep.subr.bf16.mxu0 0
      %3192 = vmatpush1.bf16.msra.mxu0 %v3189
      %3193 = vmatprep.subr.bf16.mxu0 0
      %3194 = vmatpush1.bf16.msra.mxu0 0
      %3195 = vmatprep.subr.bf16.mxu0 0
      %3196 = vmatpush1.bf16.msra.mxu0 0
      %3197 = vmatprep.subr.bf16.mxu0 0
      %3198 = vmatpush1.bf16.msra.mxu0 0
      %3199 = vmatprep.subr.bf16.mxu0 0
      %3200 = vmatpush1.bf16.msra.mxu0 0
      %3201 = vmatprep.subr.bf16.mxu0 0
      %3202 = vmatpush1.bf16.msra.mxu0 0
      %3203 = vmatprep.subr.bf16.mxu0 0
      %3204 = vmatpush1.bf16.msra.mxu0 0
      %3205 = vmatprep.subr.bf16.mxu0 0
      %3206 = vmatpush1.bf16.msra.mxu0 0
      %3207 = vmatprep.subr.bf16.mxu0 0
      %3208 = vmatpush1.bf16.msra.mxu0 0
      %3209 = vmatprep.subr.bf16.mxu0 0
      %3210 = vmatpush1.bf16.msra.mxu0 0
      %3211 = vmatprep.subr.bf16.mxu0 0
      %3212 = vmatpush1.bf16.msra.mxu0 0
      %3213 = vmatprep.subr.bf16.mxu0 0
      %3214 = vmatpush1.bf16.msra.mxu0 0
      %3215 = vmatprep.subr.bf16.mxu0 0
      %3216 = vmatpush1.bf16.msra.mxu0 0
      %3217 = vmatprep.subr.bf16.mxu0 0
      %3218 = vmatpush1.bf16.msra.mxu0 0
      %3219 = vmatprep.subr.bf16.mxu0 0
      %3220 = vmatpush1.bf16.msra.mxu0 0
      %3221 = vmatprep.subr.bf16.mxu0 0
      %3222 = vmatpush1.bf16.msra.mxu0 0
      %3223 = vmatprep.mubr.bf16.mxu0 0
      %3224 = vmatmul.mubr.bf16.gmra.mrb[0].mxu0 %v3141
      %v3225 = vpop.f32.mrb[0].mxu0
      %v3226 = vadd.f32 0.0, %v3225
      %v3227 = vpop.f32.mrb[0].mxu0
      %v3228 = vpop.f32.mrb[0].mxu0
      %v3229 = vadd.f32 0.0, %v3228
      %v3230 = vpop.f32.mrb[0].mxu0
      %3231 = vmatprep.mubr.bf16.mxu0 0
      %3232 = vmatmul.mubr.bf16.gmra.mrb[0].mxu0 %v3144
      %v3233 = vpop.f32.mrb[0].mxu0
      %v3234 = vadd.f32 0.0, %v3233
      %v3235 = vpop.f32.mrb[0].mxu0
      %v3236 = vpop.f32.mrb[0].mxu0
      %v3237 = vadd.f32 0.0, %v3236
      %v3238 = vpop.f32.mrb[0].mxu0
      %3239 = vmatprep.mubr.bf16.mxu0 0
      %3240 = vmatmul.mubr.bf16.gmra.mrb[0].mxu0 %v3147
      %v3241 = vpop.f32.mrb[0].mxu0
      %v3242 = vadd.f32 0.0, %v3241
      %v3243 = vpop.f32.mrb[0].mxu0
      %v3244 = vpop.f32.mrb[0].mxu0
      %v3245 = vadd.f32 0.0, %v3244
      %v3246 = vpop.f32.mrb[0].mxu0
      %3247 = vmatprep.mubr.bf16.mxu0 0
      %3248 = vmatmul.mubr.bf16.gmra.mrb[0].mxu0 %v3150
      %v3249 = vpop.f32.mrb[0].mxu0
      %v3250 = vadd.f32 0.0, %v3249
      %v3251 = vpop.f32.mrb[0].mxu0
      %v3252 = vpop.f32.mrb[0].mxu0
      %v3253 = vadd.f32 0.0, %v3252
      %v3254 = vpop.f32.mrb[0].mxu0
      %3255 = vmatprep.mubr.bf16.mxu0 0
      %3256 = vmatmul.mubr.bf16.gmra.mrb[0].mxu0 %v3153
      %v3257 = vpop.f32.mrb[0].mxu0
      %v3258 = vadd.f32 0.0, %v3257
      %v3259 = vpop.f32.mrb[0].mxu0
      %v3260 = vpop.f32.mrb[0].mxu0
      %v3261 = vadd.f32 0.0, %v3260
      %v3262 = vpop.f32.mrb[0].mxu0
      %3263 = vmatprep.mubr.bf16.mxu0 0
      %3264 = vmatmul.mubr.bf16.gmra.mrb[0].mxu0 %v3156
      %v3265 = vpop.f32.mrb[0].mxu0
      %v3266 = vadd.f32 0.0, %v3265
      %v3267 = vpop.f32.mrb[0].mxu0
      %v3268 = vpop.f32.mrb[0].mxu0
      %v3269 = vadd.f32 0.0, %v3268
      %v3270 = vpop.f32.mrb[0].mxu0
      %3271 = vmatprep.mubr.bf16.mxu0 0
      %3272 = vmatmul.mubr.bf16.gmra.mrb[0].mxu0 %v3159
      %v3273 = vpop.f32.mrb[0].mxu0
      %v3274 = vadd.f32 0.0, %v3273
      %v3275 = vpop.f32.mrb[0].mxu0
      %v3276 = vpop.f32.mrb[0].mxu0
      %v3277 = vadd.f32 0.0, %v3276
      %v3278 = vpop.f32.mrb[0].mxu0
      %3279 = vmatprep.mubr.bf16.mxu0 0
      %3280 = vmatmul.mubr.bf16.gmra.mrb[0].mxu0 %v3162
      %v3281 = vpop.f32.mrb[0].mxu0
      %v3282 = vadd.f32 0.0, %v3281
      %v3283 = vpop.f32.mrb[0].mxu0
      %v3284 = vpop.f32.mrb[0].mxu0
      %v3285 = vadd.f32 0.0, %v3284
      %v3286 = vpop.f32.mrb[0].mxu0
      %3287 = vmatprep.mubr.bf16.mxu0 0
      %3288 = vmatmul.mubr.bf16.gmra.mrb[0].mxu0 %v3165
      %v3289 = vpop.f32.mrb[0].mxu0
      %v3290 = vadd.f32 0.0, %v3289
      %v3291 = vpop.f32.mrb[0].mxu0
      %v3292 = vpop.f32.mrb[0].mxu0
      %v3293 = vadd.f32 0.0, %v3292
      %v3294 = vpop.f32.mrb[0].mxu0
      %3295 = vmatprep.mubr.bf16.mxu0 0
      %3296 = vmatmul.mubr.bf16.gmra.mrb[0].mxu0 %v3168
      %v3297 = vpop.f32.mrb[0].mxu0
      %v3298 = vadd.f32 0.0, %v3297
      %v3299 = vpop.f32.mrb[0].mxu0
      %v3300 = vpop.f32.mrb[0].mxu0
      %v3301 = vadd.f32 0.0, %v3300
      %v3302 = vpop.f32.mrb[0].mxu0
      %3303 = vmatprep.mubr.bf16.mxu0 0
      %3304 = vmatmul.mubr.bf16.gmra.mrb[0].mxu0 %v3171
      %v3305 = vpop.f32.mrb[0].mxu0
      %v3306 = vadd.f32 0.0, %v3305
      %v3307 = vpop.f32.mrb[0].mxu0
      %v3308 = vpop.f32.mrb[0].mxu0
      %v3309 = vadd.f32 0.0, %v3308
      %v3310 = vpop.f32.mrb[0].mxu0
      %3311 = vmatprep.mubr.bf16.mxu0 0
      %3312 = vmatmul.mubr.bf16.gmra.mrb[0].mxu0 %v3174
      %v3313 = vpop.f32.mrb[0].mxu0
      %v3314 = vadd.f32 0.0, %v3313
      %v3315 = vpop.f32.mrb[0].mxu0
      %v3316 = vpop.f32.mrb[0].mxu0
      %v3317 = vadd.f32 0.0, %v3316
      %v3318 = vpop.f32.mrb[0].mxu0
      %3319 = vmatprep.mubr.bf16.mxu0 0
      %3320 = vmatmul.mubr.bf16.gmra.mrb[0].mxu0 %v3177
      %v3321 = vpop.f32.mrb[0].mxu0
      %v3322 = vadd.f32 0.0, %v3321
      %v3323 = vpop.f32.mrb[0].mxu0
      %v3324 = vpop.f32.mrb[0].mxu0
      %v3325 = vadd.f32 0.0, %v3324
      %v3326 = vpop.f32.mrb[0].mxu0
      %3327 = vmatprep.mubr.bf16.mxu0 0
      %3328 = vmatmul.mubr.bf16.gmra.mrb[0].mxu0 %v3180
      %v3329 = vpop.f32.mrb[0].mxu0
      %v3330 = vadd.f32 0.0, %v3329
      %v3331 = vpop.f32.mrb[0].mxu0
      %v3332 = vpop.f32.mrb[0].mxu0
      %v3333 = vadd.f32 0.0, %v3332
      %v3334 = vpop.f32.mrb[0].mxu0
      %3335 = vmatprep.mubr.bf16.mxu0 0
      %3336 = vmatmul.mubr.bf16.gmra.mrb[0].mxu0 %v3183
      %v3337 = vpop.f32.mrb[0].mxu0
      %v3338 = vadd.f32 0.0, %v3337
      %v3339 = vpop.f32.mrb[0].mxu0
      %v3340 = vpop.f32.mrb[0].mxu0
      %v3341 = vadd.f32 0.0, %v3340
      %v3342 = vpop.f32.mrb[0].mxu0
      %3343 = vmatprep.mubr.bf16.mxu0 0
      %3344 = vmatmul.mubr.bf16.gmra.mrb[0].mxu0 %v3186
      %v3345 = vpop.f32.mrb[0].mxu0
      %v3346 = vadd.f32 0.0, %v3345
      %v3347 = vpop.f32.mrb[0].mxu0
      %v3348 = vpop.f32.mrb[0].mxu0
      %v3349 = vadd.f32 0.0, %v3348
      %v3350 = vpop.f32.mrb[0].mxu0
      %3351 = vdwg.mxu0
      %v3352 = vadd.f32 %v2973, %v3226
      %v3353 = vadd.f32 %v2974, %v3229
      %v3354 = vadd.f32 %v2975, %v3234
      %v3355 = vadd.f32 %v2976, %v3237
      %v3356 = vadd.f32 %v2977, %v3242
      %v3357 = vadd.f32 %v2978, %v3245
      %v3358 = vadd.f32 %v2979, %v3250
      %v3359 = vadd.f32 %v2980, %v3253
      %v3360 = vadd.f32 %v2981, %v3258
      %v3361 = vadd.f32 %v2982, %v3261
      %v3362 = vadd.f32 %v2983, %v3266
      %v3363 = vadd.f32 %v2984, %v3269
      %v3364 = vadd.f32 %v2985, %v3274
      %v3365 = vadd.f32 %v2986, %v3277
      %v3366 = vadd.f32 %v2987, %v3282
      %v3367 = vadd.f32 %v2988, %v3285
      %v3368 = vadd.f32 %v2989, %v3290
      %v3369 = vadd.f32 %v2990, %v3293
      %v3370 = vadd.f32 %v2991, %v3298
      %v3371 = vadd.f32 %v2992, %v3301
      %v3372 = vadd.f32 %v2993, %v3306
      %v3373 = vadd.f32 %v2994, %v3309
      %v3374 = vadd.f32 %v2995, %v3314
      %v3375 = vadd.f32 %v2996, %v3317
      %v3376 = vadd.f32 %v2997, %v3322
      %v3377 = vadd.f32 %v2998, %v3325
      %v3378 = vadd.f32 %v2999, %v3330
      %v3379 = vadd.f32 %v3000, %v3333
      %v3380 = vadd.f32 %v3001, %v3338
      %v3381 = vadd.f32 %v3002, %v3341
      %v3382 = vadd.f32 %v3003, %v3346
      %v3383 = vadd.f32 %v3004, %v3349
      %v3385 = vshrl.u32 %v3005, 16
      %v3387 = vrot.slane %v3385, 4
      %v3388 = vshll.u32 %v3005, 16
      %v3390 = vrot.slane %v3388, 5
      %v3391 = vor.u32 %v3387, %v3390
      %v3392 = vrot.slane %v3391, 4
      %v3394 = vshll.u32 %v3006, 16
      %v3396 = vrot.slane %v3394, 5
      %v3397 = vsel %vm347, %v3392, %v3396
      %v3398 = vshrl.u32 %v3006, 16
      %v3400 = vrot.slane %v3398, 4
      %v3401 = vor.u32 %v3400, %v3396
      %v3402 = vrot.slane %v3401, 4
      %v3404 = vshll.u32 %v3007, 16
      %v3406 = vrot.slane %v3404, 5
      %v3407 = vsel %vm347, %v3402, %v3406
      %v3409 = vshrl.u32 %v3008, 16
      %v3411 = vrot.slane %v3409, 4
      %v3412 = vshll.u32 %v3008, 16
      %v3414 = vrot.slane %v3412, 5
      %v3415 = vor.u32 %v3411, %v3414
      %v3416 = vrot.slane %v3415, 4
      %v3418 = vshll.u32 %v3009, 16
      %v3420 = vrot.slane %v3418, 5
      %v3421 = vsel %vm347, %v3416, %v3420
      %v3422 = vshrl.u32 %v3009, 16
      %v3424 = vrot.slane %v3422, 4
      %v3425 = vor.u32 %v3424, %v3420
      %v3426 = vrot.slane %v3425, 4
      %v3428 = vshll.u32 %v3010, 16
      %v3430 = vrot.slane %v3428, 5
      %v3431 = vsel %vm347, %v3426, %v3430
      %v3433 = vshrl.u32 %v3011, 16
      %v3435 = vrot.slane %v3433, 4
      %v3436 = vshll.u32 %v3011, 16
      %v3438 = vrot.slane %v3436, 5
      %v3439 = vor.u32 %v3435, %v3438
      %v3440 = vrot.slane %v3439, 4
      %v3442 = vshll.u32 %v3012, 16
      %v3444 = vrot.slane %v3442, 5
      %v3445 = vsel %vm347, %v3440, %v3444
      %v3446 = vshrl.u32 %v3012, 16
      %v3448 = vrot.slane %v3446, 4
      %v3449 = vor.u32 %v3448, %v3444
      %v3450 = vrot.slane %v3449, 4
      %v3452 = vshll.u32 %v3013, 16
      %v3454 = vrot.slane %v3452, 5
      %v3455 = vsel %vm347, %v3450, %v3454
      %v3457 = vshrl.u32 %v3014, 16
      %v3459 = vrot.slane %v3457, 4
      %v3460 = vshll.u32 %v3014, 16
      %v3462 = vrot.slane %v3460, 5
      %v3463 = vor.u32 %v3459, %v3462
      %v3464 = vrot.slane %v3463, 4
      %v3466 = vshll.u32 %v3015, 16
      %v3468 = vrot.slane %v3466, 5
      %v3469 = vsel %vm347, %v3464, %v3468
      %v3470 = vshrl.u32 %v3015, 16
      %v3472 = vrot.slane %v3470, 4
      %v3473 = vor.u32 %v3472, %v3468
      %v3474 = vrot.slane %v3473, 4
      %v3476 = vshll.u32 %v3016, 16
      %v3478 = vrot.slane %v3476, 5
      %v3479 = vsel %vm347, %v3474, %v3478
      %v3481 = vshrl.u32 %v3017, 16
      %v3483 = vrot.slane %v3481, 4
      %v3484 = vshll.u32 %v3017, 16
      %v3486 = vrot.slane %v3484, 5
      %v3487 = vor.u32 %v3483, %v3486
      %v3488 = vrot.slane %v3487, 4
      %v3490 = vshll.u32 %v3018, 16
      %v3492 = vrot.slane %v3490, 5
      %v3493 = vsel %vm347, %v3488, %v3492
      %v3494 = vshrl.u32 %v3018, 16
      %v3496 = vrot.slane %v3494, 4
      %v3497 = vor.u32 %v3496, %v3492
      %v3498 = vrot.slane %v3497, 4
      %v3500 = vshll.u32 %v3019, 16
      %v3502 = vrot.slane %v3500, 5
      %v3503 = vsel %vm347, %v3498, %v3502
      %v3505 = vshrl.u32 %v3020, 16
      %v3507 = vrot.slane %v3505, 4
      %v3508 = vshll.u32 %v3020, 16
      %v3510 = vrot.slane %v3508, 5
      %v3511 = vor.u32 %v3507, %v3510
      %v3512 = vrot.slane %v3511, 4
      %v3514 = vshll.u32 %v3021, 16
      %v3516 = vrot.slane %v3514, 5
      %v3517 = vsel %vm347, %v3512, %v3516
      %v3518 = vshrl.u32 %v3021, 16
      %v3520 = vrot.slane %v3518, 4
      %v3521 = vor.u32 %v3520, %v3516
      %v3522 = vrot.slane %v3521, 4
      %v3524 = vshll.u32 %v3022, 16
      %v3526 = vrot.slane %v3524, 5
      %v3527 = vsel %vm347, %v3522, %v3526
      %v3529 = vshrl.u32 %v3023, 16
      %v3531 = vrot.slane %v3529, 4
      %v3532 = vshll.u32 %v3023, 16
      %v3534 = vrot.slane %v3532, 5
      %v3535 = vor.u32 %v3531, %v3534
      %v3536 = vrot.slane %v3535, 4
      %v3538 = vshll.u32 %v3024, 16
      %v3540 = vrot.slane %v3538, 5
      %v3541 = vsel %vm347, %v3536, %v3540
      %v3542 = vshrl.u32 %v3024, 16
      %v3544 = vrot.slane %v3542, 4
      %v3545 = vor.u32 %v3544, %v3540
      %v3546 = vrot.slane %v3545, 4
      %v3548 = vshll.u32 %v3025, 16
      %v3550 = vrot.slane %v3548, 5
      %v3551 = vsel %vm347, %v3546, %v3550
      %v3553 = vshrl.u32 %v3026, 16
      %v3555 = vrot.slane %v3553, 4
      %v3556 = vshll.u32 %v3026, 16
      %v3558 = vrot.slane %v3556, 5
      %v3559 = vor.u32 %v3555, %v3558
      %v3560 = vrot.slane %v3559, 4
      %v3562 = vshll.u32 %v3027, 16
      %v3564 = vrot.slane %v3562, 5
      %v3565 = vsel %vm347, %v3560, %v3564
      %v3566 = vshrl.u32 %v3027, 16
      %v3568 = vrot.slane %v3566, 4
      %v3569 = vor.u32 %v3568, %v3564
      %v3570 = vrot.slane %v3569, 4
      %v3572 = vshll.u32 %v3028, 16
      %v3574 = vrot.slane %v3572, 5
      %v3575 = vsel %vm347, %v3570, %v3574
      %v3577 = vshrl.u32 %v3029, 16
      %v3579 = vrot.slane %v3577, 4
      %v3580 = vshll.u32 %v3029, 16
      %v3582 = vrot.slane %v3580, 5
      %v3583 = vor.u32 %v3579, %v3582
      %v3584 = vrot.slane %v3583, 4
      %v3586 = vshll.u32 %v3030, 16
      %v3588 = vrot.slane %v3586, 5
      %v3589 = vsel %vm347, %v3584, %v3588
      %v3590 = vshrl.u32 %v3030, 16
      %v3592 = vrot.slane %v3590, 4
      %v3593 = vor.u32 %v3592, %v3588
      %v3594 = vrot.slane %v3593, 4
      %v3596 = vshll.u32 %v3031, 16
      %v3598 = vrot.slane %v3596, 5
      %v3599 = vsel %vm347, %v3594, %v3598
      %v3601 = vshrl.u32 %v3032, 16
      %v3603 = vrot.slane %v3601, 4
      %v3604 = vshll.u32 %v3032, 16
      %v3606 = vrot.slane %v3604, 5
      %v3607 = vor.u32 %v3603, %v3606
      %v3608 = vrot.slane %v3607, 4
      %v3610 = vshll.u32 %v3033, 16
      %v3612 = vrot.slane %v3610, 5
      %v3613 = vsel %vm347, %v3608, %v3612
      %v3614 = vshrl.u32 %v3033, 16
      %v3616 = vrot.slane %v3614, 4
      %v3617 = vor.u32 %v3616, %v3612
      %v3618 = vrot.slane %v3617, 4
      %v3620 = vshll.u32 %v3034, 16
      %v3622 = vrot.slane %v3620, 5
      %v3623 = vsel %vm347, %v3618, %v3622
      %v3625 = vshrl.u32 %v3035, 16
      %v3627 = vrot.slane %v3625, 4
      %v3628 = vshll.u32 %v3035, 16
      %v3630 = vrot.slane %v3628, 5
      %v3631 = vor.u32 %v3627, %v3630
      %v3632 = vrot.slane %v3631, 4
      %v3634 = vshll.u32 %v3036, 16
      %v3636 = vrot.slane %v3634, 5
      %v3637 = vsel %vm347, %v3632, %v3636
      %v3638 = vshrl.u32 %v3036, 16
      %v3640 = vrot.slane %v3638, 4
      %v3641 = vor.u32 %v3640, %v3636
      %v3642 = vrot.slane %v3641, 4
      %v3644 = vshll.u32 %v3037, 16
      %v3646 = vrot.slane %v3644, 5
      %v3647 = vsel %vm347, %v3642, %v3646
      %v3649 = vshrl.u32 %v3038, 16
      %v3651 = vrot.slane %v3649, 4
      %v3652 = vshll.u32 %v3038, 16
      %v3654 = vrot.slane %v3652, 5
      %v3655 = vor.u32 %v3651, %v3654
      %v3656 = vrot.slane %v3655, 4
      %v3658 = vshll.u32 %v3039, 16
      %v3660 = vrot.slane %v3658, 5
      %v3661 = vsel %vm347, %v3656, %v3660
      %v3662 = vshrl.u32 %v3039, 16
      %v3664 = vrot.slane %v3662, 4
      %v3665 = vor.u32 %v3664, %v3660
      %v3666 = vrot.slane %v3665, 4
      %v3668 = vshll.u32 %v3040, 16
      %v3670 = vrot.slane %v3668, 5
      %v3671 = vsel %vm347, %v3666, %v3670
      %v3673 = vshrl.u32 %v3041, 16
      %v3675 = vrot.slane %v3673, 4
      %v3676 = vshll.u32 %v3041, 16
      %v3678 = vrot.slane %v3676, 5
      %v3679 = vor.u32 %v3675, %v3678
      %v3680 = vrot.slane %v3679, 4
      %v3682 = vshll.u32 %v3042, 16
      %v3684 = vrot.slane %v3682, 5
      %v3685 = vsel %vm347, %v3680, %v3684
      %v3686 = vshrl.u32 %v3042, 16
      %v3688 = vrot.slane %v3686, 4
      %v3689 = vor.u32 %v3688, %v3684
      %v3690 = vrot.slane %v3689, 4
      %v3692 = vshll.u32 %v3043, 16
      %v3694 = vrot.slane %v3692, 5
      %v3695 = vsel %vm347, %v3690, %v3694
      %v3697 = vshrl.u32 %v3044, 16
      %v3699 = vrot.slane %v3697, 4
      %v3700 = vshll.u32 %v3044, 16
      %v3702 = vrot.slane %v3700, 5
      %v3703 = vor.u32 %v3699, %v3702
      %v3704 = vrot.slane %v3703, 4
      %v3706 = vshll.u32 %v3045, 16
      %v3708 = vrot.slane %v3706, 5
      %v3709 = vsel %vm347, %v3704, %v3708
      %v3710 = vshrl.u32 %v3045, 16
      %v3712 = vrot.slane %v3710, 4
      %v3713 = vor.u32 %v3712, %v3708
      %v3714 = vrot.slane %v3713, 4
      %v3716 = vshll.u32 %v3046, 16
      %v3718 = vrot.slane %v3716, 5
      %v3719 = vsel %vm347, %v3714, %v3718
      %v3721 = vshrl.u32 %v3047, 16
      %v3723 = vrot.slane %v3721, 4
      %v3724 = vshll.u32 %v3047, 16
      %v3726 = vrot.slane %v3724, 5
      %v3727 = vor.u32 %v3723, %v3726
      %v3728 = vrot.slane %v3727, 4
      %v3730 = vshll.u32 %v3048, 16
      %v3732 = vrot.slane %v3730, 5
      %v3733 = vsel %vm347, %v3728, %v3732
      %v3734 = vshrl.u32 %v3048, 16
      %v3736 = vrot.slane %v3734, 4
      %v3737 = vor.u32 %v3736, %v3732
      %v3738 = vrot.slane %v3737, 4
      %v3740 = vshll.u32 %v3049, 16
      %v3742 = vrot.slane %v3740, 5
      %v3743 = vsel %vm347, %v3738, %v3742
      %v3745 = vshrl.u32 %v3050, 16
      %v3747 = vrot.slane %v3745, 4
      %v3748 = vshll.u32 %v3050, 16
      %v3750 = vrot.slane %v3748, 5
      %v3751 = vor.u32 %v3747, %v3750
      %v3752 = vrot.slane %v3751, 4
      %v3754 = vshll.u32 %v3051, 16
      %v3756 = vrot.slane %v3754, 5
      %v3757 = vsel %vm347, %v3752, %v3756
      %v3758 = vshrl.u32 %v3051, 16
      %v3760 = vrot.slane %v3758, 4
      %v3761 = vor.u32 %v3760, %v3756
      %v3762 = vrot.slane %v3761, 4
      %v3764 = vshll.u32 %v3052, 16
      %v3766 = vrot.slane %v3764, 5
      %v3767 = vsel %vm347, %v3762, %v3766
      %s3768 = scalar_lea.vmem %s3, 2
      %v3769 = vld [vmem:[%s3768] sm:$0x3]
      %v3770 = vunpack.c.l.b16 %v3397
      %v3771 = vunpack.c.l.b16 %v3407
      %v3772 = vunpack.c.l.b16 %v3421
      %v3773 = vunpack.c.l.b16 %v3431
      %v3774 = vunpack.c.l.b16 %v3445
      %v3775 = vunpack.c.l.b16 %v3455
      %v3776 = vunpack.c.l.b16 %v3469
      %v3777 = vunpack.c.l.b16 %v3479
      %v3778 = vunpack.c.l.b16 %v3493
      %v3779 = vunpack.c.l.b16 %v3503
      %v3780 = vunpack.c.l.b16 %v3517
      %v3781 = vunpack.c.l.b16 %v3527
      %v3782 = vunpack.c.l.b16 %v3541
      %v3783 = vunpack.c.l.b16 %v3551
      %v3784 = vunpack.c.l.b16 %v3565
      %v3785 = vunpack.c.l.b16 %v3575
      %v3786 = vunpack.c.l.b16 %v3589
      %v3787 = vunpack.c.l.b16 %v3599
      %v3788 = vunpack.c.l.b16 %v3613
      %v3789 = vunpack.c.l.b16 %v3623
      %v3790 = vunpack.c.l.b16 %v3637
      %v3791 = vunpack.c.l.b16 %v3647
      %v3792 = vunpack.c.l.b16 %v3661
      %v3793 = vunpack.c.l.b16 %v3671
      %v3794 = vunpack.c.l.b16 %v3685
      %v3795 = vunpack.c.l.b16 %v3695
      %v3796 = vunpack.c.l.b16 %v3709
      %v3797 = vunpack.c.l.b16 %v3719
      %v3798 = vunpack.c.l.b16 %v3733
      %v3799 = vunpack.c.l.b16 %v3743
      %v3800 = vunpack.c.l.b16 %v3757
      %v3801 = vunpack.c.l.b16 %v3767
      %v3802 = vpack.c.b16 %v3771, %v3770
      %v3803 = vpack.c.b16 %v3773, %v3772
      %v3804 = vpack.c.b16 %v3775, %v3774
      %v3805 = vpack.c.b16 %v3777, %v3776
      %v3806 = vpack.c.b16 %v3779, %v3778
      %v3807 = vpack.c.b16 %v3781, %v3780
      %v3808 = vpack.c.b16 %v3783, %v3782
      %v3809 = vpack.c.b16 %v3785, %v3784
      %v3810 = vpack.c.b16 %v3787, %v3786
      %v3811 = vpack.c.b16 %v3789, %v3788
      %v3812 = vpack.c.b16 %v3791, %v3790
      %v3813 = vpack.c.b16 %v3793, %v3792
      %v3814 = vpack.c.b16 %v3795, %v3794
      %v3815 = vpack.c.b16 %v3797, %v3796
      %v3816 = vpack.c.b16 %v3799, %v3798
      %v3817 = vpack.c.b16 %v3801, %v3800
      %v3819 = vsel %vm782, %v3802, 0
      %v3822 = vsel %vm782, %v3803, 0
      %v3825 = vsel %vm782, %v3804, 0
      %v3828 = vsel %vm782, %v3805, 0
      %v3831 = vsel %vm782, %v3806, 0
      %v3834 = vsel %vm782, %v3807, 0
      %v3837 = vsel %vm782, %v3808, 0
      %v3840 = vsel %vm782, %v3809, 0
      %v3843 = vsel %vm782, %v3810, 0
      %v3846 = vsel %vm782, %v3811, 0
      %v3849 = vsel %vm782, %v3812, 0
      %v3852 = vsel %vm782, %v3813, 0
      %v3855 = vsel %vm782, %v3814, 0
      %v3858 = vsel %vm782, %v3815, 0
      %v3861 = vsel %vm782, %v3816, 0
      %v3864 = vsel %vm782, %v3817, 0
      %v3867 = vsel %vm831, %v3769, 0
      %3869 = vmatprep.subr.bf16.mxu0 0
      %3870 = vmatpush1.bf16.msra.mxu0 %v3867
      %3871 = vmatprep.subr.bf16.mxu0 0
      %3872 = vmatpush1.bf16.msra.mxu0 0
      %3873 = vmatprep.subr.bf16.mxu0 0
      %3874 = vmatpush1.bf16.msra.mxu0 0
      %3875 = vmatprep.subr.bf16.mxu0 0
      %3876 = vmatpush1.bf16.msra.mxu0 0
      %3877 = vmatprep.subr.bf16.mxu0 0
      %3878 = vmatpush1.bf16.msra.mxu0 0
      %3879 = vmatprep.subr.bf16.mxu0 0
      %3880 = vmatpush1.bf16.msra.mxu0 0
      %3881 = vmatprep.subr.bf16.mxu0 0
      %3882 = vmatpush1.bf16.msra.mxu0 0
      %3883 = vmatprep.subr.bf16.mxu0 0
      %3884 = vmatpush1.bf16.msra.mxu0 0
      %3885 = vmatprep.subr.bf16.mxu0 0
      %3886 = vmatpush1.bf16.msra.mxu0 0
      %3887 = vmatprep.subr.bf16.mxu0 0
      %3888 = vmatpush1.bf16.msra.mxu0 0
      %3889 = vmatprep.subr.bf16.mxu0 0
      %3890 = vmatpush1.bf16.msra.mxu0 0
      %3891 = vmatprep.subr.bf16.mxu0 0
      %3892 = vmatpush1.bf16.msra.mxu0 0
      %3893 = vmatprep.subr.bf16.mxu0 0
      %3894 = vmatpush1.bf16.msra.mxu0 0
      %3895 = vmatprep.subr.bf16.mxu0 0
      %3896 = vmatpush1.bf16.msra.mxu0 0
      %3897 = vmatprep.subr.bf16.mxu0 0
      %3898 = vmatpush1.bf16.msra.mxu0 0
      %3899 = vmatprep.subr.bf16.mxu0 0
      %3900 = vmatpush1.bf16.msra.mxu0 0
      %3901 = vmatprep.mubr.bf16.mxu0 0
      %3902 = vmatmul.mubr.bf16.gmra.mrb[0].mxu0 %v3819
      %v3903 = vpop.f32.mrb[0].mxu0
      %v3904 = vadd.f32 0.0, %v3903
      %v3905 = vpop.f32.mrb[0].mxu0
      %v3906 = vpop.f32.mrb[0].mxu0
      %v3907 = vadd.f32 0.0, %v3906
      %v3908 = vpop.f32.mrb[0].mxu0
      %3909 = vmatprep.mubr.bf16.mxu0 0
      %3910 = vmatmul.mubr.bf16.gmra.mrb[0].mxu0 %v3822
      %v3911 = vpop.f32.mrb[0].mxu0
      %v3912 = vadd.f32 0.0, %v3911
      %v3913 = vpop.f32.mrb[0].mxu0
      %v3914 = vpop.f32.mrb[0].mxu0
      %v3915 = vadd.f32 0.0, %v3914
      %v3916 = vpop.f32.mrb[0].mxu0
      %3917 = vmatprep.mubr.bf16.mxu0 0
      %3918 = vmatmul.mubr.bf16.gmra.mrb[0].mxu0 %v3825
      %v3919 = vpop.f32.mrb[0].mxu0
      %v3920 = vadd.f32 0.0, %v3919
      %v3921 = vpop.f32.mrb[0].mxu0
      %v3922 = vpop.f32.mrb[0].mxu0
      %v3923 = vadd.f32 0.0, %v3922
      %v3924 = vpop.f32.mrb[0].mxu0
      %3925 = vmatprep.mubr.bf16.mxu0 0
      %3926 = vmatmul.mubr.bf16.gmra.mrb[0].mxu0 %v3828
      %v3927 = vpop.f32.mrb[0].mxu0
      %v3928 = vadd.f32 0.0, %v3927
      %v3929 = vpop.f32.mrb[0].mxu0
      %v3930 = vpop.f32.mrb[0].mxu0
      %v3931 = vadd.f32 0.0, %v3930
      %v3932 = vpop.f32.mrb[0].mxu0
      %3933 = vmatprep.mubr.bf16.mxu0 0
      %3934 = vmatmul.mubr.bf16.gmra.mrb[0].mxu0 %v3831
      %v3935 = vpop.f32.mrb[0].mxu0
      %v3936 = vadd.f32 0.0, %v3935
      %v3937 = vpop.f32.mrb[0].mxu0
      %v3938 = vpop.f32.mrb[0].mxu0
      %v3939 = vadd.f32 0.0, %v3938
      %v3940 = vpop.f32.mrb[0].mxu0
      %3941 = vmatprep.mubr.bf16.mxu0 0
      %3942 = vmatmul.mubr.bf16.gmra.mrb[0].mxu0 %v3834
      %v3943 = vpop.f32.mrb[0].mxu0
      %v3944 = vadd.f32 0.0, %v3943
      %v3945 = vpop.f32.mrb[0].mxu0
      %v3946 = vpop.f32.mrb[0].mxu0
      %v3947 = vadd.f32 0.0, %v3946
      %v3948 = vpop.f32.mrb[0].mxu0
      %3949 = vmatprep.mubr.bf16.mxu0 0
      %3950 = vmatmul.mubr.bf16.gmra.mrb[0].mxu0 %v3837
      %v3951 = vpop.f32.mrb[0].mxu0
      %v3952 = vadd.f32 0.0, %v3951
      %v3953 = vpop.f32.mrb[0].mxu0
      %v3954 = vpop.f32.mrb[0].mxu0
      %v3955 = vadd.f32 0.0, %v3954
      %v3956 = vpop.f32.mrb[0].mxu0
      %3957 = vmatprep.mubr.bf16.mxu0 0
      %3958 = vmatmul.mubr.bf16.gmra.mrb[0].mxu0 %v3840
      %v3959 = vpop.f32.mrb[0].mxu0
      %v3960 = vadd.f32 0.0, %v3959
      %v3961 = vpop.f32.mrb[0].mxu0
      %v3962 = vpop.f32.mrb[0].mxu0
      %v3963 = vadd.f32 0.0, %v3962
      %v3964 = vpop.f32.mrb[0].mxu0
      %3965 = vmatprep.mubr.bf16.mxu0 0
      %3966 = vmatmul.mubr.bf16.gmra.mrb[0].mxu0 %v3843
      %v3967 = vpop.f32.mrb[0].mxu0
      %v3968 = vadd.f32 0.0, %v3967
      %v3969 = vpop.f32.mrb[0].mxu0
      %v3970 = vpop.f32.mrb[0].mxu0
      %v3971 = vadd.f32 0.0, %v3970
      %v3972 = vpop.f32.mrb[0].mxu0
      %3973 = vmatprep.mubr.bf16.mxu0 0
      %3974 = vmatmul.mubr.bf16.gmra.mrb[0].mxu0 %v3846
      %v3975 = vpop.f32.mrb[0].mxu0
      %v3976 = vadd.f32 0.0, %v3975
      %v3977 = vpop.f32.mrb[0].mxu0
      %v3978 = vpop.f32.mrb[0].mxu0
      %v3979 = vadd.f32 0.0, %v3978
      %v3980 = vpop.f32.mrb[0].mxu0
      %3981 = vmatprep.mubr.bf16.mxu0 0
      %3982 = vmatmul.mubr.bf16.gmra.mrb[0].mxu0 %v3849
      %v3983 = vpop.f32.mrb[0].mxu0
      %v3984 = vadd.f32 0.0, %v3983
      %v3985 = vpop.f32.mrb[0].mxu0
      %v3986 = vpop.f32.mrb[0].mxu0
      %v3987 = vadd.f32 0.0, %v3986
      %v3988 = vpop.f32.mrb[0].mxu0
      %3989 = vmatprep.mubr.bf16.mxu0 0
      %3990 = vmatmul.mubr.bf16.gmra.mrb[0].mxu0 %v3852
      %v3991 = vpop.f32.mrb[0].mxu0
      %v3992 = vadd.f32 0.0, %v3991
      %v3993 = vpop.f32.mrb[0].mxu0
      %v3994 = vpop.f32.mrb[0].mxu0
      %v3995 = vadd.f32 0.0, %v3994
      %v3996 = vpop.f32.mrb[0].mxu0
      %3997 = vmatprep.mubr.bf16.mxu0 0
      %3998 = vmatmul.mubr.bf16.gmra.mrb[0].mxu0 %v3855
      %v3999 = vpop.f32.mrb[0].mxu0
      %v4000 = vadd.f32 0.0, %v3999
      %v4001 = vpop.f32.mrb[0].mxu0
      %v4002 = vpop.f32.mrb[0].mxu0
      %v4003 = vadd.f32 0.0, %v4002
      %v4004 = vpop.f32.mrb[0].mxu0
      %4005 = vmatprep.mubr.bf16.mxu0 0
      %4006 = vmatmul.mubr.bf16.gmra.mrb[0].mxu0 %v3858
      %v4007 = vpop.f32.mrb[0].mxu0
      %v4008 = vadd.f32 0.0, %v4007
      %v4009 = vpop.f32.mrb[0].mxu0
      %v4010 = vpop.f32.mrb[0].mxu0
      %v4011 = vadd.f32 0.0, %v4010
      %v4012 = vpop.f32.mrb[0].mxu0
      %4013 = vmatprep.mubr.bf16.mxu0 0
      %4014 = vmatmul.mubr.bf16.gmra.mrb[0].mxu0 %v3861
      %v4015 = vpop.f32.mrb[0].mxu0
      %v4016 = vadd.f32 0.0, %v4015
      %v4017 = vpop.f32.mrb[0].mxu0
      %v4018 = vpop.f32.mrb[0].mxu0
      %v4019 = vadd.f32 0.0, %v4018
      %v4020 = vpop.f32.mrb[0].mxu0
      %4021 = vmatprep.mubr.bf16.mxu0 0
      %4022 = vmatmul.mubr.bf16.gmra.mrb[0].mxu0 %v3864
      %v4023 = vpop.f32.mrb[0].mxu0
      %v4024 = vadd.f32 0.0, %v4023
      %v4025 = vpop.f32.mrb[0].mxu0
      %v4026 = vpop.f32.mrb[0].mxu0
      %v4027 = vadd.f32 0.0, %v4026
      %v4028 = vpop.f32.mrb[0].mxu0
      %4029 = vdwg.mxu0
      %v4030 = vadd.f32 %v3352, %v3904
      %v4031 = vadd.f32 %v3353, %v3907
      %v4032 = vadd.f32 %v3354, %v3912
      %v4033 = vadd.f32 %v3355, %v3915
      %v4034 = vadd.f32 %v3356, %v3920
      %v4035 = vadd.f32 %v3357, %v3923
      %v4036 = vadd.f32 %v3358, %v3928
      %v4037 = vadd.f32 %v3359, %v3931
      %v4038 = vadd.f32 %v3360, %v3936
      %v4039 = vadd.f32 %v3361, %v3939
      %v4040 = vadd.f32 %v3362, %v3944
      %v4041 = vadd.f32 %v3363, %v3947
      %v4042 = vadd.f32 %v3364, %v3952
      %v4043 = vadd.f32 %v3365, %v3955
      %v4044 = vadd.f32 %v3366, %v3960
      %v4045 = vadd.f32 %v3367, %v3963
      %v4046 = vadd.f32 %v3368, %v3968
      %v4047 = vadd.f32 %v3369, %v3971
      %v4048 = vadd.f32 %v3370, %v3976
      %v4049 = vadd.f32 %v3371, %v3979
      %v4050 = vadd.f32 %v3372, %v3984
      %v4051 = vadd.f32 %v3373, %v3987
      %v4052 = vadd.f32 %v3374, %v3992
      %v4053 = vadd.f32 %v3375, %v3995
      %v4054 = vadd.f32 %v3376, %v4000
      %v4055 = vadd.f32 %v3377, %v4003
      %v4056 = vadd.f32 %v3378, %v4008
      %v4057 = vadd.f32 %v3379, %v4011
      %v4058 = vadd.f32 %v3380, %v4016
      %v4059 = vadd.f32 %v3381, %v4019
      %v4060 = vadd.f32 %v3382, %v4024
      %v4061 = vadd.f32 %v3383, %v4027
      %v4078 = vrot.slane %v3005, 5
      %v4079 = vrot.slane %v4078, 4
      %v4080 = vrot.slane %v3006, 5
      %v4081 = vsel %vm1306, %v4079, %v4080
      %v4082 = vrot.slane %v4080, 4
      %v4083 = vrot.slane %v3007, 5
      %v4084 = vsel %vm1306, %v4082, %v4083
      %v4085 = vrot.slane %v3008, 5
      %v4086 = vrot.slane %v4085, 4
      %v4087 = vrot.slane %v3009, 5
      %v4088 = vsel %vm1306, %v4086, %v4087
      %v4089 = vrot.slane %v4087, 4
      %v4090 = vrot.slane %v3010, 5
      %v4091 = vsel %vm1306, %v4089, %v4090
      %v4092 = vrot.slane %v3011, 5
      %v4093 = vrot.slane %v4092, 4
      %v4094 = vrot.slane %v3012, 5
      %v4095 = vsel %vm1306, %v4093, %v4094
      %v4096 = vrot.slane %v4094, 4
      %v4097 = vrot.slane %v3013, 5
      %v4098 = vsel %vm1306, %v4096, %v4097
      %v4099 = vrot.slane %v3014, 5
      %v4100 = vrot.slane %v4099, 4
      %v4101 = vrot.slane %v3015, 5
      %v4102 = vsel %vm1306, %v4100, %v4101
      %v4103 = vrot.slane %v4101, 4
      %v4104 = vrot.slane %v3016, 5
      %v4105 = vsel %vm1306, %v4103, %v4104
      %v4106 = vrot.slane %v3017, 5
      %v4107 = vrot.slane %v4106, 4
      %v4108 = vrot.slane %v3018, 5
      %v4109 = vsel %vm1306, %v4107, %v4108
      %v4110 = vrot.slane %v4108, 4
      %v4111 = vrot.slane %v3019, 5
      %v4112 = vsel %vm1306, %v4110, %v4111
      %v4113 = vrot.slane %v3020, 5
      %v4114 = vrot.slane %v4113, 4
      %v4115 = vrot.slane %v3021, 5
      %v4116 = vsel %vm1306, %v4114, %v4115
      %v4117 = vrot.slane %v4115, 4
      %v4118 = vrot.slane %v3022, 5
      %v4119 = vsel %vm1306, %v4117, %v4118
      %v4120 = vrot.slane %v3023, 5
      %v4121 = vrot.slane %v4120, 4
      %v4122 = vrot.slane %v3024, 5
      %v4123 = vsel %vm1306, %v4121, %v4122
      %v4124 = vrot.slane %v4122, 4
      %v4125 = vrot.slane %v3025, 5
      %v4126 = vsel %vm1306, %v4124, %v4125
      %v4127 = vrot.slane %v3026, 5
      %v4128 = vrot.slane %v4127, 4
      %v4129 = vrot.slane %v3027, 5
      %v4130 = vsel %vm1306, %v4128, %v4129
      %v4131 = vrot.slane %v4129, 4
      %v4132 = vrot.slane %v3028, 5
      %v4133 = vsel %vm1306, %v4131, %v4132
      %v4134 = vrot.slane %v3029, 5
      %v4135 = vrot.slane %v4134, 4
      %v4136 = vrot.slane %v3030, 5
      %v4137 = vsel %vm1306, %v4135, %v4136
      %v4138 = vrot.slane %v4136, 4
      %v4139 = vrot.slane %v3031, 5
      %v4140 = vsel %vm1306, %v4138, %v4139
      %v4141 = vrot.slane %v3032, 5
      %v4142 = vrot.slane %v4141, 4
      %v4143 = vrot.slane %v3033, 5
      %v4144 = vsel %vm1306, %v4142, %v4143
      %v4145 = vrot.slane %v4143, 4
      %v4146 = vrot.slane %v3034, 5
      %v4147 = vsel %vm1306, %v4145, %v4146
      %v4148 = vrot.slane %v3035, 5
      %v4149 = vrot.slane %v4148, 4
      %v4150 = vrot.slane %v3036, 5
      %v4151 = vsel %vm1306, %v4149, %v4150
      %v4152 = vrot.slane %v4150, 4
      %v4153 = vrot.slane %v3037, 5
      %v4154 = vsel %vm1306, %v4152, %v4153
      %v4155 = vrot.slane %v3038, 5
      %v4156 = vrot.slane %v4155, 4
      %v4157 = vrot.slane %v3039, 5
      %v4158 = vsel %vm1306, %v4156, %v4157
      %v4159 = vrot.slane %v4157, 4
      %v4160 = vrot.slane %v3040, 5
      %v4161 = vsel %vm1306, %v4159, %v4160
      %v4162 = vrot.slane %v3041, 5
      %v4163 = vrot.slane %v4162, 4
      %v4164 = vrot.slane %v3042, 5
      %v4165 = vsel %vm1306, %v4163, %v4164
      %v4166 = vrot.slane %v4164, 4
      %v4167 = vrot.slane %v3043, 5
      %v4168 = vsel %vm1306, %v4166, %v4167
      %v4169 = vrot.slane %v3044, 5
      %v4170 = vrot.slane %v4169, 4
      %v4171 = vrot.slane %v3045, 5
      %v4172 = vsel %vm1306, %v4170, %v4171
      %v4173 = vrot.slane %v4171, 4
      %v4174 = vrot.slane %v3046, 5
      %v4175 = vsel %vm1306, %v4173, %v4174
      %v4176 = vrot.slane %v3047, 5
      %v4177 = vrot.slane %v4176, 4
      %v4178 = vrot.slane %v3048, 5
      %v4179 = vsel %vm1306, %v4177, %v4178
      %v4180 = vrot.slane %v4178, 4
      %v4181 = vrot.slane %v3049, 5
      %v4182 = vsel %vm1306, %v4180, %v4181
      %v4183 = vrot.slane %v3050, 5
      %v4184 = vrot.slane %v4183, 4
      %v4185 = vrot.slane %v3051, 5
      %v4186 = vsel %vm1306, %v4184, %v4185
      %v4187 = vrot.slane %v4185, 4
      %v4188 = vrot.slane %v3052, 5
      %v4189 = vsel %vm1306, %v4187, %v4188
      %s4190 = scalar_lea.vmem %s3, 4
      %v4191 = vld [vmem:[%s4190] sm:$0x3]
      %v4192 = vunpack.c.l.b16 %v4081
      %v4193 = vunpack.c.l.b16 %v4084
      %v4194 = vunpack.c.l.b16 %v4088
      %v4195 = vunpack.c.l.b16 %v4091
      %v4196 = vunpack.c.l.b16 %v4095
      %v4197 = vunpack.c.l.b16 %v4098
      %v4198 = vunpack.c.l.b16 %v4102
      %v4199 = vunpack.c.l.b16 %v4105
      %v4200 = vunpack.c.l.b16 %v4109
      %v4201 = vunpack.c.l.b16 %v4112
      %v4202 = vunpack.c.l.b16 %v4116
      %v4203 = vunpack.c.l.b16 %v4119
      %v4204 = vunpack.c.l.b16 %v4123
      %v4205 = vunpack.c.l.b16 %v4126
      %v4206 = vunpack.c.l.b16 %v4130
      %v4207 = vunpack.c.l.b16 %v4133
      %v4208 = vunpack.c.l.b16 %v4137
      %v4209 = vunpack.c.l.b16 %v4140
      %v4210 = vunpack.c.l.b16 %v4144
      %v4211 = vunpack.c.l.b16 %v4147
      %v4212 = vunpack.c.l.b16 %v4151
      %v4213 = vunpack.c.l.b16 %v4154
      %v4214 = vunpack.c.l.b16 %v4158
      %v4215 = vunpack.c.l.b16 %v4161
      %v4216 = vunpack.c.l.b16 %v4165
      %v4217 = vunpack.c.l.b16 %v4168
      %v4218 = vunpack.c.l.b16 %v4172
      %v4219 = vunpack.c.l.b16 %v4175
      %v4220 = vunpack.c.l.b16 %v4179
      %v4221 = vunpack.c.l.b16 %v4182
      %v4222 = vunpack.c.l.b16 %v4186
      %v4223 = vunpack.c.l.b16 %v4189
      %v4224 = vpack.c.b16 %v4193, %v4192
      %v4225 = vpack.c.b16 %v4195, %v4194
      %v4226 = vpack.c.b16 %v4197, %v4196
      %v4227 = vpack.c.b16 %v4199, %v4198
      %v4228 = vpack.c.b16 %v4201, %v4200
      %v4229 = vpack.c.b16 %v4203, %v4202
      %v4230 = vpack.c.b16 %v4205, %v4204
      %v4231 = vpack.c.b16 %v4207, %v4206
      %v4232 = vpack.c.b16 %v4209, %v4208
      %v4233 = vpack.c.b16 %v4211, %v4210
      %v4234 = vpack.c.b16 %v4213, %v4212
      %v4235 = vpack.c.b16 %v4215, %v4214
      %v4236 = vpack.c.b16 %v4217, %v4216
      %v4237 = vpack.c.b16 %v4219, %v4218
      %v4238 = vpack.c.b16 %v4221, %v4220
      %v4239 = vpack.c.b16 %v4223, %v4222
      %v4241 = vsel %vm782, %v4224, 0
      %v4244 = vsel %vm782, %v4225, 0
      %v4247 = vsel %vm782, %v4226, 0
      %v4250 = vsel %vm782, %v4227, 0
      %v4253 = vsel %vm782, %v4228, 0
      %v4256 = vsel %vm782, %v4229, 0
      %v4259 = vsel %vm782, %v4230, 0
      %v4262 = vsel %vm782, %v4231, 0
      %v4265 = vsel %vm782, %v4232, 0
      %v4268 = vsel %vm782, %v4233, 0
      %v4271 = vsel %vm782, %v4234, 0
      %v4274 = vsel %vm782, %v4235, 0
      %v4277 = vsel %vm782, %v4236, 0
      %v4280 = vsel %vm782, %v4237, 0
      %v4283 = vsel %vm782, %v4238, 0
      %v4286 = vsel %vm782, %v4239, 0
      %v4289 = vsel %vm831, %v4191, 0
      %4291 = vmatprep.subr.bf16.mxu0 0
      %4292 = vmatpush1.bf16.msra.mxu0 %v4289
      %4293 = vmatprep.subr.bf16.mxu0 0
      %4294 = vmatpush1.bf16.msra.mxu0 0
      %4295 = vmatprep.subr.bf16.mxu0 0
      %4296 = vmatpush1.bf16.msra.mxu0 0
      %4297 = vmatprep.subr.bf16.mxu0 0
      %4298 = vmatpush1.bf16.msra.mxu0 0
      %4299 = vmatprep.subr.bf16.mxu0 0
      %4300 = vmatpush1.bf16.msra.mxu0 0
      %4301 = vmatprep.subr.bf16.mxu0 0
      %4302 = vmatpush1.bf16.msra.mxu0 0
      %4303 = vmatprep.subr.bf16.mxu0 0
      %4304 = vmatpush1.bf16.msra.mxu0 0
      %4305 = vmatprep.subr.bf16.mxu0 0
      %4306 = vmatpush1.bf16.msra.mxu0 0
      %4307 = vmatprep.subr.bf16.mxu0 0
      %4308 = vmatpush1.bf16.msra.mxu0 0
      %4309 = vmatprep.subr.bf16.mxu0 0
      %4310 = vmatpush1.bf16.msra.mxu0 0
      %4311 = vmatprep.subr.bf16.mxu0 0
      %4312 = vmatpush1.bf16.msra.mxu0 0
      %4313 = vmatprep.subr.bf16.mxu0 0
      %4314 = vmatpush1.bf16.msra.mxu0 0
      %4315 = vmatprep.subr.bf16.mxu0 0
      %4316 = vmatpush1.bf16.msra.mxu0 0
      %4317 = vmatprep.subr.bf16.mxu0 0
      %4318 = vmatpush1.bf16.msra.mxu0 0
      %4319 = vmatprep.subr.bf16.mxu0 0
      %4320 = vmatpush1.bf16.msra.mxu0 0
      %4321 = vmatprep.subr.bf16.mxu0 0
      %4322 = vmatpush1.bf16.msra.mxu0 0
      %4323 = vmatprep.mubr.bf16.mxu0 0
      %4324 = vmatmul.mubr.bf16.gmra.mrb[0].mxu0 %v4241
      %v4325 = vpop.f32.mrb[0].mxu0
      %v4326 = vadd.f32 0.0, %v4325
      %v4327 = vpop.f32.mrb[0].mxu0
      %v4328 = vpop.f32.mrb[0].mxu0
      %v4329 = vadd.f32 0.0, %v4328
      %v4330 = vpop.f32.mrb[0].mxu0
      %4331 = vmatprep.mubr.bf16.mxu0 0
      %4332 = vmatmul.mubr.bf16.gmra.mrb[0].mxu0 %v4244
      %v4333 = vpop.f32.mrb[0].mxu0
      %v4334 = vadd.f32 0.0, %v4333
      %v4335 = vpop.f32.mrb[0].mxu0
      %v4336 = vpop.f32.mrb[0].mxu0
      %v4337 = vadd.f32 0.0, %v4336
      %v4338 = vpop.f32.mrb[0].mxu0
      %4339 = vmatprep.mubr.bf16.mxu0 0
      %4340 = vmatmul.mubr.bf16.gmra.mrb[0].mxu0 %v4247
      %v4341 = vpop.f32.mrb[0].mxu0
      %v4342 = vadd.f32 0.0, %v4341
      %v4343 = vpop.f32.mrb[0].mxu0
      %v4344 = vpop.f32.mrb[0].mxu0
      %v4345 = vadd.f32 0.0, %v4344
      %v4346 = vpop.f32.mrb[0].mxu0
      %4347 = vmatprep.mubr.bf16.mxu0 0
      %4348 = vmatmul.mubr.bf16.gmra.mrb[0].mxu0 %v4250
      %v4349 = vpop.f32.mrb[0].mxu0
      %v4350 = vadd.f32 0.0, %v4349
      %v4351 = vpop.f32.mrb[0].mxu0
      %v4352 = vpop.f32.mrb[0].mxu0
      %v4353 = vadd.f32 0.0, %v4352
      %v4354 = vpop.f32.mrb[0].mxu0
      %4355 = vmatprep.mubr.bf16.mxu0 0
      %4356 = vmatmul.mubr.bf16.gmra.mrb[0].mxu0 %v4253
      %v4357 = vpop.f32.mrb[0].mxu0
      %v4358 = vadd.f32 0.0, %v4357
      %v4359 = vpop.f32.mrb[0].mxu0
      %v4360 = vpop.f32.mrb[0].mxu0
      %v4361 = vadd.f32 0.0, %v4360
      %v4362 = vpop.f32.mrb[0].mxu0
      %4363 = vmatprep.mubr.bf16.mxu0 0
      %4364 = vmatmul.mubr.bf16.gmra.mrb[0].mxu0 %v4256
      %v4365 = vpop.f32.mrb[0].mxu0
      %v4366 = vadd.f32 0.0, %v4365
      %v4367 = vpop.f32.mrb[0].mxu0
      %v4368 = vpop.f32.mrb[0].mxu0
      %v4369 = vadd.f32 0.0, %v4368
      %v4370 = vpop.f32.mrb[0].mxu0
      %4371 = vmatprep.mubr.bf16.mxu0 0
      %4372 = vmatmul.mubr.bf16.gmra.mrb[0].mxu0 %v4259
      %v4373 = vpop.f32.mrb[0].mxu0
      %v4374 = vadd.f32 0.0, %v4373
      %v4375 = vpop.f32.mrb[0].mxu0
      %v4376 = vpop.f32.mrb[0].mxu0
      %v4377 = vadd.f32 0.0, %v4376
      %v4378 = vpop.f32.mrb[0].mxu0
      %4379 = vmatprep.mubr.bf16.mxu0 0
      %4380 = vmatmul.mubr.bf16.gmra.mrb[0].mxu0 %v4262
      %v4381 = vpop.f32.mrb[0].mxu0
      %v4382 = vadd.f32 0.0, %v4381
      %v4383 = vpop.f32.mrb[0].mxu0
      %v4384 = vpop.f32.mrb[0].mxu0
      %v4385 = vadd.f32 0.0, %v4384
      %v4386 = vpop.f32.mrb[0].mxu0
      %4387 = vmatprep.mubr.bf16.mxu0 0
      %4388 = vmatmul.mubr.bf16.gmra.mrb[0].mxu0 %v4265
      %v4389 = vpop.f32.mrb[0].mxu0
      %v4390 = vadd.f32 0.0, %v4389
      %v4391 = vpop.f32.mrb[0].mxu0
      %v4392 = vpop.f32.mrb[0].mxu0
      %v4393 = vadd.f32 0.0, %v4392
      %v4394 = vpop.f32.mrb[0].mxu0
      %4395 = vmatprep.mubr.bf16.mxu0 0
      %4396 = vmatmul.mubr.bf16.gmra.mrb[0].mxu0 %v4268
      %v4397 = vpop.f32.mrb[0].mxu0
      %v4398 = vadd.f32 0.0, %v4397
      %v4399 = vpop.f32.mrb[0].mxu0
      %v4400 = vpop.f32.mrb[0].mxu0
      %v4401 = vadd.f32 0.0, %v4400
      %v4402 = vpop.f32.mrb[0].mxu0
      %4403 = vmatprep.mubr.bf16.mxu0 0
      %4404 = vmatmul.mubr.bf16.gmra.mrb[0].mxu0 %v4271
      %v4405 = vpop.f32.mrb[0].mxu0
      %v4406 = vadd.f32 0.0, %v4405
      %v4407 = vpop.f32.mrb[0].mxu0
      %v4408 = vpop.f32.mrb[0].mxu0
      %v4409 = vadd.f32 0.0, %v4408
      %v4410 = vpop.f32.mrb[0].mxu0
      %4411 = vmatprep.mubr.bf16.mxu0 0
      %4412 = vmatmul.mubr.bf16.gmra.mrb[0].mxu0 %v4274
      %v4413 = vpop.f32.mrb[0].mxu0
      %v4414 = vadd.f32 0.0, %v4413
      %v4415 = vpop.f32.mrb[0].mxu0
      %v4416 = vpop.f32.mrb[0].mxu0
      %v4417 = vadd.f32 0.0, %v4416
      %v4418 = vpop.f32.mrb[0].mxu0
      %4419 = vmatprep.mubr.bf16.mxu0 0
      %4420 = vmatmul.mubr.bf16.gmra.mrb[0].mxu0 %v4277
      %v4421 = vpop.f32.mrb[0].mxu0
      %v4422 = vadd.f32 0.0, %v4421
      %v4423 = vpop.f32.mrb[0].mxu0
      %v4424 = vpop.f32.mrb[0].mxu0
      %v4425 = vadd.f32 0.0, %v4424
      %v4426 = vpop.f32.mrb[0].mxu0
      %4427 = vmatprep.mubr.bf16.mxu0 0
      %4428 = vmatmul.mubr.bf16.gmra.mrb[0].mxu0 %v4280
      %v4429 = vpop.f32.mrb[0].mxu0
      %v4430 = vadd.f32 0.0, %v4429
      %v4431 = vpop.f32.mrb[0].mxu0
      %v4432 = vpop.f32.mrb[0].mxu0
      %v4433 = vadd.f32 0.0, %v4432
      %v4434 = vpop.f32.mrb[0].mxu0
      %4435 = vmatprep.mubr.bf16.mxu0 0
      %4436 = vmatmul.mubr.bf16.gmra.mrb[0].mxu0 %v4283
      %v4437 = vpop.f32.mrb[0].mxu0
      %v4438 = vadd.f32 0.0, %v4437
      %v4439 = vpop.f32.mrb[0].mxu0
      %v4440 = vpop.f32.mrb[0].mxu0
      %v4441 = vadd.f32 0.0, %v4440
      %v4442 = vpop.f32.mrb[0].mxu0
      %4443 = vmatprep.mubr.bf16.mxu0 0
      %4444 = vmatmul.mubr.bf16.gmra.mrb[0].mxu0 %v4286
      %v4445 = vpop.f32.mrb[0].mxu0
      %v4446 = vadd.f32 0.0, %v4445
      %v4447 = vpop.f32.mrb[0].mxu0
      %v4448 = vpop.f32.mrb[0].mxu0
      %v4449 = vadd.f32 0.0, %v4448
      %v4450 = vpop.f32.mrb[0].mxu0
      %4451 = vdwg.mxu0
      %v4452 = vadd.f32 %v4030, %v4326
      %v4453 = vadd.f32 %v4031, %v4329
      %v4454 = vadd.f32 %v4032, %v4334
      %v4455 = vadd.f32 %v4033, %v4337
      %v4456 = vadd.f32 %v4034, %v4342
      %v4457 = vadd.f32 %v4035, %v4345
      %v4458 = vadd.f32 %v4036, %v4350
      %v4459 = vadd.f32 %v4037, %v4353
      %v4460 = vadd.f32 %v4038, %v4358
      %v4461 = vadd.f32 %v4039, %v4361
      %v4462 = vadd.f32 %v4040, %v4366
      %v4463 = vadd.f32 %v4041, %v4369
      %v4464 = vadd.f32 %v4042, %v4374
      %v4465 = vadd.f32 %v4043, %v4377
      %v4466 = vadd.f32 %v4044, %v4382
      %v4467 = vadd.f32 %v4045, %v4385
      %v4468 = vadd.f32 %v4046, %v4390
      %v4469 = vadd.f32 %v4047, %v4393
      %v4470 = vadd.f32 %v4048, %v4398
      %v4471 = vadd.f32 %v4049, %v4401
      %v4472 = vadd.f32 %v4050, %v4406
      %v4473 = vadd.f32 %v4051, %v4409
      %v4474 = vadd.f32 %v4052, %v4414
      %v4475 = vadd.f32 %v4053, %v4417
      %v4476 = vadd.f32 %v4054, %v4422
      %v4477 = vadd.f32 %v4055, %v4425
      %v4478 = vadd.f32 %v4056, %v4430
      %v4479 = vadd.f32 %v4057, %v4433
      %v4480 = vadd.f32 %v4058, %v4438
      %v4481 = vadd.f32 %v4059, %v4441
      %v4482 = vadd.f32 %v4060, %v4446
      %v4483 = vadd.f32 %v4061, %v4449
      %s4484 = scalar_lea.vmem %s3, 6
      %v4485 = vld [vmem:[%s4484] sm:$0x3]
      %v4488 = vunpack.c.l.b16 %v3053
      %v4489 = vunpack.c.l.b16 %v3054
      %v4490 = vpack.c.b16 %v4489, %v4488
      %v4492 = vsel %vm782, %v4490, 0
      %v4495 = vsel %vm831, %v4485, 0
      %4497 = vmatprep.subr.bf16.mxu0 0
      %4498 = vmatpush1.bf16.msra.mxu0 %v4495
      %4499 = vmatprep.subr.bf16.mxu0 0
      %4500 = vmatpush1.bf16.msra.mxu0 0
      %4501 = vmatprep.subr.bf16.mxu0 0
      %4502 = vmatpush1.bf16.msra.mxu0 0
      %4503 = vmatprep.subr.bf16.mxu0 0
      %4504 = vmatpush1.bf16.msra.mxu0 0
      %4505 = vmatprep.subr.bf16.mxu0 0
      %4506 = vmatpush1.bf16.msra.mxu0 0
      %4507 = vmatprep.subr.bf16.mxu0 0
      %4508 = vmatpush1.bf16.msra.mxu0 0
      %4509 = vmatprep.subr.bf16.mxu0 0
      %4510 = vmatpush1.bf16.msra.mxu0 0
      %4511 = vmatprep.subr.bf16.mxu0 0
      %4512 = vmatpush1.bf16.msra.mxu0 0
      %4513 = vmatprep.subr.bf16.mxu0 0
      %4514 = vmatpush1.bf16.msra.mxu0 0
      %4515 = vmatprep.subr.bf16.mxu0 0
      %4516 = vmatpush1.bf16.msra.mxu0 0
      %4517 = vmatprep.subr.bf16.mxu0 0
      %4518 = vmatpush1.bf16.msra.mxu0 0
      %4519 = vmatprep.subr.bf16.mxu0 0
      %4520 = vmatpush1.bf16.msra.mxu0 0
      %4521 = vmatprep.subr.bf16.mxu0 0
      %4522 = vmatpush1.bf16.msra.mxu0 0
      %4523 = vmatprep.subr.bf16.mxu0 0
      %4524 = vmatpush1.bf16.msra.mxu0 0
      %4525 = vmatprep.subr.bf16.mxu0 0
      %4526 = vmatpush1.bf16.msra.mxu0 0
      %4527 = vmatprep.subr.bf16.mxu0 0
      %4528 = vmatpush1.bf16.msra.mxu0 0
      %4529 = vmatprep.mubr.bf16.mxu0 0
      %4530 = vmatmul.mubr.bf16.gmra.mrb[0].mxu0 %v3144
      %v4531 = vpop.f32.mrb[0].mxu0
      %v4532 = vadd.f32 0.0, %v4531
      %v4533 = vpop.f32.mrb[0].mxu0
      %v4534 = vpop.f32.mrb[0].mxu0
      %v4535 = vadd.f32 0.0, %v4534
      %v4536 = vpop.f32.mrb[0].mxu0
      %4537 = vmatprep.mubr.bf16.mxu0 0
      %4538 = vmatmul.mubr.bf16.gmra.mrb[0].mxu0 %v3147
      %v4539 = vpop.f32.mrb[0].mxu0
      %v4540 = vadd.f32 0.0, %v4539
      %v4541 = vpop.f32.mrb[0].mxu0
      %v4542 = vpop.f32.mrb[0].mxu0
      %v4543 = vadd.f32 0.0, %v4542
      %v4544 = vpop.f32.mrb[0].mxu0
      %4545 = vmatprep.mubr.bf16.mxu0 0
      %4546 = vmatmul.mubr.bf16.gmra.mrb[0].mxu0 %v3150
      %v4547 = vpop.f32.mrb[0].mxu0
      %v4548 = vadd.f32 0.0, %v4547
      %v4549 = vpop.f32.mrb[0].mxu0
      %v4550 = vpop.f32.mrb[0].mxu0
      %v4551 = vadd.f32 0.0, %v4550
      %v4552 = vpop.f32.mrb[0].mxu0
      %4553 = vmatprep.mubr.bf16.mxu0 0
      %4554 = vmatmul.mubr.bf16.gmra.mrb[0].mxu0 %v3153
      %v4555 = vpop.f32.mrb[0].mxu0
      %v4556 = vadd.f32 0.0, %v4555
      %v4557 = vpop.f32.mrb[0].mxu0
      %v4558 = vpop.f32.mrb[0].mxu0
      %v4559 = vadd.f32 0.0, %v4558
      %v4560 = vpop.f32.mrb[0].mxu0
      %4561 = vmatprep.mubr.bf16.mxu0 0
      %4562 = vmatmul.mubr.bf16.gmra.mrb[0].mxu0 %v3156
      %v4563 = vpop.f32.mrb[0].mxu0
      %v4564 = vadd.f32 0.0, %v4563
      %v4565 = vpop.f32.mrb[0].mxu0
      %v4566 = vpop.f32.mrb[0].mxu0
      %v4567 = vadd.f32 0.0, %v4566
      %v4568 = vpop.f32.mrb[0].mxu0
      %4569 = vmatprep.mubr.bf16.mxu0 0
      %4570 = vmatmul.mubr.bf16.gmra.mrb[0].mxu0 %v3159
      %v4571 = vpop.f32.mrb[0].mxu0
      %v4572 = vadd.f32 0.0, %v4571
      %v4573 = vpop.f32.mrb[0].mxu0
      %v4574 = vpop.f32.mrb[0].mxu0
      %v4575 = vadd.f32 0.0, %v4574
      %v4576 = vpop.f32.mrb[0].mxu0
      %4577 = vmatprep.mubr.bf16.mxu0 0
      %4578 = vmatmul.mubr.bf16.gmra.mrb[0].mxu0 %v3162
      %v4579 = vpop.f32.mrb[0].mxu0
      %v4580 = vadd.f32 0.0, %v4579
      %v4581 = vpop.f32.mrb[0].mxu0
      %v4582 = vpop.f32.mrb[0].mxu0
      %v4583 = vadd.f32 0.0, %v4582
      %v4584 = vpop.f32.mrb[0].mxu0
      %4585 = vmatprep.mubr.bf16.mxu0 0
      %4586 = vmatmul.mubr.bf16.gmra.mrb[0].mxu0 %v3165
      %v4587 = vpop.f32.mrb[0].mxu0
      %v4588 = vadd.f32 0.0, %v4587
      %v4589 = vpop.f32.mrb[0].mxu0
      %v4590 = vpop.f32.mrb[0].mxu0
      %v4591 = vadd.f32 0.0, %v4590
      %v4592 = vpop.f32.mrb[0].mxu0
      %4593 = vmatprep.mubr.bf16.mxu0 0
      %4594 = vmatmul.mubr.bf16.gmra.mrb[0].mxu0 %v3168
      %v4595 = vpop.f32.mrb[0].mxu0
      %v4596 = vadd.f32 0.0, %v4595
      %v4597 = vpop.f32.mrb[0].mxu0
      %v4598 = vpop.f32.mrb[0].mxu0
      %v4599 = vadd.f32 0.0, %v4598
      %v4600 = vpop.f32.mrb[0].mxu0
      %4601 = vmatprep.mubr.bf16.mxu0 0
      %4602 = vmatmul.mubr.bf16.gmra.mrb[0].mxu0 %v3171
      %v4603 = vpop.f32.mrb[0].mxu0
      %v4604 = vadd.f32 0.0, %v4603
      %v4605 = vpop.f32.mrb[0].mxu0
      %v4606 = vpop.f32.mrb[0].mxu0
      %v4607 = vadd.f32 0.0, %v4606
      %v4608 = vpop.f32.mrb[0].mxu0
      %4609 = vmatprep.mubr.bf16.mxu0 0
      %4610 = vmatmul.mubr.bf16.gmra.mrb[0].mxu0 %v3174
      %v4611 = vpop.f32.mrb[0].mxu0
      %v4612 = vadd.f32 0.0, %v4611
      %v4613 = vpop.f32.mrb[0].mxu0
      %v4614 = vpop.f32.mrb[0].mxu0
      %v4615 = vadd.f32 0.0, %v4614
      %v4616 = vpop.f32.mrb[0].mxu0
      %4617 = vmatprep.mubr.bf16.mxu0 0
      %4618 = vmatmul.mubr.bf16.gmra.mrb[0].mxu0 %v3177
      %v4619 = vpop.f32.mrb[0].mxu0
      %v4620 = vadd.f32 0.0, %v4619
      %v4621 = vpop.f32.mrb[0].mxu0
      %v4622 = vpop.f32.mrb[0].mxu0
      %v4623 = vadd.f32 0.0, %v4622
      %v4624 = vpop.f32.mrb[0].mxu0
      %4625 = vmatprep.mubr.bf16.mxu0 0
      %4626 = vmatmul.mubr.bf16.gmra.mrb[0].mxu0 %v3180
      %v4627 = vpop.f32.mrb[0].mxu0
      %v4628 = vadd.f32 0.0, %v4627
      %v4629 = vpop.f32.mrb[0].mxu0
      %v4630 = vpop.f32.mrb[0].mxu0
      %v4631 = vadd.f32 0.0, %v4630
      %v4632 = vpop.f32.mrb[0].mxu0
      %4633 = vmatprep.mubr.bf16.mxu0 0
      %4634 = vmatmul.mubr.bf16.gmra.mrb[0].mxu0 %v3183
      %v4635 = vpop.f32.mrb[0].mxu0
      %v4636 = vadd.f32 0.0, %v4635
      %v4637 = vpop.f32.mrb[0].mxu0
      %v4638 = vpop.f32.mrb[0].mxu0
      %v4639 = vadd.f32 0.0, %v4638
      %v4640 = vpop.f32.mrb[0].mxu0
      %4641 = vmatprep.mubr.bf16.mxu0 0
      %4642 = vmatmul.mubr.bf16.gmra.mrb[0].mxu0 %v3186
      %v4643 = vpop.f32.mrb[0].mxu0
      %v4644 = vadd.f32 0.0, %v4643
      %v4645 = vpop.f32.mrb[0].mxu0
      %v4646 = vpop.f32.mrb[0].mxu0
      %v4647 = vadd.f32 0.0, %v4646
      %v4648 = vpop.f32.mrb[0].mxu0
      %4649 = vmatprep.mubr.bf16.mxu0 0
      %4650 = vmatmul.mubr.bf16.gmra.mrb[0].mxu0 %v4492
      %v4651 = vpop.f32.mrb[0].mxu0
      %v4652 = vadd.f32 0.0, %v4651
      %v4653 = vpop.f32.mrb[0].mxu0
      %v4654 = vpop.f32.mrb[0].mxu0
      %v4655 = vadd.f32 0.0, %v4654
      %v4656 = vpop.f32.mrb[0].mxu0
      %4657 = vdwg.mxu0
      %v4658 = vadd.f32 %v4452, %v4532
      %v4659 = vadd.f32 %v4453, %v4535
      %v4660 = vadd.f32 %v4454, %v4540
      %v4661 = vadd.f32 %v4455, %v4543
      %v4662 = vadd.f32 %v4456, %v4548
      %v4663 = vadd.f32 %v4457, %v4551
      %v4664 = vadd.f32 %v4458, %v4556
      %v4665 = vadd.f32 %v4459, %v4559
      %v4666 = vadd.f32 %v4460, %v4564
      %v4667 = vadd.f32 %v4461, %v4567
      %v4668 = vadd.f32 %v4462, %v4572
      %v4669 = vadd.f32 %v4463, %v4575
      %v4670 = vadd.f32 %v4464, %v4580
      %v4671 = vadd.f32 %v4465, %v4583
      %v4672 = vadd.f32 %v4466, %v4588
      %v4673 = vadd.f32 %v4467, %v4591
      %v4674 = vadd.f32 %v4468, %v4596
      %v4675 = vadd.f32 %v4469, %v4599
      %v4676 = vadd.f32 %v4470, %v4604
      %v4677 = vadd.f32 %v4471, %v4607
      %v4678 = vadd.f32 %v4472, %v4612
      %v4679 = vadd.f32 %v4473, %v4615
      %v4680 = vadd.f32 %v4474, %v4620
      %v4681 = vadd.f32 %v4475, %v4623
      %v4682 = vadd.f32 %v4476, %v4628
      %v4683 = vadd.f32 %v4477, %v4631
      %v4684 = vadd.f32 %v4478, %v4636
      %v4685 = vadd.f32 %v4479, %v4639
      %v4686 = vadd.f32 %v4480, %v4644
      %v4687 = vadd.f32 %v4481, %v4647
      %v4688 = vadd.f32 %v4482, %v4652
      %v4689 = vadd.f32 %v4483, %v4655
      %v4691 = vshrl.u32 %v3053, 16
      %v4693 = vrot.slane %v4691, 4
      %v4694 = vshll.u32 %v3053, 16
      %v4696 = vrot.slane %v4694, 5
      %v4697 = vor.u32 %v4693, %v4696
      %v4698 = vrot.slane %v4697, 4
      %v4700 = vshll.u32 %v3054, 16
      %v4702 = vrot.slane %v4700, 5
      %v4703 = vsel %vm347, %v4698, %v4702
      %v4704 = vshrl.u32 %v3054, 16
      %v4706 = vrot.slane %v4704, 4
      %v4707 = vor.u32 %v4706, %v4702
      %v4708 = vrot.slane %v4707, 4
      %v4710 = vshll.u32 %v3055, 16
      %v4712 = vrot.slane %v4710, 5
      %v4713 = vsel %vm347, %v4708, %v4712
      %s4714 = scalar_lea.vmem %s3, 8
      %v4715 = vld [vmem:[%s4714] sm:$0x3]
      %v4716 = vunpack.c.l.b16 %v4703
      %v4717 = vunpack.c.l.b16 %v4713
      %v4718 = vpack.c.b16 %v4717, %v4716
      %v4720 = vsel %vm782, %v4718, 0
      %v4723 = vsel %vm831, %v4715, 0
      %4725 = vmatprep.subr.bf16.mxu0 0
      %4726 = vmatpush1.bf16.msra.mxu0 %v4723
      %4727 = vmatprep.subr.bf16.mxu0 0
      %4728 = vmatpush1.bf16.msra.mxu0 0
      %4729 = vmatprep.subr.bf16.mxu0 0
      %4730 = vmatpush1.bf16.msra.mxu0 0
      %4731 = vmatprep.subr.bf16.mxu0 0
      %4732 = vmatpush1.bf16.msra.mxu0 0
      %4733 = vmatprep.subr.bf16.mxu0 0
      %4734 = vmatpush1.bf16.msra.mxu0 0
      %4735 = vmatprep.subr.bf16.mxu0 0
      %4736 = vmatpush1.bf16.msra.mxu0 0
      %4737 = vmatprep.subr.bf16.mxu0 0
      %4738 = vmatpush1.bf16.msra.mxu0 0
      %4739 = vmatprep.subr.bf16.mxu0 0
      %4740 = vmatpush1.bf16.msra.mxu0 0
      %4741 = vmatprep.subr.bf16.mxu0 0
      %4742 = vmatpush1.bf16.msra.mxu0 0
      %4743 = vmatprep.subr.bf16.mxu0 0
      %4744 = vmatpush1.bf16.msra.mxu0 0
      %4745 = vmatprep.subr.bf16.mxu0 0
      %4746 = vmatpush1.bf16.msra.mxu0 0
      %4747 = vmatprep.subr.bf16.mxu0 0
      %4748 = vmatpush1.bf16.msra.mxu0 0
      %4749 = vmatprep.subr.bf16.mxu0 0
      %4750 = vmatpush1.bf16.msra.mxu0 0
      %4751 = vmatprep.subr.bf16.mxu0 0
      %4752 = vmatpush1.bf16.msra.mxu0 0
      %4753 = vmatprep.subr.bf16.mxu0 0
      %4754 = vmatpush1.bf16.msra.mxu0 0
      %4755 = vmatprep.subr.bf16.mxu0 0
      %4756 = vmatpush1.bf16.msra.mxu0 0
      %4757 = vmatprep.mubr.bf16.mxu0 0
      %4758 = vmatmul.mubr.bf16.gmra.mrb[0].mxu0 %v3822
      %v4759 = vpop.f32.mrb[0].mxu0
      %v4760 = vadd.f32 0.0, %v4759
      %v4761 = vpop.f32.mrb[0].mxu0
      %v4762 = vpop.f32.mrb[0].mxu0
      %v4763 = vadd.f32 0.0, %v4762
      %v4764 = vpop.f32.mrb[0].mxu0
      %4765 = vmatprep.mubr.bf16.mxu0 0
      %4766 = vmatmul.mubr.bf16.gmra.mrb[0].mxu0 %v3825
      %v4767 = vpop.f32.mrb[0].mxu0
      %v4768 = vadd.f32 0.0, %v4767
      %v4769 = vpop.f32.mrb[0].mxu0
      %v4770 = vpop.f32.mrb[0].mxu0
      %v4771 = vadd.f32 0.0, %v4770
      %v4772 = vpop.f32.mrb[0].mxu0
      %4773 = vmatprep.mubr.bf16.mxu0 0
      %4774 = vmatmul.mubr.bf16.gmra.mrb[0].mxu0 %v3828
      %v4775 = vpop.f32.mrb[0].mxu0
      %v4776 = vadd.f32 0.0, %v4775
      %v4777 = vpop.f32.mrb[0].mxu0
      %v4778 = vpop.f32.mrb[0].mxu0
      %v4779 = vadd.f32 0.0, %v4778
      %v4780 = vpop.f32.mrb[0].mxu0
      %4781 = vmatprep.mubr.bf16.mxu0 0
      %4782 = vmatmul.mubr.bf16.gmra.mrb[0].mxu0 %v3831
      %v4783 = vpop.f32.mrb[0].mxu0
      %v4784 = vadd.f32 0.0, %v4783
      %v4785 = vpop.f32.mrb[0].mxu0
      %v4786 = vpop.f32.mrb[0].mxu0
      %v4787 = vadd.f32 0.0, %v4786
      %v4788 = vpop.f32.mrb[0].mxu0
      %4789 = vmatprep.mubr.bf16.mxu0 0
      %4790 = vmatmul.mubr.bf16.gmra.mrb[0].mxu0 %v3834
      %v4791 = vpop.f32.mrb[0].mxu0
      %v4792 = vadd.f32 0.0, %v4791
      %v4793 = vpop.f32.mrb[0].mxu0
      %v4794 = vpop.f32.mrb[0].mxu0
      %v4795 = vadd.f32 0.0, %v4794
      %v4796 = vpop.f32.mrb[0].mxu0
      %4797 = vmatprep.mubr.bf16.mxu0 0
      %4798 = vmatmul.mubr.bf16.gmra.mrb[0].mxu0 %v3837
      %v4799 = vpop.f32.mrb[0].mxu0
      %v4800 = vadd.f32 0.0, %v4799
      %v4801 = vpop.f32.mrb[0].mxu0
      %v4802 = vpop.f32.mrb[0].mxu0
      %v4803 = vadd.f32 0.0, %v4802
      %v4804 = vpop.f32.mrb[0].mxu0
      %4805 = vmatprep.mubr.bf16.mxu0 0
      %4806 = vmatmul.mubr.bf16.gmra.mrb[0].mxu0 %v3840
      %v4807 = vpop.f32.mrb[0].mxu0
      %v4808 = vadd.f32 0.0, %v4807
      %v4809 = vpop.f32.mrb[0].mxu0
      %v4810 = vpop.f32.mrb[0].mxu0
      %v4811 = vadd.f32 0.0, %v4810
      %v4812 = vpop.f32.mrb[0].mxu0
      %4813 = vmatprep.mubr.bf16.mxu0 0
      %4814 = vmatmul.mubr.bf16.gmra.mrb[0].mxu0 %v3843
      %v4815 = vpop.f32.mrb[0].mxu0
      %v4816 = vadd.f32 0.0, %v4815
      %v4817 = vpop.f32.mrb[0].mxu0
      %v4818 = vpop.f32.mrb[0].mxu0
      %v4819 = vadd.f32 0.0, %v4818
      %v4820 = vpop.f32.mrb[0].mxu0
      %4821 = vmatprep.mubr.bf16.mxu0 0
      %4822 = vmatmul.mubr.bf16.gmra.mrb[0].mxu0 %v3846
      %v4823 = vpop.f32.mrb[0].mxu0
      %v4824 = vadd.f32 0.0, %v4823
      %v4825 = vpop.f32.mrb[0].mxu0
      %v4826 = vpop.f32.mrb[0].mxu0
      %v4827 = vadd.f32 0.0, %v4826
      %v4828 = vpop.f32.mrb[0].mxu0
      %4829 = vmatprep.mubr.bf16.mxu0 0
      %4830 = vmatmul.mubr.bf16.gmra.mrb[0].mxu0 %v3849
      %v4831 = vpop.f32.mrb[0].mxu0
      %v4832 = vadd.f32 0.0, %v4831
      %v4833 = vpop.f32.mrb[0].mxu0
      %v4834 = vpop.f32.mrb[0].mxu0
      %v4835 = vadd.f32 0.0, %v4834
      %v4836 = vpop.f32.mrb[0].mxu0
      %4837 = vmatprep.mubr.bf16.mxu0 0
      %4838 = vmatmul.mubr.bf16.gmra.mrb[0].mxu0 %v3852
      %v4839 = vpop.f32.mrb[0].mxu0
      %v4840 = vadd.f32 0.0, %v4839
      %v4841 = vpop.f32.mrb[0].mxu0
      %v4842 = vpop.f32.mrb[0].mxu0
      %v4843 = vadd.f32 0.0, %v4842
      %v4844 = vpop.f32.mrb[0].mxu0
      %4845 = vmatprep.mubr.bf16.mxu0 0
      %4846 = vmatmul.mubr.bf16.gmra.mrb[0].mxu0 %v3855
      %v4847 = vpop.f32.mrb[0].mxu0
      %v4848 = vadd.f32 0.0, %v4847
      %v4849 = vpop.f32.mrb[0].mxu0
      %v4850 = vpop.f32.mrb[0].mxu0
      %v4851 = vadd.f32 0.0, %v4850
      %v4852 = vpop.f32.mrb[0].mxu0
      %4853 = vmatprep.mubr.bf16.mxu0 0
      %4854 = vmatmul.mubr.bf16.gmra.mrb[0].mxu0 %v3858
      %v4855 = vpop.f32.mrb[0].mxu0
      %v4856 = vadd.f32 0.0, %v4855
      %v4857 = vpop.f32.mrb[0].mxu0
      %v4858 = vpop.f32.mrb[0].mxu0
      %v4859 = vadd.f32 0.0, %v4858
      %v4860 = vpop.f32.mrb[0].mxu0
      %4861 = vmatprep.mubr.bf16.mxu0 0
      %4862 = vmatmul.mubr.bf16.gmra.mrb[0].mxu0 %v3861
      %v4863 = vpop.f32.mrb[0].mxu0
      %v4864 = vadd.f32 0.0, %v4863
      %v4865 = vpop.f32.mrb[0].mxu0
      %v4866 = vpop.f32.mrb[0].mxu0
      %v4867 = vadd.f32 0.0, %v4866
      %v4868 = vpop.f32.mrb[0].mxu0
      %4869 = vmatprep.mubr.bf16.mxu0 0
      %4870 = vmatmul.mubr.bf16.gmra.mrb[0].mxu0 %v3864
      %v4871 = vpop.f32.mrb[0].mxu0
      %v4872 = vadd.f32 0.0, %v4871
      %v4873 = vpop.f32.mrb[0].mxu0
      %v4874 = vpop.f32.mrb[0].mxu0
      %v4875 = vadd.f32 0.0, %v4874
      %v4876 = vpop.f32.mrb[0].mxu0
      %4877 = vmatprep.mubr.bf16.mxu0 0
      %4878 = vmatmul.mubr.bf16.gmra.mrb[0].mxu0 %v4720
      %v4879 = vpop.f32.mrb[0].mxu0
      %v4880 = vadd.f32 0.0, %v4879
      %v4881 = vpop.f32.mrb[0].mxu0
      %v4882 = vpop.f32.mrb[0].mxu0
      %v4883 = vadd.f32 0.0, %v4882
      %v4884 = vpop.f32.mrb[0].mxu0
      %4885 = vdwg.mxu0
      %v4886 = vadd.f32 %v4658, %v4760
      %v4887 = vadd.f32 %v4659, %v4763
      %v4888 = vadd.f32 %v4660, %v4768
      %v4889 = vadd.f32 %v4661, %v4771
      %v4890 = vadd.f32 %v4662, %v4776
      %v4891 = vadd.f32 %v4663, %v4779
      %v4892 = vadd.f32 %v4664, %v4784
      %v4893 = vadd.f32 %v4665, %v4787
      %v4894 = vadd.f32 %v4666, %v4792
      %v4895 = vadd.f32 %v4667, %v4795
      %v4896 = vadd.f32 %v4668, %v4800
      %v4897 = vadd.f32 %v4669, %v4803
      %v4898 = vadd.f32 %v4670, %v4808
      %v4899 = vadd.f32 %v4671, %v4811
      %v4900 = vadd.f32 %v4672, %v4816
      %v4901 = vadd.f32 %v4673, %v4819
      %v4902 = vadd.f32 %v4674, %v4824
      %v4903 = vadd.f32 %v4675, %v4827
      %v4904 = vadd.f32 %v4676, %v4832
      %v4905 = vadd.f32 %v4677, %v4835
      %v4906 = vadd.f32 %v4678, %v4840
      %v4907 = vadd.f32 %v4679, %v4843
      %v4908 = vadd.f32 %v4680, %v4848
      %v4909 = vadd.f32 %v4681, %v4851
      %v4910 = vadd.f32 %v4682, %v4856
      %v4911 = vadd.f32 %v4683, %v4859
      %v4912 = vadd.f32 %v4684, %v4864
      %v4913 = vadd.f32 %v4685, %v4867
      %v4914 = vadd.f32 %v4686, %v4872
      %v4915 = vadd.f32 %v4687, %v4875
      %v4916 = vadd.f32 %v4688, %v4880
      %v4917 = vadd.f32 %v4689, %v4883
      %v4919 = vrot.slane %v3053, 5
      %v4920 = vrot.slane %v4919, 4
      %v4921 = vrot.slane %v3054, 5
      %v4922 = vsel %vm1306, %v4920, %v4921
      %v4923 = vrot.slane %v4921, 4
      %v4924 = vrot.slane %v3055, 5
      %v4925 = vsel %vm1306, %v4923, %v4924
      %s4926 = scalar_lea.vmem %s3, 10
      %v4927 = vld [vmem:[%s4926] sm:$0x3]
      %v4928 = vunpack.c.l.b16 %v4922
      %v4929 = vunpack.c.l.b16 %v4925
      %v4930 = vpack.c.b16 %v4929, %v4928
      %v4932 = vsel %vm782, %v4930, 0
      %v4935 = vsel %vm831, %v4927, 0
      %4937 = vmatprep.subr.bf16.mxu0 0
      %4938 = vmatpush1.bf16.msra.mxu0 %v4935
      %4939 = vmatprep.subr.bf16.mxu0 0
      %4940 = vmatpush1.bf16.msra.mxu0 0
      %4941 = vmatprep.subr.bf16.mxu0 0
      %4942 = vmatpush1.bf16.msra.mxu0 0
      %4943 = vmatprep.subr.bf16.mxu0 0
      %4944 = vmatpush1.bf16.msra.mxu0 0
      %4945 = vmatprep.subr.bf16.mxu0 0
      %4946 = vmatpush1.bf16.msra.mxu0 0
      %4947 = vmatprep.subr.bf16.mxu0 0
      %4948 = vmatpush1.bf16.msra.mxu0 0
      %4949 = vmatprep.subr.bf16.mxu0 0
      %4950 = vmatpush1.bf16.msra.mxu0 0
      %4951 = vmatprep.subr.bf16.mxu0 0
      %4952 = vmatpush1.bf16.msra.mxu0 0
      %4953 = vmatprep.subr.bf16.mxu0 0
      %4954 = vmatpush1.bf16.msra.mxu0 0
      %4955 = vmatprep.subr.bf16.mxu0 0
      %4956 = vmatpush1.bf16.msra.mxu0 0
      %4957 = vmatprep.subr.bf16.mxu0 0
      %4958 = vmatpush1.bf16.msra.mxu0 0
      %4959 = vmatprep.subr.bf16.mxu0 0
      %4960 = vmatpush1.bf16.msra.mxu0 0
      %4961 = vmatprep.subr.bf16.mxu0 0
      %4962 = vmatpush1.bf16.msra.mxu0 0
      %4963 = vmatprep.subr.bf16.mxu0 0
      %4964 = vmatpush1.bf16.msra.mxu0 0
      %4965 = vmatprep.subr.bf16.mxu0 0
      %4966 = vmatpush1.bf16.msra.mxu0 0
      %4967 = vmatprep.subr.bf16.mxu0 0
      %4968 = vmatpush1.bf16.msra.mxu0 0
      %4969 = vmatprep.mubr.bf16.mxu0 0
      %4970 = vmatmul.mubr.bf16.gmra.mrb[0].mxu0 %v4244
      %v4971 = vpop.f32.mrb[0].mxu0
      %v4972 = vadd.f32 0.0, %v4971
      %v4973 = vpop.f32.mrb[0].mxu0
      %v4974 = vpop.f32.mrb[0].mxu0
      %v4975 = vadd.f32 0.0, %v4974
      %v4976 = vpop.f32.mrb[0].mxu0
      %4977 = vmatprep.mubr.bf16.mxu0 0
      %4978 = vmatmul.mubr.bf16.gmra.mrb[0].mxu0 %v4247
      %v4979 = vpop.f32.mrb[0].mxu0
      %v4980 = vadd.f32 0.0, %v4979
      %v4981 = vpop.f32.mrb[0].mxu0
      %v4982 = vpop.f32.mrb[0].mxu0
      %v4983 = vadd.f32 0.0, %v4982
      %v4984 = vpop.f32.mrb[0].mxu0
      %4985 = vmatprep.mubr.bf16.mxu0 0
      %4986 = vmatmul.mubr.bf16.gmra.mrb[0].mxu0 %v4250
      %v4987 = vpop.f32.mrb[0].mxu0
      %v4988 = vadd.f32 0.0, %v4987
      %v4989 = vpop.f32.mrb[0].mxu0
      %v4990 = vpop.f32.mrb[0].mxu0
      %v4991 = vadd.f32 0.0, %v4990
      %v4992 = vpop.f32.mrb[0].mxu0
      %4993 = vmatprep.mubr.bf16.mxu0 0
      %4994 = vmatmul.mubr.bf16.gmra.mrb[0].mxu0 %v4253
      %v4995 = vpop.f32.mrb[0].mxu0
      %v4996 = vadd.f32 0.0, %v4995
      %v4997 = vpop.f32.mrb[0].mxu0
      %v4998 = vpop.f32.mrb[0].mxu0
      %v4999 = vadd.f32 0.0, %v4998
      %v5000 = vpop.f32.mrb[0].mxu0
      %5001 = vmatprep.mubr.bf16.mxu0 0
      %5002 = vmatmul.mubr.bf16.gmra.mrb[0].mxu0 %v4256
      %v5003 = vpop.f32.mrb[0].mxu0
      %v5004 = vadd.f32 0.0, %v5003
      %v5005 = vpop.f32.mrb[0].mxu0
      %v5006 = vpop.f32.mrb[0].mxu0
      %v5007 = vadd.f32 0.0, %v5006
      %v5008 = vpop.f32.mrb[0].mxu0
      %5009 = vmatprep.mubr.bf16.mxu0 0
      %5010 = vmatmul.mubr.bf16.gmra.mrb[0].mxu0 %v4259
      %v5011 = vpop.f32.mrb[0].mxu0
      %v5012 = vadd.f32 0.0, %v5011
      %v5013 = vpop.f32.mrb[0].mxu0
      %v5014 = vpop.f32.mrb[0].mxu0
      %v5015 = vadd.f32 0.0, %v5014
      %v5016 = vpop.f32.mrb[0].mxu0
      %5017 = vmatprep.mubr.bf16.mxu0 0
      %5018 = vmatmul.mubr.bf16.gmra.mrb[0].mxu0 %v4262
      %v5019 = vpop.f32.mrb[0].mxu0
      %v5020 = vadd.f32 0.0, %v5019
      %v5021 = vpop.f32.mrb[0].mxu0
      %v5022 = vpop.f32.mrb[0].mxu0
      %v5023 = vadd.f32 0.0, %v5022
      %v5024 = vpop.f32.mrb[0].mxu0
      %5025 = vmatprep.mubr.bf16.mxu0 0
      %5026 = vmatmul.mubr.bf16.gmra.mrb[0].mxu0 %v4265
      %v5027 = vpop.f32.mrb[0].mxu0
      %v5028 = vadd.f32 0.0, %v5027
      %v5029 = vpop.f32.mrb[0].mxu0
      %v5030 = vpop.f32.mrb[0].mxu0
      %v5031 = vadd.f32 0.0, %v5030
      %v5032 = vpop.f32.mrb[0].mxu0
      %5033 = vmatprep.mubr.bf16.mxu0 0
      %5034 = vmatmul.mubr.bf16.gmra.mrb[0].mxu0 %v4268
      %v5035 = vpop.f32.mrb[0].mxu0
      %v5036 = vadd.f32 0.0, %v5035
      %v5037 = vpop.f32.mrb[0].mxu0
      %v5038 = vpop.f32.mrb[0].mxu0
      %v5039 = vadd.f32 0.0, %v5038
      %v5040 = vpop.f32.mrb[0].mxu0
      %5041 = vmatprep.mubr.bf16.mxu0 0
      %5042 = vmatmul.mubr.bf16.gmra.mrb[0].mxu0 %v4271
      %v5043 = vpop.f32.mrb[0].mxu0
      %v5044 = vadd.f32 0.0, %v5043
      %v5045 = vpop.f32.mrb[0].mxu0
      %v5046 = vpop.f32.mrb[0].mxu0
      %v5047 = vadd.f32 0.0, %v5046
      %v5048 = vpop.f32.mrb[0].mxu0
      %5049 = vmatprep.mubr.bf16.mxu0 0
      %5050 = vmatmul.mubr.bf16.gmra.mrb[0].mxu0 %v4274
      %v5051 = vpop.f32.mrb[0].mxu0
      %v5052 = vadd.f32 0.0, %v5051
      %v5053 = vpop.f32.mrb[0].mxu0
      %v5054 = vpop.f32.mrb[0].mxu0
      %v5055 = vadd.f32 0.0, %v5054
      %v5056 = vpop.f32.mrb[0].mxu0
      %5057 = vmatprep.mubr.bf16.mxu0 0
      %5058 = vmatmul.mubr.bf16.gmra.mrb[0].mxu0 %v4277
      %v5059 = vpop.f32.mrb[0].mxu0
      %v5060 = vadd.f32 0.0, %v5059
      %v5061 = vpop.f32.mrb[0].mxu0
      %v5062 = vpop.f32.mrb[0].mxu0
      %v5063 = vadd.f32 0.0, %v5062
      %v5064 = vpop.f32.mrb[0].mxu0
      %5065 = vmatprep.mubr.bf16.mxu0 0
      %5066 = vmatmul.mubr.bf16.gmra.mrb[0].mxu0 %v4280
      %v5067 = vpop.f32.mrb[0].mxu0
      %v5068 = vadd.f32 0.0, %v5067
      %v5069 = vpop.f32.mrb[0].mxu0
      %v5070 = vpop.f32.mrb[0].mxu0
      %v5071 = vadd.f32 0.0, %v5070
      %v5072 = vpop.f32.mrb[0].mxu0
      %5073 = vmatprep.mubr.bf16.mxu0 0
      %5074 = vmatmul.mubr.bf16.gmra.mrb[0].mxu0 %v4283
      %v5075 = vpop.f32.mrb[0].mxu0
      %v5076 = vadd.f32 0.0, %v5075
      %v5077 = vpop.f32.mrb[0].mxu0
      %v5078 = vpop.f32.mrb[0].mxu0
      %v5079 = vadd.f32 0.0, %v5078
      %v5080 = vpop.f32.mrb[0].mxu0
      %5081 = vmatprep.mubr.bf16.mxu0 0
      %5082 = vmatmul.mubr.bf16.gmra.mrb[0].mxu0 %v4286
      %v5083 = vpop.f32.mrb[0].mxu0
      %v5084 = vadd.f32 0.0, %v5083
      %v5085 = vpop.f32.mrb[0].mxu0
      %v5086 = vpop.f32.mrb[0].mxu0
      %v5087 = vadd.f32 0.0, %v5086
      %v5088 = vpop.f32.mrb[0].mxu0
      %5089 = vmatprep.mubr.bf16.mxu0 0
      %5090 = vmatmul.mubr.bf16.gmra.mrb[0].mxu0 %v4932
      %v5091 = vpop.f32.mrb[0].mxu0
      %v5092 = vadd.f32 0.0, %v5091
      %v5093 = vpop.f32.mrb[0].mxu0
      %v5094 = vpop.f32.mrb[0].mxu0
      %v5095 = vadd.f32 0.0, %v5094
      %v5096 = vpop.f32.mrb[0].mxu0
      %5097 = vdwg.mxu0
      %v5098 = vadd.f32 %v4886, %v4972
      %v5099 = vadd.f32 %v4887, %v4975
      %v5100 = vadd.f32 %v4888, %v4980
      %v5101 = vadd.f32 %v4889, %v4983
      %v5102 = vadd.f32 %v4890, %v4988
      %v5103 = vadd.f32 %v4891, %v4991
      %v5104 = vadd.f32 %v4892, %v4996
      %v5105 = vadd.f32 %v4893, %v4999
      %v5106 = vadd.f32 %v4894, %v5004
      %v5107 = vadd.f32 %v4895, %v5007
      %v5108 = vadd.f32 %v4896, %v5012
      %v5109 = vadd.f32 %v4897, %v5015
      %v5110 = vadd.f32 %v4898, %v5020
      %v5111 = vadd.f32 %v4899, %v5023
      %v5112 = vadd.f32 %v4900, %v5028
      %v5113 = vadd.f32 %v4901, %v5031
      %v5114 = vadd.f32 %v4902, %v5036
      %v5115 = vadd.f32 %v4903, %v5039
      %v5116 = vadd.f32 %v4904, %v5044
      %v5117 = vadd.f32 %v4905, %v5047
      %v5118 = vadd.f32 %v4906, %v5052
      %v5119 = vadd.f32 %v4907, %v5055
      %v5120 = vadd.f32 %v4908, %v5060
      %v5121 = vadd.f32 %v4909, %v5063
      %v5122 = vadd.f32 %v4910, %v5068
      %v5123 = vadd.f32 %v4911, %v5071
      %v5124 = vadd.f32 %v4912, %v5076
      %v5125 = vadd.f32 %v4913, %v5079
      %v5126 = vadd.f32 %v4914, %v5084
      %v5127 = vadd.f32 %v4915, %v5087
      %v5128 = vadd.f32 %v4916, %v5092
      %v5129 = vadd.f32 %v4917, %v5095
      %s5130 = scalar_lea.vmem %s3, 12
      %v5131 = vld [vmem:[%s5130] sm:$0x3]
      %v5134 = vunpack.c.l.b16 %v3056
      %v5135 = vunpack.c.l.b16 %v3057
      %v5136 = vpack.c.b16 %v5135, %v5134
      %v5138 = vsel %vm782, %v5136, 0
      %v5141 = vsel %vm831, %v5131, 0
      %5143 = vmatprep.subr.bf16.mxu0 0
      %5144 = vmatpush1.bf16.msra.mxu0 %v5141
      %5145 = vmatprep.subr.bf16.mxu0 0
      %5146 = vmatpush1.bf16.msra.mxu0 0
      %5147 = vmatprep.subr.bf16.mxu0 0
      %5148 = vmatpush1.bf16.msra.mxu0 0
      %5149 = vmatprep.subr.bf16.mxu0 0
      %5150 = vmatpush1.bf16.msra.mxu0 0
      %5151 = vmatprep.subr.bf16.mxu0 0
      %5152 = vmatpush1.bf16.msra.mxu0 0
      %5153 = vmatprep.subr.bf16.mxu0 0
      %5154 = vmatpush1.bf16.msra.mxu0 0
      %5155 = vmatprep.subr.bf16.mxu0 0
      %5156 = vmatpush1.bf16.msra.mxu0 0
      %5157 = vmatprep.subr.bf16.mxu0 0
      %5158 = vmatpush1.bf16.msra.mxu0 0
      %5159 = vmatprep.subr.bf16.mxu0 0
      %5160 = vmatpush1.bf16.msra.mxu0 0
      %5161 = vmatprep.subr.bf16.mxu0 0
      %5162 = vmatpush1.bf16.msra.mxu0 0
      %5163 = vmatprep.subr.bf16.mxu0 0
      %5164 = vmatpush1.bf16.msra.mxu0 0
      %5165 = vmatprep.subr.bf16.mxu0 0
      %5166 = vmatpush1.bf16.msra.mxu0 0
      %5167 = vmatprep.subr.bf16.mxu0 0
      %5168 = vmatpush1.bf16.msra.mxu0 0
      %5169 = vmatprep.subr.bf16.mxu0 0
      %5170 = vmatpush1.bf16.msra.mxu0 0
      %5171 = vmatprep.subr.bf16.mxu0 0
      %5172 = vmatpush1.bf16.msra.mxu0 0
      %5173 = vmatprep.subr.bf16.mxu0 0
      %5174 = vmatpush1.bf16.msra.mxu0 0
      %5175 = vmatprep.mubr.bf16.mxu0 0
      %5176 = vmatmul.mubr.bf16.gmra.mrb[0].mxu0 %v3147
      %v5177 = vpop.f32.mrb[0].mxu0
      %v5178 = vadd.f32 0.0, %v5177
      %v5179 = vpop.f32.mrb[0].mxu0
      %v5180 = vpop.f32.mrb[0].mxu0
      %v5181 = vadd.f32 0.0, %v5180
      %v5182 = vpop.f32.mrb[0].mxu0
      %5183 = vmatprep.mubr.bf16.mxu0 0
      %5184 = vmatmul.mubr.bf16.gmra.mrb[0].mxu0 %v3150
      %v5185 = vpop.f32.mrb[0].mxu0
      %v5186 = vadd.f32 0.0, %v5185
      %v5187 = vpop.f32.mrb[0].mxu0
      %v5188 = vpop.f32.mrb[0].mxu0
      %v5189 = vadd.f32 0.0, %v5188
      %v5190 = vpop.f32.mrb[0].mxu0
      %5191 = vmatprep.mubr.bf16.mxu0 0
      %5192 = vmatmul.mubr.bf16.gmra.mrb[0].mxu0 %v3153
      %v5193 = vpop.f32.mrb[0].mxu0
      %v5194 = vadd.f32 0.0, %v5193
      %v5195 = vpop.f32.mrb[0].mxu0
      %v5196 = vpop.f32.mrb[0].mxu0
      %v5197 = vadd.f32 0.0, %v5196
      %v5198 = vpop.f32.mrb[0].mxu0
      %5199 = vmatprep.mubr.bf16.mxu0 0
      %5200 = vmatmul.mubr.bf16.gmra.mrb[0].mxu0 %v3156
      %v5201 = vpop.f32.mrb[0].mxu0
      %v5202 = vadd.f32 0.0, %v5201
      %v5203 = vpop.f32.mrb[0].mxu0
      %v5204 = vpop.f32.mrb[0].mxu0
      %v5205 = vadd.f32 0.0, %v5204
      %v5206 = vpop.f32.mrb[0].mxu0
      %5207 = vmatprep.mubr.bf16.mxu0 0
      %5208 = vmatmul.mubr.bf16.gmra.mrb[0].mxu0 %v3159
      %v5209 = vpop.f32.mrb[0].mxu0
      %v5210 = vadd.f32 0.0, %v5209
      %v5211 = vpop.f32.mrb[0].mxu0
      %v5212 = vpop.f32.mrb[0].mxu0
      %v5213 = vadd.f32 0.0, %v5212
      %v5214 = vpop.f32.mrb[0].mxu0
      %5215 = vmatprep.mubr.bf16.mxu0 0
      %5216 = vmatmul.mubr.bf16.gmra.mrb[0].mxu0 %v3162
      %v5217 = vpop.f32.mrb[0].mxu0
      %v5218 = vadd.f32 0.0, %v5217
      %v5219 = vpop.f32.mrb[0].mxu0
      %v5220 = vpop.f32.mrb[0].mxu0
      %v5221 = vadd.f32 0.0, %v5220
      %v5222 = vpop.f32.mrb[0].mxu0
      %5223 = vmatprep.mubr.bf16.mxu0 0
      %5224 = vmatmul.mubr.bf16.gmra.mrb[0].mxu0 %v3165
      %v5225 = vpop.f32.mrb[0].mxu0
      %v5226 = vadd.f32 0.0, %v5225
      %v5227 = vpop.f32.mrb[0].mxu0
      %v5228 = vpop.f32.mrb[0].mxu0
      %v5229 = vadd.f32 0.0, %v5228
      %v5230 = vpop.f32.mrb[0].mxu0
      %5231 = vmatprep.mubr.bf16.mxu0 0
      %5232 = vmatmul.mubr.bf16.gmra.mrb[0].mxu0 %v3168
      %v5233 = vpop.f32.mrb[0].mxu0
      %v5234 = vadd.f32 0.0, %v5233
      %v5235 = vpop.f32.mrb[0].mxu0
      %v5236 = vpop.f32.mrb[0].mxu0
      %v5237 = vadd.f32 0.0, %v5236
      %v5238 = vpop.f32.mrb[0].mxu0
      %5239 = vmatprep.mubr.bf16.mxu0 0
      %5240 = vmatmul.mubr.bf16.gmra.mrb[0].mxu0 %v3171
      %v5241 = vpop.f32.mrb[0].mxu0
      %v5242 = vadd.f32 0.0, %v5241
      %v5243 = vpop.f32.mrb[0].mxu0
      %v5244 = vpop.f32.mrb[0].mxu0
      %v5245 = vadd.f32 0.0, %v5244
      %v5246 = vpop.f32.mrb[0].mxu0
      %5247 = vmatprep.mubr.bf16.mxu0 0
      %5248 = vmatmul.mubr.bf16.gmra.mrb[0].mxu0 %v3174
      %v5249 = vpop.f32.mrb[0].mxu0
      %v5250 = vadd.f32 0.0, %v5249
      %v5251 = vpop.f32.mrb[0].mxu0
      %v5252 = vpop.f32.mrb[0].mxu0
      %v5253 = vadd.f32 0.0, %v5252
      %v5254 = vpop.f32.mrb[0].mxu0
      %5255 = vmatprep.mubr.bf16.mxu0 0
      %5256 = vmatmul.mubr.bf16.gmra.mrb[0].mxu0 %v3177
      %v5257 = vpop.f32.mrb[0].mxu0
      %v5258 = vadd.f32 0.0, %v5257
      %v5259 = vpop.f32.mrb[0].mxu0
      %v5260 = vpop.f32.mrb[0].mxu0
      %v5261 = vadd.f32 0.0, %v5260
      %v5262 = vpop.f32.mrb[0].mxu0
      %5263 = vmatprep.mubr.bf16.mxu0 0
      %5264 = vmatmul.mubr.bf16.gmra.mrb[0].mxu0 %v3180
      %v5265 = vpop.f32.mrb[0].mxu0
      %v5266 = vadd.f32 0.0, %v5265
      %v5267 = vpop.f32.mrb[0].mxu0
      %v5268 = vpop.f32.mrb[0].mxu0
      %v5269 = vadd.f32 0.0, %v5268
      %v5270 = vpop.f32.mrb[0].mxu0
      %5271 = vmatprep.mubr.bf16.mxu0 0
      %5272 = vmatmul.mubr.bf16.gmra.mrb[0].mxu0 %v3183
      %v5273 = vpop.f32.mrb[0].mxu0
      %v5274 = vadd.f32 0.0, %v5273
      %v5275 = vpop.f32.mrb[0].mxu0
      %v5276 = vpop.f32.mrb[0].mxu0
      %v5277 = vadd.f32 0.0, %v5276
      %v5278 = vpop.f32.mrb[0].mxu0
      %5279 = vmatprep.mubr.bf16.mxu0 0
      %5280 = vmatmul.mubr.bf16.gmra.mrb[0].mxu0 %v3186
      %v5281 = vpop.f32.mrb[0].mxu0
      %v5282 = vadd.f32 0.0, %v5281
      %v5283 = vpop.f32.mrb[0].mxu0
      %v5284 = vpop.f32.mrb[0].mxu0
      %v5285 = vadd.f32 0.0, %v5284
      %v5286 = vpop.f32.mrb[0].mxu0
      %5287 = vmatprep.mubr.bf16.mxu0 0
      %5288 = vmatmul.mubr.bf16.gmra.mrb[0].mxu0 %v4492
      %v5289 = vpop.f32.mrb[0].mxu0
      %v5290 = vadd.f32 0.0, %v5289
      %v5291 = vpop.f32.mrb[0].mxu0
      %v5292 = vpop.f32.mrb[0].mxu0
      %v5293 = vadd.f32 0.0, %v5292
      %v5294 = vpop.f32.mrb[0].mxu0
      %5295 = vmatprep.mubr.bf16.mxu0 0
      %5296 = vmatmul.mubr.bf16.gmra.mrb[0].mxu0 %v5138
      %v5297 = vpop.f32.mrb[0].mxu0
      %v5298 = vadd.f32 0.0, %v5297
      %v5299 = vpop.f32.mrb[0].mxu0
      %v5300 = vpop.f32.mrb[0].mxu0
      %v5301 = vadd.f32 0.0, %v5300
      %v5302 = vpop.f32.mrb[0].mxu0
      %5303 = vdwg.mxu0
      %v5304 = vadd.f32 %v5098, %v5178
      %v5305 = vadd.f32 %v5099, %v5181
      %v5306 = vadd.f32 %v5100, %v5186
      %v5307 = vadd.f32 %v5101, %v5189
      %v5308 = vadd.f32 %v5102, %v5194
      %v5309 = vadd.f32 %v5103, %v5197
      %v5310 = vadd.f32 %v5104, %v5202
      %v5311 = vadd.f32 %v5105, %v5205
      %v5312 = vadd.f32 %v5106, %v5210
      %v5313 = vadd.f32 %v5107, %v5213
      %v5314 = vadd.f32 %v5108, %v5218
      %v5315 = vadd.f32 %v5109, %v5221
      %v5316 = vadd.f32 %v5110, %v5226
      %v5317 = vadd.f32 %v5111, %v5229
      %v5318 = vadd.f32 %v5112, %v5234
      %v5319 = vadd.f32 %v5113, %v5237
      %v5320 = vadd.f32 %v5114, %v5242
      %v5321 = vadd.f32 %v5115, %v5245
      %v5322 = vadd.f32 %v5116, %v5250
      %v5323 = vadd.f32 %v5117, %v5253
      %v5324 = vadd.f32 %v5118, %v5258
      %v5325 = vadd.f32 %v5119, %v5261
      %v5326 = vadd.f32 %v5120, %v5266
      %v5327 = vadd.f32 %v5121, %v5269
      %v5328 = vadd.f32 %v5122, %v5274
      %v5329 = vadd.f32 %v5123, %v5277
      %v5330 = vadd.f32 %v5124, %v5282
      %v5331 = vadd.f32 %v5125, %v5285
      %v5332 = vadd.f32 %v5126, %v5290
      %v5333 = vadd.f32 %v5127, %v5293
      %v5334 = vadd.f32 %v5128, %v5298
      %v5335 = vadd.f32 %v5129, %v5301
      %v5337 = vshrl.u32 %v3056, 16
      %v5339 = vrot.slane %v5337, 4
      %v5340 = vshll.u32 %v3056, 16
      %v5342 = vrot.slane %v5340, 5
      %v5343 = vor.u32 %v5339, %v5342
      %v5344 = vrot.slane %v5343, 4
      %v5346 = vshll.u32 %v3057, 16
      %v5348 = vrot.slane %v5346, 5
      %v5349 = vsel %vm347, %v5344, %v5348
      %v5350 = vshrl.u32 %v3057, 16
      %v5352 = vrot.slane %v5350, 4
      %v5353 = vor.u32 %v5352, %v5348
      %v5354 = vrot.slane %v5353, 4
      %v5356 = vshll.u32 %v3058, 16
      %v5358 = vrot.slane %v5356, 5
      %v5359 = vsel %vm347, %v5354, %v5358
      %s5360 = scalar_lea.vmem %s3, 14
      %v5361 = vld [vmem:[%s5360] sm:$0x3]
      %v5362 = vunpack.c.l.b16 %v5349
      %v5363 = vunpack.c.l.b16 %v5359
      %v5364 = vpack.c.b16 %v5363, %v5362
      %v5366 = vsel %vm782, %v5364, 0
      %v5369 = vsel %vm831, %v5361, 0
      %5371 = vmatprep.subr.bf16.mxu0 0
      %5372 = vmatpush1.bf16.msra.mxu0 %v5369
      %5373 = vmatprep.subr.bf16.mxu0 0
      %5374 = vmatpush1.bf16.msra.mxu0 0
      %5375 = vmatprep.subr.bf16.mxu0 0
      %5376 = vmatpush1.bf16.msra.mxu0 0
      %5377 = vmatprep.subr.bf16.mxu0 0
      %5378 = vmatpush1.bf16.msra.mxu0 0
      %5379 = vmatprep.subr.bf16.mxu0 0
      %5380 = vmatpush1.bf16.msra.mxu0 0
      %5381 = vmatprep.subr.bf16.mxu0 0
      %5382 = vmatpush1.bf16.msra.mxu0 0
      %5383 = vmatprep.subr.bf16.mxu0 0
      %5384 = vmatpush1.bf16.msra.mxu0 0
      %5385 = vmatprep.subr.bf16.mxu0 0
      %5386 = vmatpush1.bf16.msra.mxu0 0
      %5387 = vmatprep.subr.bf16.mxu0 0
      %5388 = vmatpush1.bf16.msra.mxu0 0
      %5389 = vmatprep.subr.bf16.mxu0 0
      %5390 = vmatpush1.bf16.msra.mxu0 0
      %5391 = vmatprep.subr.bf16.mxu0 0
      %5392 = vmatpush1.bf16.msra.mxu0 0
      %5393 = vmatprep.subr.bf16.mxu0 0
      %5394 = vmatpush1.bf16.msra.mxu0 0
      %5395 = vmatprep.subr.bf16.mxu0 0
      %5396 = vmatpush1.bf16.msra.mxu0 0
      %5397 = vmatprep.subr.bf16.mxu0 0
      %5398 = vmatpush1.bf16.msra.mxu0 0
      %5399 = vmatprep.subr.bf16.mxu0 0
      %5400 = vmatpush1.bf16.msra.mxu0 0
      %5401 = vmatprep.subr.bf16.mxu0 0
      %5402 = vmatpush1.bf16.msra.mxu0 0
      %5403 = vmatprep.mubr.bf16.mxu0 0
      %5404 = vmatmul.mubr.bf16.gmra.mrb[0].mxu0 %v3825
      %v5405 = vpop.f32.mrb[0].mxu0
      %v5406 = vadd.f32 0.0, %v5405
      %v5407 = vpop.f32.mrb[0].mxu0
      %v5408 = vpop.f32.mrb[0].mxu0
      %v5409 = vadd.f32 0.0, %v5408
      %v5410 = vpop.f32.mrb[0].mxu0
      %5411 = vmatprep.mubr.bf16.mxu0 0
      %5412 = vmatmul.mubr.bf16.gmra.mrb[0].mxu0 %v3828
      %v5413 = vpop.f32.mrb[0].mxu0
      %v5414 = vadd.f32 0.0, %v5413
      %v5415 = vpop.f32.mrb[0].mxu0
      %v5416 = vpop.f32.mrb[0].mxu0
      %v5417 = vadd.f32 0.0, %v5416
      %v5418 = vpop.f32.mrb[0].mxu0
      %5419 = vmatprep.mubr.bf16.mxu0 0
      %5420 = vmatmul.mubr.bf16.gmra.mrb[0].mxu0 %v3831
      %v5421 = vpop.f32.mrb[0].mxu0
      %v5422 = vadd.f32 0.0, %v5421
      %v5423 = vpop.f32.mrb[0].mxu0
      %v5424 = vpop.f32.mrb[0].mxu0
      %v5425 = vadd.f32 0.0, %v5424
      %v5426 = vpop.f32.mrb[0].mxu0
      %5427 = vmatprep.mubr.bf16.mxu0 0
      %5428 = vmatmul.mubr.bf16.gmra.mrb[0].mxu0 %v3834
      %v5429 = vpop.f32.mrb[0].mxu0
      %v5430 = vadd.f32 0.0, %v5429
      %v5431 = vpop.f32.mrb[0].mxu0
      %v5432 = vpop.f32.mrb[0].mxu0
      %v5433 = vadd.f32 0.0, %v5432
      %v5434 = vpop.f32.mrb[0].mxu0
      %5435 = vmatprep.mubr.bf16.mxu0 0
      %5436 = vmatmul.mubr.bf16.gmra.mrb[0].mxu0 %v3837
      %v5437 = vpop.f32.mrb[0].mxu0
      %v5438 = vadd.f32 0.0, %v5437
      %v5439 = vpop.f32.mrb[0].mxu0
      %v5440 = vpop.f32.mrb[0].mxu0
      %v5441 = vadd.f32 0.0, %v5440
      %v5442 = vpop.f32.mrb[0].mxu0
      %5443 = vmatprep.mubr.bf16.mxu0 0
      %5444 = vmatmul.mubr.bf16.gmra.mrb[0].mxu0 %v3840
      %v5445 = vpop.f32.mrb[0].mxu0
      %v5446 = vadd.f32 0.0, %v5445
      %v5447 = vpop.f32.mrb[0].mxu0
      %v5448 = vpop.f32.mrb[0].mxu0
      %v5449 = vadd.f32 0.0, %v5448
      %v5450 = vpop.f32.mrb[0].mxu0
      %5451 = vmatprep.mubr.bf16.mxu0 0
      %5452 = vmatmul.mubr.bf16.gmra.mrb[0].mxu0 %v3843
      %v5453 = vpop.f32.mrb[0].mxu0
      %v5454 = vadd.f32 0.0, %v5453
      %v5455 = vpop.f32.mrb[0].mxu0
      %v5456 = vpop.f32.mrb[0].mxu0
      %v5457 = vadd.f32 0.0, %v5456
      %v5458 = vpop.f32.mrb[0].mxu0
      %5459 = vmatprep.mubr.bf16.mxu0 0
      %5460 = vmatmul.mubr.bf16.gmra.mrb[0].mxu0 %v3846
      %v5461 = vpop.f32.mrb[0].mxu0
      %v5462 = vadd.f32 0.0, %v5461
      %v5463 = vpop.f32.mrb[0].mxu0
      %v5464 = vpop.f32.mrb[0].mxu0
      %v5465 = vadd.f32 0.0, %v5464
      %v5466 = vpop.f32.mrb[0].mxu0
      %5467 = vmatprep.mubr.bf16.mxu0 0
      %5468 = vmatmul.mubr.bf16.gmra.mrb[0].mxu0 %v3849
      %v5469 = vpop.f32.mrb[0].mxu0
      %v5470 = vadd.f32 0.0, %v5469
      %v5471 = vpop.f32.mrb[0].mxu0
      %v5472 = vpop.f32.mrb[0].mxu0
      %v5473 = vadd.f32 0.0, %v5472
      %v5474 = vpop.f32.mrb[0].mxu0
      %5475 = vmatprep.mubr.bf16.mxu0 0
      %5476 = vmatmul.mubr.bf16.gmra.mrb[0].mxu0 %v3852
      %v5477 = vpop.f32.mrb[0].mxu0
      %v5478 = vadd.f32 0.0, %v5477
      %v5479 = vpop.f32.mrb[0].mxu0
      %v5480 = vpop.f32.mrb[0].mxu0
      %v5481 = vadd.f32 0.0, %v5480
      %v5482 = vpop.f32.mrb[0].mxu0
      %5483 = vmatprep.mubr.bf16.mxu0 0
      %5484 = vmatmul.mubr.bf16.gmra.mrb[0].mxu0 %v3855
      %v5485 = vpop.f32.mrb[0].mxu0
      %v5486 = vadd.f32 0.0, %v5485
      %v5487 = vpop.f32.mrb[0].mxu0
      %v5488 = vpop.f32.mrb[0].mxu0
      %v5489 = vadd.f32 0.0, %v5488
      %v5490 = vpop.f32.mrb[0].mxu0
      %5491 = vmatprep.mubr.bf16.mxu0 0
      %5492 = vmatmul.mubr.bf16.gmra.mrb[0].mxu0 %v3858
      %v5493 = vpop.f32.mrb[0].mxu0
      %v5494 = vadd.f32 0.0, %v5493
      %v5495 = vpop.f32.mrb[0].mxu0
      %v5496 = vpop.f32.mrb[0].mxu0
      %v5497 = vadd.f32 0.0, %v5496
      %v5498 = vpop.f32.mrb[0].mxu0
      %5499 = vmatprep.mubr.bf16.mxu0 0
      %5500 = vmatmul.mubr.bf16.gmra.mrb[0].mxu0 %v3861
      %v5501 = vpop.f32.mrb[0].mxu0
      %v5502 = vadd.f32 0.0, %v5501
      %v5503 = vpop.f32.mrb[0].mxu0
      %v5504 = vpop.f32.mrb[0].mxu0
      %v5505 = vadd.f32 0.0, %v5504
      %v5506 = vpop.f32.mrb[0].mxu0
      %5507 = vmatprep.mubr.bf16.mxu0 0
      %5508 = vmatmul.mubr.bf16.gmra.mrb[0].mxu0 %v3864
      %v5509 = vpop.f32.mrb[0].mxu0
      %v5510 = vadd.f32 0.0, %v5509
      %v5511 = vpop.f32.mrb[0].mxu0
      %v5512 = vpop.f32.mrb[0].mxu0
      %v5513 = vadd.f32 0.0, %v5512
      %v5514 = vpop.f32.mrb[0].mxu0
      %5515 = vmatprep.mubr.bf16.mxu0 0
      %5516 = vmatmul.mubr.bf16.gmra.mrb[0].mxu0 %v4720
      %v5517 = vpop.f32.mrb[0].mxu0
      %v5518 = vadd.f32 0.0, %v5517
      %v5519 = vpop.f32.mrb[0].mxu0
      %v5520 = vpop.f32.mrb[0].mxu0
      %v5521 = vadd.f32 0.0, %v5520
      %v5522 = vpop.f32.mrb[0].mxu0
      %5523 = vmatprep.mubr.bf16.mxu0 0
      %5524 = vmatmul.mubr.bf16.gmra.mrb[0].mxu0 %v5366
      %v5525 = vpop.f32.mrb[0].mxu0
      %v5526 = vadd.f32 0.0, %v5525
      %v5527 = vpop.f32.mrb[0].mxu0
      %v5528 = vpop.f32.mrb[0].mxu0
      %v5529 = vadd.f32 0.0, %v5528
      %v5530 = vpop.f32.mrb[0].mxu0
      %5531 = vdwg.mxu0
      %v5532 = vadd.f32 %v5304, %v5406
      %v5533 = vadd.f32 %v5305, %v5409
      %v5534 = vadd.f32 %v5306, %v5414
      %v5535 = vadd.f32 %v5307, %v5417
      %v5536 = vadd.f32 %v5308, %v5422
      %v5537 = vadd.f32 %v5309, %v5425
      %v5538 = vadd.f32 %v5310, %v5430
      %v5539 = vadd.f32 %v5311, %v5433
      %v5540 = vadd.f32 %v5312, %v5438
      %v5541 = vadd.f32 %v5313, %v5441
      %v5542 = vadd.f32 %v5314, %v5446
      %v5543 = vadd.f32 %v5315, %v5449
      %v5544 = vadd.f32 %v5316, %v5454
      %v5545 = vadd.f32 %v5317, %v5457
      %v5546 = vadd.f32 %v5318, %v5462
      %v5547 = vadd.f32 %v5319, %v5465
      %v5548 = vadd.f32 %v5320, %v5470
      %v5549 = vadd.f32 %v5321, %v5473
      %v5550 = vadd.f32 %v5322, %v5478
      %v5551 = vadd.f32 %v5323, %v5481
      %v5552 = vadd.f32 %v5324, %v5486
      %v5553 = vadd.f32 %v5325, %v5489
      %v5554 = vadd.f32 %v5326, %v5494
      %v5555 = vadd.f32 %v5327, %v5497
      %v5556 = vadd.f32 %v5328, %v5502
      %v5557 = vadd.f32 %v5329, %v5505
      %v5558 = vadd.f32 %v5330, %v5510
      %v5559 = vadd.f32 %v5331, %v5513
      %v5560 = vadd.f32 %v5332, %v5518
      %v5561 = vadd.f32 %v5333, %v5521
      %v5562 = vadd.f32 %v5334, %v5526
      %v5563 = vadd.f32 %v5335, %v5529
      %v5565 = vrot.slane %v3056, 5
      %v5566 = vrot.slane %v5565, 4
      %v5567 = vrot.slane %v3057, 5
      %v5568 = vsel %vm1306, %v5566, %v5567
      %v5569 = vrot.slane %v5567, 4
      %v5570 = vrot.slane %v3058, 5
      %v5571 = vsel %vm1306, %v5569, %v5570
      %s5572 = scalar_lea.vmem %s3, 16
      %v5573 = vld [vmem:[%s5572] sm:$0x3]
      %v5574 = vunpack.c.l.b16 %v5568
      %v5575 = vunpack.c.l.b16 %v5571
      %v5576 = vpack.c.b16 %v5575, %v5574
      %v5578 = vsel %vm782, %v5576, 0
      %v5581 = vsel %vm831, %v5573, 0
      %5583 = vmatprep.subr.bf16.mxu0 0
      %5584 = vmatpush1.bf16.msra.mxu0 %v5581
      %5585 = vmatprep.subr.bf16.mxu0 0
      %5586 = vmatpush1.bf16.msra.mxu0 0
      %5587 = vmatprep.subr.bf16.mxu0 0
      %5588 = vmatpush1.bf16.msra.mxu0 0
      %5589 = vmatprep.subr.bf16.mxu0 0
      %5590 = vmatpush1.bf16.msra.mxu0 0
      %5591 = vmatprep.subr.bf16.mxu0 0
      %5592 = vmatpush1.bf16.msra.mxu0 0
      %5593 = vmatprep.subr.bf16.mxu0 0
      %5594 = vmatpush1.bf16.msra.mxu0 0
      %5595 = vmatprep.subr.bf16.mxu0 0
      %5596 = vmatpush1.bf16.msra.mxu0 0
      %5597 = vmatprep.subr.bf16.mxu0 0
      %5598 = vmatpush1.bf16.msra.mxu0 0
      %5599 = vmatprep.subr.bf16.mxu0 0
      %5600 = vmatpush1.bf16.msra.mxu0 0
      %5601 = vmatprep.subr.bf16.mxu0 0
      %5602 = vmatpush1.bf16.msra.mxu0 0
      %5603 = vmatprep.subr.bf16.mxu0 0
      %5604 = vmatpush1.bf16.msra.mxu0 0
      %5605 = vmatprep.subr.bf16.mxu0 0
      %5606 = vmatpush1.bf16.msra.mxu0 0
      %5607 = vmatprep.subr.bf16.mxu0 0
      %5608 = vmatpush1.bf16.msra.mxu0 0
      %5609 = vmatprep.subr.bf16.mxu0 0
      %5610 = vmatpush1.bf16.msra.mxu0 0
      %5611 = vmatprep.subr.bf16.mxu0 0
      %5612 = vmatpush1.bf16.msra.mxu0 0
      %5613 = vmatprep.subr.bf16.mxu0 0
      %5614 = vmatpush1.bf16.msra.mxu0 0
      %5615 = vmatprep.mubr.bf16.mxu0 0
      %5616 = vmatmul.mubr.bf16.gmra.mrb[0].mxu0 %v4247
      %v5617 = vpop.f32.mrb[0].mxu0
      %v5618 = vadd.f32 0.0, %v5617
      %v5619 = vpop.f32.mrb[0].mxu0
      %v5620 = vpop.f32.mrb[0].mxu0
      %v5621 = vadd.f32 0.0, %v5620
      %v5622 = vpop.f32.mrb[0].mxu0
      %5623 = vmatprep.mubr.bf16.mxu0 0
      %5624 = vmatmul.mubr.bf16.gmra.mrb[0].mxu0 %v4250
      %v5625 = vpop.f32.mrb[0].mxu0
      %v5626 = vadd.f32 0.0, %v5625
      %v5627 = vpop.f32.mrb[0].mxu0
      %v5628 = vpop.f32.mrb[0].mxu0
      %v5629 = vadd.f32 0.0, %v5628
      %v5630 = vpop.f32.mrb[0].mxu0
      %5631 = vmatprep.mubr.bf16.mxu0 0
      %5632 = vmatmul.mubr.bf16.gmra.mrb[0].mxu0 %v4253
      %v5633 = vpop.f32.mrb[0].mxu0
      %v5634 = vadd.f32 0.0, %v5633
      %v5635 = vpop.f32.mrb[0].mxu0
      %v5636 = vpop.f32.mrb[0].mxu0
      %v5637 = vadd.f32 0.0, %v5636
      %v5638 = vpop.f32.mrb[0].mxu0
      %5639 = vmatprep.mubr.bf16.mxu0 0
      %5640 = vmatmul.mubr.bf16.gmra.mrb[0].mxu0 %v4256
      %v5641 = vpop.f32.mrb[0].mxu0
      %v5642 = vadd.f32 0.0, %v5641
      %v5643 = vpop.f32.mrb[0].mxu0
      %v5644 = vpop.f32.mrb[0].mxu0
      %v5645 = vadd.f32 0.0, %v5644
      %v5646 = vpop.f32.mrb[0].mxu0
      %5647 = vmatprep.mubr.bf16.mxu0 0
      %5648 = vmatmul.mubr.bf16.gmra.mrb[0].mxu0 %v4259
      %v5649 = vpop.f32.mrb[0].mxu0
      %v5650 = vadd.f32 0.0, %v5649
      %v5651 = vpop.f32.mrb[0].mxu0
      %v5652 = vpop.f32.mrb[0].mxu0
      %v5653 = vadd.f32 0.0, %v5652
      %v5654 = vpop.f32.mrb[0].mxu0
      %5655 = vmatprep.mubr.bf16.mxu0 0
      %5656 = vmatmul.mubr.bf16.gmra.mrb[0].mxu0 %v4262
      %v5657 = vpop.f32.mrb[0].mxu0
      %v5658 = vadd.f32 0.0, %v5657
      %v5659 = vpop.f32.mrb[0].mxu0
      %v5660 = vpop.f32.mrb[0].mxu0
      %v5661 = vadd.f32 0.0, %v5660
      %v5662 = vpop.f32.mrb[0].mxu0
      %5663 = vmatprep.mubr.bf16.mxu0 0
      %5664 = vmatmul.mubr.bf16.gmra.mrb[0].mxu0 %v4265
      %v5665 = vpop.f32.mrb[0].mxu0
      %v5666 = vadd.f32 0.0, %v5665
      %v5667 = vpop.f32.mrb[0].mxu0
      %v5668 = vpop.f32.mrb[0].mxu0
      %v5669 = vadd.f32 0.0, %v5668
      %v5670 = vpop.f32.mrb[0].mxu0
      %5671 = vmatprep.mubr.bf16.mxu0 0
      %5672 = vmatmul.mubr.bf16.gmra.mrb[0].mxu0 %v4268
      %v5673 = vpop.f32.mrb[0].mxu0
      %v5674 = vadd.f32 0.0, %v5673
      %v5675 = vpop.f32.mrb[0].mxu0
      %v5676 = vpop.f32.mrb[0].mxu0
      %v5677 = vadd.f32 0.0, %v5676
      %v5678 = vpop.f32.mrb[0].mxu0
      %5679 = vmatprep.mubr.bf16.mxu0 0
      %5680 = vmatmul.mubr.bf16.gmra.mrb[0].mxu0 %v4271
      %v5681 = vpop.f32.mrb[0].mxu0
      %v5682 = vadd.f32 0.0, %v5681
      %v5683 = vpop.f32.mrb[0].mxu0
      %v5684 = vpop.f32.mrb[0].mxu0
      %v5685 = vadd.f32 0.0, %v5684
      %v5686 = vpop.f32.mrb[0].mxu0
      %5687 = vmatprep.mubr.bf16.mxu0 0
      %5688 = vmatmul.mubr.bf16.gmra.mrb[0].mxu0 %v4274
      %v5689 = vpop.f32.mrb[0].mxu0
      %v5690 = vadd.f32 0.0, %v5689
      %v5691 = vpop.f32.mrb[0].mxu0
      %v5692 = vpop.f32.mrb[0].mxu0
      %v5693 = vadd.f32 0.0, %v5692
      %v5694 = vpop.f32.mrb[0].mxu0
      %5695 = vmatprep.mubr.bf16.mxu0 0
      %5696 = vmatmul.mubr.bf16.gmra.mrb[0].mxu0 %v4277
      %v5697 = vpop.f32.mrb[0].mxu0
      %v5698 = vadd.f32 0.0, %v5697
      %v5699 = vpop.f32.mrb[0].mxu0
      %v5700 = vpop.f32.mrb[0].mxu0
      %v5701 = vadd.f32 0.0, %v5700
      %v5702 = vpop.f32.mrb[0].mxu0
      %5703 = vmatprep.mubr.bf16.mxu0 0
      %5704 = vmatmul.mubr.bf16.gmra.mrb[0].mxu0 %v4280
      %v5705 = vpop.f32.mrb[0].mxu0
      %v5706 = vadd.f32 0.0, %v5705
      %v5707 = vpop.f32.mrb[0].mxu0
      %v5708 = vpop.f32.mrb[0].mxu0
      %v5709 = vadd.f32 0.0, %v5708
      %v5710 = vpop.f32.mrb[0].mxu0
      %5711 = vmatprep.mubr.bf16.mxu0 0
      %5712 = vmatmul.mubr.bf16.gmra.mrb[0].mxu0 %v4283
      %v5713 = vpop.f32.mrb[0].mxu0
      %v5714 = vadd.f32 0.0, %v5713
      %v5715 = vpop.f32.mrb[0].mxu0
      %v5716 = vpop.f32.mrb[0].mxu0
      %v5717 = vadd.f32 0.0, %v5716
      %v5718 = vpop.f32.mrb[0].mxu0
      %5719 = vmatprep.mubr.bf16.mxu0 0
      %5720 = vmatmul.mubr.bf16.gmra.mrb[0].mxu0 %v4286
      %v5721 = vpop.f32.mrb[0].mxu0
      %v5722 = vadd.f32 0.0, %v5721
      %v5723 = vpop.f32.mrb[0].mxu0
      %v5724 = vpop.f32.mrb[0].mxu0
      %v5725 = vadd.f32 0.0, %v5724
      %v5726 = vpop.f32.mrb[0].mxu0
      %5727 = vmatprep.mubr.bf16.mxu0 0
      %5728 = vmatmul.mubr.bf16.gmra.mrb[0].mxu0 %v4932
      %v5729 = vpop.f32.mrb[0].mxu0
      %v5730 = vadd.f32 0.0, %v5729
      %v5731 = vpop.f32.mrb[0].mxu0
      %v5732 = vpop.f32.mrb[0].mxu0
      %v5733 = vadd.f32 0.0, %v5732
      %v5734 = vpop.f32.mrb[0].mxu0
      %5735 = vmatprep.mubr.bf16.mxu0 0
      %5736 = vmatmul.mubr.bf16.gmra.mrb[0].mxu0 %v5578
      %v5737 = vpop.f32.mrb[0].mxu0
      %v5738 = vadd.f32 0.0, %v5737
      %v5739 = vpop.f32.mrb[0].mxu0
      %v5740 = vpop.f32.mrb[0].mxu0
      %v5741 = vadd.f32 0.0, %v5740
      %v5742 = vpop.f32.mrb[0].mxu0
      %5743 = vdwg.mxu0
      %v5744 = vadd.f32 %v5532, %v5618
      %v5745 = vadd.f32 %v5533, %v5621
      %v5746 = vadd.f32 %v5534, %v5626
      %v5747 = vadd.f32 %v5535, %v5629
      %v5748 = vadd.f32 %v5536, %v5634
      %v5749 = vadd.f32 %v5537, %v5637
      %v5750 = vadd.f32 %v5538, %v5642
      %v5751 = vadd.f32 %v5539, %v5645
      %v5752 = vadd.f32 %v5540, %v5650
      %v5753 = vadd.f32 %v5541, %v5653
      %v5754 = vadd.f32 %v5542, %v5658
      %v5755 = vadd.f32 %v5543, %v5661
      %v5756 = vadd.f32 %v5544, %v5666
      %v5757 = vadd.f32 %v5545, %v5669
      %v5758 = vadd.f32 %v5546, %v5674
      %v5759 = vadd.f32 %v5547, %v5677
      %v5760 = vadd.f32 %v5548, %v5682
      %v5761 = vadd.f32 %v5549, %v5685
      %v5762 = vadd.f32 %v5550, %v5690
      %v5763 = vadd.f32 %v5551, %v5693
      %v5764 = vadd.f32 %v5552, %v5698
      %v5765 = vadd.f32 %v5553, %v5701
      %v5766 = vadd.f32 %v5554, %v5706
      %v5767 = vadd.f32 %v5555, %v5709
      %v5768 = vadd.f32 %v5556, %v5714
      %v5769 = vadd.f32 %v5557, %v5717
      %v5770 = vadd.f32 %v5558, %v5722
      %v5771 = vadd.f32 %v5559, %v5725
      %v5772 = vadd.f32 %v5560, %v5730
      %v5773 = vadd.f32 %v5561, %v5733
      %v5774 = vadd.f32 %v5562, %v5738
      %v5775 = vadd.f32 %v5563, %v5741
      %v5776 = vpack.c.bf16 %v5745, %v5744
      %v5777 = vpack.c.bf16 %v5747, %v5746
      %v5778 = vpack.c.bf16 %v5749, %v5748
      %v5779 = vpack.c.bf16 %v5751, %v5750
      %v5780 = vpack.c.bf16 %v5753, %v5752
      %v5781 = vpack.c.bf16 %v5755, %v5754
      %v5782 = vpack.c.bf16 %v5757, %v5756
      %v5783 = vpack.c.bf16 %v5759, %v5758
      %v5784 = vpack.c.bf16 %v5761, %v5760
      %v5785 = vpack.c.bf16 %v5763, %v5762
      %v5786 = vpack.c.bf16 %v5765, %v5764
      %v5787 = vpack.c.bf16 %v5767, %v5766
      %v5788 = vpack.c.bf16 %v5769, %v5768
      %v5789 = vpack.c.bf16 %v5771, %v5770
      %v5790 = vpack.c.bf16 %v5773, %v5772
      %v5791 = vpack.c.bf16 %v5775, %v5774
      %v5808 = vunpack.c.l.b16 %v5776
      %v5809 = vunpack.c.h.b16 %v5776
      %v5810 = vunpack.c.l.b16 %v5777
      %v5811 = vunpack.c.h.b16 %v5777
      %v5812 = vunpack.c.l.b16 %v5778
      %v5813 = vunpack.c.h.b16 %v5778
      %v5814 = vunpack.c.l.b16 %v5779
      %v5815 = vunpack.c.h.b16 %v5779
      %v5816 = vunpack.c.l.b16 %v5780
      %v5817 = vunpack.c.h.b16 %v5780
      %v5818 = vunpack.c.l.b16 %v5781
      %v5819 = vunpack.c.h.b16 %v5781
      %v5820 = vunpack.c.l.b16 %v5782
      %v5821 = vunpack.c.h.b16 %v5782
      %v5822 = vunpack.c.l.b16 %v5783
      %v5823 = vunpack.c.h.b16 %v5783
      %v5824 = vunpack.c.l.b16 %v5784
      %v5825 = vunpack.c.h.b16 %v5784
      %v5826 = vunpack.c.l.b16 %v5785
      %v5827 = vunpack.c.h.b16 %v5785
      %v5828 = vunpack.c.l.b16 %v5786
      %v5829 = vunpack.c.h.b16 %v5786
      %v5830 = vunpack.c.l.b16 %v5787
      %v5831 = vunpack.c.h.b16 %v5787
      %v5832 = vunpack.c.l.b16 %v5788
      %v5833 = vunpack.c.h.b16 %v5788
      %v5834 = vunpack.c.l.b16 %v5789
      %v5835 = vunpack.c.h.b16 %v5789
      %v5836 = vunpack.c.l.b16 %v5790
      %v5837 = vunpack.c.h.b16 %v5790
      %v5838 = vunpack.c.l.b16 %v5791
      %v5839 = vunpack.c.h.b16 %v5791
      %v5840 = vpack.c.b16 %v5808, %v5808
      %v5841 = vpack.c.b16 %v5809, %v5809
      %v5842 = vpack.c.b16 %v5810, %v5810
      %v5843 = vpack.c.b16 %v5811, %v5811
      %v5844 = vpack.c.b16 %v5812, %v5812
      %v5845 = vpack.c.b16 %v5813, %v5813
      %v5846 = vpack.c.b16 %v5814, %v5814
      %v5847 = vpack.c.b16 %v5815, %v5815
      %v5848 = vpack.c.b16 %v5816, %v5816
      %v5849 = vpack.c.b16 %v5817, %v5817
      %v5850 = vpack.c.b16 %v5818, %v5818
      %v5851 = vpack.c.b16 %v5819, %v5819
      %v5852 = vpack.c.b16 %v5820, %v5820
      %v5853 = vpack.c.b16 %v5821, %v5821
      %v5854 = vpack.c.b16 %v5822, %v5822
      %v5855 = vpack.c.b16 %v5823, %v5823
      %v5856 = vpack.c.b16 %v5824, %v5824
      %v5857 = vpack.c.b16 %v5825, %v5825
      %v5858 = vpack.c.b16 %v5826, %v5826
      %v5859 = vpack.c.b16 %v5827, %v5827
      %v5860 = vpack.c.b16 %v5828, %v5828
      %v5861 = vpack.c.b16 %v5829, %v5829
      %v5862 = vpack.c.b16 %v5830, %v5830
      %v5863 = vpack.c.b16 %v5831, %v5831
      %v5864 = vpack.c.b16 %v5832, %v5832
      %v5865 = vpack.c.b16 %v5833, %v5833
      %v5866 = vpack.c.b16 %v5834, %v5834
      %v5867 = vpack.c.b16 %v5835, %v5835
      %v5868 = vpack.c.b16 %v5836, %v5836
      %v5869 = vpack.c.b16 %v5837, %v5837
      %v5870 = vpack.c.b16 %v5838, %v5838
      %v5871 = vpack.c.b16 %v5839, %v5839
      %vm5904 = vcmask 60416
      %5905 = vst.msk [vmem:[%s280] sm:$0xf] %vm5904, %v5840
      %5906 = vst.msk [vmem:[%s280 + $0x4] sm:$0xf] %vm5904, %v5841
      %5907 = vst.msk [vmem:[%s280 + $0x8] sm:$0xf] %vm5904, %v5842
      %5908 = vst.msk [vmem:[%s280 + $0xc] sm:$0xf] %vm5904, %v5843
      %5909 = vst.msk [vmem:[%s280 + $0x10] sm:$0xf] %vm5904, %v5844
      %5910 = vst.msk [vmem:[%s280 + $0x14] sm:$0xf] %vm5904, %v5845
      %5911 = vst.msk [vmem:[%s280 + $0x18] sm:$0xf] %vm5904, %v5846
      %5912 = vst.msk [vmem:[%s280 + $0x1c] sm:$0xf] %vm5904, %v5847
      %5913 = vst.msk [vmem:[%s280 + $0x20] sm:$0xf] %vm5904, %v5848
      %5914 = vst.msk [vmem:[%s280 + $0x24] sm:$0xf] %vm5904, %v5849
      %5915 = vst.msk [vmem:[%s280 + $0x28] sm:$0xf] %vm5904, %v5850
      %5916 = vst.msk [vmem:[%s280 + $0x2c] sm:$0xf] %vm5904, %v5851
      %5917 = vst.msk [vmem:[%s280 + $0x30] sm:$0xf] %vm5904, %v5852
      %5918 = vst.msk [vmem:[%s280 + $0x34] sm:$0xf] %vm5904, %v5853
      %5919 = vst.msk [vmem:[%s280 + $0x38] sm:$0xf] %vm5904, %v5854
      %5920 = vst.msk [vmem:[%s280 + $0x3c] sm:$0xf] %vm5904, %v5855
      %5921 = vst.msk [vmem:[%s280 + $0x40] sm:$0xf] %vm5904, %v5856
      %5922 = vst.msk [vmem:[%s280 + $0x44] sm:$0xf] %vm5904, %v5857
      %5923 = vst.msk [vmem:[%s280 + $0x48] sm:$0xf] %vm5904, %v5858
      %5924 = vst.msk [vmem:[%s280 + $0x4c] sm:$0xf] %vm5904, %v5859
      %5925 = vst.msk [vmem:[%s280 + $0x50] sm:$0xf] %vm5904, %v5860
      %5926 = vst.msk [vmem:[%s280 + $0x54] sm:$0xf] %vm5904, %v5861
      %5927 = vst.msk [vmem:[%s280 + $0x58] sm:$0xf] %vm5904, %v5862
      %5928 = vst.msk [vmem:[%s280 + $0x5c] sm:$0xf] %vm5904, %v5863
      %5929 = vst.msk [vmem:[%s280 + $0x60] sm:$0xf] %vm5904, %v5864
      %5930 = vst.msk [vmem:[%s280 + $0x64] sm:$0xf] %vm5904, %v5865
      %5931 = vst.msk [vmem:[%s280 + $0x68] sm:$0xf] %vm5904, %v5866
      %5932 = vst.msk [vmem:[%s280 + $0x6c] sm:$0xf] %vm5904, %v5867
      %5933 = vst.msk [vmem:[%s280 + $0x70] sm:$0xf] %vm5904, %v5868
      %5934 = vst.msk [vmem:[%s280 + $0x74] sm:$0xf] %vm5904, %v5869
      %5935 = vst.msk [vmem:[%s280 + $0x78] sm:$0xf] %vm5904, %v5870
      %5936 = vst.msk [vmem:[%s280 + $0x7c] sm:$0xf] %vm5904, %v5871
      %vm5937 = vcmask 64512
      %v5938 = vsel %vm5937, %v5744, 0.0
      %v5939 = vsel %vm5937, %v5745, 0.0
      %v5940 = vadd.f32 %v5938, %v5939
      %v5941 = vsel %vm5937, %v5746, 0.0
      %v5942 = vadd.f32 %v5940, %v5941
      %v5943 = vsel %vm5937, %v5747, 0.0
      %v5944 = vadd.f32 %v5942, %v5943
      %v5945 = vsel %vm5937, %v5748, 0.0
      %v5946 = vadd.f32 %v5944, %v5945
      %v5947 = vsel %vm5937, %v5749, 0.0
      %v5948 = vadd.f32 %v5946, %v5947
      %v5949 = vsel %vm5937, %v5750, 0.0
      %v5950 = vadd.f32 %v5948, %v5949
      %v5951 = vsel %vm5937, %v5751, 0.0
      %v5952 = vadd.f32 %v5950, %v5951
      %v5953 = vsel %vm5937, %v5752, 0.0
      %v5954 = vadd.f32 %v5952, %v5953
      %v5955 = vsel %vm5937, %v5753, 0.0
      %v5956 = vadd.f32 %v5954, %v5955
      %v5957 = vsel %vm5937, %v5754, 0.0
      %v5958 = vadd.f32 %v5956, %v5957
      %v5959 = vsel %vm5937, %v5755, 0.0
      %v5960 = vadd.f32 %v5958, %v5959
      %v5961 = vsel %vm5937, %v5756, 0.0
      %v5962 = vadd.f32 %v5960, %v5961
      %v5963 = vsel %vm5937, %v5757, 0.0
      %v5964 = vadd.f32 %v5962, %v5963
      %v5965 = vsel %vm5937, %v5758, 0.0
      %v5966 = vadd.f32 %v5964, %v5965
      %v5967 = vsel %vm5937, %v5759, 0.0
      %v5968 = vadd.f32 %v5966, %v5967
      %v5969 = vsel %vm5937, %v5760, 0.0
      %v5970 = vadd.f32 %v5968, %v5969
      %v5971 = vsel %vm5937, %v5761, 0.0
      %v5972 = vadd.f32 %v5970, %v5971
      %v5973 = vsel %vm5937, %v5762, 0.0
      %v5974 = vadd.f32 %v5972, %v5973
      %v5975 = vsel %vm5937, %v5763, 0.0
      %v5976 = vadd.f32 %v5974, %v5975
      %v5977 = vsel %vm5937, %v5764, 0.0
      %v5978 = vadd.f32 %v5976, %v5977
      %v5979 = vsel %vm5937, %v5765, 0.0
      %v5980 = vadd.f32 %v5978, %v5979
      %v5981 = vsel %vm5937, %v5766, 0.0
      %v5982 = vadd.f32 %v5980, %v5981
      %v5983 = vsel %vm5937, %v5767, 0.0
      %v5984 = vadd.f32 %v5982, %v5983
      %v5985 = vsel %vm5937, %v5768, 0.0
      %v5986 = vadd.f32 %v5984, %v5985
      %v5987 = vsel %vm5937, %v5769, 0.0
      %v5988 = vadd.f32 %v5986, %v5987
      %v5989 = vsel %vm5937, %v5770, 0.0
      %v5990 = vadd.f32 %v5988, %v5989
      %v5991 = vsel %vm5937, %v5771, 0.0
      %v5992 = vadd.f32 %v5990, %v5991
      %v5993 = vsel %vm5937, %v5772, 0.0
      %v5994 = vadd.f32 %v5992, %v5993
      %v5995 = vsel %vm5937, %v5773, 0.0
      %v5996 = vadd.f32 %v5994, %v5995
      %v5997 = vsel %vm5937, %v5774, 0.0
      %v5998 = vadd.f32 %v5996, %v5997
      %v5999 = vsel %vm5937, %v5775, 0.0
      %v6000 = vadd.f32 %v5998, %v5999
      %v6001 = vrot.slane %v6000, 4
      %v6002 = vadd.f32 %v6000, %v6001
      %v6003 = vrot.slane %v6002, 2
      %v6004 = vadd.f32 %v6002, %v6003
      %v6005 = vrot.slane %v6004, 1
      %v6006 = vadd.f32 %v6004, %v6005
      %v6007 = vmul.f32 %v5744, %v5744
      %v6008 = vmul.f32 %v5745, %v5745
      %v6009 = vmul.f32 %v5746, %v5746
      %v6010 = vmul.f32 %v5747, %v5747
      %v6011 = vmul.f32 %v5748, %v5748
      %v6012 = vmul.f32 %v5749, %v5749
      %v6013 = vmul.f32 %v5750, %v5750
      %v6014 = vmul.f32 %v5751, %v5751
      %v6015 = vmul.f32 %v5752, %v5752
      %v6016 = vmul.f32 %v5753, %v5753
      %v6017 = vmul.f32 %v5754, %v5754
      %v6018 = vmul.f32 %v5755, %v5755
      %v6019 = vmul.f32 %v5756, %v5756
      %v6020 = vmul.f32 %v5757, %v5757
      %v6021 = vmul.f32 %v5758, %v5758
      %v6022 = vmul.f32 %v5759, %v5759
      %v6023 = vmul.f32 %v5760, %v5760
      %v6024 = vmul.f32 %v5761, %v5761
      %v6025 = vmul.f32 %v5762, %v5762
      %v6026 = vmul.f32 %v5763, %v5763
      %v6027 = vmul.f32 %v5764, %v5764
      %v6028 = vmul.f32 %v5765, %v5765
      %v6029 = vmul.f32 %v5766, %v5766
      %v6030 = vmul.f32 %v5767, %v5767
      %v6031 = vmul.f32 %v5768, %v5768
      %v6032 = vmul.f32 %v5769, %v5769
      %v6033 = vmul.f32 %v5770, %v5770
      %v6034 = vmul.f32 %v5771, %v5771
      %v6035 = vmul.f32 %v5772, %v5772
      %v6036 = vmul.f32 %v5773, %v5773
      %v6037 = vmul.f32 %v5774, %v5774
      %v6038 = vmul.f32 %v5775, %v5775
      %v6039 = vsel %vm5937, %v6007, 0.0
      %v6040 = vsel %vm5937, %v6008, 0.0
      %v6041 = vadd.f32 %v6039, %v6040
      %v6042 = vsel %vm5937, %v6009, 0.0
      %v6043 = vadd.f32 %v6041, %v6042
      %v6044 = vsel %vm5937, %v6010, 0.0
      %v6045 = vadd.f32 %v6043, %v6044
      %v6046 = vsel %vm5937, %v6011, 0.0
      %v6047 = vadd.f32 %v6045, %v6046
      %v6048 = vsel %vm5937, %v6012, 0.0
      %v6049 = vadd.f32 %v6047, %v6048
      %v6050 = vsel %vm5937, %v6013, 0.0
      %v6051 = vadd.f32 %v6049, %v6050
      %v6052 = vsel %vm5937, %v6014, 0.0
      %v6053 = vadd.f32 %v6051, %v6052
      %v6054 = vsel %vm5937, %v6015, 0.0
      %v6055 = vadd.f32 %v6053, %v6054
      %v6056 = vsel %vm5937, %v6016, 0.0
      %v6057 = vadd.f32 %v6055, %v6056
      %v6058 = vsel %vm5937, %v6017, 0.0
      %v6059 = vadd.f32 %v6057, %v6058
      %v6060 = vsel %vm5937, %v6018, 0.0
      %v6061 = vadd.f32 %v6059, %v6060
      %v6062 = vsel %vm5937, %v6019, 0.0
      %v6063 = vadd.f32 %v6061, %v6062
      %v6064 = vsel %vm5937, %v6020, 0.0
      %v6065 = vadd.f32 %v6063, %v6064
      %v6066 = vsel %vm5937, %v6021, 0.0
      %v6067 = vadd.f32 %v6065, %v6066
      %v6068 = vsel %vm5937, %v6022, 0.0
      %v6069 = vadd.f32 %v6067, %v6068
      %v6070 = vsel %vm5937, %v6023, 0.0
      %v6071 = vadd.f32 %v6069, %v6070
      %v6072 = vsel %vm5937, %v6024, 0.0
      %v6073 = vadd.f32 %v6071, %v6072
      %v6074 = vsel %vm5937, %v6025, 0.0
      %v6075 = vadd.f32 %v6073, %v6074
      %v6076 = vsel %vm5937, %v6026, 0.0
      %v6077 = vadd.f32 %v6075, %v6076
      %v6078 = vsel %vm5937, %v6027, 0.0
      %v6079 = vadd.f32 %v6077, %v6078
      %v6080 = vsel %vm5937, %v6028, 0.0
      %v6081 = vadd.f32 %v6079, %v6080
      %v6082 = vsel %vm5937, %v6029, 0.0
      %v6083 = vadd.f32 %v6081, %v6082
      %v6084 = vsel %vm5937, %v6030, 0.0
      %v6085 = vadd.f32 %v6083, %v6084
      %v6086 = vsel %vm5937, %v6031, 0.0
      %v6087 = vadd.f32 %v6085, %v6086
      %v6088 = vsel %vm5937, %v6032, 0.0
      %v6089 = vadd.f32 %v6087, %v6088
      %v6090 = vsel %vm5937, %v6033, 0.0
      %v6091 = vadd.f32 %v6089, %v6090
      %v6092 = vsel %vm5937, %v6034, 0.0
      %v6093 = vadd.f32 %v6091, %v6092
      %v6094 = vsel %vm5937, %v6035, 0.0
      %v6095 = vadd.f32 %v6093, %v6094
      %v6096 = vsel %vm5937, %v6036, 0.0
      %v6097 = vadd.f32 %v6095, %v6096
      %v6098 = vsel %vm5937, %v6037, 0.0
      %v6099 = vadd.f32 %v6097, %v6098
      %v6100 = vsel %vm5937, %v6038, 0.0
      %v6101 = vadd.f32 %v6099, %v6100
      %v6102 = vrot.slane %v6101, 4
      %v6103 = vadd.f32 %v6101, %v6102
      %v6104 = vrot.slane %v6103, 2
      %v6105 = vadd.f32 %v6103, %v6104
      %v6106 = vrot.slane %v6105, 1
      %v6107 = vadd.f32 %v6105, %v6106
      %vm6108 = vcmask 1040384
      %v6109 = vsel %vm6108, %v6006, %v6107
      %vm6110 = vcmask 58368
      %6111 = vst.msk [vmem:[%s288] sm:$0x3] %vm6110, %v6109
      %s6112 = smul.u32 16, %s22
      %p6113 = scmp.lt.s32.totalorder %s21, 1
      %s6114 = scalar_select %p6113, %s21, 1
      %p6115 = scmp.lt.s32.totalorder %s6112, 15
      %s6116 = scalar_select %p6115, %s6112, 15
      %s6117 = smul.addr %s6116, 2
      %s6118 = smul.addr %s6114, 32
      %s6119 = sadd.s32 %s6117, %s6118
      %s6120 = smul.addr %s6119, 4
      %s6121 = scalar_lea.vmem %s4, %s6120
      %p6122 = scmp.lt.s32.totalorder %s21, 1
      %s6123 = scalar_select %p6122, %s21, 1
      %p6124 = scmp.lt.s32.totalorder %s22, 0
      %s6125 = scalar_select %p6124, %s22, 0
      %s6126 = sadd.s32 %s6125, %s6123
      %s6127 = smul.addr %s6126, 2
      %s6128 = scalar_lea.vmem %s5, %s6127
      // Predicated region
      $region37: #{upsample_block_forward.3} parent=35 // pred_check
        %p6129 = pneg %p143
      $region38: #{upsample_block_forward.3} parent=35 // pred_check_branch
        %6131 = sbr.rel (%p6129) target = $region40
      $region39: #{upsample_block_forward.3} parent=35 // pred_region
        %s6132 = smul.u32 16, %s22
      $region40: #{upsample_block_forward.3} parent=35 // pred_fallthru
        _
      // Predicated region
      $region41: #{upsample_block_forward.3} parent=35 // pred_check
        %p6133 = pneg %p171
      $region42: #{upsample_block_forward.3} parent=35 // pred_check_branch
        %6135 = sbr.rel (%p6133) target = $region44
      $region43: #{upsample_block_forward.3} parent=35 // pred_region
        _
      $region44: #{upsample_block_forward.3} parent=35 // pred_fallthru
        _
    $region36: #{upsample_block_forward.3} parent=5 // pred_fallthru
      _
    %p6136 = scmp.le.s32.totalorder 2, %s12
    // Predicated region
    $region45: #{upsample_block_forward.3} parent=5 // pred_check
      %p6137 = pneg %p6136
    $region46: #{upsample_block_forward.3} parent=5 // pred_check_branch
      %6139 = sbr.rel (%p6137) target = $region48
    $region47: #{upsample_block_forward.3} parent=5 // pred_region
      %s6140 = ssub.s32 %s12, 2
      // Predicated region
      $region49: #{upsample_block_forward.3} parent=47 // pred_check
        %p6141 = pneg %p149
      $region50: #{upsample_block_forward.3} parent=47 // pred_check_branch
        %6143 = sbr.rel (%p6141) target = $region52
      $region51: #{upsample_block_forward.3} parent=47 // pred_region
        %s6144 = smul.u32 16, %s24
        %p6145 = scmp.lt.s32.totalorder %s23, 1
        %s6146 = scalar_select %p6145, %s23, 1
        %p6147 = scmp.lt.s32.totalorder %s6144, 15
        %s6148 = scalar_select %p6147, %s6144, 15
        %s6149 = smul.addr %s6148, 2
        %s6150 = smul.addr %s6146, 32
        %s6151 = sadd.s32 %s6149, %s6150
        %s6152 = smul.addr %s6151, 4
        %s6153 = scalar_lea.vmem %s4, %s6152
      $region52: #{upsample_block_forward.3} parent=47 // pred_fallthru
        _
      // Predicated region
      $region53: #{upsample_block_forward.3} parent=47 // pred_check
        %p6154 = pneg %p177
      $region54: #{upsample_block_forward.3} parent=47 // pred_check_branch
        %6156 = sbr.rel (%p6154) target = $region56
      $region55: #{upsample_block_forward.3} parent=47 // pred_region
        %p6157 = scmp.lt.s32.totalorder %s23, 1
        %s6158 = scalar_select %p6157, %s23, 1
        %p6159 = scmp.lt.s32.totalorder %s24, 0
        %s6160 = scalar_select %p6159, %s24, 0
        %s6161 = sadd.s32 %s6160, %s6158
        %s6162 = smul.addr %s6161, 2
        %s6163 = scalar_lea.vmem %s5, %s6162
      $region56: #{upsample_block_forward.3} parent=47 // pred_fallthru
        _
    $region48: #{upsample_block_forward.3} parent=5 // pred_fallthru
      _
  $region6: #{upsample_block_forward.3} parent=0 // loop_footer
    %s16 = sadd.s32 1, %s12
  $region7: #{upsample_block_forward.3} parent=0 // loop_footer_branch
    %11 = sbr.rel target = $region3
  $region8: #{upsample_block_forward.3} parent=0 // loop_exit
    _

</llo_original>
